<compile_context>
chip_gen: v6e
topology: v6e:2x2x1
jax: 0.10.0
libtpu: 0.0.40
codegen_flags: <defaults>
</compile_context>

<pallas_src>
import functools

import jax
import jax.numpy as jnp
from jax import lax
from jax.experimental import pallas as pl
from jax.experimental.pallas import tpu as pltpu

# ---------------- small synthetic config ----------------
B = 2          # batch
S = 8          # encoder sequence length
T = 4          # decoder steps (max_dec_len of the example batch)
E = 32         # emb_dim
H = 16         # hidden_dim
V = 50         # vocab_size (synthetic w2i)
V_PAD = 128    # vocab padded to a full lane width
PAD_ID = 1
START_ID = 2
EPS = 1e-12
COV_WT = 1.0
NEG = -100000.0
LN_EPS = 1e-5

# Row layout of the packed small-vector table (one (16,128) f32 operand).
ROW_B_ENC_F = 0    # encoder fwd LSTM bias            [0:4H]
ROW_B_ENC_B = 1    # encoder bwd LSTM bias            [0:4H]
ROW_B_WH = 2       # W_h bias                         [0:2H]
ROW_GAMMA = 3      # LayerNorm gamma                  [0:2H]
ROW_BETA = 4       # LayerNorm beta                   [0:2H]
ROW_BXC = 5        # x_context bias                   [0:E]
ROW_B_DEC = 6      # decoder LSTM bias                [0:4H]
ROW_BDP = 7        # decode_proj bias                 [0:2H]
ROW_WC = 8         # W_c coverage weight              [0:2H]
ROW_WPG = 9        # p_gen weight, order [c_t|h|c|x]  [0:4H+E]
ROW_BPG = 10       # p_gen bias                       [0:1]
ROW_BO1 = 11       # out1 bias                        [0:H]
N_VEC_ROWS = 16

_DOT = functools.partial(jnp.dot, preferred_element_type=jnp.float32)
_VMEM = pl.BlockSpec(memory_space=pltpu.MemorySpace.VMEM)


def _row(vecs_ref, r, n):
    """(1, n) static slice of the packed small-vector table."""
    return vecs_ref[r:r + 1, 0:n]


def _lstm_cell(x, h, c, w_ref, b):
    """Single fused-matmul LSTM cell.

    w_ref: (in+H, 4H), rows = [input rows ; hidden rows], gate columns in
    order [i | f | o | g].  Sigmoid is applied only to the i/f/o block and
    tanh only to the g block.
    """
    xh = jnp.concatenate([x, h], axis=1)                   # (B, in+H)
    gates = _DOT(xh, w_ref[...]) + b                       # (B, 4H)
    sg = jax.nn.sigmoid(gates[:, 0:3 * H])
    g = jnp.tanh(gates[:, 3 * H:4 * H])
    i = sg[:, 0:H]
    f = sg[:, H:2 * H]
    o = sg[:, 2 * H:3 * H]
    c_new = f * c + i * g
    h_new = o * jnp.tanh(c_new)
    return h_new, c_new


def _bmm_nt(vec2d, mat3d):
    """(B, K) x (B, N, K) -> (B, N): contract last dims (batched MXU, M=1)."""
    out = jnp.einsum('bqk,bnk->bqn', vec2d[:, None, :], mat3d,
                     preferred_element_type=jnp.float32)
    return out.reshape(vec2d.shape[0], mat3d.shape[1])


def _bmm_nn(vec2d, mat3d):
    """(B, K) x (B, K, N) -> (B, N): standard bmm (batched MXU, M=1)."""
    out = jnp.einsum('bqk,bkn->bqn', vec2d[:, None, :], mat3d,
                     preferred_element_type=jnp.float32)
    return out.reshape(vec2d.shape[0], mat3d.shape[2])


# ======================= the fused Pallas kernel =======================

def pointer_generator_kernel(
        emb_ref, yemb_ref, enc_mask_ref, scatter_ref, tgt_oh_ref,
        dec_mask_ref, dec_lens_ref,
        wef_ref, web_ref, wh_ref, wxc_ref, wdec_ref, wdp_ref,
        wo1_ref, wo2_ref, bo2_ref, vecs_ref,
        loss_ref,
        enc_out_scr):
    """Whole PointerGenerator forward; only the scalar loss leaves the chip."""

    # ---------------- encoder: bidirectional LSTM ----------------
    h = jnp.zeros((B, H), jnp.float32)
    c = jnp.zeros((B, H), jnp.float32)
    for t in range(S):                                     # forward direction
        h, c = _lstm_cell(emb_ref[t], h, c, wef_ref,
                          _row(vecs_ref, ROW_B_ENC_F, 4 * H))
        enc_out_scr[:, t, 0:H] = h
    h0, c0 = h, c      # decoder init state = fwd-direction final (h[0], c[0])

    h = jnp.zeros((B, H), jnp.float32)
    c = jnp.zeros((B, H), jnp.float32)
    for t in range(S - 1, -1, -1):                         # backward direction
        h, c = _lstm_cell(emb_ref[t], h, c, web_ref,
                          _row(vecs_ref, ROW_B_ENC_B, 4 * H))
        enc_out_scr[:, t, H:2 * H] = h

    # encoder_feature = LayerNorm(enc_out @ W_h + b), batched over all B*S rows
    enc_out = enc_out_scr[...]                             # (B, S, 2H)
    y = (_DOT(enc_out.reshape(B * S, 2 * H), wh_ref[...])
         + _row(vecs_ref, ROW_B_WH, 2 * H))                # (B*S, 2H)
    mean = jnp.mean(y, axis=-1, keepdims=True)
    var = jnp.mean(jnp.square(y - mean), axis=-1, keepdims=True)
    yn = ((y - mean) * lax.rsqrt(var + LN_EPS)
          * _row(vecs_ref, ROW_GAMMA, 2 * H) + _row(vecs_ref, ROW_BETA, 2 * H))
    enc_feat = yn.reshape(B, S, 2 * H)

    # ---------------- decoder: T fused steps ----------------
    h, c = h0, c0
    c_t = jnp.zeros((B, 2 * H), jnp.float32)
    coverage = jnp.zeros((B, S), jnp.float32)
    sum_loss = jnp.zeros((B, 1), jnp.float32)

    for t in range(T):
        # x = ReLU(x_context([c_t_1 ; y_emb]))   (dropout == identity / eval)
        x_in = jnp.concatenate([c_t, yemb_ref[t]], axis=1)            # (B,2H+E)
        x = jnp.maximum(_DOT(x_in, wxc_ref[...])
                        + _row(vecs_ref, ROW_BXC, E), 0.0)

        # single-step decoder LSTM cell
        h, c = _lstm_cell(x, h, c, wdec_ref, _row(vecs_ref, ROW_B_DEC, 4 * H))
        s_hat = jnp.concatenate([h, c], axis=1)                        # (B, 2H)

        # attention with coverage (W_c is rank-1: exact reference math)
        dec_fea = _DOT(s_hat, wdp_ref[...]) + _row(vecs_ref, ROW_BDP, 2 * H)
        cov_coef = jnp.sum(dec_fea * _row(vecs_ref, ROW_WC, 2 * H),
                           axis=1, keepdims=True)                      # (B, 1)
        scores = (_bmm_nt(dec_fea, enc_feat)
                  + coverage * cov_coef + enc_mask_ref[...])           # (B, S)
        mx = jnp.max(scores, axis=1, keepdims=True)
        ex = jnp.exp(scores - mx)
        attn = ex / jnp.sum(ex, axis=1, keepdims=True)                 # (B, S)
        c_t = _bmm_nn(attn, enc_out)                                   # (B, 2H)

        # coverage loss uses the OLD coverage, then update
        cov_loss = jnp.sum(jnp.minimum(attn, coverage),
                           axis=1, keepdims=True)                      # (B, 1)
        coverage = coverage + attn

        # p_gen = sigmoid(w_pg . [c_t ; h ; c ; x] + b)  (VPU lane reduction)
        pg_feat = jnp.concatenate([c_t, s_hat, x], axis=1)             # (B,4H+E)
        p_gen = jax.nn.sigmoid(
            jnp.sum(pg_feat * _row(vecs_ref, ROW_WPG, 4 * H + E),
                    axis=1, keepdims=True)
            + _row(vecs_ref, ROW_BPG, 1))                              # (B, 1)

        # vocab distribution over V_PAD lanes (pad cols carry a -1e30 bias)
        out_feat = jnp.concatenate([h, c_t], axis=1)                   # (B, 3H)
        hid = jnp.maximum(_DOT(out_feat, wo1_ref[...])
                          + _row(vecs_ref, ROW_BO1, H), 0.0)
        logits = _DOT(hid, wo2_ref[...]) + bo2_ref[...]                # (B, VP)
        lm = jnp.max(logits, axis=1, keepdims=True)
        le = jnp.exp(logits - lm)
        vocab_dist = le / jnp.sum(le, axis=1, keepdims=True)

        # pointer scatter_add against the hoisted one-hot matrix (MXU)
        attn_ = (1.0 - p_gen) * attn                                   # (B, S)
        final = p_gen * vocab_dist + _bmm_nn(attn_, scatter_ref[...])  # (B, VP)

        # gold-prob gather + step loss + step mask
        gold = jnp.sum(final * tgt_oh_ref[t], axis=1, keepdims=True)   # (B, 1)
        step_loss = (-jnp.log(gold + EPS)
                     + COV_WT * cov_loss) * dec_mask_ref[t]            # (B, 1)
        sum_loss = sum_loss + step_loss

    # loss = mean_b( sum_t step_loss_b / dec_len_b )
    per_batch = sum_loss / dec_lens_ref[...]                           # (B, 1)
    loss_ref[...] = jnp.sum(per_batch, axis=0, keepdims=True) * (1.0 / B)


# ======================= wrapper =======================

def pointer_generator_forward(params, enc_batch, enc_lens, dec_batch, dec_lens):
    del enc_lens  # full lengths in the example -> pack_padded_sequence no-op
    emb = params['embedding']

    # Time-major embedding gathers (no separate transpose ops between calls).
    enc_emb_tm = emb[enc_batch.T]                                  # (S, B, E)

    # Deterministic teacher forcing: y_0 = START, y_t = target_{t-1}.
    # TODO(synk): reference flips a python coin per step (teacher_forcing_ratio).
    y_ids = jnp.concatenate(
        [jnp.full((B, 1), START_ID, jnp.int32), dec_batch[:, :T - 1]], axis=1)
    y_emb_tm = emb[y_ids.T]                                        # (T, B, E)

    enc_mask = (enc_batch == PAD_ID).astype(jnp.float32) * NEG     # (B, S)
    dec_mask_tm = (dec_batch.T != PAD_ID).astype(jnp.float32)[:, :, None]  # (T,B,1)

    # Hoisted one-hot matrices: pointer scatter_add + gold-prob gather.
    # TODO(synk): O(B*S*V)/O(T*B*V); tile the vocab axis for a realistic vocab
    # (first thing to blow v7x's 64 MiB VMEM if the model is scaled up).
    vp_iota = jnp.arange(V_PAD, dtype=jnp.int32)
    scatter = (enc_batch[:, :, None] == vp_iota).astype(jnp.float32)       # (B,S,VP)
    tgt_onehot = (dec_batch.T[:, :, None] == vp_iota).astype(jnp.float32)  # (T,B,VP)

    dec_lens_f = dec_lens.astype(jnp.float32)[:, None]             # (B, 1)

    # TODO(synk): v7x has 2 TensorCores; the recurrence is serial at these
    # sizes so no parallel grid axis is used (one TC).
    loss = pl.pallas_call(
        pointer_generator_kernel,
        out_shape=jax.ShapeDtypeStruct((1, 1), jnp.float32),
        in_specs=[_VMEM] * 17,
        out_specs=_VMEM,
        scratch_shapes=[pltpu.VMEM((B, S, 2 * H), jnp.float32)],
    )(enc_emb_tm, y_emb_tm, enc_mask, scatter, tgt_onehot, dec_mask_tm,
      dec_lens_f,
      params['W_enc_f'], params['W_enc_b'], params['W_h'],
      params['W_xc'], params['W_dec'], params['W_dp'],
      params['W_o1'], params['W_o2'], params['b_o2'], params['vecs'])
    return loss[0, 0]


# ======================= deterministic parameter init =======================

def init_params(key):
    ks = jax.random.split(key, 32)
    emb_std = 1e-4     # trunc_norm_init_std
    mag = 0.02         # rand_unif_init_mag
    lin_std = 0.05     # stand-in for default nn.Linear init scale

    def nrm(k, shape, s=lin_std):
        return s * jax.random.normal(k, shape, jnp.float32)

    def unif(k, shape):
        return jax.random.uniform(k, shape, jnp.float32, -mag, mag)

    # LSTM bias with gate order [i | f | o | g]; forget gate = 1.0 + 1.0
    # (bias_ih + bias_hh each get 1.0 in the reference init).
    lstm_bias = jnp.zeros((4 * H,), jnp.float32).at[H:2 * H].set(2.0)

    p = {}
    p['embedding'] = nrm(ks[0], (V, E), emb_std)           # shared enc/dec

    # fused [W_ih ; W_hh] per LSTM direction: (E+H, 4H), cols [i|f|o|g]
    p['W_enc_f'] = jnp.concatenate([unif(ks[1], (E, 4 * H)),
                                    unif(ks[2], (H, 4 * H))], axis=0)
    p['W_enc_b'] = jnp.concatenate([unif(ks[3], (E, 4 * H)),
                                    unif(ks[4], (H, 4 * H))], axis=0)
    p['W_h'] = nrm(ks[5], (2 * H, 2 * H))
    b_h = nrm(ks[6], (2 * H,))

    # decoder x_context Linear(2H+E -> E), rows = [c_t ; y_emb]
    p['W_xc'] = jnp.concatenate([nrm(ks[7], (2 * H, E)),
                                 nrm(ks[8], (E, E))], axis=0)
    bxc = nrm(ks[9], (E,))
    # decoder LSTM, fused [W_ih ; W_hh]
    p['W_dec'] = jnp.concatenate([unif(ks[10], (E, 4 * H)),
                                  unif(ks[11], (H, 4 * H))], axis=0)
    # attention decode_proj Linear(2H -> 2H), rows = [h ; c]; W_c Linear(1->2H)
    p['W_dp'] = jnp.concatenate([nrm(ks[12], (H, 2 * H)),
                                 nrm(ks[13], (H, 2 * H))], axis=0)
    bdp = nrm(ks[14], (2 * H,))
    wc = nrm(ks[15], (2 * H,))
    # p_gen Linear(4H+E -> 1), row vector in order [c_t | h | c | x]
    wpg = nrm(ks[16], (4 * H + E,))
    bpg = nrm(ks[17], (1,))
    # out1 Linear(3H -> H), rows = [h ; c_t]; out2 Linear(H -> V) padded
    p['W_o1'] = jnp.concatenate([nrm(ks[18], (H, H)),
                                 nrm(ks[19], (2 * H, H))], axis=0)
    bo1 = nrm(ks[20], (H,))
    wo2 = nrm(ks[21], (H, V), emb_std)
    bo2 = nrm(ks[22], (V,), emb_std)
    p['W_o2'] = jnp.zeros((H, V_PAD), jnp.float32).at[:, :V].set(wo2)
    p['b_o2'] = jnp.full((1, V_PAD), -1e30, jnp.float32).at[0, :V].set(bo2)

    # packed small-vector / bias table
    vecs = jnp.zeros((N_VEC_ROWS, 128), jnp.float32)
    vecs = vecs.at[ROW_B_ENC_F, 0:4 * H].set(lstm_bias)
    vecs = vecs.at[ROW_B_ENC_B, 0:4 * H].set(lstm_bias)
    vecs = vecs.at[ROW_B_WH, 0:2 * H].set(b_h)
    vecs = vecs.at[ROW_GAMMA, 0:2 * H].set(1.0)            # LayerNorm gamma
    # ROW_BETA stays zero                                  # LayerNorm beta
    vecs = vecs.at[ROW_BXC, 0:E].set(bxc)
    vecs = vecs.at[ROW_B_DEC, 0:4 * H].set(lstm_bias)
    vecs = vecs.at[ROW_BDP, 0:2 * H].set(bdp)
    vecs = vecs.at[ROW_WC, 0:2 * H].set(wc)
    vecs = vecs.at[ROW_WPG, 0:4 * H + E].set(wpg)
    vecs = vecs.at[ROW_BPG, 0:1].set(bpg)
    vecs = vecs.at[ROW_BO1, 0:H].set(bo1)
    p['vecs'] = vecs
    return p


# ======================= main =======================

if __name__ == "__main__":
    key = jax.random.PRNGKey(0)
    kp, k1, k2 = jax.random.split(key, 3)
    params = init_params(kp)

    enc_batch = jax.random.randint(k1, (B, S), 0, V, dtype=jnp.int32)
    enc_lens = jnp.full((B,), S, jnp.int32)     # full lengths (pack == no-op)
    dec_batch = jax.random.randint(k2, (B, T), 4, V, dtype=jnp.int32)
    dec_lens = jnp.full((B,), T, jnp.int32)

    loss_fn = jax.jit(pointer_generator_forward)
    loss = jax.block_until_ready(
        loss_fn(params, enc_batch, enc_lens, dec_batch, dec_lens))
    assert jnp.isfinite(loss), "loss is not finite"
    print("KERNEL_OK")
</pallas_src>

<mosaic_0001>
module attributes {stable_mosaic.version = 11 : i64} {
  func.func @pointer_generator_kernel(%arg0: memref<8x2x32xf32, #tpu.memory_space<vmem>>, %arg1: memref<4x2x32xf32, #tpu.memory_space<vmem>>, %arg2: memref<2x8xf32, #tpu.memory_space<vmem>>, %arg3: memref<2x8x128xf32, #tpu.memory_space<vmem>>, %arg4: memref<4x2x128xf32, #tpu.memory_space<vmem>>, %arg5: memref<4x2x1xf32, #tpu.memory_space<vmem>>, %arg6: memref<2x1xf32, #tpu.memory_space<vmem>>, %arg7: memref<48x64xf32, #tpu.memory_space<vmem>>, %arg8: memref<48x64xf32, #tpu.memory_space<vmem>>, %arg9: memref<32x32xf32, #tpu.memory_space<vmem>>, %arg10: memref<64x32xf32, #tpu.memory_space<vmem>>, %arg11: memref<48x64xf32, #tpu.memory_space<vmem>>, %arg12: memref<32x32xf32, #tpu.memory_space<vmem>>, %arg13: memref<48x16xf32, #tpu.memory_space<vmem>>, %arg14: memref<16x128xf32, #tpu.memory_space<vmem>>, %arg15: memref<1x128xf32, #tpu.memory_space<vmem>>, %arg16: memref<16x128xf32, #tpu.memory_space<vmem>>, %arg17: memref<1x1xf32, #tpu.memory_space<vmem>>, %arg18: memref<2x8x32xf32, #tpu.memory_space<vmem>>) attributes {dimension_semantics = [], scalar_prefetch = 0 : i64, scratch_operands = 1 : i64, tpu.core_type = #tpu.core_type<tc>} {
    %cst = arith.constant 0.000000e+00 : f32
    %0 = vector.broadcast %cst : f32 to vector<2x16xf32>
    %cst_0 = arith.constant 0.000000e+00 : f32
    %1 = vector.broadcast %cst_0 : f32 to vector<2x16xf32>
    %c0 = arith.constant 0 : index
    %c0_1 = arith.constant 0 : index
    %c0_2 = arith.constant 0 : index
    %2 = vector.load %arg0[%c0, %c0_1, %c0_2] : memref<8x2x32xf32, #tpu.memory_space<vmem>>, vector<1x2x32xf32>
    %3 = vector.shape_cast %2 : vector<1x2x32xf32> to vector<2x32xf32>
    %c0_3 = arith.constant 0 : index
    %c0_4 = arith.constant 0 : index
    %4 = vector.load %arg16[%c0_3, %c0_4] : memref<16x128xf32, #tpu.memory_space<vmem>>, vector<1x64xf32>
    %5 = tpu.concatenate %3, %0 in 1 : vector<2x32xf32>, vector<2x16xf32> -> vector<2x48xf32>
    %c0_5 = arith.constant 0 : index
    %c0_6 = arith.constant 0 : index
    %6 = vector.load %arg7[%c0_5, %c0_6] : memref<48x64xf32, #tpu.memory_space<vmem>>, vector<48x64xf32>
    %cst_7 = arith.constant dense<0.000000e+00> : vector<2x64xf32>
    %7 = tpu.matmul %5, %6, %cst_7 {dimension_numbers = #tpu.dot_dimension_numbers<[1], [0], [0], [1], [0, 0, 1, 1], [], []>} : vector<2x48xf32>, vector<48x64xf32>, vector<2x64xf32> -> vector<2x64xf32>
    %8 = vector.broadcast %4 : vector<1x64xf32> to vector<2x64xf32>
    %9 = arith.addf %7, %8 : vector<2x64xf32>
    %10 = vector.extract_strided_slice %9 {offsets = [0, 0], sizes = [2, 48], strides = [1, 1]} : vector<2x64xf32> to vector<2x48xf32>
    %11 = arith.negf %10 : vector<2x48xf32>
    %12 = math.exp %11 : vector<2x48xf32>
    %cst_8 = arith.constant 1.000000e+00 : f32
    %13 = vector.broadcast %cst_8 : f32 to vector<2x48xf32>
    %14 = arith.addf %13, %12 : vector<2x48xf32>
    %15 = arith.divf %13, %14 : vector<2x48xf32>
    %16 = vector.extract_strided_slice %9 {offsets = [0, 48], sizes = [2, 16], strides = [1, 1]} : vector<2x64xf32> to vector<2x16xf32>
    %17 = math.tanh %16 : vector<2x16xf32>
    %18 = vector.extract_strided_slice %15 {offsets = [0, 0], sizes = [2, 16], strides = [1, 1]} : vector<2x48xf32> to vector<2x16xf32>
    %19 = vector.extract_strided_slice %15 {offsets = [0, 16], sizes = [2, 16], strides = [1, 1]} : vector<2x48xf32> to vector<2x16xf32>
    %20 = vector.extract_strided_slice %15 {offsets = [0, 32], sizes = [2, 16], strides = [1, 1]} : vector<2x48xf32> to vector<2x16xf32>
    %21 = arith.mulf %19, %1 : vector<2x16xf32>
    %22 = arith.mulf %18, %17 : vector<2x16xf32>
    %23 = arith.addf %21, %22 : vector<2x16xf32>
    %24 = math.tanh %23 : vector<2x16xf32>
    %25 = arith.mulf %20, %24 : vector<2x16xf32>
    %c0_9 = arith.constant 0 : index
    %c0_10 = arith.constant 0 : index
    %c0_11 = arith.constant 0 : index
    %26 = vector.load %arg18[%c0_9, %c0_10, %c0_11] : memref<2x8x32xf32, #tpu.memory_space<vmem>>, vector<2x1x16xf32>
    %27 = vector.shape_cast %26 : vector<2x1x16xf32> to vector<2x16xf32>
    %28 = vector.shape_cast %25 : vector<2x16xf32> to vector<2x1x16xf32>
    tpu.vector_store %arg18[%c0_9, %c0_10, %c0_11], %28 {strides = array<i32>} : memref<2x8x32xf32, #tpu.memory_space<vmem>>, vector<2x1x16xf32>,
    %c1 = arith.constant 1 : index
    %c0_12 = arith.constant 0 : index
    %c0_13 = arith.constant 0 : index
    %29 = vector.load %arg0[%c1, %c0_12, %c0_13] : memref<8x2x32xf32, #tpu.memory_space<vmem>>, vector<1x2x32xf32>
    %30 = vector.shape_cast %29 : vector<1x2x32xf32> to vector<2x32xf32>
    %c0_14 = arith.constant 0 : index
    %c0_15 = arith.constant 0 : index
    %31 = vector.load %arg16[%c0_14, %c0_15] : memref<16x128xf32, #tpu.memory_space<vmem>>, vector<1x64xf32>
    %32 = tpu.concatenate %30, %25 in 1 : vector<2x32xf32>, vector<2x16xf32> -> vector<2x48xf32>
    %c0_16 = arith.constant 0 : index
    %c0_17 = arith.constant 0 : index
    %33 = vector.load %arg7[%c0_16, %c0_17] : memref<48x64xf32, #tpu.memory_space<vmem>>, vector<48x64xf32>
    %cst_18 = arith.constant dense<0.000000e+00> : vector<2x64xf32>
    %34 = tpu.matmul %32, %33, %cst_18 {dimension_numbers = #tpu.dot_dimension_numbers<[1], [0], [0], [1], [0, 0, 1, 1], [], []>} : vector<2x48xf32>, vector<48x64xf32>, vector<2x64xf32> -> vector<2x64xf32>
    %35 = vector.broadcast %31 : vector<1x64xf32> to vector<2x64xf32>
    %36 = arith.addf %34, %35 : vector<2x64xf32>
    %37 = vector.extract_strided_slice %36 {offsets = [0, 0], sizes = [2, 48], strides = [1, 1]} : vector<2x64xf32> to vector<2x48xf32>
    %38 = arith.negf %37 : vector<2x48xf32>
    %39 = math.exp %38 : vector<2x48xf32>
    %cst_19 = arith.constant 1.000000e+00 : f32
    %40 = vector.broadcast %cst_19 : f32 to vector<2x48xf32>
    %41 = arith.addf %40, %39 : vector<2x48xf32>
    %42 = arith.divf %40, %41 : vector<2x48xf32>
    %43 = vector.extract_strided_slice %36 {offsets = [0, 48], sizes = [2, 16], strides = [1, 1]} : vector<2x64xf32> to vector<2x16xf32>
    %44 = math.tanh %43 : vector<2x16xf32>
    %45 = vector.extract_strided_slice %42 {offsets = [0, 0], sizes = [2, 16], strides = [1, 1]} : vector<2x48xf32> to vector<2x16xf32>
    %46 = vector.extract_strided_slice %42 {offsets = [0, 16], sizes = [2, 16], strides = [1, 1]} : vector<2x48xf32> to vector<2x16xf32>
    %47 = vector.extract_strided_slice %42 {offsets = [0, 32], sizes = [2, 16], strides = [1, 1]} : vector<2x48xf32> to vector<2x16xf32>
    %48 = arith.mulf %46, %23 : vector<2x16xf32>
    %49 = arith.mulf %45, %44 : vector<2x16xf32>
    %50 = arith.addf %48, %49 : vector<2x16xf32>
    %51 = math.tanh %50 : vector<2x16xf32>
    %52 = arith.mulf %47, %51 : vector<2x16xf32>
    %c0_20 = arith.constant 0 : index
    %c1_21 = arith.constant 1 : index
    %c0_22 = arith.constant 0 : index
    %53 = vector.load %arg18[%c0_20, %c1_21, %c0_22] : memref<2x8x32xf32, #tpu.memory_space<vmem>>, vector<2x1x16xf32>
    %54 = vector.shape_cast %53 : vector<2x1x16xf32> to vector<2x16xf32>
    %55 = vector.shape_cast %52 : vector<2x16xf32> to vector<2x1x16xf32>
    tpu.vector_store %arg18[%c0_20, %c1_21, %c0_22], %55 {strides = array<i32>} : memref<2x8x32xf32, #tpu.memory_space<vmem>>, vector<2x1x16xf32>,
    %c2 = arith.constant 2 : index
    %c0_23 = arith.constant 0 : index
    %c0_24 = arith.constant 0 : index
    %56 = vector.load %arg0[%c2, %c0_23, %c0_24] : memref<8x2x32xf32, #tpu.memory_space<vmem>>, vector<1x2x32xf32>
    %57 = vector.shape_cast %56 : vector<1x2x32xf32> to vector<2x32xf32>
    %c0_25 = arith.constant 0 : index
    %c0_26 = arith.constant 0 : index
    %58 = vector.load %arg16[%c0_25, %c0_26] : memref<16x128xf32, #tpu.memory_space<vmem>>, vector<1x64xf32>
    %59 = tpu.concatenate %57, %52 in 1 : vector<2x32xf32>, vector<2x16xf32> -> vector<2x48xf32>
    %c0_27 = arith.constant 0 : index
    %c0_28 = arith.constant 0 : index
    %60 = vector.load %arg7[%c0_27, %c0_28] : memref<48x64xf32, #tpu.memory_space<vmem>>, vector<48x64xf32>
    %cst_29 = arith.constant dense<0.000000e+00> : vector<2x64xf32>
    %61 = tpu.matmul %59, %60, %cst_29 {dimension_numbers = #tpu.dot_dimension_numbers<[1], [0], [0], [1], [0, 0, 1, 1], [], []>} : vector<2x48xf32>, vector<48x64xf32>, vector<2x64xf32> -> vector<2x64xf32>
    %62 = vector.broadcast %58 : vector<1x64xf32> to vector<2x64xf32>
    %63 = arith.addf %61, %62 : vector<2x64xf32>
    %64 = vector.extract_strided_slice %63 {offsets = [0, 0], sizes = [2, 48], strides = [1, 1]} : vector<2x64xf32> to vector<2x48xf32>
    %65 = arith.negf %64 : vector<2x48xf32>
    %66 = math.exp %65 : vector<2x48xf32>
    %cst_30 = arith.constant 1.000000e+00 : f32
    %67 = vector.broadcast %cst_30 : f32 to vector<2x48xf32>
    %68 = arith.addf %67, %66 : vector<2x48xf32>
    %69 = arith.divf %67, %68 : vector<2x48xf32>
    %70 = vector.extract_strided_slice %63 {offsets = [0, 48], sizes = [2, 16], strides = [1, 1]} : vector<2x64xf32> to vector<2x16xf32>
    %71 = math.tanh %70 : vector<2x16xf32>
    %72 = vector.extract_strided_slice %69 {offsets = [0, 0], sizes = [2, 16], strides = [1, 1]} : vector<2x48xf32> to vector<2x16xf32>
    %73 = vector.extract_strided_slice %69 {offsets = [0, 16], sizes = [2, 16], strides = [1, 1]} : vector<2x48xf32> to vector<2x16xf32>
    %74 = vector.extract_strided_slice %69 {offsets = [0, 32], sizes = [2, 16], strides = [1, 1]} : vector<2x48xf32> to vector<2x16xf32>
    %75 = arith.mulf %73, %50 : vector<2x16xf32>
    %76 = arith.mulf %72, %71 : vector<2x16xf32>
    %77 = arith.addf %75, %76 : vector<2x16xf32>
    %78 = math.tanh %77 : vector<2x16xf32>
    %79 = arith.mulf %74, %78 : vector<2x16xf32>
    %c0_31 = arith.constant 0 : index
    %c2_32 = arith.constant 2 : index
    %c0_33 = arith.constant 0 : index
    %80 = vector.load %arg18[%c0_31, %c2_32, %c0_33] : memref<2x8x32xf32, #tpu.memory_space<vmem>>, vector<2x1x16xf32>
    %81 = vector.shape_cast %80 : vector<2x1x16xf32> to vector<2x16xf32>
    %82 = vector.shape_cast %79 : vector<2x16xf32> to vector<2x1x16xf32>
    tpu.vector_store %arg18[%c0_31, %c2_32, %c0_33], %82 {strides = array<i32>} : memref<2x8x32xf32, #tpu.memory_space<vmem>>, vector<2x1x16xf32>,
    %c3 = arith.constant 3 : index
    %c0_34 = arith.constant 0 : index
    %c0_35 = arith.constant 0 : index
    %83 = vector.load %arg0[%c3, %c0_34, %c0_35] : memref<8x2x32xf32, #tpu.memory_space<vmem>>, vector<1x2x32xf32>
    %84 = vector.shape_cast %83 : vector<1x2x32xf32> to vector<2x32xf32>
    %c0_36 = arith.constant 0 : index
    %c0_37 = arith.constant 0 : index
    %85 = vector.load %arg16[%c0_36, %c0_37] : memref<16x128xf32, #tpu.memory_space<vmem>>, vector<1x64xf32>
    %86 = tpu.concatenate %84, %79 in 1 : vector<2x32xf32>, vector<2x16xf32> -> vector<2x48xf32>
    %c0_38 = arith.constant 0 : index
    %c0_39 = arith.constant 0 : index
    %87 = vector.load %arg7[%c0_38, %c0_39] : memref<48x64xf32, #tpu.memory_space<vmem>>, vector<48x64xf32>
    %cst_40 = arith.constant dense<0.000000e+00> : vector<2x64xf32>
    %88 = tpu.matmul %86, %87, %cst_40 {dimension_numbers = #tpu.dot_dimension_numbers<[1], [0], [0], [1], [0, 0, 1, 1], [], []>} : vector<2x48xf32>, vector<48x64xf32>, vector<2x64xf32> -> vector<2x64xf32>
    %89 = vector.broadcast %85 : vector<1x64xf32> to vector<2x64xf32>
    %90 = arith.addf %88, %89 : vector<2x64xf32>
    %91 = vector.extract_strided_slice %90 {offsets = [0, 0], sizes = [2, 48], strides = [1, 1]} : vector<2x64xf32> to vector<2x48xf32>
    %92 = arith.negf %91 : vector<2x48xf32>
    %93 = math.exp %92 : vector<2x48xf32>
    %cst_41 = arith.constant 1.000000e+00 : f32
    %94 = vector.broadcast %cst_41 : f32 to vector<2x48xf32>
    %95 = arith.addf %94, %93 : vector<2x48xf32>
    %96 = arith.divf %94, %95 : vector<2x48xf32>
    %97 = vector.extract_strided_slice %90 {offsets = [0, 48], sizes = [2, 16], strides = [1, 1]} : vector<2x64xf32> to vector<2x16xf32>
    %98 = math.tanh %97 : vector<2x16xf32>
    %99 = vector.extract_strided_slice %96 {offsets = [0, 0], sizes = [2, 16], strides = [1, 1]} : vector<2x48xf32> to vector<2x16xf32>
    %100 = vector.extract_strided_slice %96 {offsets = [0, 16], sizes = [2, 16], strides = [1, 1]} : vector<2x48xf32> to vector<2x16xf32>
    %101 = vector.extract_strided_slice %96 {offsets = [0, 32], sizes = [2, 16], strides = [1, 1]} : vector<2x48xf32> to vector<2x16xf32>
    %102 = arith.mulf %100, %77 : vector<2x16xf32>
    %103 = arith.mulf %99, %98 : vector<2x16xf32>
    %104 = arith.addf %102, %103 : vector<2x16xf32>
    %105 = math.tanh %104 : vector<2x16xf32>
    %106 = arith.mulf %101, %105 : vector<2x16xf32>
    %c0_42 = arith.constant 0 : index
    %c3_43 = arith.constant 3 : index
    %c0_44 = arith.constant 0 : index
    %107 = vector.load %arg18[%c0_42, %c3_43, %c0_44] : memref<2x8x32xf32, #tpu.memory_space<vmem>>, vector<2x1x16xf32>
    %108 = vector.shape_cast %107 : vector<2x1x16xf32> to vector<2x16xf32>
    %109 = vector.shape_cast %106 : vector<2x16xf32> to vector<2x1x16xf32>
    tpu.vector_store %arg18[%c0_42, %c3_43, %c0_44], %109 {strides = array<i32>} : memref<2x8x32xf32, #tpu.memory_space<vmem>>, vector<2x1x16xf32>,
    %c4 = arith.constant 4 : index
    %c0_45 = arith.constant 0 : index
    %c0_46 = arith.constant 0 : index
    %110 = vector.load %arg0[%c4, %c0_45, %c0_46] : memref<8x2x32xf32, #tpu.memory_space<vmem>>, vector<1x2x32xf32>
    %111 = vector.shape_cast %110 : vector<1x2x32xf32> to vector<2x32xf32>
    %c0_47 = arith.constant 0 : index
    %c0_48 = arith.constant 0 : index
    %112 = vector.load %arg16[%c0_47, %c0_48] : memref<16x128xf32, #tpu.memory_space<vmem>>, vector<1x64xf32>
    %113 = tpu.concatenate %111, %106 in 1 : vector<2x32xf32>, vector<2x16xf32> -> vector<2x48xf32>
    %c0_49 = arith.constant 0 : index
    %c0_50 = arith.constant 0 : index
    %114 = vector.load %arg7[%c0_49, %c0_50] : memref<48x64xf32, #tpu.memory_space<vmem>>, vector<48x64xf32>
    %cst_51 = arith.constant dense<0.000000e+00> : vector<2x64xf32>
    %115 = tpu.matmul %113, %114, %cst_51 {dimension_numbers = #tpu.dot_dimension_numbers<[1], [0], [0], [1], [0, 0, 1, 1], [], []>} : vector<2x48xf32>, vector<48x64xf32>, vector<2x64xf32> -> vector<2x64xf32>
    %116 = vector.broadcast %112 : vector<1x64xf32> to vector<2x64xf32>
    %117 = arith.addf %115, %116 : vector<2x64xf32>
    %118 = vector.extract_strided_slice %117 {offsets = [0, 0], sizes = [2, 48], strides = [1, 1]} : vector<2x64xf32> to vector<2x48xf32>
    %119 = arith.negf %118 : vector<2x48xf32>
    %120 = math.exp %119 : vector<2x48xf32>
    %cst_52 = arith.constant 1.000000e+00 : f32
    %121 = vector.broadcast %cst_52 : f32 to vector<2x48xf32>
    %122 = arith.addf %121, %120 : vector<2x48xf32>
    %123 = arith.divf %121, %122 : vector<2x48xf32>
    %124 = vector.extract_strided_slice %117 {offsets = [0, 48], sizes = [2, 16], strides = [1, 1]} : vector<2x64xf32> to vector<2x16xf32>
    %125 = math.tanh %124 : vector<2x16xf32>
    %126 = vector.extract_strided_slice %123 {offsets = [0, 0], sizes = [2, 16], strides = [1, 1]} : vector<2x48xf32> to vector<2x16xf32>
    %127 = vector.extract_strided_slice %123 {offsets = [0, 16], sizes = [2, 16], strides = [1, 1]} : vector<2x48xf32> to vector<2x16xf32>
    %128 = vector.extract_strided_slice %123 {offsets = [0, 32], sizes = [2, 16], strides = [1, 1]} : vector<2x48xf32> to vector<2x16xf32>
    %129 = arith.mulf %127, %104 : vector<2x16xf32>
    %130 = arith.mulf %126, %125 : vector<2x16xf32>
    %131 = arith.addf %129, %130 : vector<2x16xf32>
    %132 = math.tanh %131 : vector<2x16xf32>
    %133 = arith.mulf %128, %132 : vector<2x16xf32>
    %c0_53 = arith.constant 0 : index
    %c4_54 = arith.constant 4 : index
    %c0_55 = arith.constant 0 : index
    %134 = vector.load %arg18[%c0_53, %c4_54, %c0_55] : memref<2x8x32xf32, #tpu.memory_space<vmem>>, vector<2x1x16xf32>
    %135 = vector.shape_cast %134 : vector<2x1x16xf32> to vector<2x16xf32>
    %136 = vector.shape_cast %133 : vector<2x16xf32> to vector<2x1x16xf32>
    tpu.vector_store %arg18[%c0_53, %c4_54, %c0_55], %136 {strides = array<i32>} : memref<2x8x32xf32, #tpu.memory_space<vmem>>, vector<2x1x16xf32>,
    %c5 = arith.constant 5 : index
    %c0_56 = arith.constant 0 : index
    %c0_57 = arith.constant 0 : index
    %137 = vector.load %arg0[%c5, %c0_56, %c0_57] : memref<8x2x32xf32, #tpu.memory_space<vmem>>, vector<1x2x32xf32>
    %138 = vector.shape_cast %137 : vector<1x2x32xf32> to vector<2x32xf32>
    %c0_58 = arith.constant 0 : index
    %c0_59 = arith.constant 0 : index
    %139 = vector.load %arg16[%c0_58, %c0_59] : memref<16x128xf32, #tpu.memory_space<vmem>>, vector<1x64xf32>
    %140 = tpu.concatenate %138, %133 in 1 : vector<2x32xf32>, vector<2x16xf32> -> vector<2x48xf32>
    %c0_60 = arith.constant 0 : index
    %c0_61 = arith.constant 0 : index
    %141 = vector.load %arg7[%c0_60, %c0_61] : memref<48x64xf32, #tpu.memory_space<vmem>>, vector<48x64xf32>
    %cst_62 = arith.constant dense<0.000000e+00> : vector<2x64xf32>
    %142 = tpu.matmul %140, %141, %cst_62 {dimension_numbers = #tpu.dot_dimension_numbers<[1], [0], [0], [1], [0, 0, 1, 1], [], []>} : vector<2x48xf32>, vector<48x64xf32>, vector<2x64xf32> -> vector<2x64xf32>
    %143 = vector.broadcast %139 : vector<1x64xf32> to vector<2x64xf32>
    %144 = arith.addf %142, %143 : vector<2x64xf32>
    %145 = vector.extract_strided_slice %144 {offsets = [0, 0], sizes = [2, 48], strides = [1, 1]} : vector<2x64xf32> to vector<2x48xf32>
    %146 = arith.negf %145 : vector<2x48xf32>
    %147 = math.exp %146 : vector<2x48xf32>
    %cst_63 = arith.constant 1.000000e+00 : f32
    %148 = vector.broadcast %cst_63 : f32 to vector<2x48xf32>
    %149 = arith.addf %148, %147 : vector<2x48xf32>
    %150 = arith.divf %148, %149 : vector<2x48xf32>
    %151 = vector.extract_strided_slice %144 {offsets = [0, 48], sizes = [2, 16], strides = [1, 1]} : vector<2x64xf32> to vector<2x16xf32>
    %152 = math.tanh %151 : vector<2x16xf32>
    %153 = vector.extract_strided_slice %150 {offsets = [0, 0], sizes = [2, 16], strides = [1, 1]} : vector<2x48xf32> to vector<2x16xf32>
    %154 = vector.extract_strided_slice %150 {offsets = [0, 16], sizes = [2, 16], strides = [1, 1]} : vector<2x48xf32> to vector<2x16xf32>
    %155 = vector.extract_strided_slice %150 {offsets = [0, 32], sizes = [2, 16], strides = [1, 1]} : vector<2x48xf32> to vector<2x16xf32>
    %156 = arith.mulf %154, %131 : vector<2x16xf32>
    %157 = arith.mulf %153, %152 : vector<2x16xf32>
    %158 = arith.addf %156, %157 : vector<2x16xf32>
    %159 = math.tanh %158 : vector<2x16xf32>
    %160 = arith.mulf %155, %159 : vector<2x16xf32>
    %c0_64 = arith.constant 0 : index
    %c5_65 = arith.constant 5 : index
    %c0_66 = arith.constant 0 : index
    %161 = vector.load %arg18[%c0_64, %c5_65, %c0_66] : memref<2x8x32xf32, #tpu.memory_space<vmem>>, vector<2x1x16xf32>
    %162 = vector.shape_cast %161 : vector<2x1x16xf32> to vector<2x16xf32>
    %163 = vector.shape_cast %160 : vector<2x16xf32> to vector<2x1x16xf32>
    tpu.vector_store %arg18[%c0_64, %c5_65, %c0_66], %163 {strides = array<i32>} : memref<2x8x32xf32, #tpu.memory_space<vmem>>, vector<2x1x16xf32>,
    %c6 = arith.constant 6 : index
    %c0_67 = arith.constant 0 : index
    %c0_68 = arith.constant 0 : index
    %164 = vector.load %arg0[%c6, %c0_67, %c0_68] : memref<8x2x32xf32, #tpu.memory_space<vmem>>, vector<1x2x32xf32>
    %165 = vector.shape_cast %164 : vector<1x2x32xf32> to vector<2x32xf32>
    %c0_69 = arith.constant 0 : index
    %c0_70 = arith.constant 0 : index
    %166 = vector.load %arg16[%c0_69, %c0_70] : memref<16x128xf32, #tpu.memory_space<vmem>>, vector<1x64xf32>
    %167 = tpu.concatenate %165, %160 in 1 : vector<2x32xf32>, vector<2x16xf32> -> vector<2x48xf32>
    %c0_71 = arith.constant 0 : index
    %c0_72 = arith.constant 0 : index
    %168 = vector.load %arg7[%c0_71, %c0_72] : memref<48x64xf32, #tpu.memory_space<vmem>>, vector<48x64xf32>
    %cst_73 = arith.constant dense<0.000000e+00> : vector<2x64xf32>
    %169 = tpu.matmul %167, %168, %cst_73 {dimension_numbers = #tpu.dot_dimension_numbers<[1], [0], [0], [1], [0, 0, 1, 1], [], []>} : vector<2x48xf32>, vector<48x64xf32>, vector<2x64xf32> -> vector<2x64xf32>
    %170 = vector.broadcast %166 : vector<1x64xf32> to vector<2x64xf32>
    %171 = arith.addf %169, %170 : vector<2x64xf32>
    %172 = vector.extract_strided_slice %171 {offsets = [0, 0], sizes = [2, 48], strides = [1, 1]} : vector<2x64xf32> to vector<2x48xf32>
    %173 = arith.negf %172 : vector<2x48xf32>
    %174 = math.exp %173 : vector<2x48xf32>
    %cst_74 = arith.constant 1.000000e+00 : f32
    %175 = vector.broadcast %cst_74 : f32 to vector<2x48xf32>
    %176 = arith.addf %175, %174 : vector<2x48xf32>
    %177 = arith.divf %175, %176 : vector<2x48xf32>
    %178 = vector.extract_strided_slice %171 {offsets = [0, 48], sizes = [2, 16], strides = [1, 1]} : vector<2x64xf32> to vector<2x16xf32>
    %179 = math.tanh %178 : vector<2x16xf32>
    %180 = vector.extract_strided_slice %177 {offsets = [0, 0], sizes = [2, 16], strides = [1, 1]} : vector<2x48xf32> to vector<2x16xf32>
    %181 = vector.extract_strided_slice %177 {offsets = [0, 16], sizes = [2, 16], strides = [1, 1]} : vector<2x48xf32> to vector<2x16xf32>
    %182 = vector.extract_strided_slice %177 {offsets = [0, 32], sizes = [2, 16], strides = [1, 1]} : vector<2x48xf32> to vector<2x16xf32>
    %183 = arith.mulf %181, %158 : vector<2x16xf32>
    %184 = arith.mulf %180, %179 : vector<2x16xf32>
    %185 = arith.addf %183, %184 : vector<2x16xf32>
    %186 = math.tanh %185 : vector<2x16xf32>
    %187 = arith.mulf %182, %186 : vector<2x16xf32>
    %c0_75 = arith.constant 0 : index
    %c6_76 = arith.constant 6 : index
    %c0_77 = arith.constant 0 : index
    %188 = vector.load %arg18[%c0_75, %c6_76, %c0_77] : memref<2x8x32xf32, #tpu.memory_space<vmem>>, vector<2x1x16xf32>
    %189 = vector.shape_cast %188 : vector<2x1x16xf32> to vector<2x16xf32>
    %190 = vector.shape_cast %187 : vector<2x16xf32> to vector<2x1x16xf32>
    tpu.vector_store %arg18[%c0_75, %c6_76, %c0_77], %190 {strides = array<i32>} : memref<2x8x32xf32, #tpu.memory_space<vmem>>, vector<2x1x16xf32>,
    %c7 = arith.constant 7 : index
    %c0_78 = arith.constant 0 : index
    %c0_79 = arith.constant 0 : index
    %191 = vector.load %arg0[%c7, %c0_78, %c0_79] : memref<8x2x32xf32, #tpu.memory_space<vmem>>, vector<1x2x32xf32>
    %192 = vector.shape_cast %191 : vector<1x2x32xf32> to vector<2x32xf32>
    %c0_80 = arith.constant 0 : index
    %c0_81 = arith.constant 0 : index
    %193 = vector.load %arg16[%c0_80, %c0_81] : memref<16x128xf32, #tpu.memory_space<vmem>>, vector<1x64xf32>
    %194 = tpu.concatenate %192, %187 in 1 : vector<2x32xf32>, vector<2x16xf32> -> vector<2x48xf32>
    %c0_82 = arith.constant 0 : index
    %c0_83 = arith.constant 0 : index
    %195 = vector.load %arg7[%c0_82, %c0_83] : memref<48x64xf32, #tpu.memory_space<vmem>>, vector<48x64xf32>
    %cst_84 = arith.constant dense<0.000000e+00> : vector<2x64xf32>
    %196 = tpu.matmul %194, %195, %cst_84 {dimension_numbers = #tpu.dot_dimension_numbers<[1], [0], [0], [1], [0, 0, 1, 1], [], []>} : vector<2x48xf32>, vector<48x64xf32>, vector<2x64xf32> -> vector<2x64xf32>
    %197 = vector.broadcast %193 : vector<1x64xf32> to vector<2x64xf32>
    %198 = arith.addf %196, %197 : vector<2x64xf32>
    %199 = vector.extract_strided_slice %198 {offsets = [0, 0], sizes = [2, 48], strides = [1, 1]} : vector<2x64xf32> to vector<2x48xf32>
    %200 = arith.negf %199 : vector<2x48xf32>
    %201 = math.exp %200 : vector<2x48xf32>
    %cst_85 = arith.constant 1.000000e+00 : f32
    %202 = vector.broadcast %cst_85 : f32 to vector<2x48xf32>
    %203 = arith.addf %202, %201 : vector<2x48xf32>
    %204 = arith.divf %202, %203 : vector<2x48xf32>
    %205 = vector.extract_strided_slice %198 {offsets = [0, 48], sizes = [2, 16], strides = [1, 1]} : vector<2x64xf32> to vector<2x16xf32>
    %206 = math.tanh %205 : vector<2x16xf32>
    %207 = vector.extract_strided_slice %204 {offsets = [0, 0], sizes = [2, 16], strides = [1, 1]} : vector<2x48xf32> to vector<2x16xf32>
    %208 = vector.extract_strided_slice %204 {offsets = [0, 16], sizes = [2, 16], strides = [1, 1]} : vector<2x48xf32> to vector<2x16xf32>
    %209 = vector.extract_strided_slice %204 {offsets = [0, 32], sizes = [2, 16], strides = [1, 1]} : vector<2x48xf32> to vector<2x16xf32>
    %210 = arith.mulf %208, %185 : vector<2x16xf32>
    %211 = arith.mulf %207, %206 : vector<2x16xf32>
    %212 = arith.addf %210, %211 : vector<2x16xf32>
    %213 = math.tanh %212 : vector<2x16xf32>
    %214 = arith.mulf %209, %213 : vector<2x16xf32>
    %c0_86 = arith.constant 0 : index
    %c7_87 = arith.constant 7 : index
    %c0_88 = arith.constant 0 : index
    %215 = vector.load %arg18[%c0_86, %c7_87, %c0_88] : memref<2x8x32xf32, #tpu.memory_space<vmem>>, vector<2x1x16xf32>
    %216 = vector.shape_cast %215 : vector<2x1x16xf32> to vector<2x16xf32>
    %217 = vector.shape_cast %214 : vector<2x16xf32> to vector<2x1x16xf32>
    tpu.vector_store %arg18[%c0_86, %c7_87, %c0_88], %217 {strides = array<i32>} : memref<2x8x32xf32, #tpu.memory_space<vmem>>, vector<2x1x16xf32>,
    %cst_89 = arith.constant 0.000000e+00 : f32
    %218 = vector.broadcast %cst_89 : f32 to vector<2x16xf32>
    %cst_90 = arith.constant 0.000000e+00 : f32
    %219 = vector.broadcast %cst_90 : f32 to vector<2x16xf32>
    %c7_91 = arith.constant 7 : index
    %c0_92 = arith.constant 0 : index
    %c0_93 = arith.constant 0 : index
    %220 = vector.load %arg0[%c7_91, %c0_92, %c0_93] : memref<8x2x32xf32, #tpu.memory_space<vmem>>, vector<1x2x32xf32>
    %221 = vector.shape_cast %220 : vector<1x2x32xf32> to vector<2x32xf32>
    %c1_94 = arith.constant 1 : index
    %c0_95 = arith.constant 0 : index
    %222 = vector.load %arg16[%c1_94, %c0_95] : memref<16x128xf32, #tpu.memory_space<vmem>>, vector<1x64xf32>
    %223 = tpu.concatenate %221, %218 in 1 : vector<2x32xf32>, vector<2x16xf32> -> vector<2x48xf32>
    %c0_96 = arith.constant 0 : index
    %c0_97 = arith.constant 0 : index
    %224 = vector.load %arg8[%c0_96, %c0_97] : memref<48x64xf32, #tpu.memory_space<vmem>>, vector<48x64xf32>
    %cst_98 = arith.constant dense<0.000000e+00> : vector<2x64xf32>
    %225 = tpu.matmul %223, %224, %cst_98 {dimension_numbers = #tpu.dot_dimension_numbers<[1], [0], [0], [1], [0, 0, 1, 1], [], []>} : vector<2x48xf32>, vector<48x64xf32>, vector<2x64xf32> -> vector<2x64xf32>
    %226 = vector.broadcast %222 : vector<1x64xf32> to vector<2x64xf32>
    %227 = arith.addf %225, %226 : vector<2x64xf32>
    %228 = vector.extract_strided_slice %227 {offsets = [0, 0], sizes = [2, 48], strides = [1, 1]} : vector<2x64xf32> to vector<2x48xf32>
    %229 = arith.negf %228 : vector<2x48xf32>
    %230 = math.exp %229 : vector<2x48xf32>
    %cst_99 = arith.constant 1.000000e+00 : f32
    %231 = vector.broadcast %cst_99 : f32 to vector<2x48xf32>
    %232 = arith.addf %231, %230 : vector<2x48xf32>
    %233 = arith.divf %231, %232 : vector<2x48xf32>
    %234 = vector.extract_strided_slice %227 {offsets = [0, 48], sizes = [2, 16], strides = [1, 1]} : vector<2x64xf32> to vector<2x16xf32>
    %235 = math.tanh %234 : vector<2x16xf32>
    %236 = vector.extract_strided_slice %233 {offsets = [0, 0], sizes = [2, 16], strides = [1, 1]} : vector<2x48xf32> to vector<2x16xf32>
    %237 = vector.extract_strided_slice %233 {offsets = [0, 16], sizes = [2, 16], strides = [1, 1]} : vector<2x48xf32> to vector<2x16xf32>
    %238 = vector.extract_strided_slice %233 {offsets = [0, 32], sizes = [2, 16], strides = [1, 1]} : vector<2x48xf32> to vector<2x16xf32>
    %239 = arith.mulf %237, %219 : vector<2x16xf32>
    %240 = arith.mulf %236, %235 : vector<2x16xf32>
    %241 = arith.addf %239, %240 : vector<2x16xf32>
    %242 = math.tanh %241 : vector<2x16xf32>
    %243 = arith.mulf %238, %242 : vector<2x16xf32>
    %c0_100 = arith.constant 0 : index
    %c7_101 = arith.constant 7 : index
    %c16 = arith.constant 16 : index
    %244 = vector.load %arg18[%c0_100, %c7_101, %c16] : memref<2x8x32xf32, #tpu.memory_space<vmem>>, vector<2x1x16xf32>
    %245 = vector.shape_cast %244 : vector<2x1x16xf32> to vector<2x16xf32>
    %246 = vector.shape_cast %243 : vector<2x16xf32> to vector<2x1x16xf32>
    tpu.vector_store %arg18[%c0_100, %c7_101, %c16], %246 {strides = array<i32>} : memref<2x8x32xf32, #tpu.memory_space<vmem>>, vector<2x1x16xf32>,
    %c6_102 = arith.constant 6 : index
    %c0_103 = arith.constant 0 : index
    %c0_104 = arith.constant 0 : index
    %247 = vector.load %arg0[%c6_102, %c0_103, %c0_104] : memref<8x2x32xf32, #tpu.memory_space<vmem>>, vector<1x2x32xf32>
    %248 = vector.shape_cast %247 : vector<1x2x32xf32> to vector<2x32xf32>
    %c1_105 = arith.constant 1 : index
    %c0_106 = arith.constant 0 : index
    %249 = vector.load %arg16[%c1_105, %c0_106] : memref<16x128xf32, #tpu.memory_space<vmem>>, vector<1x64xf32>
    %250 = tpu.concatenate %248, %243 in 1 : vector<2x32xf32>, vector<2x16xf32> -> vector<2x48xf32>
    %c0_107 = arith.constant 0 : index
    %c0_108 = arith.constant 0 : index
    %251 = vector.load %arg8[%c0_107, %c0_108] : memref<48x64xf32, #tpu.memory_space<vmem>>, vector<48x64xf32>
    %cst_109 = arith.constant dense<0.000000e+00> : vector<2x64xf32>
    %252 = tpu.matmul %250, %251, %cst_109 {dimension_numbers = #tpu.dot_dimension_numbers<[1], [0], [0], [1], [0, 0, 1, 1], [], []>} : vector<2x48xf32>, vector<48x64xf32>, vector<2x64xf32> -> vector<2x64xf32>
    %253 = vector.broadcast %249 : vector<1x64xf32> to vector<2x64xf32>
    %254 = arith.addf %252, %253 : vector<2x64xf32>
    %255 = vector.extract_strided_slice %254 {offsets = [0, 0], sizes = [2, 48], strides = [1, 1]} : vector<2x64xf32> to vector<2x48xf32>
    %256 = arith.negf %255 : vector<2x48xf32>
    %257 = math.exp %256 : vector<2x48xf32>
    %cst_110 = arith.constant 1.000000e+00 : f32
    %258 = vector.broadcast %cst_110 : f32 to vector<2x48xf32>
    %259 = arith.addf %258, %257 : vector<2x48xf32>
    %260 = arith.divf %258, %259 : vector<2x48xf32>
    %261 = vector.extract_strided_slice %254 {offsets = [0, 48], sizes = [2, 16], strides = [1, 1]} : vector<2x64xf32> to vector<2x16xf32>
    %262 = math.tanh %261 : vector<2x16xf32>
    %263 = vector.extract_strided_slice %260 {offsets = [0, 0], sizes = [2, 16], strides = [1, 1]} : vector<2x48xf32> to vector<2x16xf32>
    %264 = vector.extract_strided_slice %260 {offsets = [0, 16], sizes = [2, 16], strides = [1, 1]} : vector<2x48xf32> to vector<2x16xf32>
    %265 = vector.extract_strided_slice %260 {offsets = [0, 32], sizes = [2, 16], strides = [1, 1]} : vector<2x48xf32> to vector<2x16xf32>
    %266 = arith.mulf %264, %241 : vector<2x16xf32>
    %267 = arith.mulf %263, %262 : vector<2x16xf32>
    %268 = arith.addf %266, %267 : vector<2x16xf32>
    %269 = math.tanh %268 : vector<2x16xf32>
    %270 = arith.mulf %265, %269 : vector<2x16xf32>
    %c0_111 = arith.constant 0 : index
    %c6_112 = arith.constant 6 : index
    %c16_113 = arith.constant 16 : index
    %271 = vector.load %arg18[%c0_111, %c6_112, %c16_113] : memref<2x8x32xf32, #tpu.memory_space<vmem>>, vector<2x1x16xf32>
    %272 = vector.shape_cast %271 : vector<2x1x16xf32> to vector<2x16xf32>
    %273 = vector.shape_cast %270 : vector<2x16xf32> to vector<2x1x16xf32>
    tpu.vector_store %arg18[%c0_111, %c6_112, %c16_113], %273 {strides = array<i32>} : memref<2x8x32xf32, #tpu.memory_space<vmem>>, vector<2x1x16xf32>,
    %c5_114 = arith.constant 5 : index
    %c0_115 = arith.constant 0 : index
    %c0_116 = arith.constant 0 : index
    %274 = vector.load %arg0[%c5_114, %c0_115, %c0_116] : memref<8x2x32xf32, #tpu.memory_space<vmem>>, vector<1x2x32xf32>
    %275 = vector.shape_cast %274 : vector<1x2x32xf32> to vector<2x32xf32>
    %c1_117 = arith.constant 1 : index
    %c0_118 = arith.constant 0 : index
    %276 = vector.load %arg16[%c1_117, %c0_118] : memref<16x128xf32, #tpu.memory_space<vmem>>, vector<1x64xf32>
    %277 = tpu.concatenate %275, %270 in 1 : vector<2x32xf32>, vector<2x16xf32> -> vector<2x48xf32>
    %c0_119 = arith.constant 0 : index
    %c0_120 = arith.constant 0 : index
    %278 = vector.load %arg8[%c0_119, %c0_120] : memref<48x64xf32, #tpu.memory_space<vmem>>, vector<48x64xf32>
    %cst_121 = arith.constant dense<0.000000e+00> : vector<2x64xf32>
    %279 = tpu.matmul %277, %278, %cst_121 {dimension_numbers = #tpu.dot_dimension_numbers<[1], [0], [0], [1], [0, 0, 1, 1], [], []>} : vector<2x48xf32>, vector<48x64xf32>, vector<2x64xf32> -> vector<2x64xf32>
    %280 = vector.broadcast %276 : vector<1x64xf32> to vector<2x64xf32>
    %281 = arith.addf %279, %280 : vector<2x64xf32>
    %282 = vector.extract_strided_slice %281 {offsets = [0, 0], sizes = [2, 48], strides = [1, 1]} : vector<2x64xf32> to vector<2x48xf32>
    %283 = arith.negf %282 : vector<2x48xf32>
    %284 = math.exp %283 : vector<2x48xf32>
    %cst_122 = arith.constant 1.000000e+00 : f32
    %285 = vector.broadcast %cst_122 : f32 to vector<2x48xf32>
    %286 = arith.addf %285, %284 : vector<2x48xf32>
    %287 = arith.divf %285, %286 : vector<2x48xf32>
    %288 = vector.extract_strided_slice %281 {offsets = [0, 48], sizes = [2, 16], strides = [1, 1]} : vector<2x64xf32> to vector<2x16xf32>
    %289 = math.tanh %288 : vector<2x16xf32>
    %290 = vector.extract_strided_slice %287 {offsets = [0, 0], sizes = [2, 16], strides = [1, 1]} : vector<2x48xf32> to vector<2x16xf32>
    %291 = vector.extract_strided_slice %287 {offsets = [0, 16], sizes = [2, 16], strides = [1, 1]} : vector<2x48xf32> to vector<2x16xf32>
    %292 = vector.extract_strided_slice %287 {offsets = [0, 32], sizes = [2, 16], strides = [1, 1]} : vector<2x48xf32> to vector<2x16xf32>
    %293 = arith.mulf %291, %268 : vector<2x16xf32>
    %294 = arith.mulf %290, %289 : vector<2x16xf32>
    %295 = arith.addf %293, %294 : vector<2x16xf32>
    %296 = math.tanh %295 : vector<2x16xf32>
    %297 = arith.mulf %292, %296 : vector<2x16xf32>
    %c0_123 = arith.constant 0 : index
    %c5_124 = arith.constant 5 : index
    %c16_125 = arith.constant 16 : index
    %298 = vector.load %arg18[%c0_123, %c5_124, %c16_125] : memref<2x8x32xf32, #tpu.memory_space<vmem>>, vector<2x1x16xf32>
    %299 = vector.shape_cast %298 : vector<2x1x16xf32> to vector<2x16xf32>
    %300 = vector.shape_cast %297 : vector<2x16xf32> to vector<2x1x16xf32>
    tpu.vector_store %arg18[%c0_123, %c5_124, %c16_125], %300 {strides = array<i32>} : memref<2x8x32xf32, #tpu.memory_space<vmem>>, vector<2x1x16xf32>,
    %c4_126 = arith.constant 4 : index
    %c0_127 = arith.constant 0 : index
    %c0_128 = arith.constant 0 : index
    %301 = vector.load %arg0[%c4_126, %c0_127, %c0_128] : memref<8x2x32xf32, #tpu.memory_space<vmem>>, vector<1x2x32xf32>
    %302 = vector.shape_cast %301 : vector<1x2x32xf32> to vector<2x32xf32>
    %c1_129 = arith.constant 1 : index
    %c0_130 = arith.constant 0 : index
    %303 = vector.load %arg16[%c1_129, %c0_130] : memref<16x128xf32, #tpu.memory_space<vmem>>, vector<1x64xf32>
    %304 = tpu.concatenate %302, %297 in 1 : vector<2x32xf32>, vector<2x16xf32> -> vector<2x48xf32>
    %c0_131 = arith.constant 0 : index
    %c0_132 = arith.constant 0 : index
    %305 = vector.load %arg8[%c0_131, %c0_132] : memref<48x64xf32, #tpu.memory_space<vmem>>, vector<48x64xf32>
    %cst_133 = arith.constant dense<0.000000e+00> : vector<2x64xf32>
    %306 = tpu.matmul %304, %305, %cst_133 {dimension_numbers = #tpu.dot_dimension_numbers<[1], [0], [0], [1], [0, 0, 1, 1], [], []>} : vector<2x48xf32>, vector<48x64xf32>, vector<2x64xf32> -> vector<2x64xf32>
    %307 = vector.broadcast %303 : vector<1x64xf32> to vector<2x64xf32>
    %308 = arith.addf %306, %307 : vector<2x64xf32>
    %309 = vector.extract_strided_slice %308 {offsets = [0, 0], sizes = [2, 48], strides = [1, 1]} : vector<2x64xf32> to vector<2x48xf32>
    %310 = arith.negf %309 : vector<2x48xf32>
    %311 = math.exp %310 : vector<2x48xf32>
    %cst_134 = arith.constant 1.000000e+00 : f32
    %312 = vector.broadcast %cst_134 : f32 to vector<2x48xf32>
    %313 = arith.addf %312, %311 : vector<2x48xf32>
    %314 = arith.divf %312, %313 : vector<2x48xf32>
    %315 = vector.extract_strided_slice %308 {offsets = [0, 48], sizes = [2, 16], strides = [1, 1]} : vector<2x64xf32> to vector<2x16xf32>
    %316 = math.tanh %315 : vector<2x16xf32>
    %317 = vector.extract_strided_slice %314 {offsets = [0, 0], sizes = [2, 16], strides = [1, 1]} : vector<2x48xf32> to vector<2x16xf32>
    %318 = vector.extract_strided_slice %314 {offsets = [0, 16], sizes = [2, 16], strides = [1, 1]} : vector<2x48xf32> to vector<2x16xf32>
    %319 = vector.extract_strided_slice %314 {offsets = [0, 32], sizes = [2, 16], strides = [1, 1]} : vector<2x48xf32> to vector<2x16xf32>
    %320 = arith.mulf %318, %295 : vector<2x16xf32>
    %321 = arith.mulf %317, %316 : vector<2x16xf32>
    %322 = arith.addf %320, %321 : vector<2x16xf32>
    %323 = math.tanh %322 : vector<2x16xf32>
    %324 = arith.mulf %319, %323 : vector<2x16xf32>
    %c0_135 = arith.constant 0 : index
    %c4_136 = arith.constant 4 : index
    %c16_137 = arith.constant 16 : index
    %325 = vector.load %arg18[%c0_135, %c4_136, %c16_137] : memref<2x8x32xf32, #tpu.memory_space<vmem>>, vector<2x1x16xf32>
    %326 = vector.shape_cast %325 : vector<2x1x16xf32> to vector<2x16xf32>
    %327 = vector.shape_cast %324 : vector<2x16xf32> to vector<2x1x16xf32>
    tpu.vector_store %arg18[%c0_135, %c4_136, %c16_137], %327 {strides = array<i32>} : memref<2x8x32xf32, #tpu.memory_space<vmem>>, vector<2x1x16xf32>,
    %c3_138 = arith.constant 3 : index
    %c0_139 = arith.constant 0 : index
    %c0_140 = arith.constant 0 : index
    %328 = vector.load %arg0[%c3_138, %c0_139, %c0_140] : memref<8x2x32xf32, #tpu.memory_space<vmem>>, vector<1x2x32xf32>
    %329 = vector.shape_cast %328 : vector<1x2x32xf32> to vector<2x32xf32>
    %c1_141 = arith.constant 1 : index
    %c0_142 = arith.constant 0 : index
    %330 = vector.load %arg16[%c1_141, %c0_142] : memref<16x128xf32, #tpu.memory_space<vmem>>, vector<1x64xf32>
    %331 = tpu.concatenate %329, %324 in 1 : vector<2x32xf32>, vector<2x16xf32> -> vector<2x48xf32>
    %c0_143 = arith.constant 0 : index
    %c0_144 = arith.constant 0 : index
    %332 = vector.load %arg8[%c0_143, %c0_144] : memref<48x64xf32, #tpu.memory_space<vmem>>, vector<48x64xf32>
    %cst_145 = arith.constant dense<0.000000e+00> : vector<2x64xf32>
    %333 = tpu.matmul %331, %332, %cst_145 {dimension_numbers = #tpu.dot_dimension_numbers<[1], [0], [0], [1], [0, 0, 1, 1], [], []>} : vector<2x48xf32>, vector<48x64xf32>, vector<2x64xf32> -> vector<2x64xf32>
    %334 = vector.broadcast %330 : vector<1x64xf32> to vector<2x64xf32>
    %335 = arith.addf %333, %334 : vector<2x64xf32>
    %336 = vector.extract_strided_slice %335 {offsets = [0, 0], sizes = [2, 48], strides = [1, 1]} : vector<2x64xf32> to vector<2x48xf32>
    %337 = arith.negf %336 : vector<2x48xf32>
    %338 = math.exp %337 : vector<2x48xf32>
    %cst_146 = arith.constant 1.000000e+00 : f32
    %339 = vector.broadcast %cst_146 : f32 to vector<2x48xf32>
    %340 = arith.addf %339, %338 : vector<2x48xf32>
    %341 = arith.divf %339, %340 : vector<2x48xf32>
    %342 = vector.extract_strided_slice %335 {offsets = [0, 48], sizes = [2, 16], strides = [1, 1]} : vector<2x64xf32> to vector<2x16xf32>
    %343 = math.tanh %342 : vector<2x16xf32>
    %344 = vector.extract_strided_slice %341 {offsets = [0, 0], sizes = [2, 16], strides = [1, 1]} : vector<2x48xf32> to vector<2x16xf32>
    %345 = vector.extract_strided_slice %341 {offsets = [0, 16], sizes = [2, 16], strides = [1, 1]} : vector<2x48xf32> to vector<2x16xf32>
    %346 = vector.extract_strided_slice %341 {offsets = [0, 32], sizes = [2, 16], strides = [1, 1]} : vector<2x48xf32> to vector<2x16xf32>
    %347 = arith.mulf %345, %322 : vector<2x16xf32>
    %348 = arith.mulf %344, %343 : vector<2x16xf32>
    %349 = arith.addf %347, %348 : vector<2x16xf32>
    %350 = math.tanh %349 : vector<2x16xf32>
    %351 = arith.mulf %346, %350 : vector<2x16xf32>
    %c0_147 = arith.constant 0 : index
    %c3_148 = arith.constant 3 : index
    %c16_149 = arith.constant 16 : index
    %352 = vector.load %arg18[%c0_147, %c3_148, %c16_149] : memref<2x8x32xf32, #tpu.memory_space<vmem>>, vector<2x1x16xf32>
    %353 = vector.shape_cast %352 : vector<2x1x16xf32> to vector<2x16xf32>
    %354 = vector.shape_cast %351 : vector<2x16xf32> to vector<2x1x16xf32>
    tpu.vector_store %arg18[%c0_147, %c3_148, %c16_149], %354 {strides = array<i32>} : memref<2x8x32xf32, #tpu.memory_space<vmem>>, vector<2x1x16xf32>,
    %c2_150 = arith.constant 2 : index
    %c0_151 = arith.constant 0 : index
    %c0_152 = arith.constant 0 : index
    %355 = vector.load %arg0[%c2_150, %c0_151, %c0_152] : memref<8x2x32xf32, #tpu.memory_space<vmem>>, vector<1x2x32xf32>
    %356 = vector.shape_cast %355 : vector<1x2x32xf32> to vector<2x32xf32>
    %c1_153 = arith.constant 1 : index
    %c0_154 = arith.constant 0 : index
    %357 = vector.load %arg16[%c1_153, %c0_154] : memref<16x128xf32, #tpu.memory_space<vmem>>, vector<1x64xf32>
    %358 = tpu.concatenate %356, %351 in 1 : vector<2x32xf32>, vector<2x16xf32> -> vector<2x48xf32>
    %c0_155 = arith.constant 0 : index
    %c0_156 = arith.constant 0 : index
    %359 = vector.load %arg8[%c0_155, %c0_156] : memref<48x64xf32, #tpu.memory_space<vmem>>, vector<48x64xf32>
    %cst_157 = arith.constant dense<0.000000e+00> : vector<2x64xf32>
    %360 = tpu.matmul %358, %359, %cst_157 {dimension_numbers = #tpu.dot_dimension_numbers<[1], [0], [0], [1], [0, 0, 1, 1], [], []>} : vector<2x48xf32>, vector<48x64xf32>, vector<2x64xf32> -> vector<2x64xf32>
    %361 = vector.broadcast %357 : vector<1x64xf32> to vector<2x64xf32>
    %362 = arith.addf %360, %361 : vector<2x64xf32>
    %363 = vector.extract_strided_slice %362 {offsets = [0, 0], sizes = [2, 48], strides = [1, 1]} : vector<2x64xf32> to vector<2x48xf32>
    %364 = arith.negf %363 : vector<2x48xf32>
    %365 = math.exp %364 : vector<2x48xf32>
    %cst_158 = arith.constant 1.000000e+00 : f32
    %366 = vector.broadcast %cst_158 : f32 to vector<2x48xf32>
    %367 = arith.addf %366, %365 : vector<2x48xf32>
    %368 = arith.divf %366, %367 : vector<2x48xf32>
    %369 = vector.extract_strided_slice %362 {offsets = [0, 48], sizes = [2, 16], strides = [1, 1]} : vector<2x64xf32> to vector<2x16xf32>
    %370 = math.tanh %369 : vector<2x16xf32>
    %371 = vector.extract_strided_slice %368 {offsets = [0, 0], sizes = [2, 16], strides = [1, 1]} : vector<2x48xf32> to vector<2x16xf32>
    %372 = vector.extract_strided_slice %368 {offsets = [0, 16], sizes = [2, 16], strides = [1, 1]} : vector<2x48xf32> to vector<2x16xf32>
    %373 = vector.extract_strided_slice %368 {offsets = [0, 32], sizes = [2, 16], strides = [1, 1]} : vector<2x48xf32> to vector<2x16xf32>
    %374 = arith.mulf %372, %349 : vector<2x16xf32>
    %375 = arith.mulf %371, %370 : vector<2x16xf32>
    %376 = arith.addf %374, %375 : vector<2x16xf32>
    %377 = math.tanh %376 : vector<2x16xf32>
    %378 = arith.mulf %373, %377 : vector<2x16xf32>
    %c0_159 = arith.constant 0 : index
    %c2_160 = arith.constant 2 : index
    %c16_161 = arith.constant 16 : index
    %379 = vector.load %arg18[%c0_159, %c2_160, %c16_161] : memref<2x8x32xf32, #tpu.memory_space<vmem>>, vector<2x1x16xf32>
    %380 = vector.shape_cast %379 : vector<2x1x16xf32> to vector<2x16xf32>
    %381 = vector.shape_cast %378 : vector<2x16xf32> to vector<2x1x16xf32>
    tpu.vector_store %arg18[%c0_159, %c2_160, %c16_161], %381 {strides = array<i32>} : memref<2x8x32xf32, #tpu.memory_space<vmem>>, vector<2x1x16xf32>,
    %c1_162 = arith.constant 1 : index
    %c0_163 = arith.constant 0 : index
    %c0_164 = arith.constant 0 : index
    %382 = vector.load %arg0[%c1_162, %c0_163, %c0_164] : memref<8x2x32xf32, #tpu.memory_space<vmem>>, vector<1x2x32xf32>
    %383 = vector.shape_cast %382 : vector<1x2x32xf32> to vector<2x32xf32>
    %c1_165 = arith.constant 1 : index
    %c0_166 = arith.constant 0 : index
    %384 = vector.load %arg16[%c1_165, %c0_166] : memref<16x128xf32, #tpu.memory_space<vmem>>, vector<1x64xf32>
    %385 = tpu.concatenate %383, %378 in 1 : vector<2x32xf32>, vector<2x16xf32> -> vector<2x48xf32>
    %c0_167 = arith.constant 0 : index
    %c0_168 = arith.constant 0 : index
    %386 = vector.load %arg8[%c0_167, %c0_168] : memref<48x64xf32, #tpu.memory_space<vmem>>, vector<48x64xf32>
    %cst_169 = arith.constant dense<0.000000e+00> : vector<2x64xf32>
    %387 = tpu.matmul %385, %386, %cst_169 {dimension_numbers = #tpu.dot_dimension_numbers<[1], [0], [0], [1], [0, 0, 1, 1], [], []>} : vector<2x48xf32>, vector<48x64xf32>, vector<2x64xf32> -> vector<2x64xf32>
    %388 = vector.broadcast %384 : vector<1x64xf32> to vector<2x64xf32>
    %389 = arith.addf %387, %388 : vector<2x64xf32>
    %390 = vector.extract_strided_slice %389 {offsets = [0, 0], sizes = [2, 48], strides = [1, 1]} : vector<2x64xf32> to vector<2x48xf32>
    %391 = arith.negf %390 : vector<2x48xf32>
    %392 = math.exp %391 : vector<2x48xf32>
    %cst_170 = arith.constant 1.000000e+00 : f32
    %393 = vector.broadcast %cst_170 : f32 to vector<2x48xf32>
    %394 = arith.addf %393, %392 : vector<2x48xf32>
    %395 = arith.divf %393, %394 : vector<2x48xf32>
    %396 = vector.extract_strided_slice %389 {offsets = [0, 48], sizes = [2, 16], strides = [1, 1]} : vector<2x64xf32> to vector<2x16xf32>
    %397 = math.tanh %396 : vector<2x16xf32>
    %398 = vector.extract_strided_slice %395 {offsets = [0, 0], sizes = [2, 16], strides = [1, 1]} : vector<2x48xf32> to vector<2x16xf32>
    %399 = vector.extract_strided_slice %395 {offsets = [0, 16], sizes = [2, 16], strides = [1, 1]} : vector<2x48xf32> to vector<2x16xf32>
    %400 = vector.extract_strided_slice %395 {offsets = [0, 32], sizes = [2, 16], strides = [1, 1]} : vector<2x48xf32> to vector<2x16xf32>
    %401 = arith.mulf %399, %376 : vector<2x16xf32>
    %402 = arith.mulf %398, %397 : vector<2x16xf32>
    %403 = arith.addf %401, %402 : vector<2x16xf32>
    %404 = math.tanh %403 : vector<2x16xf32>
    %405 = arith.mulf %400, %404 : vector<2x16xf32>
    %c0_171 = arith.constant 0 : index
    %c1_172 = arith.constant 1 : index
    %c16_173 = arith.constant 16 : index
    %406 = vector.load %arg18[%c0_171, %c1_172, %c16_173] : memref<2x8x32xf32, #tpu.memory_space<vmem>>, vector<2x1x16xf32>
    %407 = vector.shape_cast %406 : vector<2x1x16xf32> to vector<2x16xf32>
    %408 = vector.shape_cast %405 : vector<2x16xf32> to vector<2x1x16xf32>
    tpu.vector_store %arg18[%c0_171, %c1_172, %c16_173], %408 {strides = array<i32>} : memref<2x8x32xf32, #tpu.memory_space<vmem>>, vector<2x1x16xf32>,
    %c0_174 = arith.constant 0 : index
    %c0_175 = arith.constant 0 : index
    %c0_176 = arith.constant 0 : index
    %409 = vector.load %arg0[%c0_174, %c0_175, %c0_176] : memref<8x2x32xf32, #tpu.memory_space<vmem>>, vector<1x2x32xf32>
    %410 = vector.shape_cast %409 : vector<1x2x32xf32> to vector<2x32xf32>
    %c1_177 = arith.constant 1 : index
    %c0_178 = arith.constant 0 : index
    %411 = vector.load %arg16[%c1_177, %c0_178] : memref<16x128xf32, #tpu.memory_space<vmem>>, vector<1x64xf32>
    %412 = tpu.concatenate %410, %405 in 1 : vector<2x32xf32>, vector<2x16xf32> -> vector<2x48xf32>
    %c0_179 = arith.constant 0 : index
    %c0_180 = arith.constant 0 : index
    %413 = vector.load %arg8[%c0_179, %c0_180] : memref<48x64xf32, #tpu.memory_space<vmem>>, vector<48x64xf32>
    %cst_181 = arith.constant dense<0.000000e+00> : vector<2x64xf32>
    %414 = tpu.matmul %412, %413, %cst_181 {dimension_numbers = #tpu.dot_dimension_numbers<[1], [0], [0], [1], [0, 0, 1, 1], [], []>} : vector<2x48xf32>, vector<48x64xf32>, vector<2x64xf32> -> vector<2x64xf32>
    %415 = vector.broadcast %411 : vector<1x64xf32> to vector<2x64xf32>
    %416 = arith.addf %414, %415 : vector<2x64xf32>
    %417 = vector.extract_strided_slice %416 {offsets = [0, 0], sizes = [2, 48], strides = [1, 1]} : vector<2x64xf32> to vector<2x48xf32>
    %418 = arith.negf %417 : vector<2x48xf32>
    %419 = math.exp %418 : vector<2x48xf32>
    %cst_182 = arith.constant 1.000000e+00 : f32
    %420 = vector.broadcast %cst_182 : f32 to vector<2x48xf32>
    %421 = arith.addf %420, %419 : vector<2x48xf32>
    %422 = arith.divf %420, %421 : vector<2x48xf32>
    %423 = vector.extract_strided_slice %416 {offsets = [0, 48], sizes = [2, 16], strides = [1, 1]} : vector<2x64xf32> to vector<2x16xf32>
    %424 = math.tanh %423 : vector<2x16xf32>
    %425 = vector.extract_strided_slice %422 {offsets = [0, 0], sizes = [2, 16], strides = [1, 1]} : vector<2x48xf32> to vector<2x16xf32>
    %426 = vector.extract_strided_slice %422 {offsets = [0, 16], sizes = [2, 16], strides = [1, 1]} : vector<2x48xf32> to vector<2x16xf32>
    %427 = vector.extract_strided_slice %422 {offsets = [0, 32], sizes = [2, 16], strides = [1, 1]} : vector<2x48xf32> to vector<2x16xf32>
    %428 = arith.mulf %426, %403 : vector<2x16xf32>
    %429 = arith.mulf %425, %424 : vector<2x16xf32>
    %430 = arith.addf %428, %429 : vector<2x16xf32>
    %431 = math.tanh %430 : vector<2x16xf32>
    %432 = arith.mulf %427, %431 : vector<2x16xf32>
    %c0_183 = arith.constant 0 : index
    %c0_184 = arith.constant 0 : index
    %c16_185 = arith.constant 16 : index
    %433 = vector.load %arg18[%c0_183, %c0_184, %c16_185] : memref<2x8x32xf32, #tpu.memory_space<vmem>>, vector<2x1x16xf32>
    %434 = vector.shape_cast %433 : vector<2x1x16xf32> to vector<2x16xf32>
    %435 = vector.shape_cast %432 : vector<2x16xf32> to vector<2x1x16xf32>
    tpu.vector_store %arg18[%c0_183, %c0_184, %c16_185], %435 {strides = array<i32>} : memref<2x8x32xf32, #tpu.memory_space<vmem>>, vector<2x1x16xf32>,
    %c0_186 = arith.constant 0 : index
    %c0_187 = arith.constant 0 : index
    %c0_188 = arith.constant 0 : index
    %436 = vector.load %arg18[%c0_186, %c0_187, %c0_188] : memref<2x8x32xf32, #tpu.memory_space<vmem>>, vector<2x8x32xf32>
    %437 = vector.shape_cast %436 : vector<2x8x32xf32> to vector<16x32xf32>
    %c0_189 = arith.constant 0 : index
    %c0_190 = arith.constant 0 : index
    %438 = vector.load %arg9[%c0_189, %c0_190] : memref<32x32xf32, #tpu.memory_space<vmem>>, vector<32x32xf32>
    %cst_191 = arith.constant dense<0.000000e+00> : vector<16x32xf32>
    %439 = tpu.matmul %437, %438, %cst_191 {dimension_numbers = #tpu.dot_dimension_numbers<[1], [0], [0], [1], [0, 0, 1, 1], [], []>} : vector<16x32xf32>, vector<32x32xf32>, vector<16x32xf32> -> vector<16x32xf32>
    %c2_192 = arith.constant 2 : index
    %c0_193 = arith.constant 0 : index
    %440 = vector.load %arg16[%c2_192, %c0_193] : memref<16x128xf32, #tpu.memory_space<vmem>>, vector<1x32xf32>
    %441 = vector.broadcast %440 : vector<1x32xf32> to vector<16x32xf32>
    %442 = arith.addf %439, %441 : vector<16x32xf32>
    %cst_194 = arith.constant dense<0.000000e+00> : vector<16xf32>
    %443 = vector.multi_reduction <add>, %442, %cst_194 [1] : vector<16x32xf32> to vector<16xf32>
    %444 = vector.shape_cast %443 : vector<16xf32> to vector<16x1xf32>
    %cst_195 = arith.constant 3.200000e+01 : f32
    %445 = vector.broadcast %cst_195 : f32 to vector<16x1xf32>
    %446 = arith.divf %444, %445 : vector<16x1xf32>
    %447 = vector.broadcast %446 : vector<16x1xf32> to vector<16x32xf32>
    %448 = arith.subf %442, %447 : vector<16x32xf32>
    %449 = arith.mulf %448, %448 : vector<16x32xf32>
    %cst_196 = arith.constant dense<0.000000e+00> : vector<16xf32>
    %450 = vector.multi_reduction <add>, %449, %cst_196 [1] : vector<16x32xf32> to vector<16xf32>
    %451 = vector.shape_cast %450 : vector<16xf32> to vector<16x1xf32>
    %cst_197 = arith.constant 3.200000e+01 : f32
    %452 = vector.broadcast %cst_197 : f32 to vector<16x1xf32>
    %453 = arith.divf %451, %452 : vector<16x1xf32>
    %454 = vector.broadcast %446 : vector<16x1xf32> to vector<16x32xf32>
    %455 = arith.subf %442, %454 : vector<16x32xf32>
    %cst_198 = arith.constant 9.99999974E-6 : f32
    %456 = vector.broadcast %cst_198 : f32 to vector<16x1xf32>
    %457 = arith.addf %453, %456 : vector<16x1xf32>
    %458 = math.rsqrt %457 : vector<16x1xf32>
    %459 = vector.broadcast %458 : vector<16x1xf32> to vector<16x32xf32>
    %460 = arith.mulf %455, %459 : vector<16x32xf32>
    %c3_199 = arith.constant 3 : index
    %c0_200 = arith.constant 0 : index
    %461 = vector.load %arg16[%c3_199, %c0_200] : memref<16x128xf32, #tpu.memory_space<vmem>>, vector<1x32xf32>
    %462 = vector.broadcast %461 : vector<1x32xf32> to vector<16x32xf32>
    %463 = arith.mulf %460, %462 : vector<16x32xf32>
    %c4_201 = arith.constant 4 : index
    %c0_202 = arith.constant 0 : index
    %464 = vector.load %arg16[%c4_201, %c0_202] : memref<16x128xf32, #tpu.memory_space<vmem>>, vector<1x32xf32>
    %465 = vector.broadcast %464 : vector<1x32xf32> to vector<16x32xf32>
    %466 = arith.addf %463, %465 : vector<16x32xf32>
    %467 = vector.shape_cast %466 : vector<16x32xf32> to vector<2x8x32xf32>
    %cst_203 = arith.constant 0.000000e+00 : f32
    %468 = vector.broadcast %cst_203 : f32 to vector<2x32xf32>
    %cst_204 = arith.constant 0.000000e+00 : f32
    %469 = vector.broadcast %cst_204 : f32 to vector<2x8xf32>
    %cst_205 = arith.constant 0.000000e+00 : f32
    %470 = vector.broadcast %cst_205 : f32 to vector<2x1xf32>
    %c0_206 = arith.constant 0 : index
    %c0_207 = arith.constant 0 : index
    %c0_208 = arith.constant 0 : index
    %471 = vector.load %arg1[%c0_206, %c0_207, %c0_208] : memref<4x2x32xf32, #tpu.memory_space<vmem>>, vector<1x2x32xf32>
    %472 = vector.shape_cast %471 : vector<1x2x32xf32> to vector<2x32xf32>
    %473 = tpu.concatenate %468, %472 in 1 : vector<2x32xf32>, vector<2x32xf32> -> vector<2x64xf32>
    %c0_209 = arith.constant 0 : index
    %c0_210 = arith.constant 0 : index
    %474 = vector.load %arg10[%c0_209, %c0_210] : memref<64x32xf32, #tpu.memory_space<vmem>>, vector<64x32xf32>
    %cst_211 = arith.constant dense<0.000000e+00> : vector<2x32xf32>
    %475 = tpu.matmul %473, %474, %cst_211 {dimension_numbers = #tpu.dot_dimension_numbers<[1], [0], [0], [1], [0, 0, 1, 1], [], []>} : vector<2x64xf32>, vector<64x32xf32>, vector<2x32xf32> -> vector<2x32xf32>
    %c5_212 = arith.constant 5 : index
    %c0_213 = arith.constant 0 : index
    %476 = vector.load %arg16[%c5_212, %c0_213] : memref<16x128xf32, #tpu.memory_space<vmem>>, vector<1x32xf32>
    %477 = vector.broadcast %476 : vector<1x32xf32> to vector<2x32xf32>
    %478 = arith.addf %475, %477 : vector<2x32xf32>
    %cst_214 = arith.constant 0.000000e+00 : f32
    %479 = vector.broadcast %cst_214 : f32 to vector<2x32xf32>
    %480 = arith.maximumf %478, %479 : vector<2x32xf32>
    %c6_215 = arith.constant 6 : index
    %c0_216 = arith.constant 0 : index
    %481 = vector.load %arg16[%c6_215, %c0_216] : memref<16x128xf32, #tpu.memory_space<vmem>>, vector<1x64xf32>
    %482 = tpu.concatenate %480, %214 in 1 : vector<2x32xf32>, vector<2x16xf32> -> vector<2x48xf32>
    %c0_217 = arith.constant 0 : index
    %c0_218 = arith.constant 0 : index
    %483 = vector.load %arg11[%c0_217, %c0_218] : memref<48x64xf32, #tpu.memory_space<vmem>>, vector<48x64xf32>
    %cst_219 = arith.constant dense<0.000000e+00> : vector<2x64xf32>
    %484 = tpu.matmul %482, %483, %cst_219 {dimension_numbers = #tpu.dot_dimension_numbers<[1], [0], [0], [1], [0, 0, 1, 1], [], []>} : vector<2x48xf32>, vector<48x64xf32>, vector<2x64xf32> -> vector<2x64xf32>
    %485 = vector.broadcast %481 : vector<1x64xf32> to vector<2x64xf32>
    %486 = arith.addf %484, %485 : vector<2x64xf32>
    %487 = vector.extract_strided_slice %486 {offsets = [0, 0], sizes = [2, 48], strides = [1, 1]} : vector<2x64xf32> to vector<2x48xf32>
    %488 = arith.negf %487 : vector<2x48xf32>
    %489 = math.exp %488 : vector<2x48xf32>
    %cst_220 = arith.constant 1.000000e+00 : f32
    %490 = vector.broadcast %cst_220 : f32 to vector<2x48xf32>
    %491 = arith.addf %490, %489 : vector<2x48xf32>
    %492 = arith.divf %490, %491 : vector<2x48xf32>
    %493 = vector.extract_strided_slice %486 {offsets = [0, 48], sizes = [2, 16], strides = [1, 1]} : vector<2x64xf32> to vector<2x16xf32>
    %494 = math.tanh %493 : vector<2x16xf32>
    %495 = vector.extract_strided_slice %492 {offsets = [0, 0], sizes = [2, 16], strides = [1, 1]} : vector<2x48xf32> to vector<2x16xf32>
    %496 = vector.extract_strided_slice %492 {offsets = [0, 16], sizes = [2, 16], strides = [1, 1]} : vector<2x48xf32> to vector<2x16xf32>
    %497 = vector.extract_strided_slice %492 {offsets = [0, 32], sizes = [2, 16], strides = [1, 1]} : vector<2x48xf32> to vector<2x16xf32>
    %498 = arith.mulf %496, %212 : vector<2x16xf32>
    %499 = arith.mulf %495, %494 : vector<2x16xf32>
    %500 = arith.addf %498, %499 : vector<2x16xf32>
    %501 = math.tanh %500 : vector<2x16xf32>
    %502 = arith.mulf %497, %501 : vector<2x16xf32>
    %503 = tpu.concatenate %502, %500 in 1 : vector<2x16xf32>, vector<2x16xf32> -> vector<2x32xf32>
    %c0_221 = arith.constant 0 : index
    %c0_222 = arith.constant 0 : index
    %504 = vector.load %arg12[%c0_221, %c0_222] : memref<32x32xf32, #tpu.memory_space<vmem>>, vector<32x32xf32>
    %cst_223 = arith.constant dense<0.000000e+00> : vector<2x32xf32>
    %505 = tpu.matmul %503, %504, %cst_223 {dimension_numbers = #tpu.dot_dimension_numbers<[1], [0], [0], [1], [0, 0, 1, 1], [], []>} : vector<2x32xf32>, vector<32x32xf32>, vector<2x32xf32> -> vector<2x32xf32>
    %c7_224 = arith.constant 7 : index
    %c0_225 = arith.constant 0 : index
    %506 = vector.load %arg16[%c7_224, %c0_225] : memref<16x128xf32, #tpu.memory_space<vmem>>, vector<1x32xf32>
    %507 = vector.broadcast %506 : vector<1x32xf32> to vector<2x32xf32>
    %508 = arith.addf %505, %507 : vector<2x32xf32>
    %c8 = arith.constant 8 : index
    %c0_226 = arith.constant 0 : index
    %509 = vector.load %arg16[%c8, %c0_226] : memref<16x128xf32, #tpu.memory_space<vmem>>, vector<1x32xf32>
    %510 = vector.broadcast %509 : vector<1x32xf32> to vector<2x32xf32>
    %511 = arith.mulf %508, %510 : vector<2x32xf32>
    %cst_227 = arith.constant dense<0.000000e+00> : vector<2xf32>
    %512 = vector.multi_reduction <add>, %511, %cst_227 [1] : vector<2x32xf32> to vector<2xf32>
    %513 = vector.shape_cast %512 : vector<2xf32> to vector<2x1xf32>
    %514 = vector.shape_cast %508 : vector<2x32xf32> to vector<2x1x32xf32>
    "tpu.trace_start"() <{level = 10 : i32, message = "bqk,bnk->bqn"}> : () -> ()
    %cst_228 = arith.constant dense<0.000000e+00> : vector<2x1x8xf32>
    %515 = tpu.matmul %514, %467, %cst_228 {dimension_numbers = #tpu.dot_dimension_numbers<[2], [2], [1], [1], [0, 0, 0, 1, 1, 1], [0], [0]>} : vector<2x1x32xf32>, vector<2x8x32xf32>, vector<2x1x8xf32> -> vector<2x1x8xf32>
    "tpu.trace_stop"() : () -> ()
    %516 = vector.shape_cast %515 : vector<2x1x8xf32> to vector<2x8xf32>
    %517 = vector.broadcast %513 : vector<2x1xf32> to vector<2x8xf32>
    %518 = arith.mulf %469, %517 : vector<2x8xf32>
    %519 = arith.addf %516, %518 : vector<2x8xf32>
    %c0_229 = arith.constant 0 : index
    %c0_230 = arith.constant 0 : index
    %520 = vector.load %arg2[%c0_229, %c0_230] : memref<2x8xf32, #tpu.memory_space<vmem>>, vector<2x8xf32>
    %521 = arith.addf %519, %520 : vector<2x8xf32>
    %cst_231 = arith.constant dense<0xFF800000> : vector<2xf32>
    %522 = vector.multi_reduction <maximumf>, %521, %cst_231 [1] : vector<2x8xf32> to vector<2xf32>
    %523 = vector.shape_cast %522 : vector<2xf32> to vector<2x1xf32>
    %524 = vector.broadcast %523 : vector<2x1xf32> to vector<2x8xf32>
    %525 = arith.subf %521, %524 : vector<2x8xf32>
    %526 = math.exp %525 : vector<2x8xf32>
    %cst_232 = arith.constant dense<0.000000e+00> : vector<2xf32>
    %527 = vector.multi_reduction <add>, %526, %cst_232 [1] : vector<2x8xf32> to vector<2xf32>
    %528 = vector.shape_cast %527 : vector<2xf32> to vector<2x1xf32>
    %529 = vector.broadcast %528 : vector<2x1xf32> to vector<2x8xf32>
    %530 = arith.divf %526, %529 : vector<2x8xf32>
    %531 = vector.shape_cast %530 : vector<2x8xf32> to vector<2x1x8xf32>
    "tpu.trace_start"() <{level = 10 : i32, message = "bqk,bkn->bqn"}> : () -> ()
    %cst_233 = arith.constant dense<0.000000e+00> : vector<2x1x32xf32>
    %532 = tpu.matmul %531, %436, %cst_233 {dimension_numbers = #tpu.dot_dimension_numbers<[2], [1], [1], [2], [0, 0, 0, 1, 1, 2], [0], [0]>} : vector<2x1x8xf32>, vector<2x8x32xf32>, vector<2x1x32xf32> -> vector<2x1x32xf32>
    "tpu.trace_stop"() : () -> ()
    %533 = vector.shape_cast %532 : vector<2x1x32xf32> to vector<2x32xf32>
    %534 = arith.minimumf %530, %469 : vector<2x8xf32>
    %cst_234 = arith.constant dense<0.000000e+00> : vector<2xf32>
    %535 = vector.multi_reduction <add>, %534, %cst_234 [1] : vector<2x8xf32> to vector<2xf32>
    %536 = vector.shape_cast %535 : vector<2xf32> to vector<2x1xf32>
    %537 = arith.addf %469, %530 : vector<2x8xf32>
    %538 = tpu.concatenate %533, %503, %480 in 1 : vector<2x32xf32>, vector<2x32xf32>, vector<2x32xf32> -> vector<2x96xf32>
    %c9 = arith.constant 9 : index
    %c0_235 = arith.constant 0 : index
    %539 = vector.load %arg16[%c9, %c0_235] : memref<16x128xf32, #tpu.memory_space<vmem>>, vector<1x96xf32>
    %540 = vector.broadcast %539 : vector<1x96xf32> to vector<2x96xf32>
    %541 = arith.mulf %538, %540 : vector<2x96xf32>
    %cst_236 = arith.constant dense<0.000000e+00> : vector<2xf32>
    %542 = vector.multi_reduction <add>, %541, %cst_236 [1] : vector<2x96xf32> to vector<2xf32>
    %543 = vector.shape_cast %542 : vector<2xf32> to vector<2x1xf32>
    %c10 = arith.constant 10 : index
    %c0_237 = arith.constant 0 : index
    %544 = vector.load %arg16[%c10, %c0_237] : memref<16x128xf32, #tpu.memory_space<vmem>>, vector<1x1xf32>
    %545 = vector.broadcast %544 : vector<1x1xf32> to vector<2x1xf32>
    %546 = arith.addf %543, %545 : vector<2x1xf32>
    %547 = arith.negf %546 : vector<2x1xf32>
    %548 = math.exp %547 : vector<2x1xf32>
    %cst_238 = arith.constant 1.000000e+00 : f32
    %549 = vector.broadcast %cst_238 : f32 to vector<2x1xf32>
    %550 = arith.addf %549, %548 : vector<2x1xf32>
    %551 = arith.divf %549, %550 : vector<2x1xf32>
    %552 = tpu.concatenate %502, %533 in 1 : vector<2x16xf32>, vector<2x32xf32> -> vector<2x48xf32>
    %c0_239 = arith.constant 0 : index
    %c0_240 = arith.constant 0 : index
    %553 = vector.load %arg13[%c0_239, %c0_240] : memref<48x16xf32, #tpu.memory_space<vmem>>, vector<48x16xf32>
    %cst_241 = arith.constant dense<0.000000e+00> : vector<2x16xf32>
    %554 = tpu.matmul %552, %553, %cst_241 {dimension_numbers = #tpu.dot_dimension_numbers<[1], [0], [0], [1], [0, 0, 1, 1], [], []>} : vector<2x48xf32>, vector<48x16xf32>, vector<2x16xf32> -> vector<2x16xf32>
    %c11 = arith.constant 11 : index
    %c0_242 = arith.constant 0 : index
    %555 = vector.load %arg16[%c11, %c0_242] : memref<16x128xf32, #tpu.memory_space<vmem>>, vector<1x16xf32>
    %556 = vector.broadcast %555 : vector<1x16xf32> to vector<2x16xf32>
    %557 = arith.addf %554, %556 : vector<2x16xf32>
    %cst_243 = arith.constant 0.000000e+00 : f32
    %558 = vector.broadcast %cst_243 : f32 to vector<2x16xf32>
    %559 = arith.maximumf %557, %558 : vector<2x16xf32>
    %c0_244 = arith.constant 0 : index
    %c0_245 = arith.constant 0 : index
    %560 = vector.load %arg14[%c0_244, %c0_245] : memref<16x128xf32, #tpu.memory_space<vmem>>, vector<16x128xf32>
    %cst_246 = arith.constant dense<0.000000e+00> : vector<2x128xf32>
    %561 = tpu.matmul %559, %560, %cst_246 {dimension_numbers = #tpu.dot_dimension_numbers<[1], [0], [0], [1], [0, 0, 1, 1], [], []>} : vector<2x16xf32>, vector<16x128xf32>, vector<2x128xf32> -> vector<2x128xf32>
    %c0_247 = arith.constant 0 : index
    %c0_248 = arith.constant 0 : index
    %562 = vector.load %arg15[%c0_247, %c0_248] : memref<1x128xf32, #tpu.memory_space<vmem>>, vector<1x128xf32>
    %563 = vector.broadcast %562 : vector<1x128xf32> to vector<2x128xf32>
    %564 = arith.addf %561, %563 : vector<2x128xf32>
    %cst_249 = arith.constant dense<0xFF800000> : vector<2xf32>
    %565 = vector.multi_reduction <maximumf>, %564, %cst_249 [1] : vector<2x128xf32> to vector<2xf32>
    %566 = vector.shape_cast %565 : vector<2xf32> to vector<2x1xf32>
    %567 = vector.broadcast %566 : vector<2x1xf32> to vector<2x128xf32>
    %568 = arith.subf %564, %567 : vector<2x128xf32>
    %569 = math.exp %568 : vector<2x128xf32>
    %cst_250 = arith.constant dense<0.000000e+00> : vector<2xf32>
    %570 = vector.multi_reduction <add>, %569, %cst_250 [1] : vector<2x128xf32> to vector<2xf32>
    %571 = vector.shape_cast %570 : vector<2xf32> to vector<2x1xf32>
    %572 = vector.broadcast %571 : vector<2x1xf32> to vector<2x128xf32>
    %573 = arith.divf %569, %572 : vector<2x128xf32>
    %cst_251 = arith.constant 1.000000e+00 : f32
    %574 = vector.broadcast %cst_251 : f32 to vector<2x1xf32>
    %575 = arith.subf %574, %551 : vector<2x1xf32>
    %576 = vector.broadcast %575 : vector<2x1xf32> to vector<2x8xf32>
    %577 = arith.mulf %576, %530 : vector<2x8xf32>
    %578 = vector.broadcast %551 : vector<2x1xf32> to vector<2x128xf32>
    %579 = arith.mulf %578, %573 : vector<2x128xf32>
    %c0_252 = arith.constant 0 : index
    %c0_253 = arith.constant 0 : index
    %c0_254 = arith.constant 0 : index
    %580 = vector.load %arg3[%c0_252, %c0_253, %c0_254] : memref<2x8x128xf32, #tpu.memory_space<vmem>>, vector<2x8x128xf32>
    %581 = vector.shape_cast %577 : vector<2x8xf32> to vector<2x1x8xf32>
    "tpu.trace_start"() <{level = 10 : i32, message = "bqk,bkn->bqn"}> : () -> ()
    %cst_255 = arith.constant dense<0.000000e+00> : vector<2x1x128xf32>
    %582 = tpu.matmul %581, %580, %cst_255 {dimension_numbers = #tpu.dot_dimension_numbers<[2], [1], [1], [2], [0, 0, 0, 1, 1, 2], [0], [0]>} : vector<2x1x8xf32>, vector<2x8x128xf32>, vector<2x1x128xf32> -> vector<2x1x128xf32>
    "tpu.trace_stop"() : () -> ()
    %583 = vector.shape_cast %582 : vector<2x1x128xf32> to vector<2x128xf32>
    %584 = arith.addf %579, %583 : vector<2x128xf32>
    %c0_256 = arith.constant 0 : index
    %c0_257 = arith.constant 0 : index
    %c0_258 = arith.constant 0 : index
    %585 = vector.load %arg4[%c0_256, %c0_257, %c0_258] : memref<4x2x128xf32, #tpu.memory_space<vmem>>, vector<1x2x128xf32>
    %586 = vector.shape_cast %585 : vector<1x2x128xf32> to vector<2x128xf32>
    %587 = arith.mulf %584, %586 : vector<2x128xf32>
    %cst_259 = arith.constant dense<0.000000e+00> : vector<2xf32>
    %588 = vector.multi_reduction <add>, %587, %cst_259 [1] : vector<2x128xf32> to vector<2xf32>
    %589 = vector.shape_cast %588 : vector<2xf32> to vector<2x1xf32>
    %cst_260 = arith.constant 9.99999996E-13 : f32
    %590 = vector.broadcast %cst_260 : f32 to vector<2x1xf32>
    %591 = arith.addf %589, %590 : vector<2x1xf32>
    %592 = math.log %591 : vector<2x1xf32>
    %cst_261 = arith.constant 0.000000e+00 : f32
    %593 = vector.broadcast %cst_261 : f32 to vector<2x1xf32>
    %594 = arith.subf %593, %592 : vector<2x1xf32>
    %cst_262 = arith.constant 1.000000e+00 : f32
    %595 = vector.broadcast %cst_262 : f32 to vector<2x1xf32>
    %596 = arith.mulf %595, %536 : vector<2x1xf32>
    %597 = arith.addf %594, %596 : vector<2x1xf32>
    %c0_263 = arith.constant 0 : index
    %c0_264 = arith.constant 0 : index
    %c0_265 = arith.constant 0 : index
    %598 = vector.load %arg5[%c0_263, %c0_264, %c0_265] : memref<4x2x1xf32, #tpu.memory_space<vmem>>, vector<1x2x1xf32>
    %599 = vector.shape_cast %598 : vector<1x2x1xf32> to vector<2x1xf32>
    %600 = arith.mulf %597, %599 : vector<2x1xf32>
    %601 = arith.addf %470, %600 : vector<2x1xf32>
    %c1_266 = arith.constant 1 : index
    %c0_267 = arith.constant 0 : index
    %c0_268 = arith.constant 0 : index
    %602 = vector.load %arg1[%c1_266, %c0_267, %c0_268] : memref<4x2x32xf32, #tpu.memory_space<vmem>>, vector<1x2x32xf32>
    %603 = vector.shape_cast %602 : vector<1x2x32xf32> to vector<2x32xf32>
    %604 = tpu.concatenate %533, %603 in 1 : vector<2x32xf32>, vector<2x32xf32> -> vector<2x64xf32>
    %c0_269 = arith.constant 0 : index
    %c0_270 = arith.constant 0 : index
    %605 = vector.load %arg10[%c0_269, %c0_270] : memref<64x32xf32, #tpu.memory_space<vmem>>, vector<64x32xf32>
    %cst_271 = arith.constant dense<0.000000e+00> : vector<2x32xf32>
    %606 = tpu.matmul %604, %605, %cst_271 {dimension_numbers = #tpu.dot_dimension_numbers<[1], [0], [0], [1], [0, 0, 1, 1], [], []>} : vector<2x64xf32>, vector<64x32xf32>, vector<2x32xf32> -> vector<2x32xf32>
    %c5_272 = arith.constant 5 : index
    %c0_273 = arith.constant 0 : index
    %607 = vector.load %arg16[%c5_272, %c0_273] : memref<16x128xf32, #tpu.memory_space<vmem>>, vector<1x32xf32>
    %608 = vector.broadcast %607 : vector<1x32xf32> to vector<2x32xf32>
    %609 = arith.addf %606, %608 : vector<2x32xf32>
    %cst_274 = arith.constant 0.000000e+00 : f32
    %610 = vector.broadcast %cst_274 : f32 to vector<2x32xf32>
    %611 = arith.maximumf %609, %610 : vector<2x32xf32>
    %c6_275 = arith.constant 6 : index
    %c0_276 = arith.constant 0 : index
    %612 = vector.load %arg16[%c6_275, %c0_276] : memref<16x128xf32, #tpu.memory_space<vmem>>, vector<1x64xf32>
    %613 = tpu.concatenate %611, %502 in 1 : vector<2x32xf32>, vector<2x16xf32> -> vector<2x48xf32>
    %c0_277 = arith.constant 0 : index
    %c0_278 = arith.constant 0 : index
    %614 = vector.load %arg11[%c0_277, %c0_278] : memref<48x64xf32, #tpu.memory_space<vmem>>, vector<48x64xf32>
    %cst_279 = arith.constant dense<0.000000e+00> : vector<2x64xf32>
    %615 = tpu.matmul %613, %614, %cst_279 {dimension_numbers = #tpu.dot_dimension_numbers<[1], [0], [0], [1], [0, 0, 1, 1], [], []>} : vector<2x48xf32>, vector<48x64xf32>, vector<2x64xf32> -> vector<2x64xf32>
    %616 = vector.broadcast %612 : vector<1x64xf32> to vector<2x64xf32>
    %617 = arith.addf %615, %616 : vector<2x64xf32>
    %618 = vector.extract_strided_slice %617 {offsets = [0, 0], sizes = [2, 48], strides = [1, 1]} : vector<2x64xf32> to vector<2x48xf32>
    %619 = arith.negf %618 : vector<2x48xf32>
    %620 = math.exp %619 : vector<2x48xf32>
    %cst_280 = arith.constant 1.000000e+00 : f32
    %621 = vector.broadcast %cst_280 : f32 to vector<2x48xf32>
    %622 = arith.addf %621, %620 : vector<2x48xf32>
    %623 = arith.divf %621, %622 : vector<2x48xf32>
    %624 = vector.extract_strided_slice %617 {offsets = [0, 48], sizes = [2, 16], strides = [1, 1]} : vector<2x64xf32> to vector<2x16xf32>
    %625 = math.tanh %624 : vector<2x16xf32>
    %626 = vector.extract_strided_slice %623 {offsets = [0, 0], sizes = [2, 16], strides = [1, 1]} : vector<2x48xf32> to vector<2x16xf32>
    %627 = vector.extract_strided_slice %623 {offsets = [0, 16], sizes = [2, 16], strides = [1, 1]} : vector<2x48xf32> to vector<2x16xf32>
    %628 = vector.extract_strided_slice %623 {offsets = [0, 32], sizes = [2, 16], strides = [1, 1]} : vector<2x48xf32> to vector<2x16xf32>
    %629 = arith.mulf %627, %500 : vector<2x16xf32>
    %630 = arith.mulf %626, %625 : vector<2x16xf32>
    %631 = arith.addf %629, %630 : vector<2x16xf32>
    %632 = math.tanh %631 : vector<2x16xf32>
    %633 = arith.mulf %628, %632 : vector<2x16xf32>
    %634 = tpu.concatenate %633, %631 in 1 : vector<2x16xf32>, vector<2x16xf32> -> vector<2x32xf32>
    %c0_281 = arith.constant 0 : index
    %c0_282 = arith.constant 0 : index
    %635 = vector.load %arg12[%c0_281, %c0_282] : memref<32x32xf32, #tpu.memory_space<vmem>>, vector<32x32xf32>
    %cst_283 = arith.constant dense<0.000000e+00> : vector<2x32xf32>
    %636 = tpu.matmul %634, %635, %cst_283 {dimension_numbers = #tpu.dot_dimension_numbers<[1], [0], [0], [1], [0, 0, 1, 1], [], []>} : vector<2x32xf32>, vector<32x32xf32>, vector<2x32xf32> -> vector<2x32xf32>
    %c7_284 = arith.constant 7 : index
    %c0_285 = arith.constant 0 : index
    %637 = vector.load %arg16[%c7_284, %c0_285] : memref<16x128xf32, #tpu.memory_space<vmem>>, vector<1x32xf32>
    %638 = vector.broadcast %637 : vector<1x32xf32> to vector<2x32xf32>
    %639 = arith.addf %636, %638 : vector<2x32xf32>
    %c8_286 = arith.constant 8 : index
    %c0_287 = arith.constant 0 : index
    %640 = vector.load %arg16[%c8_286, %c0_287] : memref<16x128xf32, #tpu.memory_space<vmem>>, vector<1x32xf32>
    %641 = vector.broadcast %640 : vector<1x32xf32> to vector<2x32xf32>
    %642 = arith.mulf %639, %641 : vector<2x32xf32>
    %cst_288 = arith.constant dense<0.000000e+00> : vector<2xf32>
    %643 = vector.multi_reduction <add>, %642, %cst_288 [1] : vector<2x32xf32> to vector<2xf32>
    %644 = vector.shape_cast %643 : vector<2xf32> to vector<2x1xf32>
    %645 = vector.shape_cast %639 : vector<2x32xf32> to vector<2x1x32xf32>
    "tpu.trace_start"() <{level = 10 : i32, message = "bqk,bnk->bqn"}> : () -> ()
    %cst_289 = arith.constant dense<0.000000e+00> : vector<2x1x8xf32>
    %646 = tpu.matmul %645, %467, %cst_289 {dimension_numbers = #tpu.dot_dimension_numbers<[2], [2], [1], [1], [0, 0, 0, 1, 1, 1], [0], [0]>} : vector<2x1x32xf32>, vector<2x8x32xf32>, vector<2x1x8xf32> -> vector<2x1x8xf32>
    "tpu.trace_stop"() : () -> ()
    %647 = vector.shape_cast %646 : vector<2x1x8xf32> to vector<2x8xf32>
    %648 = vector.broadcast %644 : vector<2x1xf32> to vector<2x8xf32>
    %649 = arith.mulf %537, %648 : vector<2x8xf32>
    %650 = arith.addf %647, %649 : vector<2x8xf32>
    %c0_290 = arith.constant 0 : index
    %c0_291 = arith.constant 0 : index
    %651 = vector.load %arg2[%c0_290, %c0_291] : memref<2x8xf32, #tpu.memory_space<vmem>>, vector<2x8xf32>
    %652 = arith.addf %650, %651 : vector<2x8xf32>
    %cst_292 = arith.constant dense<0xFF800000> : vector<2xf32>
    %653 = vector.multi_reduction <maximumf>, %652, %cst_292 [1] : vector<2x8xf32> to vector<2xf32>
    %654 = vector.shape_cast %653 : vector<2xf32> to vector<2x1xf32>
    %655 = vector.broadcast %654 : vector<2x1xf32> to vector<2x8xf32>
    %656 = arith.subf %652, %655 : vector<2x8xf32>
    %657 = math.exp %656 : vector<2x8xf32>
    %cst_293 = arith.constant dense<0.000000e+00> : vector<2xf32>
    %658 = vector.multi_reduction <add>, %657, %cst_293 [1] : vector<2x8xf32> to vector<2xf32>
    %659 = vector.shape_cast %658 : vector<2xf32> to vector<2x1xf32>
    %660 = vector.broadcast %659 : vector<2x1xf32> to vector<2x8xf32>
    %661 = arith.divf %657, %660 : vector<2x8xf32>
    %662 = vector.shape_cast %661 : vector<2x8xf32> to vector<2x1x8xf32>
    "tpu.trace_start"() <{level = 10 : i32, message = "bqk,bkn->bqn"}> : () -> ()
    %cst_294 = arith.constant dense<0.000000e+00> : vector<2x1x32xf32>
    %663 = tpu.matmul %662, %436, %cst_294 {dimension_numbers = #tpu.dot_dimension_numbers<[2], [1], [1], [2], [0, 0, 0, 1, 1, 2], [0], [0]>} : vector<2x1x8xf32>, vector<2x8x32xf32>, vector<2x1x32xf32> -> vector<2x1x32xf32>
    "tpu.trace_stop"() : () -> ()
    %664 = vector.shape_cast %663 : vector<2x1x32xf32> to vector<2x32xf32>
    %665 = arith.minimumf %661, %537 : vector<2x8xf32>
    %cst_295 = arith.constant dense<0.000000e+00> : vector<2xf32>
    %666 = vector.multi_reduction <add>, %665, %cst_295 [1] : vector<2x8xf32> to vector<2xf32>
    %667 = vector.shape_cast %666 : vector<2xf32> to vector<2x1xf32>
    %668 = arith.addf %537, %661 : vector<2x8xf32>
    %669 = tpu.concatenate %664, %634, %611 in 1 : vector<2x32xf32>, vector<2x32xf32>, vector<2x32xf32> -> vector<2x96xf32>
    %c9_296 = arith.constant 9 : index
    %c0_297 = arith.constant 0 : index
    %670 = vector.load %arg16[%c9_296, %c0_297] : memref<16x128xf32, #tpu.memory_space<vmem>>, vector<1x96xf32>
    %671 = vector.broadcast %670 : vector<1x96xf32> to vector<2x96xf32>
    %672 = arith.mulf %669, %671 : vector<2x96xf32>
    %cst_298 = arith.constant dense<0.000000e+00> : vector<2xf32>
    %673 = vector.multi_reduction <add>, %672, %cst_298 [1] : vector<2x96xf32> to vector<2xf32>
    %674 = vector.shape_cast %673 : vector<2xf32> to vector<2x1xf32>
    %c10_299 = arith.constant 10 : index
    %c0_300 = arith.constant 0 : index
    %675 = vector.load %arg16[%c10_299, %c0_300] : memref<16x128xf32, #tpu.memory_space<vmem>>, vector<1x1xf32>
    %676 = vector.broadcast %675 : vector<1x1xf32> to vector<2x1xf32>
    %677 = arith.addf %674, %676 : vector<2x1xf32>
    %678 = arith.negf %677 : vector<2x1xf32>
    %679 = math.exp %678 : vector<2x1xf32>
    %cst_301 = arith.constant 1.000000e+00 : f32
    %680 = vector.broadcast %cst_301 : f32 to vector<2x1xf32>
    %681 = arith.addf %680, %679 : vector<2x1xf32>
    %682 = arith.divf %680, %681 : vector<2x1xf32>
    %683 = tpu.concatenate %633, %664 in 1 : vector<2x16xf32>, vector<2x32xf32> -> vector<2x48xf32>
    %c0_302 = arith.constant 0 : index
    %c0_303 = arith.constant 0 : index
    %684 = vector.load %arg13[%c0_302, %c0_303] : memref<48x16xf32, #tpu.memory_space<vmem>>, vector<48x16xf32>
    %cst_304 = arith.constant dense<0.000000e+00> : vector<2x16xf32>
    %685 = tpu.matmul %683, %684, %cst_304 {dimension_numbers = #tpu.dot_dimension_numbers<[1], [0], [0], [1], [0, 0, 1, 1], [], []>} : vector<2x48xf32>, vector<48x16xf32>, vector<2x16xf32> -> vector<2x16xf32>
    %c11_305 = arith.constant 11 : index
    %c0_306 = arith.constant 0 : index
    %686 = vector.load %arg16[%c11_305, %c0_306] : memref<16x128xf32, #tpu.memory_space<vmem>>, vector<1x16xf32>
    %687 = vector.broadcast %686 : vector<1x16xf32> to vector<2x16xf32>
    %688 = arith.addf %685, %687 : vector<2x16xf32>
    %cst_307 = arith.constant 0.000000e+00 : f32
    %689 = vector.broadcast %cst_307 : f32 to vector<2x16xf32>
    %690 = arith.maximumf %688, %689 : vector<2x16xf32>
    %c0_308 = arith.constant 0 : index
    %c0_309 = arith.constant 0 : index
    %691 = vector.load %arg14[%c0_308, %c0_309] : memref<16x128xf32, #tpu.memory_space<vmem>>, vector<16x128xf32>
    %cst_310 = arith.constant dense<0.000000e+00> : vector<2x128xf32>
    %692 = tpu.matmul %690, %691, %cst_310 {dimension_numbers = #tpu.dot_dimension_numbers<[1], [0], [0], [1], [0, 0, 1, 1], [], []>} : vector<2x16xf32>, vector<16x128xf32>, vector<2x128xf32> -> vector<2x128xf32>
    %c0_311 = arith.constant 0 : index
    %c0_312 = arith.constant 0 : index
    %693 = vector.load %arg15[%c0_311, %c0_312] : memref<1x128xf32, #tpu.memory_space<vmem>>, vector<1x128xf32>
    %694 = vector.broadcast %693 : vector<1x128xf32> to vector<2x128xf32>
    %695 = arith.addf %692, %694 : vector<2x128xf32>
    %cst_313 = arith.constant dense<0xFF800000> : vector<2xf32>
    %696 = vector.multi_reduction <maximumf>, %695, %cst_313 [1] : vector<2x128xf32> to vector<2xf32>
    %697 = vector.shape_cast %696 : vector<2xf32> to vector<2x1xf32>
    %698 = vector.broadcast %697 : vector<2x1xf32> to vector<2x128xf32>
    %699 = arith.subf %695, %698 : vector<2x128xf32>
    %700 = math.exp %699 : vector<2x128xf32>
    %cst_314 = arith.constant dense<0.000000e+00> : vector<2xf32>
    %701 = vector.multi_reduction <add>, %700, %cst_314 [1] : vector<2x128xf32> to vector<2xf32>
    %702 = vector.shape_cast %701 : vector<2xf32> to vector<2x1xf32>
    %703 = vector.broadcast %702 : vector<2x1xf32> to vector<2x128xf32>
    %704 = arith.divf %700, %703 : vector<2x128xf32>
    %cst_315 = arith.constant 1.000000e+00 : f32
    %705 = vector.broadcast %cst_315 : f32 to vector<2x1xf32>
    %706 = arith.subf %705, %682 : vector<2x1xf32>
    %707 = vector.broadcast %706 : vector<2x1xf32> to vector<2x8xf32>
    %708 = arith.mulf %707, %661 : vector<2x8xf32>
    %709 = vector.broadcast %682 : vector<2x1xf32> to vector<2x128xf32>
    %710 = arith.mulf %709, %704 : vector<2x128xf32>
    %c0_316 = arith.constant 0 : index
    %c0_317 = arith.constant 0 : index
    %c0_318 = arith.constant 0 : index
    %711 = vector.load %arg3[%c0_316, %c0_317, %c0_318] : memref<2x8x128xf32, #tpu.memory_space<vmem>>, vector<2x8x128xf32>
    %712 = vector.shape_cast %708 : vector<2x8xf32> to vector<2x1x8xf32>
    "tpu.trace_start"() <{level = 10 : i32, message = "bqk,bkn->bqn"}> : () -> ()
    %cst_319 = arith.constant dense<0.000000e+00> : vector<2x1x128xf32>
    %713 = tpu.matmul %712, %711, %cst_319 {dimension_numbers = #tpu.dot_dimension_numbers<[2], [1], [1], [2], [0, 0, 0, 1, 1, 2], [0], [0]>} : vector<2x1x8xf32>, vector<2x8x128xf32>, vector<2x1x128xf32> -> vector<2x1x128xf32>
    "tpu.trace_stop"() : () -> ()
    %714 = vector.shape_cast %713 : vector<2x1x128xf32> to vector<2x128xf32>
    %715 = arith.addf %710, %714 : vector<2x128xf32>
    %c1_320 = arith.constant 1 : index
    %c0_321 = arith.constant 0 : index
    %c0_322 = arith.constant 0 : index
    %716 = vector.load %arg4[%c1_320, %c0_321, %c0_322] : memref<4x2x128xf32, #tpu.memory_space<vmem>>, vector<1x2x128xf32>
    %717 = vector.shape_cast %716 : vector<1x2x128xf32> to vector<2x128xf32>
    %718 = arith.mulf %715, %717 : vector<2x128xf32>
    %cst_323 = arith.constant dense<0.000000e+00> : vector<2xf32>
    %719 = vector.multi_reduction <add>, %718, %cst_323 [1] : vector<2x128xf32> to vector<2xf32>
    %720 = vector.shape_cast %719 : vector<2xf32> to vector<2x1xf32>
    %cst_324 = arith.constant 9.99999996E-13 : f32
    %721 = vector.broadcast %cst_324 : f32 to vector<2x1xf32>
    %722 = arith.addf %720, %721 : vector<2x1xf32>
    %723 = math.log %722 : vector<2x1xf32>
    %cst_325 = arith.constant 0.000000e+00 : f32
    %724 = vector.broadcast %cst_325 : f32 to vector<2x1xf32>
    %725 = arith.subf %724, %723 : vector<2x1xf32>
    %cst_326 = arith.constant 1.000000e+00 : f32
    %726 = vector.broadcast %cst_326 : f32 to vector<2x1xf32>
    %727 = arith.mulf %726, %667 : vector<2x1xf32>
    %728 = arith.addf %725, %727 : vector<2x1xf32>
    %c1_327 = arith.constant 1 : index
    %c0_328 = arith.constant 0 : index
    %c0_329 = arith.constant 0 : index
    %729 = vector.load %arg5[%c1_327, %c0_328, %c0_329] : memref<4x2x1xf32, #tpu.memory_space<vmem>>, vector<1x2x1xf32>
    %730 = vector.shape_cast %729 : vector<1x2x1xf32> to vector<2x1xf32>
    %731 = arith.mulf %728, %730 : vector<2x1xf32>
    %732 = arith.addf %601, %731 : vector<2x1xf32>
    %c2_330 = arith.constant 2 : index
    %c0_331 = arith.constant 0 : index
    %c0_332 = arith.constant 0 : index
    %733 = vector.load %arg1[%c2_330, %c0_331, %c0_332] : memref<4x2x32xf32, #tpu.memory_space<vmem>>, vector<1x2x32xf32>
    %734 = vector.shape_cast %733 : vector<1x2x32xf32> to vector<2x32xf32>
    %735 = tpu.concatenate %664, %734 in 1 : vector<2x32xf32>, vector<2x32xf32> -> vector<2x64xf32>
    %c0_333 = arith.constant 0 : index
    %c0_334 = arith.constant 0 : index
    %736 = vector.load %arg10[%c0_333, %c0_334] : memref<64x32xf32, #tpu.memory_space<vmem>>, vector<64x32xf32>
    %cst_335 = arith.constant dense<0.000000e+00> : vector<2x32xf32>
    %737 = tpu.matmul %735, %736, %cst_335 {dimension_numbers = #tpu.dot_dimension_numbers<[1], [0], [0], [1], [0, 0, 1, 1], [], []>} : vector<2x64xf32>, vector<64x32xf32>, vector<2x32xf32> -> vector<2x32xf32>
    %c5_336 = arith.constant 5 : index
    %c0_337 = arith.constant 0 : index
    %738 = vector.load %arg16[%c5_336, %c0_337] : memref<16x128xf32, #tpu.memory_space<vmem>>, vector<1x32xf32>
    %739 = vector.broadcast %738 : vector<1x32xf32> to vector<2x32xf32>
    %740 = arith.addf %737, %739 : vector<2x32xf32>
    %cst_338 = arith.constant 0.000000e+00 : f32
    %741 = vector.broadcast %cst_338 : f32 to vector<2x32xf32>
    %742 = arith.maximumf %740, %741 : vector<2x32xf32>
    %c6_339 = arith.constant 6 : index
    %c0_340 = arith.constant 0 : index
    %743 = vector.load %arg16[%c6_339, %c0_340] : memref<16x128xf32, #tpu.memory_space<vmem>>, vector<1x64xf32>
    %744 = tpu.concatenate %742, %633 in 1 : vector<2x32xf32>, vector<2x16xf32> -> vector<2x48xf32>
    %c0_341 = arith.constant 0 : index
    %c0_342 = arith.constant 0 : index
    %745 = vector.load %arg11[%c0_341, %c0_342] : memref<48x64xf32, #tpu.memory_space<vmem>>, vector<48x64xf32>
    %cst_343 = arith.constant dense<0.000000e+00> : vector<2x64xf32>
    %746 = tpu.matmul %744, %745, %cst_343 {dimension_numbers = #tpu.dot_dimension_numbers<[1], [0], [0], [1], [0, 0, 1, 1], [], []>} : vector<2x48xf32>, vector<48x64xf32>, vector<2x64xf32> -> vector<2x64xf32>
    %747 = vector.broadcast %743 : vector<1x64xf32> to vector<2x64xf32>
    %748 = arith.addf %746, %747 : vector<2x64xf32>
    %749 = vector.extract_strided_slice %748 {offsets = [0, 0], sizes = [2, 48], strides = [1, 1]} : vector<2x64xf32> to vector<2x48xf32>
    %750 = arith.negf %749 : vector<2x48xf32>
    %751 = math.exp %750 : vector<2x48xf32>
    %cst_344 = arith.constant 1.000000e+00 : f32
    %752 = vector.broadcast %cst_344 : f32 to vector<2x48xf32>
    %753 = arith.addf %752, %751 : vector<2x48xf32>
    %754 = arith.divf %752, %753 : vector<2x48xf32>
    %755 = vector.extract_strided_slice %748 {offsets = [0, 48], sizes = [2, 16], strides = [1, 1]} : vector<2x64xf32> to vector<2x16xf32>
    %756 = math.tanh %755 : vector<2x16xf32>
    %757 = vector.extract_strided_slice %754 {offsets = [0, 0], sizes = [2, 16], strides = [1, 1]} : vector<2x48xf32> to vector<2x16xf32>
    %758 = vector.extract_strided_slice %754 {offsets = [0, 16], sizes = [2, 16], strides = [1, 1]} : vector<2x48xf32> to vector<2x16xf32>
    %759 = vector.extract_strided_slice %754 {offsets = [0, 32], sizes = [2, 16], strides = [1, 1]} : vector<2x48xf32> to vector<2x16xf32>
    %760 = arith.mulf %758, %631 : vector<2x16xf32>
    %761 = arith.mulf %757, %756 : vector<2x16xf32>
    %762 = arith.addf %760, %761 : vector<2x16xf32>
    %763 = math.tanh %762 : vector<2x16xf32>
    %764 = arith.mulf %759, %763 : vector<2x16xf32>
    %765 = tpu.concatenate %764, %762 in 1 : vector<2x16xf32>, vector<2x16xf32> -> vector<2x32xf32>
    %c0_345 = arith.constant 0 : index
    %c0_346 = arith.constant 0 : index
    %766 = vector.load %arg12[%c0_345, %c0_346] : memref<32x32xf32, #tpu.memory_space<vmem>>, vector<32x32xf32>
    %cst_347 = arith.constant dense<0.000000e+00> : vector<2x32xf32>
    %767 = tpu.matmul %765, %766, %cst_347 {dimension_numbers = #tpu.dot_dimension_numbers<[1], [0], [0], [1], [0, 0, 1, 1], [], []>} : vector<2x32xf32>, vector<32x32xf32>, vector<2x32xf32> -> vector<2x32xf32>
    %c7_348 = arith.constant 7 : index
    %c0_349 = arith.constant 0 : index
    %768 = vector.load %arg16[%c7_348, %c0_349] : memref<16x128xf32, #tpu.memory_space<vmem>>, vector<1x32xf32>
    %769 = vector.broadcast %768 : vector<1x32xf32> to vector<2x32xf32>
    %770 = arith.addf %767, %769 : vector<2x32xf32>
    %c8_350 = arith.constant 8 : index
    %c0_351 = arith.constant 0 : index
    %771 = vector.load %arg16[%c8_350, %c0_351] : memref<16x128xf32, #tpu.memory_space<vmem>>, vector<1x32xf32>
    %772 = vector.broadcast %771 : vector<1x32xf32> to vector<2x32xf32>
    %773 = arith.mulf %770, %772 : vector<2x32xf32>
    %cst_352 = arith.constant dense<0.000000e+00> : vector<2xf32>
    %774 = vector.multi_reduction <add>, %773, %cst_352 [1] : vector<2x32xf32> to vector<2xf32>
    %775 = vector.shape_cast %774 : vector<2xf32> to vector<2x1xf32>
    %776 = vector.shape_cast %770 : vector<2x32xf32> to vector<2x1x32xf32>
    "tpu.trace_start"() <{level = 10 : i32, message = "bqk,bnk->bqn"}> : () -> ()
    %cst_353 = arith.constant dense<0.000000e+00> : vector<2x1x8xf32>
    %777 = tpu.matmul %776, %467, %cst_353 {dimension_numbers = #tpu.dot_dimension_numbers<[2], [2], [1], [1], [0, 0, 0, 1, 1, 1], [0], [0]>} : vector<2x1x32xf32>, vector<2x8x32xf32>, vector<2x1x8xf32> -> vector<2x1x8xf32>
    "tpu.trace_stop"() : () -> ()
    %778 = vector.shape_cast %777 : vector<2x1x8xf32> to vector<2x8xf32>
    %779 = vector.broadcast %775 : vector<2x1xf32> to vector<2x8xf32>
    %780 = arith.mulf %668, %779 : vector<2x8xf32>
    %781 = arith.addf %778, %780 : vector<2x8xf32>
    %c0_354 = arith.constant 0 : index
    %c0_355 = arith.constant 0 : index
    %782 = vector.load %arg2[%c0_354, %c0_355] : memref<2x8xf32, #tpu.memory_space<vmem>>, vector<2x8xf32>
    %783 = arith.addf %781, %782 : vector<2x8xf32>
    %cst_356 = arith.constant dense<0xFF800000> : vector<2xf32>
    %784 = vector.multi_reduction <maximumf>, %783, %cst_356 [1] : vector<2x8xf32> to vector<2xf32>
    %785 = vector.shape_cast %784 : vector<2xf32> to vector<2x1xf32>
    %786 = vector.broadcast %785 : vector<2x1xf32> to vector<2x8xf32>
    %787 = arith.subf %783, %786 : vector<2x8xf32>
    %788 = math.exp %787 : vector<2x8xf32>
    %cst_357 = arith.constant dense<0.000000e+00> : vector<2xf32>
    %789 = vector.multi_reduction <add>, %788, %cst_357 [1] : vector<2x8xf32> to vector<2xf32>
    %790 = vector.shape_cast %789 : vector<2xf32> to vector<2x1xf32>
    %791 = vector.broadcast %790 : vector<2x1xf32> to vector<2x8xf32>
    %792 = arith.divf %788, %791 : vector<2x8xf32>
    %793 = vector.shape_cast %792 : vector<2x8xf32> to vector<2x1x8xf32>
    "tpu.trace_start"() <{level = 10 : i32, message = "bqk,bkn->bqn"}> : () -> ()
    %cst_358 = arith.constant dense<0.000000e+00> : vector<2x1x32xf32>
    %794 = tpu.matmul %793, %436, %cst_358 {dimension_numbers = #tpu.dot_dimension_numbers<[2], [1], [1], [2], [0, 0, 0, 1, 1, 2], [0], [0]>} : vector<2x1x8xf32>, vector<2x8x32xf32>, vector<2x1x32xf32> -> vector<2x1x32xf32>
    "tpu.trace_stop"() : () -> ()
    %795 = vector.shape_cast %794 : vector<2x1x32xf32> to vector<2x32xf32>
    %796 = arith.minimumf %792, %668 : vector<2x8xf32>
    %cst_359 = arith.constant dense<0.000000e+00> : vector<2xf32>
    %797 = vector.multi_reduction <add>, %796, %cst_359 [1] : vector<2x8xf32> to vector<2xf32>
    %798 = vector.shape_cast %797 : vector<2xf32> to vector<2x1xf32>
    %799 = arith.addf %668, %792 : vector<2x8xf32>
    %800 = tpu.concatenate %795, %765, %742 in 1 : vector<2x32xf32>, vector<2x32xf32>, vector<2x32xf32> -> vector<2x96xf32>
    %c9_360 = arith.constant 9 : index
    %c0_361 = arith.constant 0 : index
    %801 = vector.load %arg16[%c9_360, %c0_361] : memref<16x128xf32, #tpu.memory_space<vmem>>, vector<1x96xf32>
    %802 = vector.broadcast %801 : vector<1x96xf32> to vector<2x96xf32>
    %803 = arith.mulf %800, %802 : vector<2x96xf32>
    %cst_362 = arith.constant dense<0.000000e+00> : vector<2xf32>
    %804 = vector.multi_reduction <add>, %803, %cst_362 [1] : vector<2x96xf32> to vector<2xf32>
    %805 = vector.shape_cast %804 : vector<2xf32> to vector<2x1xf32>
    %c10_363 = arith.constant 10 : index
    %c0_364 = arith.constant 0 : index
    %806 = vector.load %arg16[%c10_363, %c0_364] : memref<16x128xf32, #tpu.memory_space<vmem>>, vector<1x1xf32>
    %807 = vector.broadcast %806 : vector<1x1xf32> to vector<2x1xf32>
    %808 = arith.addf %805, %807 : vector<2x1xf32>
    %809 = arith.negf %808 : vector<2x1xf32>
    %810 = math.exp %809 : vector<2x1xf32>
    %cst_365 = arith.constant 1.000000e+00 : f32
    %811 = vector.broadcast %cst_365 : f32 to vector<2x1xf32>
    %812 = arith.addf %811, %810 : vector<2x1xf32>
    %813 = arith.divf %811, %812 : vector<2x1xf32>
    %814 = tpu.concatenate %764, %795 in 1 : vector<2x16xf32>, vector<2x32xf32> -> vector<2x48xf32>
    %c0_366 = arith.constant 0 : index
    %c0_367 = arith.constant 0 : index
    %815 = vector.load %arg13[%c0_366, %c0_367] : memref<48x16xf32, #tpu.memory_space<vmem>>, vector<48x16xf32>
    %cst_368 = arith.constant dense<0.000000e+00> : vector<2x16xf32>
    %816 = tpu.matmul %814, %815, %cst_368 {dimension_numbers = #tpu.dot_dimension_numbers<[1], [0], [0], [1], [0, 0, 1, 1], [], []>} : vector<2x48xf32>, vector<48x16xf32>, vector<2x16xf32> -> vector<2x16xf32>
    %c11_369 = arith.constant 11 : index
    %c0_370 = arith.constant 0 : index
    %817 = vector.load %arg16[%c11_369, %c0_370] : memref<16x128xf32, #tpu.memory_space<vmem>>, vector<1x16xf32>
    %818 = vector.broadcast %817 : vector<1x16xf32> to vector<2x16xf32>
    %819 = arith.addf %816, %818 : vector<2x16xf32>
    %cst_371 = arith.constant 0.000000e+00 : f32
    %820 = vector.broadcast %cst_371 : f32 to vector<2x16xf32>
    %821 = arith.maximumf %819, %820 : vector<2x16xf32>
    %c0_372 = arith.constant 0 : index
    %c0_373 = arith.constant 0 : index
    %822 = vector.load %arg14[%c0_372, %c0_373] : memref<16x128xf32, #tpu.memory_space<vmem>>, vector<16x128xf32>
    %cst_374 = arith.constant dense<0.000000e+00> : vector<2x128xf32>
    %823 = tpu.matmul %821, %822, %cst_374 {dimension_numbers = #tpu.dot_dimension_numbers<[1], [0], [0], [1], [0, 0, 1, 1], [], []>} : vector<2x16xf32>, vector<16x128xf32>, vector<2x128xf32> -> vector<2x128xf32>
    %c0_375 = arith.constant 0 : index
    %c0_376 = arith.constant 0 : index
    %824 = vector.load %arg15[%c0_375, %c0_376] : memref<1x128xf32, #tpu.memory_space<vmem>>, vector<1x128xf32>
    %825 = vector.broadcast %824 : vector<1x128xf32> to vector<2x128xf32>
    %826 = arith.addf %823, %825 : vector<2x128xf32>
    %cst_377 = arith.constant dense<0xFF800000> : vector<2xf32>
    %827 = vector.multi_reduction <maximumf>, %826, %cst_377 [1] : vector<2x128xf32> to vector<2xf32>
    %828 = vector.shape_cast %827 : vector<2xf32> to vector<2x1xf32>
    %829 = vector.broadcast %828 : vector<2x1xf32> to vector<2x128xf32>
    %830 = arith.subf %826, %829 : vector<2x128xf32>
    %831 = math.exp %830 : vector<2x128xf32>
    %cst_378 = arith.constant dense<0.000000e+00> : vector<2xf32>
    %832 = vector.multi_reduction <add>, %831, %cst_378 [1] : vector<2x128xf32> to vector<2xf32>
    %833 = vector.shape_cast %832 : vector<2xf32> to vector<2x1xf32>
    %834 = vector.broadcast %833 : vector<2x1xf32> to vector<2x128xf32>
    %835 = arith.divf %831, %834 : vector<2x128xf32>
    %cst_379 = arith.constant 1.000000e+00 : f32
    %836 = vector.broadcast %cst_379 : f32 to vector<2x1xf32>
    %837 = arith.subf %836, %813 : vector<2x1xf32>
    %838 = vector.broadcast %837 : vector<2x1xf32> to vector<2x8xf32>
    %839 = arith.mulf %838, %792 : vector<2x8xf32>
    %840 = vector.broadcast %813 : vector<2x1xf32> to vector<2x128xf32>
    %841 = arith.mulf %840, %835 : vector<2x128xf32>
    %c0_380 = arith.constant 0 : index
    %c0_381 = arith.constant 0 : index
    %c0_382 = arith.constant 0 : index
    %842 = vector.load %arg3[%c0_380, %c0_381, %c0_382] : memref<2x8x128xf32, #tpu.memory_space<vmem>>, vector<2x8x128xf32>
    %843 = vector.shape_cast %839 : vector<2x8xf32> to vector<2x1x8xf32>
    "tpu.trace_start"() <{level = 10 : i32, message = "bqk,bkn->bqn"}> : () -> ()
    %cst_383 = arith.constant dense<0.000000e+00> : vector<2x1x128xf32>
    %844 = tpu.matmul %843, %842, %cst_383 {dimension_numbers = #tpu.dot_dimension_numbers<[2], [1], [1], [2], [0, 0, 0, 1, 1, 2], [0], [0]>} : vector<2x1x8xf32>, vector<2x8x128xf32>, vector<2x1x128xf32> -> vector<2x1x128xf32>
    "tpu.trace_stop"() : () -> ()
    %845 = vector.shape_cast %844 : vector<2x1x128xf32> to vector<2x128xf32>
    %846 = arith.addf %841, %845 : vector<2x128xf32>
    %c2_384 = arith.constant 2 : index
    %c0_385 = arith.constant 0 : index
    %c0_386 = arith.constant 0 : index
    %847 = vector.load %arg4[%c2_384, %c0_385, %c0_386] : memref<4x2x128xf32, #tpu.memory_space<vmem>>, vector<1x2x128xf32>
    %848 = vector.shape_cast %847 : vector<1x2x128xf32> to vector<2x128xf32>
    %849 = arith.mulf %846, %848 : vector<2x128xf32>
    %cst_387 = arith.constant dense<0.000000e+00> : vector<2xf32>
    %850 = vector.multi_reduction <add>, %849, %cst_387 [1] : vector<2x128xf32> to vector<2xf32>
    %851 = vector.shape_cast %850 : vector<2xf32> to vector<2x1xf32>
    %cst_388 = arith.constant 9.99999996E-13 : f32
    %852 = vector.broadcast %cst_388 : f32 to vector<2x1xf32>
    %853 = arith.addf %851, %852 : vector<2x1xf32>
    %854 = math.log %853 : vector<2x1xf32>
    %cst_389 = arith.constant 0.000000e+00 : f32
    %855 = vector.broadcast %cst_389 : f32 to vector<2x1xf32>
    %856 = arith.subf %855, %854 : vector<2x1xf32>
    %cst_390 = arith.constant 1.000000e+00 : f32
    %857 = vector.broadcast %cst_390 : f32 to vector<2x1xf32>
    %858 = arith.mulf %857, %798 : vector<2x1xf32>
    %859 = arith.addf %856, %858 : vector<2x1xf32>
    %c2_391 = arith.constant 2 : index
    %c0_392 = arith.constant 0 : index
    %c0_393 = arith.constant 0 : index
    %860 = vector.load %arg5[%c2_391, %c0_392, %c0_393] : memref<4x2x1xf32, #tpu.memory_space<vmem>>, vector<1x2x1xf32>
    %861 = vector.shape_cast %860 : vector<1x2x1xf32> to vector<2x1xf32>
    %862 = arith.mulf %859, %861 : vector<2x1xf32>
    %863 = arith.addf %732, %862 : vector<2x1xf32>
    %c3_394 = arith.constant 3 : index
    %c0_395 = arith.constant 0 : index
    %c0_396 = arith.constant 0 : index
    %864 = vector.load %arg1[%c3_394, %c0_395, %c0_396] : memref<4x2x32xf32, #tpu.memory_space<vmem>>, vector<1x2x32xf32>
    %865 = vector.shape_cast %864 : vector<1x2x32xf32> to vector<2x32xf32>
    %866 = tpu.concatenate %795, %865 in 1 : vector<2x32xf32>, vector<2x32xf32> -> vector<2x64xf32>
    %c0_397 = arith.constant 0 : index
    %c0_398 = arith.constant 0 : index
    %867 = vector.load %arg10[%c0_397, %c0_398] : memref<64x32xf32, #tpu.memory_space<vmem>>, vector<64x32xf32>
    %cst_399 = arith.constant dense<0.000000e+00> : vector<2x32xf32>
    %868 = tpu.matmul %866, %867, %cst_399 {dimension_numbers = #tpu.dot_dimension_numbers<[1], [0], [0], [1], [0, 0, 1, 1], [], []>} : vector<2x64xf32>, vector<64x32xf32>, vector<2x32xf32> -> vector<2x32xf32>
    %c5_400 = arith.constant 5 : index
    %c0_401 = arith.constant 0 : index
    %869 = vector.load %arg16[%c5_400, %c0_401] : memref<16x128xf32, #tpu.memory_space<vmem>>, vector<1x32xf32>
    %870 = vector.broadcast %869 : vector<1x32xf32> to vector<2x32xf32>
    %871 = arith.addf %868, %870 : vector<2x32xf32>
    %cst_402 = arith.constant 0.000000e+00 : f32
    %872 = vector.broadcast %cst_402 : f32 to vector<2x32xf32>
    %873 = arith.maximumf %871, %872 : vector<2x32xf32>
    %c6_403 = arith.constant 6 : index
    %c0_404 = arith.constant 0 : index
    %874 = vector.load %arg16[%c6_403, %c0_404] : memref<16x128xf32, #tpu.memory_space<vmem>>, vector<1x64xf32>
    %875 = tpu.concatenate %873, %764 in 1 : vector<2x32xf32>, vector<2x16xf32> -> vector<2x48xf32>
    %c0_405 = arith.constant 0 : index
    %c0_406 = arith.constant 0 : index
    %876 = vector.load %arg11[%c0_405, %c0_406] : memref<48x64xf32, #tpu.memory_space<vmem>>, vector<48x64xf32>
    %cst_407 = arith.constant dense<0.000000e+00> : vector<2x64xf32>
    %877 = tpu.matmul %875, %876, %cst_407 {dimension_numbers = #tpu.dot_dimension_numbers<[1], [0], [0], [1], [0, 0, 1, 1], [], []>} : vector<2x48xf32>, vector<48x64xf32>, vector<2x64xf32> -> vector<2x64xf32>
    %878 = vector.broadcast %874 : vector<1x64xf32> to vector<2x64xf32>
    %879 = arith.addf %877, %878 : vector<2x64xf32>
    %880 = vector.extract_strided_slice %879 {offsets = [0, 0], sizes = [2, 48], strides = [1, 1]} : vector<2x64xf32> to vector<2x48xf32>
    %881 = arith.negf %880 : vector<2x48xf32>
    %882 = math.exp %881 : vector<2x48xf32>
    %cst_408 = arith.constant 1.000000e+00 : f32
    %883 = vector.broadcast %cst_408 : f32 to vector<2x48xf32>
    %884 = arith.addf %883, %882 : vector<2x48xf32>
    %885 = arith.divf %883, %884 : vector<2x48xf32>
    %886 = vector.extract_strided_slice %879 {offsets = [0, 48], sizes = [2, 16], strides = [1, 1]} : vector<2x64xf32> to vector<2x16xf32>
    %887 = math.tanh %886 : vector<2x16xf32>
    %888 = vector.extract_strided_slice %885 {offsets = [0, 0], sizes = [2, 16], strides = [1, 1]} : vector<2x48xf32> to vector<2x16xf32>
    %889 = vector.extract_strided_slice %885 {offsets = [0, 16], sizes = [2, 16], strides = [1, 1]} : vector<2x48xf32> to vector<2x16xf32>
    %890 = vector.extract_strided_slice %885 {offsets = [0, 32], sizes = [2, 16], strides = [1, 1]} : vector<2x48xf32> to vector<2x16xf32>
    %891 = arith.mulf %889, %762 : vector<2x16xf32>
    %892 = arith.mulf %888, %887 : vector<2x16xf32>
    %893 = arith.addf %891, %892 : vector<2x16xf32>
    %894 = math.tanh %893 : vector<2x16xf32>
    %895 = arith.mulf %890, %894 : vector<2x16xf32>
    %896 = tpu.concatenate %895, %893 in 1 : vector<2x16xf32>, vector<2x16xf32> -> vector<2x32xf32>
    %c0_409 = arith.constant 0 : index
    %c0_410 = arith.constant 0 : index
    %897 = vector.load %arg12[%c0_409, %c0_410] : memref<32x32xf32, #tpu.memory_space<vmem>>, vector<32x32xf32>
    %cst_411 = arith.constant dense<0.000000e+00> : vector<2x32xf32>
    %898 = tpu.matmul %896, %897, %cst_411 {dimension_numbers = #tpu.dot_dimension_numbers<[1], [0], [0], [1], [0, 0, 1, 1], [], []>} : vector<2x32xf32>, vector<32x32xf32>, vector<2x32xf32> -> vector<2x32xf32>
    %c7_412 = arith.constant 7 : index
    %c0_413 = arith.constant 0 : index
    %899 = vector.load %arg16[%c7_412, %c0_413] : memref<16x128xf32, #tpu.memory_space<vmem>>, vector<1x32xf32>
    %900 = vector.broadcast %899 : vector<1x32xf32> to vector<2x32xf32>
    %901 = arith.addf %898, %900 : vector<2x32xf32>
    %c8_414 = arith.constant 8 : index
    %c0_415 = arith.constant 0 : index
    %902 = vector.load %arg16[%c8_414, %c0_415] : memref<16x128xf32, #tpu.memory_space<vmem>>, vector<1x32xf32>
    %903 = vector.broadcast %902 : vector<1x32xf32> to vector<2x32xf32>
    %904 = arith.mulf %901, %903 : vector<2x32xf32>
    %cst_416 = arith.constant dense<0.000000e+00> : vector<2xf32>
    %905 = vector.multi_reduction <add>, %904, %cst_416 [1] : vector<2x32xf32> to vector<2xf32>
    %906 = vector.shape_cast %905 : vector<2xf32> to vector<2x1xf32>
    %907 = vector.shape_cast %901 : vector<2x32xf32> to vector<2x1x32xf32>
    "tpu.trace_start"() <{level = 10 : i32, message = "bqk,bnk->bqn"}> : () -> ()
    %cst_417 = arith.constant dense<0.000000e+00> : vector<2x1x8xf32>
    %908 = tpu.matmul %907, %467, %cst_417 {dimension_numbers = #tpu.dot_dimension_numbers<[2], [2], [1], [1], [0, 0, 0, 1, 1, 1], [0], [0]>} : vector<2x1x32xf32>, vector<2x8x32xf32>, vector<2x1x8xf32> -> vector<2x1x8xf32>
    "tpu.trace_stop"() : () -> ()
    %909 = vector.shape_cast %908 : vector<2x1x8xf32> to vector<2x8xf32>
    %910 = vector.broadcast %906 : vector<2x1xf32> to vector<2x8xf32>
    %911 = arith.mulf %799, %910 : vector<2x8xf32>
    %912 = arith.addf %909, %911 : vector<2x8xf32>
    %c0_418 = arith.constant 0 : index
    %c0_419 = arith.constant 0 : index
    %913 = vector.load %arg2[%c0_418, %c0_419] : memref<2x8xf32, #tpu.memory_space<vmem>>, vector<2x8xf32>
    %914 = arith.addf %912, %913 : vector<2x8xf32>
    %cst_420 = arith.constant dense<0xFF800000> : vector<2xf32>
    %915 = vector.multi_reduction <maximumf>, %914, %cst_420 [1] : vector<2x8xf32> to vector<2xf32>
    %916 = vector.shape_cast %915 : vector<2xf32> to vector<2x1xf32>
    %917 = vector.broadcast %916 : vector<2x1xf32> to vector<2x8xf32>
    %918 = arith.subf %914, %917 : vector<2x8xf32>
    %919 = math.exp %918 : vector<2x8xf32>
    %cst_421 = arith.constant dense<0.000000e+00> : vector<2xf32>
    %920 = vector.multi_reduction <add>, %919, %cst_421 [1] : vector<2x8xf32> to vector<2xf32>
    %921 = vector.shape_cast %920 : vector<2xf32> to vector<2x1xf32>
    %922 = vector.broadcast %921 : vector<2x1xf32> to vector<2x8xf32>
    %923 = arith.divf %919, %922 : vector<2x8xf32>
    %924 = vector.shape_cast %923 : vector<2x8xf32> to vector<2x1x8xf32>
    "tpu.trace_start"() <{level = 10 : i32, message = "bqk,bkn->bqn"}> : () -> ()
    %cst_422 = arith.constant dense<0.000000e+00> : vector<2x1x32xf32>
    %925 = tpu.matmul %924, %436, %cst_422 {dimension_numbers = #tpu.dot_dimension_numbers<[2], [1], [1], [2], [0, 0, 0, 1, 1, 2], [0], [0]>} : vector<2x1x8xf32>, vector<2x8x32xf32>, vector<2x1x32xf32> -> vector<2x1x32xf32>
    "tpu.trace_stop"() : () -> ()
    %926 = vector.shape_cast %925 : vector<2x1x32xf32> to vector<2x32xf32>
    %927 = arith.minimumf %923, %799 : vector<2x8xf32>
    %cst_423 = arith.constant dense<0.000000e+00> : vector<2xf32>
    %928 = vector.multi_reduction <add>, %927, %cst_423 [1] : vector<2x8xf32> to vector<2xf32>
    %929 = vector.shape_cast %928 : vector<2xf32> to vector<2x1xf32>
    %930 = tpu.concatenate %926, %896, %873 in 1 : vector<2x32xf32>, vector<2x32xf32>, vector<2x32xf32> -> vector<2x96xf32>
    %c9_424 = arith.constant 9 : index
    %c0_425 = arith.constant 0 : index
    %931 = vector.load %arg16[%c9_424, %c0_425] : memref<16x128xf32, #tpu.memory_space<vmem>>, vector<1x96xf32>
    %932 = vector.broadcast %931 : vector<1x96xf32> to vector<2x96xf32>
    %933 = arith.mulf %930, %932 : vector<2x96xf32>
    %cst_426 = arith.constant dense<0.000000e+00> : vector<2xf32>
    %934 = vector.multi_reduction <add>, %933, %cst_426 [1] : vector<2x96xf32> to vector<2xf32>
    %935 = vector.shape_cast %934 : vector<2xf32> to vector<2x1xf32>
    %c10_427 = arith.constant 10 : index
    %c0_428 = arith.constant 0 : index
    %936 = vector.load %arg16[%c10_427, %c0_428] : memref<16x128xf32, #tpu.memory_space<vmem>>, vector<1x1xf32>
    %937 = vector.broadcast %936 : vector<1x1xf32> to vector<2x1xf32>
    %938 = arith.addf %935, %937 : vector<2x1xf32>
    %939 = arith.negf %938 : vector<2x1xf32>
    %940 = math.exp %939 : vector<2x1xf32>
    %cst_429 = arith.constant 1.000000e+00 : f32
    %941 = vector.broadcast %cst_429 : f32 to vector<2x1xf32>
    %942 = arith.addf %941, %940 : vector<2x1xf32>
    %943 = arith.divf %941, %942 : vector<2x1xf32>
    %944 = tpu.concatenate %895, %926 in 1 : vector<2x16xf32>, vector<2x32xf32> -> vector<2x48xf32>
    %c0_430 = arith.constant 0 : index
    %c0_431 = arith.constant 0 : index
    %945 = vector.load %arg13[%c0_430, %c0_431] : memref<48x16xf32, #tpu.memory_space<vmem>>, vector<48x16xf32>
    %cst_432 = arith.constant dense<0.000000e+00> : vector<2x16xf32>
    %946 = tpu.matmul %944, %945, %cst_432 {dimension_numbers = #tpu.dot_dimension_numbers<[1], [0], [0], [1], [0, 0, 1, 1], [], []>} : vector<2x48xf32>, vector<48x16xf32>, vector<2x16xf32> -> vector<2x16xf32>
    %c11_433 = arith.constant 11 : index
    %c0_434 = arith.constant 0 : index
    %947 = vector.load %arg16[%c11_433, %c0_434] : memref<16x128xf32, #tpu.memory_space<vmem>>, vector<1x16xf32>
    %948 = vector.broadcast %947 : vector<1x16xf32> to vector<2x16xf32>
    %949 = arith.addf %946, %948 : vector<2x16xf32>
    %cst_435 = arith.constant 0.000000e+00 : f32
    %950 = vector.broadcast %cst_435 : f32 to vector<2x16xf32>
    %951 = arith.maximumf %949, %950 : vector<2x16xf32>
    %c0_436 = arith.constant 0 : index
    %c0_437 = arith.constant 0 : index
    %952 = vector.load %arg14[%c0_436, %c0_437] : memref<16x128xf32, #tpu.memory_space<vmem>>, vector<16x128xf32>
    %cst_438 = arith.constant dense<0.000000e+00> : vector<2x128xf32>
    %953 = tpu.matmul %951, %952, %cst_438 {dimension_numbers = #tpu.dot_dimension_numbers<[1], [0], [0], [1], [0, 0, 1, 1], [], []>} : vector<2x16xf32>, vector<16x128xf32>, vector<2x128xf32> -> vector<2x128xf32>
    %c0_439 = arith.constant 0 : index
    %c0_440 = arith.constant 0 : index
    %954 = vector.load %arg15[%c0_439, %c0_440] : memref<1x128xf32, #tpu.memory_space<vmem>>, vector<1x128xf32>
    %955 = vector.broadcast %954 : vector<1x128xf32> to vector<2x128xf32>
    %956 = arith.addf %953, %955 : vector<2x128xf32>
    %cst_441 = arith.constant dense<0xFF800000> : vector<2xf32>
    %957 = vector.multi_reduction <maximumf>, %956, %cst_441 [1] : vector<2x128xf32> to vector<2xf32>
    %958 = vector.shape_cast %957 : vector<2xf32> to vector<2x1xf32>
    %959 = vector.broadcast %958 : vector<2x1xf32> to vector<2x128xf32>
    %960 = arith.subf %956, %959 : vector<2x128xf32>
    %961 = math.exp %960 : vector<2x128xf32>
    %cst_442 = arith.constant dense<0.000000e+00> : vector<2xf32>
    %962 = vector.multi_reduction <add>, %961, %cst_442 [1] : vector<2x128xf32> to vector<2xf32>
    %963 = vector.shape_cast %962 : vector<2xf32> to vector<2x1xf32>
    %964 = vector.broadcast %963 : vector<2x1xf32> to vector<2x128xf32>
    %965 = arith.divf %961, %964 : vector<2x128xf32>
    %cst_443 = arith.constant 1.000000e+00 : f32
    %966 = vector.broadcast %cst_443 : f32 to vector<2x1xf32>
    %967 = arith.subf %966, %943 : vector<2x1xf32>
    %968 = vector.broadcast %967 : vector<2x1xf32> to vector<2x8xf32>
    %969 = arith.mulf %968, %923 : vector<2x8xf32>
    %970 = vector.broadcast %943 : vector<2x1xf32> to vector<2x128xf32>
    %971 = arith.mulf %970, %965 : vector<2x128xf32>
    %c0_444 = arith.constant 0 : index
    %c0_445 = arith.constant 0 : index
    %c0_446 = arith.constant 0 : index
    %972 = vector.load %arg3[%c0_444, %c0_445, %c0_446] : memref<2x8x128xf32, #tpu.memory_space<vmem>>, vector<2x8x128xf32>
    %973 = vector.shape_cast %969 : vector<2x8xf32> to vector<2x1x8xf32>
    "tpu.trace_start"() <{level = 10 : i32, message = "bqk,bkn->bqn"}> : () -> ()
    %cst_447 = arith.constant dense<0.000000e+00> : vector<2x1x128xf32>
    %974 = tpu.matmul %973, %972, %cst_447 {dimension_numbers = #tpu.dot_dimension_numbers<[2], [1], [1], [2], [0, 0, 0, 1, 1, 2], [0], [0]>} : vector<2x1x8xf32>, vector<2x8x128xf32>, vector<2x1x128xf32> -> vector<2x1x128xf32>
    "tpu.trace_stop"() : () -> ()
    %975 = vector.shape_cast %974 : vector<2x1x128xf32> to vector<2x128xf32>
    %976 = arith.addf %971, %975 : vector<2x128xf32>
    %c3_448 = arith.constant 3 : index
    %c0_449 = arith.constant 0 : index
    %c0_450 = arith.constant 0 : index
    %977 = vector.load %arg4[%c3_448, %c0_449, %c0_450] : memref<4x2x128xf32, #tpu.memory_space<vmem>>, vector<1x2x128xf32>
    %978 = vector.shape_cast %977 : vector<1x2x128xf32> to vector<2x128xf32>
    %979 = arith.mulf %976, %978 : vector<2x128xf32>
    %cst_451 = arith.constant dense<0.000000e+00> : vector<2xf32>
    %980 = vector.multi_reduction <add>, %979, %cst_451 [1] : vector<2x128xf32> to vector<2xf32>
    %981 = vector.shape_cast %980 : vector<2xf32> to vector<2x1xf32>
    %cst_452 = arith.constant 9.99999996E-13 : f32
    %982 = vector.broadcast %cst_452 : f32 to vector<2x1xf32>
    %983 = arith.addf %981, %982 : vector<2x1xf32>
    %984 = math.log %983 : vector<2x1xf32>
    %cst_453 = arith.constant 0.000000e+00 : f32
    %985 = vector.broadcast %cst_453 : f32 to vector<2x1xf32>
    %986 = arith.subf %985, %984 : vector<2x1xf32>
    %cst_454 = arith.constant 1.000000e+00 : f32
    %987 = vector.broadcast %cst_454 : f32 to vector<2x1xf32>
    %988 = arith.mulf %987, %929 : vector<2x1xf32>
    %989 = arith.addf %986, %988 : vector<2x1xf32>
    %c3_455 = arith.constant 3 : index
    %c0_456 = arith.constant 0 : index
    %c0_457 = arith.constant 0 : index
    %990 = vector.load %arg5[%c3_455, %c0_456, %c0_457] : memref<4x2x1xf32, #tpu.memory_space<vmem>>, vector<1x2x1xf32>
    %991 = vector.shape_cast %990 : vector<1x2x1xf32> to vector<2x1xf32>
    %992 = arith.mulf %989, %991 : vector<2x1xf32>
    %993 = arith.addf %863, %992 : vector<2x1xf32>
    %c0_458 = arith.constant 0 : index
    %c0_459 = arith.constant 0 : index
    %994 = vector.load %arg6[%c0_458, %c0_459] : memref<2x1xf32, #tpu.memory_space<vmem>>, vector<2x1xf32>
    %995 = arith.divf %993, %994 : vector<2x1xf32>
    %cst_460 = arith.constant dense<0.000000e+00> : vector<1xf32>
    %996 = vector.multi_reduction <add>, %995, %cst_460 [0] : vector<2x1xf32> to vector<1xf32>
    %997 = vector.shape_cast %996 : vector<1xf32> to vector<1x1xf32>
    %cst_461 = arith.constant 5.000000e-01 : f32
    %998 = vector.broadcast %cst_461 : f32 to vector<1x1xf32>
    %999 = arith.mulf %997, %998 : vector<1x1xf32>
    %c0_462 = arith.constant 0 : index
    %c0_463 = arith.constant 0 : index
    %1000 = vector.load %arg17[%c0_462, %c0_463] : memref<1x1xf32, #tpu.memory_space<vmem>>, vector<1x1xf32>
    tpu.vector_store %arg17[%c0_462, %c0_463], %999 {strides = array<i32>} : memref<1x1xf32, #tpu.memory_space<vmem>>, vector<1x1xf32>,
    return
  }
}

</mosaic_0001>

<llo_original>
// kernel: pointer_generator_forward.1
$region0: #{pointer_generator_forward.1}
  #allocation0 [shape = 'u32[]', space=smem, size = 0x4, offset = 0x4, fixed_abs, tag = 'smem constant byte address 0x4 - core index']
  #allocation1 [shape = 'u32[144,128]{1,0:T(1,128)}', space=vmem, size = 0x12000, scoped, tag = 'internal scratch']
  #allocation2 [shape = 'f32[2,8,32]{2,1,0:T(8,128)}', space=vmem, size = 0x2000, scoped, tag = 'scratch operand']
  %s0 = inlined_call_operand.vmem [shape: f32[8,2,32], index: 0, kind: input, shape index: {}]
  %s1 = inlined_call_operand.vmem [shape: f32[4,2,32], index: 1, kind: input, shape index: {}]
  %s2 = inlined_call_operand.vmem [shape: f32[2,8], index: 2, kind: input, shape index: {}]
  %s3 = inlined_call_operand.vmem [shape: f32[2,8,128], index: 3, kind: input, shape index: {}]
  %s4 = inlined_call_operand.vmem [shape: f32[4,2,128], index: 4, kind: input, shape index: {}]
  %s5 = inlined_call_operand.vmem [shape: f32[4,2,1], index: 5, kind: input, shape index: {}]
  %s6 = inlined_call_operand.vmem [shape: f32[2,1], index: 6, kind: input, shape index: {}]
  %s7 = inlined_call_operand.vmem [shape: f32[48,64], index: 7, kind: input, shape index: {}]
  %s8 = inlined_call_operand.vmem [shape: f32[48,64], index: 8, kind: input, shape index: {}]
  %s9 = inlined_call_operand.vmem [shape: f32[32,32], index: 9, kind: input, shape index: {}]
  %s10 = inlined_call_operand.vmem [shape: f32[64,32], index: 10, kind: input, shape index: {}]
  %s11 = inlined_call_operand.vmem [shape: f32[48,64], index: 11, kind: input, shape index: {}]
  %s12 = inlined_call_operand.vmem [shape: f32[32,32], index: 12, kind: input, shape index: {}]
  %s13 = inlined_call_operand.vmem [shape: f32[48,16], index: 13, kind: input, shape index: {}]
  %s14 = inlined_call_operand.vmem [shape: f32[16,128], index: 14, kind: input, shape index: {}]
  %s15 = inlined_call_operand.vmem [shape: f32[1,128], index: 15, kind: input, shape index: {}]
  %s16 = inlined_call_operand.vmem [shape: f32[16,128], index: 16, kind: input, shape index: {}]
  %s17 = inlined_call_operand.hbm [shape: f32[1,1], index: 17, kind: output, shape index: {}]
  %s18 = sld [smem:[#allocation0]]
  $region78: #{pointer_generator_forward.1} parent=0
    _
  %s20 = ssub.s32 1, %s18
  %s21 = scalar_select 0, %s20, %s18
  $region1: #{pointer_generator_forward.1} parent=0
    #allocation3 [shape = 'u8[512]{0}', space=vmem, size = 0x400, scoped, tag = 'output window, operand 0, single buffered']
    #allocation4 [shape = 's32[1]{0}', space=sflag, size = 0x4, scoped, tag = 'scoped memory for pointer_generator_forward.1']
    %22 = vsyncpa [#allocation4], 0
    // Predicated region
    $region2: #{pointer_generator_forward.1} parent=1 // pred_check
      _
    $region3: #{pointer_generator_forward.1} parent=1 // pred_check_branch
      %24 = sbr.rel (0) target = $region5
    $region4: #{pointer_generator_forward.1} parent=1 // pred_region
      _
    $region5: #{pointer_generator_forward.1} parent=1 // pred_fallthru
      _
    // Predicated region
    $region6: #{pointer_generator_forward.1} parent=1 // pred_check
      _
    $region7: #{pointer_generator_forward.1} parent=1 // pred_check_branch
      %26 = sbr.rel (0) target = $region9
    $region8: #{pointer_generator_forward.1} parent=1 // pred_region
      _
    $region9: #{pointer_generator_forward.1} parent=1 // pred_fallthru
      _
    // Predicated region
    $region10: #{pointer_generator_forward.1} parent=1 // pred_check
      _
    $region11: #{pointer_generator_forward.1} parent=1 // pred_check_branch
      %28 = sbr.rel (0) target = $region13
    $region12: #{pointer_generator_forward.1} parent=1 // pred_region
      _
    $region13: #{pointer_generator_forward.1} parent=1 // pred_fallthru
      _
    // Predicated region
    $region14: #{pointer_generator_forward.1} parent=1 // pred_check
      _
    $region15: #{pointer_generator_forward.1} parent=1 // pred_check_branch
      %30 = sbr.rel (0) target = $region17
    $region16: #{pointer_generator_forward.1} parent=1 // pred_region
      _
    $region17: #{pointer_generator_forward.1} parent=1 // pred_fallthru
      _
    // Predicated region
    $region18: #{pointer_generator_forward.1} parent=1 // pred_check
      _
    $region19: #{pointer_generator_forward.1} parent=1 // pred_check_branch
      %32 = sbr.rel (0) target = $region21
    $region20: #{pointer_generator_forward.1} parent=1 // pred_region
      _
    $region21: #{pointer_generator_forward.1} parent=1 // pred_fallthru
      _
    // Predicated region
    $region22: #{pointer_generator_forward.1} parent=1 // pred_check
      _
    $region23: #{pointer_generator_forward.1} parent=1 // pred_check_branch
      %34 = sbr.rel (0) target = $region25
    $region24: #{pointer_generator_forward.1} parent=1 // pred_region
      _
    $region25: #{pointer_generator_forward.1} parent=1 // pred_fallthru
      _
    // Predicated region
    $region26: #{pointer_generator_forward.1} parent=1 // pred_check
      _
    $region27: #{pointer_generator_forward.1} parent=1 // pred_check_branch
      %36 = sbr.rel (0) target = $region29
    $region28: #{pointer_generator_forward.1} parent=1 // pred_region
      _
    $region29: #{pointer_generator_forward.1} parent=1 // pred_fallthru
      _
    // Predicated region
    $region30: #{pointer_generator_forward.1} parent=1 // pred_check
      _
    $region31: #{pointer_generator_forward.1} parent=1 // pred_check_branch
      %38 = sbr.rel (0) target = $region33
    $region32: #{pointer_generator_forward.1} parent=1 // pred_region
      _
    $region33: #{pointer_generator_forward.1} parent=1 // pred_fallthru
      _
    // Predicated region
    $region34: #{pointer_generator_forward.1} parent=1 // pred_check
      _
    $region35: #{pointer_generator_forward.1} parent=1 // pred_check_branch
      %40 = sbr.rel (0) target = $region37
    $region36: #{pointer_generator_forward.1} parent=1 // pred_region
      _
    $region37: #{pointer_generator_forward.1} parent=1 // pred_fallthru
      _
    // Predicated region
    $region38: #{pointer_generator_forward.1} parent=1 // pred_check
      _
    $region39: #{pointer_generator_forward.1} parent=1 // pred_check_branch
      %42 = sbr.rel (0) target = $region41
    $region40: #{pointer_generator_forward.1} parent=1 // pred_region
      _
    $region41: #{pointer_generator_forward.1} parent=1 // pred_fallthru
      _
    // Predicated region
    $region42: #{pointer_generator_forward.1} parent=1 // pred_check
      _
    $region43: #{pointer_generator_forward.1} parent=1 // pred_check_branch
      %44 = sbr.rel (0) target = $region45
    $region44: #{pointer_generator_forward.1} parent=1 // pred_region
      _
    $region45: #{pointer_generator_forward.1} parent=1 // pred_fallthru
      _
    // Predicated region
    $region46: #{pointer_generator_forward.1} parent=1 // pred_check
      _
    $region47: #{pointer_generator_forward.1} parent=1 // pred_check_branch
      %46 = sbr.rel (0) target = $region49
    $region48: #{pointer_generator_forward.1} parent=1 // pred_region
      _
    $region49: #{pointer_generator_forward.1} parent=1 // pred_fallthru
      _
    // Predicated region
    $region50: #{pointer_generator_forward.1} parent=1 // pred_check
      _
    $region51: #{pointer_generator_forward.1} parent=1 // pred_check_branch
      %48 = sbr.rel (0) target = $region53
    $region52: #{pointer_generator_forward.1} parent=1 // pred_region
      _
    $region53: #{pointer_generator_forward.1} parent=1 // pred_fallthru
      _
    // Predicated region
    $region54: #{pointer_generator_forward.1} parent=1 // pred_check
      _
    $region55: #{pointer_generator_forward.1} parent=1 // pred_check_branch
      %50 = sbr.rel (0) target = $region57
    $region56: #{pointer_generator_forward.1} parent=1 // pred_region
      _
    $region57: #{pointer_generator_forward.1} parent=1 // pred_fallthru
      _
    // Predicated region
    $region58: #{pointer_generator_forward.1} parent=1 // pred_check
      _
    $region59: #{pointer_generator_forward.1} parent=1 // pred_check_branch
      %52 = sbr.rel (0) target = $region61
    $region60: #{pointer_generator_forward.1} parent=1 // pred_region
      _
    $region61: #{pointer_generator_forward.1} parent=1 // pred_fallthru
      _
    // Predicated region
    $region62: #{pointer_generator_forward.1} parent=1 // pred_check
      _
    $region63: #{pointer_generator_forward.1} parent=1 // pred_check_branch
      %54 = sbr.rel (0) target = $region65
    $region64: #{pointer_generator_forward.1} parent=1 // pred_region
      _
    $region65: #{pointer_generator_forward.1} parent=1 // pred_fallthru
      _
    // Predicated region
    $region66: #{pointer_generator_forward.1} parent=1 // pred_check
      _
    $region67: #{pointer_generator_forward.1} parent=1 // pred_check_branch
      %56 = sbr.rel (0) target = $region69
    $region68: #{pointer_generator_forward.1} parent=1 // pred_region
      _
    $region69: #{pointer_generator_forward.1} parent=1 // pred_fallthru
      _
    %v57 = vld [vmem:[%s0] sm:$0x3]
    %v58 = vld [vmem:[%s16] sm:$0x1]
    %vm59 = vcmask 261120
    %v60 = vsel %vm59, %v57, 0.0
    %v61 = vld [vmem:[%s7] sm:$0xff]
    %v62 = vld [vmem:[%s7 + $0x8] sm:$0xff]
    %v63 = vld [vmem:[%s7 + $0x10] sm:$0xff]
    %v64 = vld [vmem:[%s7 + $0x18] sm:$0xff]
    %v65 = vld [vmem:[%s7 + $0x20] sm:$0xff]
    %v66 = vld [vmem:[%s7 + $0x28] sm:$0xff]
    %v67 = vlaneseq
    %v68 = vshrl.u32 %v67, 7
    %v69 = vsub.s32 0, %v68
    %v70 = vrot.slane %v58, %v69
    %vm71 = vcmask 392192
    %v73 = vsel %vm71, %v60, 0
    %75 = vmatprep.subr.mxu0 0.0
    %76 = vmatpush1.msra.mxu0 0.0
    %77 = vmatprep.subr.mxu0 0.0
    %78 = vmatpush1.msra.mxu0 0.0
    %79 = vmatprep.subr.mxu0 0.0
    %80 = vmatpush1.msra.mxu0 0.0
    %81 = vmatprep.subr.mxu0 0.0
    %82 = vmatpush1.msra.mxu0 0.0
    %83 = vmatprep.subr.mxu0 0.0
    %84 = vmatpush1.msra.mxu0 0.0
    %85 = vmatprep.subr.mxu0 0.0
    %86 = vmatpush1.msra.mxu0 0.0
    %87 = vmatprep.subr.mxu0 0.0
    %88 = vmatpush1.msra.mxu0 0.0
    %89 = vmatprep.subr.mxu0 0.0
    %90 = vmatpush1.msra.mxu0 0.0
    %91 = vmatprep.subr.mxu0 0.0
    %92 = vmatpush1.msra.mxu0 0.0
    %93 = vmatprep.subr.mxu0 0.0
    %94 = vmatpush1.msra.mxu0 0.0
    %95 = vmatprep.subr.mxu0 0.0
    %96 = vmatpush1.msra.mxu0 %v66
    %97 = vmatprep.subr.mxu0 0.0
    %98 = vmatpush1.msra.mxu0 %v65
    %99 = vmatprep.subr.mxu0 0.0
    %100 = vmatpush1.msra.mxu0 %v64
    %101 = vmatprep.subr.mxu0 0.0
    %102 = vmatpush1.msra.mxu0 %v63
    %103 = vmatprep.subr.mxu0 0.0
    %104 = vmatpush1.msra.mxu0 %v62
    %105 = vmatprep.subr.mxu0 0.0
    %106 = vmatpush1.msra.mxu0 %v61
    %107 = vmatprep.subr.mxu0 0.0
    %108 = vmatpush2.msra.mxu0 0.0
    %109 = vmatprep.subr.mxu0 0.0
    %110 = vmatpush2.msra.mxu0 0.0
    %111 = vmatprep.subr.mxu0 0.0
    %112 = vmatpush2.msra.mxu0 0.0
    %113 = vmatprep.subr.mxu0 0.0
    %114 = vmatpush2.msra.mxu0 0.0
    %115 = vmatprep.subr.mxu0 0.0
    %116 = vmatpush2.msra.mxu0 0.0
    %117 = vmatprep.subr.mxu0 0.0
    %118 = vmatpush2.msra.mxu0 0.0
    %119 = vmatprep.subr.mxu0 0.0
    %120 = vmatpush2.msra.mxu0 0.0
    %121 = vmatprep.subr.mxu0 0.0
    %122 = vmatpush2.msra.mxu0 0.0
    %123 = vmatprep.subr.mxu0 0.0
    %124 = vmatpush2.msra.mxu0 0.0
    %125 = vmatprep.subr.mxu0 0.0
    %126 = vmatpush2.msra.mxu0 0.0
    %127 = vmatprep.subr.mxu0 0.0
    %128 = vmatpush2.msra.mxu0 0.0
    %129 = vmatprep.subr.mxu0 0.0
    %130 = vmatpush2.msra.mxu0 0.0
    %131 = vmatprep.subr.mxu0 0.0
    %132 = vmatpush2.msra.mxu0 0.0
    %133 = vmatprep.subr.mxu0 0.0
    %134 = vmatpush2.msra.mxu0 0.0
    %135 = vmatprep.subr.mxu0 0.0
    %136 = vmatpush2.msra.mxu0 0.0
    %137 = vmatprep.subr.mxu0 0.0
    %138 = vmatpush2.msra.mxu0 0.0
    %139 = vmatprep.mubr.f32.mxu0 0.0
    %140 = vmatmul.mubr.f32.gmra.mxu0 %v73
    %v141 = vpop.f32.mrf.mxu0
    %v142 = vadd.f32 %v70, %v141
    %v143 = vpop.f32.mrf.mxu0
    %144 = vdwg.mxu0
    %v145 = vxor.u32 %v142, 2147483648
    %v146 = vmul.f32 %v145, 1.442695
    %v147 = vpow.pop %v146
    %v148 = vadd.f32 %v147, 1.0
    %v149 = vrcp.pop %v148
    %v150 = vmul.f32 1.0, %v149
    %v151 = vtanh.pop %v142
    %v152 = vmul.f32 %v150, 0.0
    %154 = vrot.lane.b32.xlu0 %v151, 80
    %v155 = vpop.permute.xlu0 %154
    %v157 = vmul.f32 %v150, %v155
    %159 = vrot.lane.b32.xlu0 %v157, 16
    %v160 = vpop.permute.xlu0 %159
    %v162 = vadd.f32 %v152, %v160
    %v163 = vtanh.pop %v162
    %165 = vrot.lane.b32.xlu0 %v163, 16
    %v166 = vpop.permute.xlu0 %165
    %v168 = vmul.f32 %v150, %v166
    %v171 = vunpack.c.l.s4 1966171168
    %v172 = vunpack.c.0.s8 %v171
    %v173 = vlaneseq
    %v174 = vshrl.u32 %v173, 7
    %v175 = vsub.s32 %v172, %v174
    %v176 = vrot.slane %v168, %v175
    %v177 = vcombine.high %v176, %v176
    %v179 = vunpack.c.l.s4 1966171168
    %v180 = vunpack.c.0.s8 %v179
    %v181 = vlaneseq
    %v182 = vshrl.u32 %v181, 7
    %v183 = vsub.s32 %v180, %v182
    %v184 = vrot.slane %v176, %v183
    %v186 = vunpack.c.l.s4 1966171168
    %v187 = vunpack.c.0.s8 %v186
    %v188 = vlaneseq
    %v189 = vshrl.u32 %v188, 7
    %v190 = vsub.s32 %v187, %v189
    %v191 = vrot.slane %v177, %v190
    %v192 = vlaneseq
    %v193 = vshrl.u32 %v192, 7
    %v194 = vsub.s32 0, %v193
    %v195 = vrot.slane %v184, %v194
    %v196 = vlaneseq
    %v197 = vshrl.u32 %v196, 7
    %v198 = vsub.s32 0, %v197
    %v199 = vrot.slane %v191, %v198
    %200 = vrot.lane.b32.xlu0 %v195, 96
    %v201 = vpop.permute.xlu0 %200
    %202 = vrot.lane.b32.xlu0 %v199, 96
    %v203 = vpop.permute.xlu0 %202
    %vm206 = vcmask 122880
    %207 = vst.msk [vmem:[#allocation2] sm:$0x1] %vm206, %v201
    %208 = vst.msk [vmem:[#allocation2 + $0x8] sm:$0x1] %vm206, %v203
    %s209 = scalar_lea.vmem %s0, 2
    %v210 = vld [vmem:[%s209] sm:$0x3]
    %v211 = vld [vmem:[%s16] sm:$0x1]
    %v212 = vsel %vm59, %v210, %v168
    %v213 = vld [vmem:[%s7] sm:$0xff]
    %v214 = vld [vmem:[%s7 + $0x8] sm:$0xff]
    %v215 = vld [vmem:[%s7 + $0x10] sm:$0xff]
    %v216 = vld [vmem:[%s7 + $0x18] sm:$0xff]
    %v217 = vld [vmem:[%s7 + $0x20] sm:$0xff]
    %v218 = vld [vmem:[%s7 + $0x28] sm:$0xff]
    %v219 = vlaneseq
    %v220 = vshrl.u32 %v219, 7
    %v221 = vsub.s32 0, %v220
    %v222 = vrot.slane %v211, %v221
    %v224 = vsel %vm71, %v212, 0
    %226 = vmatprep.subr.mxu0 0.0
    %227 = vmatpush1.msra.mxu0 0.0
    %228 = vmatprep.subr.mxu0 0.0
    %229 = vmatpush1.msra.mxu0 0.0
    %230 = vmatprep.subr.mxu0 0.0
    %231 = vmatpush1.msra.mxu0 0.0
    %232 = vmatprep.subr.mxu0 0.0
    %233 = vmatpush1.msra.mxu0 0.0
    %234 = vmatprep.subr.mxu0 0.0
    %235 = vmatpush1.msra.mxu0 0.0
    %236 = vmatprep.subr.mxu0 0.0
    %237 = vmatpush1.msra.mxu0 0.0
    %238 = vmatprep.subr.mxu0 0.0
    %239 = vmatpush1.msra.mxu0 0.0
    %240 = vmatprep.subr.mxu0 0.0
    %241 = vmatpush1.msra.mxu0 0.0
    %242 = vmatprep.subr.mxu0 0.0
    %243 = vmatpush1.msra.mxu0 0.0
    %244 = vmatprep.subr.mxu0 0.0
    %245 = vmatpush1.msra.mxu0 0.0
    %246 = vmatprep.subr.mxu0 0.0
    %247 = vmatpush1.msra.mxu0 %v218
    %248 = vmatprep.subr.mxu0 0.0
    %249 = vmatpush1.msra.mxu0 %v217
    %250 = vmatprep.subr.mxu0 0.0
    %251 = vmatpush1.msra.mxu0 %v216
    %252 = vmatprep.subr.mxu0 0.0
    %253 = vmatpush1.msra.mxu0 %v215
    %254 = vmatprep.subr.mxu0 0.0
    %255 = vmatpush1.msra.mxu0 %v214
    %256 = vmatprep.subr.mxu0 0.0
    %257 = vmatpush1.msra.mxu0 %v213
    %258 = vmatprep.subr.mxu0 0.0
    %259 = vmatpush2.msra.mxu0 0.0
    %260 = vmatprep.subr.mxu0 0.0
    %261 = vmatpush2.msra.mxu0 0.0
    %262 = vmatprep.subr.mxu0 0.0
    %263 = vmatpush2.msra.mxu0 0.0
    %264 = vmatprep.subr.mxu0 0.0
    %265 = vmatpush2.msra.mxu0 0.0
    %266 = vmatprep.subr.mxu0 0.0
    %267 = vmatpush2.msra.mxu0 0.0
    %268 = vmatprep.subr.mxu0 0.0
    %269 = vmatpush2.msra.mxu0 0.0
    %270 = vmatprep.subr.mxu0 0.0
    %271 = vmatpush2.msra.mxu0 0.0
    %272 = vmatprep.subr.mxu0 0.0
    %273 = vmatpush2.msra.mxu0 0.0
    %274 = vmatprep.subr.mxu0 0.0
    %275 = vmatpush2.msra.mxu0 0.0
    %276 = vmatprep.subr.mxu0 0.0
    %277 = vmatpush2.msra.mxu0 0.0
    %278 = vmatprep.subr.mxu0 0.0
    %279 = vmatpush2.msra.mxu0 0.0
    %280 = vmatprep.subr.mxu0 0.0
    %281 = vmatpush2.msra.mxu0 0.0
    %282 = vmatprep.subr.mxu0 0.0
    %283 = vmatpush2.msra.mxu0 0.0
    %284 = vmatprep.subr.mxu0 0.0
    %285 = vmatpush2.msra.mxu0 0.0
    %286 = vmatprep.subr.mxu0 0.0
    %287 = vmatpush2.msra.mxu0 0.0
    %288 = vmatprep.subr.mxu0 0.0
    %289 = vmatpush2.msra.mxu0 0.0
    %290 = vmatprep.mubr.f32.mxu0 0.0
    %291 = vmatmul.mubr.f32.gmra.mxu0 %v224
    %v292 = vpop.f32.mrf.mxu0
    %v293 = vadd.f32 %v222, %v292
    %v294 = vpop.f32.mrf.mxu0
    %295 = vdwg.mxu0
    %v296 = vxor.u32 %v293, 2147483648
    %v297 = vmul.f32 %v296, 1.442695
    %v298 = vpow.pop %v297
    %v299 = vadd.f32 %v298, 1.0
    %v300 = vrcp.pop %v299
    %v301 = vmul.f32 1.0, %v300
    %v302 = vtanh.pop %v293
    %v303 = vmul.f32 %v301, %v162
    %305 = vrot.lane.b32.xlu0 %v302, 80
    %v306 = vpop.permute.xlu0 %305
    %v308 = vmul.f32 %v301, %v306
    %310 = vrot.lane.b32.xlu0 %v308, 16
    %v311 = vpop.permute.xlu0 %310
    %v313 = vadd.f32 %v303, %v311
    %v314 = vtanh.pop %v313
    %316 = vrot.lane.b32.xlu0 %v314, 16
    %v317 = vpop.permute.xlu0 %316
    %v319 = vmul.f32 %v301, %v317
    %v322 = vunpack.c.l.s4 1966171168
    %v323 = vunpack.c.0.s8 %v322
    %v324 = vlaneseq
    %v325 = vshrl.u32 %v324, 7
    %v326 = vsub.s32 %v323, %v325
    %v327 = vrot.slane %v319, %v326
    %v328 = vcombine.high %v327, %v327
    %v330 = vunpack.c.l.s4 1966171168
    %v331 = vunpack.c.0.s8 %v330
    %v332 = vlaneseq
    %v333 = vshrl.u32 %v332, 7
    %v334 = vsub.s32 %v331, %v333
    %v335 = vrot.slane %v327, %v334
    %v337 = vunpack.c.l.s4 1966171168
    %v338 = vunpack.c.0.s8 %v337
    %v339 = vlaneseq
    %v340 = vshrl.u32 %v339, 7
    %v341 = vsub.s32 %v338, %v340
    %v342 = vrot.slane %v328, %v341
    %v343 = vlaneseq
    %v344 = vshrl.u32 %v343, 7
    %v345 = vsub.s32 0, %v344
    %v346 = vrot.slane %v335, %v345
    %v347 = vlaneseq
    %v348 = vshrl.u32 %v347, 7
    %v349 = vsub.s32 0, %v348
    %v350 = vrot.slane %v342, %v349
    %351 = vrot.lane.b32.xlu0 %v346, 96
    %v352 = vpop.permute.xlu0 %351
    %353 = vrot.lane.b32.xlu0 %v350, 96
    %v354 = vpop.permute.xlu0 %353
    %357 = vst.msk [vmem:[#allocation2 + $0x1] sm:$0x1] %vm206, %v352
    %358 = vst.msk [vmem:[#allocation2 + $0x9] sm:$0x1] %vm206, %v354
    %s359 = scalar_lea.vmem %s0, 4
    %v360 = vld [vmem:[%s359] sm:$0x3]
    %v361 = vld [vmem:[%s16] sm:$0x1]
    %v362 = vsel %vm59, %v360, %v319
    %v363 = vld [vmem:[%s7] sm:$0xff]
    %v364 = vld [vmem:[%s7 + $0x8] sm:$0xff]
    %v365 = vld [vmem:[%s7 + $0x10] sm:$0xff]
    %v366 = vld [vmem:[%s7 + $0x18] sm:$0xff]
    %v367 = vld [vmem:[%s7 + $0x20] sm:$0xff]
    %v368 = vld [vmem:[%s7 + $0x28] sm:$0xff]
    %v369 = vlaneseq
    %v370 = vshrl.u32 %v369, 7
    %v371 = vsub.s32 0, %v370
    %v372 = vrot.slane %v361, %v371
    %v374 = vsel %vm71, %v362, 0
    %376 = vmatprep.subr.mxu0 0.0
    %377 = vmatpush1.msra.mxu0 0.0
    %378 = vmatprep.subr.mxu0 0.0
    %379 = vmatpush1.msra.mxu0 0.0
    %380 = vmatprep.subr.mxu0 0.0
    %381 = vmatpush1.msra.mxu0 0.0
    %382 = vmatprep.subr.mxu0 0.0
    %383 = vmatpush1.msra.mxu0 0.0
    %384 = vmatprep.subr.mxu0 0.0
    %385 = vmatpush1.msra.mxu0 0.0
    %386 = vmatprep.subr.mxu0 0.0
    %387 = vmatpush1.msra.mxu0 0.0
    %388 = vmatprep.subr.mxu0 0.0
    %389 = vmatpush1.msra.mxu0 0.0
    %390 = vmatprep.subr.mxu0 0.0
    %391 = vmatpush1.msra.mxu0 0.0
    %392 = vmatprep.subr.mxu0 0.0
    %393 = vmatpush1.msra.mxu0 0.0
    %394 = vmatprep.subr.mxu0 0.0
    %395 = vmatpush1.msra.mxu0 0.0
    %396 = vmatprep.subr.mxu0 0.0
    %397 = vmatpush1.msra.mxu0 %v368
    %398 = vmatprep.subr.mxu0 0.0
    %399 = vmatpush1.msra.mxu0 %v367
    %400 = vmatprep.subr.mxu0 0.0
    %401 = vmatpush1.msra.mxu0 %v366
    %402 = vmatprep.subr.mxu0 0.0
    %403 = vmatpush1.msra.mxu0 %v365
    %404 = vmatprep.subr.mxu0 0.0
    %405 = vmatpush1.msra.mxu0 %v364
    %406 = vmatprep.subr.mxu0 0.0
    %407 = vmatpush1.msra.mxu0 %v363
    %408 = vmatprep.subr.mxu0 0.0
    %409 = vmatpush2.msra.mxu0 0.0
    %410 = vmatprep.subr.mxu0 0.0
    %411 = vmatpush2.msra.mxu0 0.0
    %412 = vmatprep.subr.mxu0 0.0
    %413 = vmatpush2.msra.mxu0 0.0
    %414 = vmatprep.subr.mxu0 0.0
    %415 = vmatpush2.msra.mxu0 0.0
    %416 = vmatprep.subr.mxu0 0.0
    %417 = vmatpush2.msra.mxu0 0.0
    %418 = vmatprep.subr.mxu0 0.0
    %419 = vmatpush2.msra.mxu0 0.0
    %420 = vmatprep.subr.mxu0 0.0
    %421 = vmatpush2.msra.mxu0 0.0
    %422 = vmatprep.subr.mxu0 0.0
    %423 = vmatpush2.msra.mxu0 0.0
    %424 = vmatprep.subr.mxu0 0.0
    %425 = vmatpush2.msra.mxu0 0.0
    %426 = vmatprep.subr.mxu0 0.0
    %427 = vmatpush2.msra.mxu0 0.0
    %428 = vmatprep.subr.mxu0 0.0
    %429 = vmatpush2.msra.mxu0 0.0
    %430 = vmatprep.subr.mxu0 0.0
    %431 = vmatpush2.msra.mxu0 0.0
    %432 = vmatprep.subr.mxu0 0.0
    %433 = vmatpush2.msra.mxu0 0.0
    %434 = vmatprep.subr.mxu0 0.0
    %435 = vmatpush2.msra.mxu0 0.0
    %436 = vmatprep.subr.mxu0 0.0
    %437 = vmatpush2.msra.mxu0 0.0
    %438 = vmatprep.subr.mxu0 0.0
    %439 = vmatpush2.msra.mxu0 0.0
    %440 = vmatprep.mubr.f32.mxu0 0.0
    %441 = vmatmul.mubr.f32.gmra.mxu0 %v374
    %v442 = vpop.f32.mrf.mxu0
    %v443 = vadd.f32 %v372, %v442
    %v444 = vpop.f32.mrf.mxu0
    %445 = vdwg.mxu0
    %v446 = vxor.u32 %v443, 2147483648
    %v447 = vmul.f32 %v446, 1.442695
    %v448 = vpow.pop %v447
    %v449 = vadd.f32 %v448, 1.0
    %v450 = vrcp.pop %v449
    %v451 = vmul.f32 1.0, %v450
    %v452 = vtanh.pop %v443
    %v453 = vmul.f32 %v451, %v313
    %455 = vrot.lane.b32.xlu0 %v452, 80
    %v456 = vpop.permute.xlu0 %455
    %v458 = vmul.f32 %v451, %v456
    %460 = vrot.lane.b32.xlu0 %v458, 16
    %v461 = vpop.permute.xlu0 %460
    %v463 = vadd.f32 %v453, %v461
    %v464 = vtanh.pop %v463
    %466 = vrot.lane.b32.xlu0 %v464, 16
    %v467 = vpop.permute.xlu0 %466
    %v469 = vmul.f32 %v451, %v467
    %v472 = vunpack.c.l.s4 1966171168
    %v473 = vunpack.c.0.s8 %v472
    %v474 = vlaneseq
    %v475 = vshrl.u32 %v474, 7
    %v476 = vsub.s32 %v473, %v475
    %v477 = vrot.slane %v469, %v476
    %v478 = vcombine.high %v477, %v477
    %v480 = vunpack.c.l.s4 1966171168
    %v481 = vunpack.c.0.s8 %v480
    %v482 = vlaneseq
    %v483 = vshrl.u32 %v482, 7
    %v484 = vsub.s32 %v481, %v483
    %v485 = vrot.slane %v477, %v484
    %v487 = vunpack.c.l.s4 1966171168
    %v488 = vunpack.c.0.s8 %v487
    %v489 = vlaneseq
    %v490 = vshrl.u32 %v489, 7
    %v491 = vsub.s32 %v488, %v490
    %v492 = vrot.slane %v478, %v491
    %v493 = vlaneseq
    %v494 = vshrl.u32 %v493, 7
    %v495 = vsub.s32 0, %v494
    %v496 = vrot.slane %v485, %v495
    %v497 = vlaneseq
    %v498 = vshrl.u32 %v497, 7
    %v499 = vsub.s32 0, %v498
    %v500 = vrot.slane %v492, %v499
    %501 = vrot.lane.b32.xlu0 %v496, 96
    %v502 = vpop.permute.xlu0 %501
    %503 = vrot.lane.b32.xlu0 %v500, 96
    %v504 = vpop.permute.xlu0 %503
    %507 = vst.msk [vmem:[#allocation2 + $0x2] sm:$0x1] %vm206, %v502
    %508 = vst.msk [vmem:[#allocation2 + $0xa] sm:$0x1] %vm206, %v504
    %s509 = scalar_lea.vmem %s0, 6
    %v510 = vld [vmem:[%s509] sm:$0x3]
    %v511 = vld [vmem:[%s16] sm:$0x1]
    %v512 = vsel %vm59, %v510, %v469
    %v513 = vld [vmem:[%s7] sm:$0xff]
    %v514 = vld [vmem:[%s7 + $0x8] sm:$0xff]
    %v515 = vld [vmem:[%s7 + $0x10] sm:$0xff]
    %v516 = vld [vmem:[%s7 + $0x18] sm:$0xff]
    %v517 = vld [vmem:[%s7 + $0x20] sm:$0xff]
    %v518 = vld [vmem:[%s7 + $0x28] sm:$0xff]
    %v519 = vlaneseq
    %v520 = vshrl.u32 %v519, 7
    %v521 = vsub.s32 0, %v520
    %v522 = vrot.slane %v511, %v521
    %v524 = vsel %vm71, %v512, 0
    %526 = vmatprep.subr.mxu0 0.0
    %527 = vmatpush1.msra.mxu0 0.0
    %528 = vmatprep.subr.mxu0 0.0
    %529 = vmatpush1.msra.mxu0 0.0
    %530 = vmatprep.subr.mxu0 0.0
    %531 = vmatpush1.msra.mxu0 0.0
    %532 = vmatprep.subr.mxu0 0.0
    %533 = vmatpush1.msra.mxu0 0.0
    %534 = vmatprep.subr.mxu0 0.0
    %535 = vmatpush1.msra.mxu0 0.0
    %536 = vmatprep.subr.mxu0 0.0
    %537 = vmatpush1.msra.mxu0 0.0
    %538 = vmatprep.subr.mxu0 0.0
    %539 = vmatpush1.msra.mxu0 0.0
    %540 = vmatprep.subr.mxu0 0.0
    %541 = vmatpush1.msra.mxu0 0.0
    %542 = vmatprep.subr.mxu0 0.0
    %543 = vmatpush1.msra.mxu0 0.0
    %544 = vmatprep.subr.mxu0 0.0
    %545 = vmatpush1.msra.mxu0 0.0
    %546 = vmatprep.subr.mxu0 0.0
    %547 = vmatpush1.msra.mxu0 %v518
    %548 = vmatprep.subr.mxu0 0.0
    %549 = vmatpush1.msra.mxu0 %v517
    %550 = vmatprep.subr.mxu0 0.0
    %551 = vmatpush1.msra.mxu0 %v516
    %552 = vmatprep.subr.mxu0 0.0
    %553 = vmatpush1.msra.mxu0 %v515
    %554 = vmatprep.subr.mxu0 0.0
    %555 = vmatpush1.msra.mxu0 %v514
    %556 = vmatprep.subr.mxu0 0.0
    %557 = vmatpush1.msra.mxu0 %v513
    %558 = vmatprep.subr.mxu0 0.0
    %559 = vmatpush2.msra.mxu0 0.0
    %560 = vmatprep.subr.mxu0 0.0
    %561 = vmatpush2.msra.mxu0 0.0
    %562 = vmatprep.subr.mxu0 0.0
    %563 = vmatpush2.msra.mxu0 0.0
    %564 = vmatprep.subr.mxu0 0.0
    %565 = vmatpush2.msra.mxu0 0.0
    %566 = vmatprep.subr.mxu0 0.0
    %567 = vmatpush2.msra.mxu0 0.0
    %568 = vmatprep.subr.mxu0 0.0
    %569 = vmatpush2.msra.mxu0 0.0
    %570 = vmatprep.subr.mxu0 0.0
    %571 = vmatpush2.msra.mxu0 0.0
    %572 = vmatprep.subr.mxu0 0.0
    %573 = vmatpush2.msra.mxu0 0.0
    %574 = vmatprep.subr.mxu0 0.0
    %575 = vmatpush2.msra.mxu0 0.0
    %576 = vmatprep.subr.mxu0 0.0
    %577 = vmatpush2.msra.mxu0 0.0
    %578 = vmatprep.subr.mxu0 0.0
    %579 = vmatpush2.msra.mxu0 0.0
    %580 = vmatprep.subr.mxu0 0.0
    %581 = vmatpush2.msra.mxu0 0.0
    %582 = vmatprep.subr.mxu0 0.0
    %583 = vmatpush2.msra.mxu0 0.0
    %584 = vmatprep.subr.mxu0 0.0
    %585 = vmatpush2.msra.mxu0 0.0
    %586 = vmatprep.subr.mxu0 0.0
    %587 = vmatpush2.msra.mxu0 0.0
    %588 = vmatprep.subr.mxu0 0.0
    %589 = vmatpush2.msra.mxu0 0.0
    %590 = vmatprep.mubr.f32.mxu0 0.0
    %591 = vmatmul.mubr.f32.gmra.mxu0 %v524
    %v592 = vpop.f32.mrf.mxu0
    %v593 = vadd.f32 %v522, %v592
    %v594 = vpop.f32.mrf.mxu0
    %595 = vdwg.mxu0
    %v596 = vxor.u32 %v593, 2147483648
    %v597 = vmul.f32 %v596, 1.442695
    %v598 = vpow.pop %v597
    %v599 = vadd.f32 %v598, 1.0
    %v600 = vrcp.pop %v599
    %v601 = vmul.f32 1.0, %v600
    %v602 = vtanh.pop %v593
    %v603 = vmul.f32 %v601, %v463
    %605 = vrot.lane.b32.xlu0 %v602, 80
    %v606 = vpop.permute.xlu0 %605
    %v608 = vmul.f32 %v601, %v606
    %610 = vrot.lane.b32.xlu0 %v608, 16
    %v611 = vpop.permute.xlu0 %610
    %v613 = vadd.f32 %v603, %v611
    %v614 = vtanh.pop %v613
    %616 = vrot.lane.b32.xlu0 %v614, 16
    %v617 = vpop.permute.xlu0 %616
    %v619 = vmul.f32 %v601, %v617
    %v622 = vunpack.c.l.s4 1966171168
    %v623 = vunpack.c.0.s8 %v622
    %v624 = vlaneseq
    %v625 = vshrl.u32 %v624, 7
    %v626 = vsub.s32 %v623, %v625
    %v627 = vrot.slane %v619, %v626
    %v628 = vcombine.high %v627, %v627
    %v630 = vunpack.c.l.s4 1966171168
    %v631 = vunpack.c.0.s8 %v630
    %v632 = vlaneseq
    %v633 = vshrl.u32 %v632, 7
    %v634 = vsub.s32 %v631, %v633
    %v635 = vrot.slane %v627, %v634
    %v637 = vunpack.c.l.s4 1966171168
    %v638 = vunpack.c.0.s8 %v637
    %v639 = vlaneseq
    %v640 = vshrl.u32 %v639, 7
    %v641 = vsub.s32 %v638, %v640
    %v642 = vrot.slane %v628, %v641
    %v643 = vlaneseq
    %v644 = vshrl.u32 %v643, 7
    %v645 = vsub.s32 0, %v644
    %v646 = vrot.slane %v635, %v645
    %v647 = vlaneseq
    %v648 = vshrl.u32 %v647, 7
    %v649 = vsub.s32 0, %v648
    %v650 = vrot.slane %v642, %v649
    %651 = vrot.lane.b32.xlu0 %v646, 96
    %v652 = vpop.permute.xlu0 %651
    %653 = vrot.lane.b32.xlu0 %v650, 96
    %v654 = vpop.permute.xlu0 %653
    %657 = vst.msk [vmem:[#allocation2 + $0x3] sm:$0x1] %vm206, %v652
    %658 = vst.msk [vmem:[#allocation2 + $0xb] sm:$0x1] %vm206, %v654
    %s659 = scalar_lea.vmem %s0, 8
    %v660 = vld [vmem:[%s659] sm:$0x3]
    %v661 = vld [vmem:[%s16] sm:$0x1]
    %v662 = vsel %vm59, %v660, %v619
    %v663 = vld [vmem:[%s7] sm:$0xff]
    %v664 = vld [vmem:[%s7 + $0x8] sm:$0xff]
    %v665 = vld [vmem:[%s7 + $0x10] sm:$0xff]
    %v666 = vld [vmem:[%s7 + $0x18] sm:$0xff]
    %v667 = vld [vmem:[%s7 + $0x20] sm:$0xff]
    %v668 = vld [vmem:[%s7 + $0x28] sm:$0xff]
    %v669 = vlaneseq
    %v670 = vshrl.u32 %v669, 7
    %v671 = vsub.s32 0, %v670
    %v672 = vrot.slane %v661, %v671
    %v674 = vsel %vm71, %v662, 0
    %676 = vmatprep.subr.mxu0 0.0
    %677 = vmatpush1.msra.mxu0 0.0
    %678 = vmatprep.subr.mxu0 0.0
    %679 = vmatpush1.msra.mxu0 0.0
    %680 = vmatprep.subr.mxu0 0.0
    %681 = vmatpush1.msra.mxu0 0.0
    %682 = vmatprep.subr.mxu0 0.0
    %683 = vmatpush1.msra.mxu0 0.0
    %684 = vmatprep.subr.mxu0 0.0
    %685 = vmatpush1.msra.mxu0 0.0
    %686 = vmatprep.subr.mxu0 0.0
    %687 = vmatpush1.msra.mxu0 0.0
    %688 = vmatprep.subr.mxu0 0.0
    %689 = vmatpush1.msra.mxu0 0.0
    %690 = vmatprep.subr.mxu0 0.0
    %691 = vmatpush1.msra.mxu0 0.0
    %692 = vmatprep.subr.mxu0 0.0
    %693 = vmatpush1.msra.mxu0 0.0
    %694 = vmatprep.subr.mxu0 0.0
    %695 = vmatpush1.msra.mxu0 0.0
    %696 = vmatprep.subr.mxu0 0.0
    %697 = vmatpush1.msra.mxu0 %v668
    %698 = vmatprep.subr.mxu0 0.0
    %699 = vmatpush1.msra.mxu0 %v667
    %700 = vmatprep.subr.mxu0 0.0
    %701 = vmatpush1.msra.mxu0 %v666
    %702 = vmatprep.subr.mxu0 0.0
    %703 = vmatpush1.msra.mxu0 %v665
    %704 = vmatprep.subr.mxu0 0.0
    %705 = vmatpush1.msra.mxu0 %v664
    %706 = vmatprep.subr.mxu0 0.0
    %707 = vmatpush1.msra.mxu0 %v663
    %708 = vmatprep.subr.mxu0 0.0
    %709 = vmatpush2.msra.mxu0 0.0
    %710 = vmatprep.subr.mxu0 0.0
    %711 = vmatpush2.msra.mxu0 0.0
    %712 = vmatprep.subr.mxu0 0.0
    %713 = vmatpush2.msra.mxu0 0.0
    %714 = vmatprep.subr.mxu0 0.0
    %715 = vmatpush2.msra.mxu0 0.0
    %716 = vmatprep.subr.mxu0 0.0
    %717 = vmatpush2.msra.mxu0 0.0
    %718 = vmatprep.subr.mxu0 0.0
    %719 = vmatpush2.msra.mxu0 0.0
    %720 = vmatprep.subr.mxu0 0.0
    %721 = vmatpush2.msra.mxu0 0.0
    %722 = vmatprep.subr.mxu0 0.0
    %723 = vmatpush2.msra.mxu0 0.0
    %724 = vmatprep.subr.mxu0 0.0
    %725 = vmatpush2.msra.mxu0 0.0
    %726 = vmatprep.subr.mxu0 0.0
    %727 = vmatpush2.msra.mxu0 0.0
    %728 = vmatprep.subr.mxu0 0.0
    %729 = vmatpush2.msra.mxu0 0.0
    %730 = vmatprep.subr.mxu0 0.0
    %731 = vmatpush2.msra.mxu0 0.0
    %732 = vmatprep.subr.mxu0 0.0
    %733 = vmatpush2.msra.mxu0 0.0
    %734 = vmatprep.subr.mxu0 0.0
    %735 = vmatpush2.msra.mxu0 0.0
    %736 = vmatprep.subr.mxu0 0.0
    %737 = vmatpush2.msra.mxu0 0.0
    %738 = vmatprep.subr.mxu0 0.0
    %739 = vmatpush2.msra.mxu0 0.0
    %740 = vmatprep.mubr.f32.mxu0 0.0
    %741 = vmatmul.mubr.f32.gmra.mxu0 %v674
    %v742 = vpop.f32.mrf.mxu0
    %v743 = vadd.f32 %v672, %v742
    %v744 = vpop.f32.mrf.mxu0
    %745 = vdwg.mxu0
    %v746 = vxor.u32 %v743, 2147483648
    %v747 = vmul.f32 %v746, 1.442695
    %v748 = vpow.pop %v747
    %v749 = vadd.f32 %v748, 1.0
    %v750 = vrcp.pop %v749
    %v751 = vmul.f32 1.0, %v750
    %v752 = vtanh.pop %v743
    %v753 = vmul.f32 %v751, %v613
    %755 = vrot.lane.b32.xlu0 %v752, 80
    %v756 = vpop.permute.xlu0 %755
    %v758 = vmul.f32 %v751, %v756
    %760 = vrot.lane.b32.xlu0 %v758, 16
    %v761 = vpop.permute.xlu0 %760
    %v763 = vadd.f32 %v753, %v761
    %v764 = vtanh.pop %v763
    %766 = vrot.lane.b32.xlu0 %v764, 16
    %v767 = vpop.permute.xlu0 %766
    %v769 = vmul.f32 %v751, %v767
    %v772 = vunpack.c.l.s4 1966171168
    %v773 = vunpack.c.0.s8 %v772
    %v774 = vlaneseq
    %v775 = vshrl.u32 %v774, 7
    %v776 = vsub.s32 %v773, %v775
    %v777 = vrot.slane %v769, %v776
    %v778 = vcombine.high %v777, %v777
    %v780 = vunpack.c.l.s4 1966171168
    %v781 = vunpack.c.0.s8 %v780
    %v782 = vlaneseq
    %v783 = vshrl.u32 %v782, 7
    %v784 = vsub.s32 %v781, %v783
    %v785 = vrot.slane %v777, %v784
    %v787 = vunpack.c.l.s4 1966171168
    %v788 = vunpack.c.0.s8 %v787
    %v789 = vlaneseq
    %v790 = vshrl.u32 %v789, 7
    %v791 = vsub.s32 %v788, %v790
    %v792 = vrot.slane %v778, %v791
    %v793 = vlaneseq
    %v794 = vshrl.u32 %v793, 7
    %v795 = vsub.s32 0, %v794
    %v796 = vrot.slane %v785, %v795
    %v797 = vlaneseq
    %v798 = vshrl.u32 %v797, 7
    %v799 = vsub.s32 0, %v798
    %v800 = vrot.slane %v792, %v799
    %801 = vrot.lane.b32.xlu0 %v796, 96
    %v802 = vpop.permute.xlu0 %801
    %803 = vrot.lane.b32.xlu0 %v800, 96
    %v804 = vpop.permute.xlu0 %803
    %807 = vst.msk [vmem:[#allocation2 + $0x4] sm:$0x1] %vm206, %v802
    %808 = vst.msk [vmem:[#allocation2 + $0xc] sm:$0x1] %vm206, %v804
    %s809 = scalar_lea.vmem %s0, 10
    %v810 = vld [vmem:[%s809] sm:$0x3]
    %v811 = vld [vmem:[%s16] sm:$0x1]
    %v812 = vsel %vm59, %v810, %v769
    %v813 = vld [vmem:[%s7] sm:$0xff]
    %v814 = vld [vmem:[%s7 + $0x8] sm:$0xff]
    %v815 = vld [vmem:[%s7 + $0x10] sm:$0xff]
    %v816 = vld [vmem:[%s7 + $0x18] sm:$0xff]
    %v817 = vld [vmem:[%s7 + $0x20] sm:$0xff]
    %v818 = vld [vmem:[%s7 + $0x28] sm:$0xff]
    %v819 = vlaneseq
    %v820 = vshrl.u32 %v819, 7
    %v821 = vsub.s32 0, %v820
    %v822 = vrot.slane %v811, %v821
    %v824 = vsel %vm71, %v812, 0
    %826 = vmatprep.subr.mxu0 0.0
    %827 = vmatpush1.msra.mxu0 0.0
    %828 = vmatprep.subr.mxu0 0.0
    %829 = vmatpush1.msra.mxu0 0.0
    %830 = vmatprep.subr.mxu0 0.0
    %831 = vmatpush1.msra.mxu0 0.0
    %832 = vmatprep.subr.mxu0 0.0
    %833 = vmatpush1.msra.mxu0 0.0
    %834 = vmatprep.subr.mxu0 0.0
    %835 = vmatpush1.msra.mxu0 0.0
    %836 = vmatprep.subr.mxu0 0.0
    %837 = vmatpush1.msra.mxu0 0.0
    %838 = vmatprep.subr.mxu0 0.0
    %839 = vmatpush1.msra.mxu0 0.0
    %840 = vmatprep.subr.mxu0 0.0
    %841 = vmatpush1.msra.mxu0 0.0
    %842 = vmatprep.subr.mxu0 0.0
    %843 = vmatpush1.msra.mxu0 0.0
    %844 = vmatprep.subr.mxu0 0.0
    %845 = vmatpush1.msra.mxu0 0.0
    %846 = vmatprep.subr.mxu0 0.0
    %847 = vmatpush1.msra.mxu0 %v818
    %848 = vmatprep.subr.mxu0 0.0
    %849 = vmatpush1.msra.mxu0 %v817
    %850 = vmatprep.subr.mxu0 0.0
    %851 = vmatpush1.msra.mxu0 %v816
    %852 = vmatprep.subr.mxu0 0.0
    %853 = vmatpush1.msra.mxu0 %v815
    %854 = vmatprep.subr.mxu0 0.0
    %855 = vmatpush1.msra.mxu0 %v814
    %856 = vmatprep.subr.mxu0 0.0
    %857 = vmatpush1.msra.mxu0 %v813
    %858 = vmatprep.subr.mxu0 0.0
    %859 = vmatpush2.msra.mxu0 0.0
    %860 = vmatprep.subr.mxu0 0.0
    %861 = vmatpush2.msra.mxu0 0.0
    %862 = vmatprep.subr.mxu0 0.0
    %863 = vmatpush2.msra.mxu0 0.0
    %864 = vmatprep.subr.mxu0 0.0
    %865 = vmatpush2.msra.mxu0 0.0
    %866 = vmatprep.subr.mxu0 0.0
    %867 = vmatpush2.msra.mxu0 0.0
    %868 = vmatprep.subr.mxu0 0.0
    %869 = vmatpush2.msra.mxu0 0.0
    %870 = vmatprep.subr.mxu0 0.0
    %871 = vmatpush2.msra.mxu0 0.0
    %872 = vmatprep.subr.mxu0 0.0
    %873 = vmatpush2.msra.mxu0 0.0
    %874 = vmatprep.subr.mxu0 0.0
    %875 = vmatpush2.msra.mxu0 0.0
    %876 = vmatprep.subr.mxu0 0.0
    %877 = vmatpush2.msra.mxu0 0.0
    %878 = vmatprep.subr.mxu0 0.0
    %879 = vmatpush2.msra.mxu0 0.0
    %880 = vmatprep.subr.mxu0 0.0
    %881 = vmatpush2.msra.mxu0 0.0
    %882 = vmatprep.subr.mxu0 0.0
    %883 = vmatpush2.msra.mxu0 0.0
    %884 = vmatprep.subr.mxu0 0.0
    %885 = vmatpush2.msra.mxu0 0.0
    %886 = vmatprep.subr.mxu0 0.0
    %887 = vmatpush2.msra.mxu0 0.0
    %888 = vmatprep.subr.mxu0 0.0
    %889 = vmatpush2.msra.mxu0 0.0
    %890 = vmatprep.mubr.f32.mxu0 0.0
    %891 = vmatmul.mubr.f32.gmra.mxu0 %v824
    %v892 = vpop.f32.mrf.mxu0
    %v893 = vadd.f32 %v822, %v892
    %v894 = vpop.f32.mrf.mxu0
    %895 = vdwg.mxu0
    %v896 = vxor.u32 %v893, 2147483648
    %v897 = vmul.f32 %v896, 1.442695
    %v898 = vpow.pop %v897
    %v899 = vadd.f32 %v898, 1.0
    %v900 = vrcp.pop %v899
    %v901 = vmul.f32 1.0, %v900
    %v902 = vtanh.pop %v893
    %v903 = vmul.f32 %v901, %v763
    %905 = vrot.lane.b32.xlu0 %v902, 80
    %v906 = vpop.permute.xlu0 %905
    %v908 = vmul.f32 %v901, %v906
    %910 = vrot.lane.b32.xlu0 %v908, 16
    %v911 = vpop.permute.xlu0 %910
    %v913 = vadd.f32 %v903, %v911
    %v914 = vtanh.pop %v913
    %916 = vrot.lane.b32.xlu0 %v914, 16
    %v917 = vpop.permute.xlu0 %916
    %v919 = vmul.f32 %v901, %v917
    %v922 = vunpack.c.l.s4 1966171168
    %v923 = vunpack.c.0.s8 %v922
    %v924 = vlaneseq
    %v925 = vshrl.u32 %v924, 7
    %v926 = vsub.s32 %v923, %v925
    %v927 = vrot.slane %v919, %v926
    %v928 = vcombine.high %v927, %v927
    %v930 = vunpack.c.l.s4 1966171168
    %v931 = vunpack.c.0.s8 %v930
    %v932 = vlaneseq
    %v933 = vshrl.u32 %v932, 7
    %v934 = vsub.s32 %v931, %v933
    %v935 = vrot.slane %v927, %v934
    %v937 = vunpack.c.l.s4 1966171168
    %v938 = vunpack.c.0.s8 %v937
    %v939 = vlaneseq
    %v940 = vshrl.u32 %v939, 7
    %v941 = vsub.s32 %v938, %v940
    %v942 = vrot.slane %v928, %v941
    %v943 = vlaneseq
    %v944 = vshrl.u32 %v943, 7
    %v945 = vsub.s32 0, %v944
    %v946 = vrot.slane %v935, %v945
    %v947 = vlaneseq
    %v948 = vshrl.u32 %v947, 7
    %v949 = vsub.s32 0, %v948
    %v950 = vrot.slane %v942, %v949
    %951 = vrot.lane.b32.xlu0 %v946, 96
    %v952 = vpop.permute.xlu0 %951
    %953 = vrot.lane.b32.xlu0 %v950, 96
    %v954 = vpop.permute.xlu0 %953
    %957 = vst.msk [vmem:[#allocation2 + $0x5] sm:$0x1] %vm206, %v952
    %958 = vst.msk [vmem:[#allocation2 + $0xd] sm:$0x1] %vm206, %v954
    %s959 = scalar_lea.vmem %s0, 12
    %v960 = vld [vmem:[%s959] sm:$0x3]
    %v961 = vld [vmem:[%s16] sm:$0x1]
    %v962 = vsel %vm59, %v960, %v919
    %v963 = vld [vmem:[%s7] sm:$0xff]
    %v964 = vld [vmem:[%s7 + $0x8] sm:$0xff]
    %v965 = vld [vmem:[%s7 + $0x10] sm:$0xff]
    %v966 = vld [vmem:[%s7 + $0x18] sm:$0xff]
    %v967 = vld [vmem:[%s7 + $0x20] sm:$0xff]
    %v968 = vld [vmem:[%s7 + $0x28] sm:$0xff]
    %v969 = vlaneseq
    %v970 = vshrl.u32 %v969, 7
    %v971 = vsub.s32 0, %v970
    %v972 = vrot.slane %v961, %v971
    %v974 = vsel %vm71, %v962, 0
    %976 = vmatprep.subr.mxu0 0.0
    %977 = vmatpush1.msra.mxu0 0.0
    %978 = vmatprep.subr.mxu0 0.0
    %979 = vmatpush1.msra.mxu0 0.0
    %980 = vmatprep.subr.mxu0 0.0
    %981 = vmatpush1.msra.mxu0 0.0
    %982 = vmatprep.subr.mxu0 0.0
    %983 = vmatpush1.msra.mxu0 0.0
    %984 = vmatprep.subr.mxu0 0.0
    %985 = vmatpush1.msra.mxu0 0.0
    %986 = vmatprep.subr.mxu0 0.0
    %987 = vmatpush1.msra.mxu0 0.0
    %988 = vmatprep.subr.mxu0 0.0
    %989 = vmatpush1.msra.mxu0 0.0
    %990 = vmatprep.subr.mxu0 0.0
    %991 = vmatpush1.msra.mxu0 0.0
    %992 = vmatprep.subr.mxu0 0.0
    %993 = vmatpush1.msra.mxu0 0.0
    %994 = vmatprep.subr.mxu0 0.0
    %995 = vmatpush1.msra.mxu0 0.0
    %996 = vmatprep.subr.mxu0 0.0
    %997 = vmatpush1.msra.mxu0 %v968
    %998 = vmatprep.subr.mxu0 0.0
    %999 = vmatpush1.msra.mxu0 %v967
    %1000 = vmatprep.subr.mxu0 0.0
    %1001 = vmatpush1.msra.mxu0 %v966
    %1002 = vmatprep.subr.mxu0 0.0
    %1003 = vmatpush1.msra.mxu0 %v965
    %1004 = vmatprep.subr.mxu0 0.0
    %1005 = vmatpush1.msra.mxu0 %v964
    %1006 = vmatprep.subr.mxu0 0.0
    %1007 = vmatpush1.msra.mxu0 %v963
    %1008 = vmatprep.subr.mxu0 0.0
    %1009 = vmatpush2.msra.mxu0 0.0
    %1010 = vmatprep.subr.mxu0 0.0
    %1011 = vmatpush2.msra.mxu0 0.0
    %1012 = vmatprep.subr.mxu0 0.0
    %1013 = vmatpush2.msra.mxu0 0.0
    %1014 = vmatprep.subr.mxu0 0.0
    %1015 = vmatpush2.msra.mxu0 0.0
    %1016 = vmatprep.subr.mxu0 0.0
    %1017 = vmatpush2.msra.mxu0 0.0
    %1018 = vmatprep.subr.mxu0 0.0
    %1019 = vmatpush2.msra.mxu0 0.0
    %1020 = vmatprep.subr.mxu0 0.0
    %1021 = vmatpush2.msra.mxu0 0.0
    %1022 = vmatprep.subr.mxu0 0.0
    %1023 = vmatpush2.msra.mxu0 0.0
    %1024 = vmatprep.subr.mxu0 0.0
    %1025 = vmatpush2.msra.mxu0 0.0
    %1026 = vmatprep.subr.mxu0 0.0
    %1027 = vmatpush2.msra.mxu0 0.0
    %1028 = vmatprep.subr.mxu0 0.0
    %1029 = vmatpush2.msra.mxu0 0.0
    %1030 = vmatprep.subr.mxu0 0.0
    %1031 = vmatpush2.msra.mxu0 0.0
    %1032 = vmatprep.subr.mxu0 0.0
    %1033 = vmatpush2.msra.mxu0 0.0
    %1034 = vmatprep.subr.mxu0 0.0
    %1035 = vmatpush2.msra.mxu0 0.0
    %1036 = vmatprep.subr.mxu0 0.0
    %1037 = vmatpush2.msra.mxu0 0.0
    %1038 = vmatprep.subr.mxu0 0.0
    %1039 = vmatpush2.msra.mxu0 0.0
    %1040 = vmatprep.mubr.f32.mxu0 0.0
    %1041 = vmatmul.mubr.f32.gmra.mxu0 %v974
    %v1042 = vpop.f32.mrf.mxu0
    %v1043 = vadd.f32 %v972, %v1042
    %v1044 = vpop.f32.mrf.mxu0
    %1045 = vdwg.mxu0
    %v1046 = vxor.u32 %v1043, 2147483648
    %v1047 = vmul.f32 %v1046, 1.442695
    %v1048 = vpow.pop %v1047
    %v1049 = vadd.f32 %v1048, 1.0
    %v1050 = vrcp.pop %v1049
    %v1051 = vmul.f32 1.0, %v1050
    %v1052 = vtanh.pop %v1043
    %v1053 = vmul.f32 %v1051, %v913
    %1055 = vrot.lane.b32.xlu0 %v1052, 80
    %v1056 = vpop.permute.xlu0 %1055
    %v1058 = vmul.f32 %v1051, %v1056
    %1060 = vrot.lane.b32.xlu0 %v1058, 16
    %v1061 = vpop.permute.xlu0 %1060
    %v1063 = vadd.f32 %v1053, %v1061
    %v1064 = vtanh.pop %v1063
    %1066 = vrot.lane.b32.xlu0 %v1064, 16
    %v1067 = vpop.permute.xlu0 %1066
    %v1069 = vmul.f32 %v1051, %v1067
    %v1072 = vunpack.c.l.s4 1966171168
    %v1073 = vunpack.c.0.s8 %v1072
    %v1074 = vlaneseq
    %v1075 = vshrl.u32 %v1074, 7
    %v1076 = vsub.s32 %v1073, %v1075
    %v1077 = vrot.slane %v1069, %v1076
    %v1078 = vcombine.high %v1077, %v1077
    %v1080 = vunpack.c.l.s4 1966171168
    %v1081 = vunpack.c.0.s8 %v1080
    %v1082 = vlaneseq
    %v1083 = vshrl.u32 %v1082, 7
    %v1084 = vsub.s32 %v1081, %v1083
    %v1085 = vrot.slane %v1077, %v1084
    %v1087 = vunpack.c.l.s4 1966171168
    %v1088 = vunpack.c.0.s8 %v1087
    %v1089 = vlaneseq
    %v1090 = vshrl.u32 %v1089, 7
    %v1091 = vsub.s32 %v1088, %v1090
    %v1092 = vrot.slane %v1078, %v1091
    %v1093 = vlaneseq
    %v1094 = vshrl.u32 %v1093, 7
    %v1095 = vsub.s32 0, %v1094
    %v1096 = vrot.slane %v1085, %v1095
    %v1097 = vlaneseq
    %v1098 = vshrl.u32 %v1097, 7
    %v1099 = vsub.s32 0, %v1098
    %v1100 = vrot.slane %v1092, %v1099
    %1101 = vrot.lane.b32.xlu0 %v1096, 96
    %v1102 = vpop.permute.xlu0 %1101
    %1103 = vrot.lane.b32.xlu0 %v1100, 96
    %v1104 = vpop.permute.xlu0 %1103
    %1107 = vst.msk [vmem:[#allocation2 + $0x6] sm:$0x1] %vm206, %v1102
    %1108 = vst.msk [vmem:[#allocation2 + $0xe] sm:$0x1] %vm206, %v1104
    %s1109 = scalar_lea.vmem %s0, 14
    %v1110 = vld [vmem:[%s1109] sm:$0x3]
    %v1111 = vld [vmem:[%s16] sm:$0x1]
    %v1112 = vsel %vm59, %v1110, %v1069
    %v1113 = vld [vmem:[%s7] sm:$0xff]
    %v1114 = vld [vmem:[%s7 + $0x8] sm:$0xff]
    %v1115 = vld [vmem:[%s7 + $0x10] sm:$0xff]
    %v1116 = vld [vmem:[%s7 + $0x18] sm:$0xff]
    %v1117 = vld [vmem:[%s7 + $0x20] sm:$0xff]
    %v1118 = vld [vmem:[%s7 + $0x28] sm:$0xff]
    %v1119 = vlaneseq
    %v1120 = vshrl.u32 %v1119, 7
    %v1121 = vsub.s32 0, %v1120
    %v1122 = vrot.slane %v1111, %v1121
    %v1124 = vsel %vm71, %v1112, 0
    %1126 = vmatprep.subr.mxu0 0.0
    %1127 = vmatpush1.msra.mxu0 0.0
    %1128 = vmatprep.subr.mxu0 0.0
    %1129 = vmatpush1.msra.mxu0 0.0
    %1130 = vmatprep.subr.mxu0 0.0
    %1131 = vmatpush1.msra.mxu0 0.0
    %1132 = vmatprep.subr.mxu0 0.0
    %1133 = vmatpush1.msra.mxu0 0.0
    %1134 = vmatprep.subr.mxu0 0.0
    %1135 = vmatpush1.msra.mxu0 0.0
    %1136 = vmatprep.subr.mxu0 0.0
    %1137 = vmatpush1.msra.mxu0 0.0
    %1138 = vmatprep.subr.mxu0 0.0
    %1139 = vmatpush1.msra.mxu0 0.0
    %1140 = vmatprep.subr.mxu0 0.0
    %1141 = vmatpush1.msra.mxu0 0.0
    %1142 = vmatprep.subr.mxu0 0.0
    %1143 = vmatpush1.msra.mxu0 0.0
    %1144 = vmatprep.subr.mxu0 0.0
    %1145 = vmatpush1.msra.mxu0 0.0
    %1146 = vmatprep.subr.mxu0 0.0
    %1147 = vmatpush1.msra.mxu0 %v1118
    %1148 = vmatprep.subr.mxu0 0.0
    %1149 = vmatpush1.msra.mxu0 %v1117
    %1150 = vmatprep.subr.mxu0 0.0
    %1151 = vmatpush1.msra.mxu0 %v1116
    %1152 = vmatprep.subr.mxu0 0.0
    %1153 = vmatpush1.msra.mxu0 %v1115
    %1154 = vmatprep.subr.mxu0 0.0
    %1155 = vmatpush1.msra.mxu0 %v1114
    %1156 = vmatprep.subr.mxu0 0.0
    %1157 = vmatpush1.msra.mxu0 %v1113
    %1158 = vmatprep.subr.mxu0 0.0
    %1159 = vmatpush2.msra.mxu0 0.0
    %1160 = vmatprep.subr.mxu0 0.0
    %1161 = vmatpush2.msra.mxu0 0.0
    %1162 = vmatprep.subr.mxu0 0.0
    %1163 = vmatpush2.msra.mxu0 0.0
    %1164 = vmatprep.subr.mxu0 0.0
    %1165 = vmatpush2.msra.mxu0 0.0
    %1166 = vmatprep.subr.mxu0 0.0
    %1167 = vmatpush2.msra.mxu0 0.0
    %1168 = vmatprep.subr.mxu0 0.0
    %1169 = vmatpush2.msra.mxu0 0.0
    %1170 = vmatprep.subr.mxu0 0.0
    %1171 = vmatpush2.msra.mxu0 0.0
    %1172 = vmatprep.subr.mxu0 0.0
    %1173 = vmatpush2.msra.mxu0 0.0
    %1174 = vmatprep.subr.mxu0 0.0
    %1175 = vmatpush2.msra.mxu0 0.0
    %1176 = vmatprep.subr.mxu0 0.0
    %1177 = vmatpush2.msra.mxu0 0.0
    %1178 = vmatprep.subr.mxu0 0.0
    %1179 = vmatpush2.msra.mxu0 0.0
    %1180 = vmatprep.subr.mxu0 0.0
    %1181 = vmatpush2.msra.mxu0 0.0
    %1182 = vmatprep.subr.mxu0 0.0
    %1183 = vmatpush2.msra.mxu0 0.0
    %1184 = vmatprep.subr.mxu0 0.0
    %1185 = vmatpush2.msra.mxu0 0.0
    %1186 = vmatprep.subr.mxu0 0.0
    %1187 = vmatpush2.msra.mxu0 0.0
    %1188 = vmatprep.subr.mxu0 0.0
    %1189 = vmatpush2.msra.mxu0 0.0
    %1190 = vmatprep.mubr.f32.mxu0 0.0
    %1191 = vmatmul.mubr.f32.gmra.mxu0 %v1124
    %v1192 = vpop.f32.mrf.mxu0
    %v1193 = vadd.f32 %v1122, %v1192
    %v1194 = vpop.f32.mrf.mxu0
    %1195 = vdwg.mxu0
    %v1196 = vxor.u32 %v1193, 2147483648
    %v1197 = vmul.f32 %v1196, 1.442695
    %v1198 = vpow.pop %v1197
    %v1199 = vadd.f32 %v1198, 1.0
    %v1200 = vrcp.pop %v1199
    %v1201 = vmul.f32 1.0, %v1200
    %v1202 = vtanh.pop %v1193
    %v1203 = vmul.f32 %v1201, %v1063
    %1205 = vrot.lane.b32.xlu0 %v1202, 80
    %v1206 = vpop.permute.xlu0 %1205
    %v1208 = vmul.f32 %v1201, %v1206
    %1210 = vrot.lane.b32.xlu0 %v1208, 16
    %v1211 = vpop.permute.xlu0 %1210
    %v1213 = vadd.f32 %v1203, %v1211
    %v1214 = vtanh.pop %v1213
    %1216 = vrot.lane.b32.xlu0 %v1214, 16
    %v1217 = vpop.permute.xlu0 %1216
    %v1219 = vmul.f32 %v1201, %v1217
    %v1222 = vunpack.c.l.s4 1966171168
    %v1223 = vunpack.c.0.s8 %v1222
    %v1224 = vlaneseq
    %v1225 = vshrl.u32 %v1224, 7
    %v1226 = vsub.s32 %v1223, %v1225
    %v1227 = vrot.slane %v1219, %v1226
    %v1228 = vcombine.high %v1227, %v1227
    %v1230 = vunpack.c.l.s4 1966171168
    %v1231 = vunpack.c.0.s8 %v1230
    %v1232 = vlaneseq
    %v1233 = vshrl.u32 %v1232, 7
    %v1234 = vsub.s32 %v1231, %v1233
    %v1235 = vrot.slane %v1227, %v1234
    %v1237 = vunpack.c.l.s4 1966171168
    %v1238 = vunpack.c.0.s8 %v1237
    %v1239 = vlaneseq
    %v1240 = vshrl.u32 %v1239, 7
    %v1241 = vsub.s32 %v1238, %v1240
    %v1242 = vrot.slane %v1228, %v1241
    %v1243 = vlaneseq
    %v1244 = vshrl.u32 %v1243, 7
    %v1245 = vsub.s32 0, %v1244
    %v1246 = vrot.slane %v1235, %v1245
    %v1247 = vlaneseq
    %v1248 = vshrl.u32 %v1247, 7
    %v1249 = vsub.s32 0, %v1248
    %v1250 = vrot.slane %v1242, %v1249
    %1251 = vrot.lane.b32.xlu0 %v1246, 96
    %v1252 = vpop.permute.xlu0 %1251
    %1253 = vrot.lane.b32.xlu0 %v1250, 96
    %v1254 = vpop.permute.xlu0 %1253
    %1257 = vst.msk [vmem:[#allocation2 + $0x7] sm:$0x1] %vm206, %v1252
    %1258 = vst.msk [vmem:[#allocation2 + $0xf] sm:$0x1] %vm206, %v1254
    %v1259 = vld [vmem:[%s1109] sm:$0x3]
    %v1260 = vld [vmem:[%s16 + $0x1] sm:$0x1]
    %v1261 = vsel %vm59, %v1259, 0.0
    %v1262 = vld [vmem:[%s8] sm:$0xff]
    %v1263 = vld [vmem:[%s8 + $0x8] sm:$0xff]
    %v1264 = vld [vmem:[%s8 + $0x10] sm:$0xff]
    %v1265 = vld [vmem:[%s8 + $0x18] sm:$0xff]
    %v1266 = vld [vmem:[%s8 + $0x20] sm:$0xff]
    %v1267 = vld [vmem:[%s8 + $0x28] sm:$0xff]
    %v1268 = vlaneseq
    %v1269 = vshrl.u32 %v1268, 7
    %v1270 = vsub.s32 0, %v1269
    %v1271 = vrot.slane %v1260, %v1270
    %v1273 = vsel %vm71, %v1261, 0
    %1275 = vmatprep.subr.mxu0 0.0
    %1276 = vmatpush1.msra.mxu0 0.0
    %1277 = vmatprep.subr.mxu0 0.0
    %1278 = vmatpush1.msra.mxu0 0.0
    %1279 = vmatprep.subr.mxu0 0.0
    %1280 = vmatpush1.msra.mxu0 0.0
    %1281 = vmatprep.subr.mxu0 0.0
    %1282 = vmatpush1.msra.mxu0 0.0
    %1283 = vmatprep.subr.mxu0 0.0
    %1284 = vmatpush1.msra.mxu0 0.0
    %1285 = vmatprep.subr.mxu0 0.0
    %1286 = vmatpush1.msra.mxu0 0.0
    %1287 = vmatprep.subr.mxu0 0.0
    %1288 = vmatpush1.msra.mxu0 0.0
    %1289 = vmatprep.subr.mxu0 0.0
    %1290 = vmatpush1.msra.mxu0 0.0
    %1291 = vmatprep.subr.mxu0 0.0
    %1292 = vmatpush1.msra.mxu0 0.0
    %1293 = vmatprep.subr.mxu0 0.0
    %1294 = vmatpush1.msra.mxu0 0.0
    %1295 = vmatprep.subr.mxu0 0.0
    %1296 = vmatpush1.msra.mxu0 %v1267
    %1297 = vmatprep.subr.mxu0 0.0
    %1298 = vmatpush1.msra.mxu0 %v1266
    %1299 = vmatprep.subr.mxu0 0.0
    %1300 = vmatpush1.msra.mxu0 %v1265
    %1301 = vmatprep.subr.mxu0 0.0
    %1302 = vmatpush1.msra.mxu0 %v1264
    %1303 = vmatprep.subr.mxu0 0.0
    %1304 = vmatpush1.msra.mxu0 %v1263
    %1305 = vmatprep.subr.mxu0 0.0
    %1306 = vmatpush1.msra.mxu0 %v1262
    %1307 = vmatprep.subr.mxu0 0.0
    %1308 = vmatpush2.msra.mxu0 0.0
    %1309 = vmatprep.subr.mxu0 0.0
    %1310 = vmatpush2.msra.mxu0 0.0
    %1311 = vmatprep.subr.mxu0 0.0
    %1312 = vmatpush2.msra.mxu0 0.0
    %1313 = vmatprep.subr.mxu0 0.0
    %1314 = vmatpush2.msra.mxu0 0.0
    %1315 = vmatprep.subr.mxu0 0.0
    %1316 = vmatpush2.msra.mxu0 0.0
    %1317 = vmatprep.subr.mxu0 0.0
    %1318 = vmatpush2.msra.mxu0 0.0
    %1319 = vmatprep.subr.mxu0 0.0
    %1320 = vmatpush2.msra.mxu0 0.0
    %1321 = vmatprep.subr.mxu0 0.0
    %1322 = vmatpush2.msra.mxu0 0.0
    %1323 = vmatprep.subr.mxu0 0.0
    %1324 = vmatpush2.msra.mxu0 0.0
    %1325 = vmatprep.subr.mxu0 0.0
    %1326 = vmatpush2.msra.mxu0 0.0
    %1327 = vmatprep.subr.mxu0 0.0
    %1328 = vmatpush2.msra.mxu0 0.0
    %1329 = vmatprep.subr.mxu0 0.0
    %1330 = vmatpush2.msra.mxu0 0.0
    %1331 = vmatprep.subr.mxu0 0.0
    %1332 = vmatpush2.msra.mxu0 0.0
    %1333 = vmatprep.subr.mxu0 0.0
    %1334 = vmatpush2.msra.mxu0 0.0
    %1335 = vmatprep.subr.mxu0 0.0
    %1336 = vmatpush2.msra.mxu0 0.0
    %1337 = vmatprep.subr.mxu0 0.0
    %1338 = vmatpush2.msra.mxu0 0.0
    %1339 = vmatprep.mubr.f32.mxu0 0.0
    %1340 = vmatmul.mubr.f32.gmra.mxu0 %v1273
    %v1341 = vpop.f32.mrf.mxu0
    %v1342 = vadd.f32 %v1271, %v1341
    %v1343 = vpop.f32.mrf.mxu0
    %1344 = vdwg.mxu0
    %v1345 = vxor.u32 %v1342, 2147483648
    %v1346 = vmul.f32 %v1345, 1.442695
    %v1347 = vpow.pop %v1346
    %v1348 = vadd.f32 %v1347, 1.0
    %v1349 = vrcp.pop %v1348
    %v1350 = vmul.f32 1.0, %v1349
    %v1351 = vtanh.pop %v1342
    %v1352 = vmul.f32 %v1350, 0.0
    %1354 = vrot.lane.b32.xlu0 %v1351, 80
    %v1355 = vpop.permute.xlu0 %1354
    %v1357 = vmul.f32 %v1350, %v1355
    %1359 = vrot.lane.b32.xlu0 %v1357, 16
    %v1360 = vpop.permute.xlu0 %1359
    %v1362 = vadd.f32 %v1352, %v1360
    %v1363 = vtanh.pop %v1362
    %1365 = vrot.lane.b32.xlu0 %v1363, 16
    %v1366 = vpop.permute.xlu0 %1365
    %v1368 = vmul.f32 %v1350, %v1366
    %v1371 = vunpack.c.l.s4 1966171168
    %v1372 = vunpack.c.0.s8 %v1371
    %v1373 = vlaneseq
    %v1374 = vshrl.u32 %v1373, 7
    %v1375 = vsub.s32 %v1372, %v1374
    %v1376 = vrot.slane %v1368, %v1375
    %v1377 = vcombine.high %v1376, %v1376
    %v1379 = vunpack.c.l.s4 1966171168
    %v1380 = vunpack.c.0.s8 %v1379
    %v1381 = vlaneseq
    %v1382 = vshrl.u32 %v1381, 7
    %v1383 = vsub.s32 %v1380, %v1382
    %v1384 = vrot.slane %v1376, %v1383
    %v1386 = vunpack.c.l.s4 1966171168
    %v1387 = vunpack.c.0.s8 %v1386
    %v1388 = vlaneseq
    %v1389 = vshrl.u32 %v1388, 7
    %v1390 = vsub.s32 %v1387, %v1389
    %v1391 = vrot.slane %v1377, %v1390
    %v1392 = vlaneseq
    %v1393 = vshrl.u32 %v1392, 7
    %v1394 = vsub.s32 0, %v1393
    %v1395 = vrot.slane %v1384, %v1394
    %v1396 = vlaneseq
    %v1397 = vshrl.u32 %v1396, 7
    %v1398 = vsub.s32 0, %v1397
    %v1399 = vrot.slane %v1391, %v1398
    %1400 = vrot.lane.b32.xlu0 %v1395, 112
    %v1401 = vpop.permute.xlu0 %1400
    %1402 = vrot.lane.b32.xlu0 %v1399, 112
    %v1403 = vpop.permute.xlu0 %1402
    %vm1406 = vcmask 254080
    %1407 = vst.msk [vmem:[#allocation2 + $0x7] sm:$0x1] %vm1406, %v1401
    %1408 = vst.msk [vmem:[#allocation2 + $0xf] sm:$0x1] %vm1406, %v1403
    %v1409 = vld [vmem:[%s959] sm:$0x3]
    %v1410 = vld [vmem:[%s16 + $0x1] sm:$0x1]
    %v1411 = vsel %vm59, %v1409, %v1368
    %v1412 = vld [vmem:[%s8] sm:$0xff]
    %v1413 = vld [vmem:[%s8 + $0x8] sm:$0xff]
    %v1414 = vld [vmem:[%s8 + $0x10] sm:$0xff]
    %v1415 = vld [vmem:[%s8 + $0x18] sm:$0xff]
    %v1416 = vld [vmem:[%s8 + $0x20] sm:$0xff]
    %v1417 = vld [vmem:[%s8 + $0x28] sm:$0xff]
    %v1418 = vlaneseq
    %v1419 = vshrl.u32 %v1418, 7
    %v1420 = vsub.s32 0, %v1419
    %v1421 = vrot.slane %v1410, %v1420
    %v1423 = vsel %vm71, %v1411, 0
    %1425 = vmatprep.subr.mxu0 0.0
    %1426 = vmatpush1.msra.mxu0 0.0
    %1427 = vmatprep.subr.mxu0 0.0
    %1428 = vmatpush1.msra.mxu0 0.0
    %1429 = vmatprep.subr.mxu0 0.0
    %1430 = vmatpush1.msra.mxu0 0.0
    %1431 = vmatprep.subr.mxu0 0.0
    %1432 = vmatpush1.msra.mxu0 0.0
    %1433 = vmatprep.subr.mxu0 0.0
    %1434 = vmatpush1.msra.mxu0 0.0
    %1435 = vmatprep.subr.mxu0 0.0
    %1436 = vmatpush1.msra.mxu0 0.0
    %1437 = vmatprep.subr.mxu0 0.0
    %1438 = vmatpush1.msra.mxu0 0.0
    %1439 = vmatprep.subr.mxu0 0.0
    %1440 = vmatpush1.msra.mxu0 0.0
    %1441 = vmatprep.subr.mxu0 0.0
    %1442 = vmatpush1.msra.mxu0 0.0
    %1443 = vmatprep.subr.mxu0 0.0
    %1444 = vmatpush1.msra.mxu0 0.0
    %1445 = vmatprep.subr.mxu0 0.0
    %1446 = vmatpush1.msra.mxu0 %v1417
    %1447 = vmatprep.subr.mxu0 0.0
    %1448 = vmatpush1.msra.mxu0 %v1416
    %1449 = vmatprep.subr.mxu0 0.0
    %1450 = vmatpush1.msra.mxu0 %v1415
    %1451 = vmatprep.subr.mxu0 0.0
    %1452 = vmatpush1.msra.mxu0 %v1414
    %1453 = vmatprep.subr.mxu0 0.0
    %1454 = vmatpush1.msra.mxu0 %v1413
    %1455 = vmatprep.subr.mxu0 0.0
    %1456 = vmatpush1.msra.mxu0 %v1412
    %1457 = vmatprep.subr.mxu0 0.0
    %1458 = vmatpush2.msra.mxu0 0.0
    %1459 = vmatprep.subr.mxu0 0.0
    %1460 = vmatpush2.msra.mxu0 0.0
    %1461 = vmatprep.subr.mxu0 0.0
    %1462 = vmatpush2.msra.mxu0 0.0
    %1463 = vmatprep.subr.mxu0 0.0
    %1464 = vmatpush2.msra.mxu0 0.0
    %1465 = vmatprep.subr.mxu0 0.0
    %1466 = vmatpush2.msra.mxu0 0.0
    %1467 = vmatprep.subr.mxu0 0.0
    %1468 = vmatpush2.msra.mxu0 0.0
    %1469 = vmatprep.subr.mxu0 0.0
    %1470 = vmatpush2.msra.mxu0 0.0
    %1471 = vmatprep.subr.mxu0 0.0
    %1472 = vmatpush2.msra.mxu0 0.0
    %1473 = vmatprep.subr.mxu0 0.0
    %1474 = vmatpush2.msra.mxu0 0.0
    %1475 = vmatprep.subr.mxu0 0.0
    %1476 = vmatpush2.msra.mxu0 0.0
    %1477 = vmatprep.subr.mxu0 0.0
    %1478 = vmatpush2.msra.mxu0 0.0
    %1479 = vmatprep.subr.mxu0 0.0
    %1480 = vmatpush2.msra.mxu0 0.0
    %1481 = vmatprep.subr.mxu0 0.0
    %1482 = vmatpush2.msra.mxu0 0.0
    %1483 = vmatprep.subr.mxu0 0.0
    %1484 = vmatpush2.msra.mxu0 0.0
    %1485 = vmatprep.subr.mxu0 0.0
    %1486 = vmatpush2.msra.mxu0 0.0
    %1487 = vmatprep.subr.mxu0 0.0
    %1488 = vmatpush2.msra.mxu0 0.0
    %1489 = vmatprep.mubr.f32.mxu0 0.0
    %1490 = vmatmul.mubr.f32.gmra.mxu0 %v1423
    %v1491 = vpop.f32.mrf.mxu0
    %v1492 = vadd.f32 %v1421, %v1491
    %v1493 = vpop.f32.mrf.mxu0
    %1494 = vdwg.mxu0
    %v1495 = vxor.u32 %v1492, 2147483648
    %v1496 = vmul.f32 %v1495, 1.442695
    %v1497 = vpow.pop %v1496
    %v1498 = vadd.f32 %v1497, 1.0
    %v1499 = vrcp.pop %v1498
    %v1500 = vmul.f32 1.0, %v1499
    %v1501 = vtanh.pop %v1492
    %v1502 = vmul.f32 %v1500, %v1362
    %1504 = vrot.lane.b32.xlu0 %v1501, 80
    %v1505 = vpop.permute.xlu0 %1504
    %v1507 = vmul.f32 %v1500, %v1505
    %1509 = vrot.lane.b32.xlu0 %v1507, 16
    %v1510 = vpop.permute.xlu0 %1509
    %v1512 = vadd.f32 %v1502, %v1510
    %v1513 = vtanh.pop %v1512
    %1515 = vrot.lane.b32.xlu0 %v1513, 16
    %v1516 = vpop.permute.xlu0 %1515
    %v1518 = vmul.f32 %v1500, %v1516
    %v1521 = vunpack.c.l.s4 1966171168
    %v1522 = vunpack.c.0.s8 %v1521
    %v1523 = vlaneseq
    %v1524 = vshrl.u32 %v1523, 7
    %v1525 = vsub.s32 %v1522, %v1524
    %v1526 = vrot.slane %v1518, %v1525
    %v1527 = vcombine.high %v1526, %v1526
    %v1529 = vunpack.c.l.s4 1966171168
    %v1530 = vunpack.c.0.s8 %v1529
    %v1531 = vlaneseq
    %v1532 = vshrl.u32 %v1531, 7
    %v1533 = vsub.s32 %v1530, %v1532
    %v1534 = vrot.slane %v1526, %v1533
    %v1536 = vunpack.c.l.s4 1966171168
    %v1537 = vunpack.c.0.s8 %v1536
    %v1538 = vlaneseq
    %v1539 = vshrl.u32 %v1538, 7
    %v1540 = vsub.s32 %v1537, %v1539
    %v1541 = vrot.slane %v1527, %v1540
    %v1542 = vlaneseq
    %v1543 = vshrl.u32 %v1542, 7
    %v1544 = vsub.s32 0, %v1543
    %v1545 = vrot.slane %v1534, %v1544
    %v1546 = vlaneseq
    %v1547 = vshrl.u32 %v1546, 7
    %v1548 = vsub.s32 0, %v1547
    %v1549 = vrot.slane %v1541, %v1548
    %1550 = vrot.lane.b32.xlu0 %v1545, 112
    %v1551 = vpop.permute.xlu0 %1550
    %1552 = vrot.lane.b32.xlu0 %v1549, 112
    %v1553 = vpop.permute.xlu0 %1552
    %1556 = vst.msk [vmem:[#allocation2 + $0x6] sm:$0x1] %vm1406, %v1551
    %1557 = vst.msk [vmem:[#allocation2 + $0xe] sm:$0x1] %vm1406, %v1553
    %v1558 = vld [vmem:[%s809] sm:$0x3]
    %v1559 = vld [vmem:[%s16 + $0x1] sm:$0x1]
    %v1560 = vsel %vm59, %v1558, %v1518
    %v1561 = vld [vmem:[%s8] sm:$0xff]
    %v1562 = vld [vmem:[%s8 + $0x8] sm:$0xff]
    %v1563 = vld [vmem:[%s8 + $0x10] sm:$0xff]
    %v1564 = vld [vmem:[%s8 + $0x18] sm:$0xff]
    %v1565 = vld [vmem:[%s8 + $0x20] sm:$0xff]
    %v1566 = vld [vmem:[%s8 + $0x28] sm:$0xff]
    %v1567 = vlaneseq
    %v1568 = vshrl.u32 %v1567, 7
    %v1569 = vsub.s32 0, %v1568
    %v1570 = vrot.slane %v1559, %v1569
    %v1572 = vsel %vm71, %v1560, 0
    %1574 = vmatprep.subr.mxu0 0.0
    %1575 = vmatpush1.msra.mxu0 0.0
    %1576 = vmatprep.subr.mxu0 0.0
    %1577 = vmatpush1.msra.mxu0 0.0
    %1578 = vmatprep.subr.mxu0 0.0
    %1579 = vmatpush1.msra.mxu0 0.0
    %1580 = vmatprep.subr.mxu0 0.0
    %1581 = vmatpush1.msra.mxu0 0.0
    %1582 = vmatprep.subr.mxu0 0.0
    %1583 = vmatpush1.msra.mxu0 0.0
    %1584 = vmatprep.subr.mxu0 0.0
    %1585 = vmatpush1.msra.mxu0 0.0
    %1586 = vmatprep.subr.mxu0 0.0
    %1587 = vmatpush1.msra.mxu0 0.0
    %1588 = vmatprep.subr.mxu0 0.0
    %1589 = vmatpush1.msra.mxu0 0.0
    %1590 = vmatprep.subr.mxu0 0.0
    %1591 = vmatpush1.msra.mxu0 0.0
    %1592 = vmatprep.subr.mxu0 0.0
    %1593 = vmatpush1.msra.mxu0 0.0
    %1594 = vmatprep.subr.mxu0 0.0
    %1595 = vmatpush1.msra.mxu0 %v1566
    %1596 = vmatprep.subr.mxu0 0.0
    %1597 = vmatpush1.msra.mxu0 %v1565
    %1598 = vmatprep.subr.mxu0 0.0
    %1599 = vmatpush1.msra.mxu0 %v1564
    %1600 = vmatprep.subr.mxu0 0.0
    %1601 = vmatpush1.msra.mxu0 %v1563
    %1602 = vmatprep.subr.mxu0 0.0
    %1603 = vmatpush1.msra.mxu0 %v1562
    %1604 = vmatprep.subr.mxu0 0.0
    %1605 = vmatpush1.msra.mxu0 %v1561
    %1606 = vmatprep.subr.mxu0 0.0
    %1607 = vmatpush2.msra.mxu0 0.0
    %1608 = vmatprep.subr.mxu0 0.0
    %1609 = vmatpush2.msra.mxu0 0.0
    %1610 = vmatprep.subr.mxu0 0.0
    %1611 = vmatpush2.msra.mxu0 0.0
    %1612 = vmatprep.subr.mxu0 0.0
    %1613 = vmatpush2.msra.mxu0 0.0
    %1614 = vmatprep.subr.mxu0 0.0
    %1615 = vmatpush2.msra.mxu0 0.0
    %1616 = vmatprep.subr.mxu0 0.0
    %1617 = vmatpush2.msra.mxu0 0.0
    %1618 = vmatprep.subr.mxu0 0.0
    %1619 = vmatpush2.msra.mxu0 0.0
    %1620 = vmatprep.subr.mxu0 0.0
    %1621 = vmatpush2.msra.mxu0 0.0
    %1622 = vmatprep.subr.mxu0 0.0
    %1623 = vmatpush2.msra.mxu0 0.0
    %1624 = vmatprep.subr.mxu0 0.0
    %1625 = vmatpush2.msra.mxu0 0.0
    %1626 = vmatprep.subr.mxu0 0.0
    %1627 = vmatpush2.msra.mxu0 0.0
    %1628 = vmatprep.subr.mxu0 0.0
    %1629 = vmatpush2.msra.mxu0 0.0
    %1630 = vmatprep.subr.mxu0 0.0
    %1631 = vmatpush2.msra.mxu0 0.0
    %1632 = vmatprep.subr.mxu0 0.0
    %1633 = vmatpush2.msra.mxu0 0.0
    %1634 = vmatprep.subr.mxu0 0.0
    %1635 = vmatpush2.msra.mxu0 0.0
    %1636 = vmatprep.subr.mxu0 0.0
    %1637 = vmatpush2.msra.mxu0 0.0
    %1638 = vmatprep.mubr.f32.mxu0 0.0
    %1639 = vmatmul.mubr.f32.gmra.mxu0 %v1572
    %v1640 = vpop.f32.mrf.mxu0
    %v1641 = vadd.f32 %v1570, %v1640
    %v1642 = vpop.f32.mrf.mxu0
    %1643 = vdwg.mxu0
    %v1644 = vxor.u32 %v1641, 2147483648
    %v1645 = vmul.f32 %v1644, 1.442695
    %v1646 = vpow.pop %v1645
    %v1647 = vadd.f32 %v1646, 1.0
    %v1648 = vrcp.pop %v1647
    %v1649 = vmul.f32 1.0, %v1648
    %v1650 = vtanh.pop %v1641
    %v1651 = vmul.f32 %v1649, %v1512
    %1653 = vrot.lane.b32.xlu0 %v1650, 80
    %v1654 = vpop.permute.xlu0 %1653
    %v1656 = vmul.f32 %v1649, %v1654
    %1658 = vrot.lane.b32.xlu0 %v1656, 16
    %v1659 = vpop.permute.xlu0 %1658
    %v1661 = vadd.f32 %v1651, %v1659
    %v1662 = vtanh.pop %v1661
    %1664 = vrot.lane.b32.xlu0 %v1662, 16
    %v1665 = vpop.permute.xlu0 %1664
    %v1667 = vmul.f32 %v1649, %v1665
    %v1670 = vunpack.c.l.s4 1966171168
    %v1671 = vunpack.c.0.s8 %v1670
    %v1672 = vlaneseq
    %v1673 = vshrl.u32 %v1672, 7
    %v1674 = vsub.s32 %v1671, %v1673
    %v1675 = vrot.slane %v1667, %v1674
    %v1676 = vcombine.high %v1675, %v1675
    %v1678 = vunpack.c.l.s4 1966171168
    %v1679 = vunpack.c.0.s8 %v1678
    %v1680 = vlaneseq
    %v1681 = vshrl.u32 %v1680, 7
    %v1682 = vsub.s32 %v1679, %v1681
    %v1683 = vrot.slane %v1675, %v1682
    %v1685 = vunpack.c.l.s4 1966171168
    %v1686 = vunpack.c.0.s8 %v1685
    %v1687 = vlaneseq
    %v1688 = vshrl.u32 %v1687, 7
    %v1689 = vsub.s32 %v1686, %v1688
    %v1690 = vrot.slane %v1676, %v1689
    %v1691 = vlaneseq
    %v1692 = vshrl.u32 %v1691, 7
    %v1693 = vsub.s32 0, %v1692
    %v1694 = vrot.slane %v1683, %v1693
    %v1695 = vlaneseq
    %v1696 = vshrl.u32 %v1695, 7
    %v1697 = vsub.s32 0, %v1696
    %v1698 = vrot.slane %v1690, %v1697
    %1699 = vrot.lane.b32.xlu0 %v1694, 112
    %v1700 = vpop.permute.xlu0 %1699
    %1701 = vrot.lane.b32.xlu0 %v1698, 112
    %v1702 = vpop.permute.xlu0 %1701
    %1705 = vst.msk [vmem:[#allocation2 + $0x5] sm:$0x1] %vm1406, %v1700
    %1706 = vst.msk [vmem:[#allocation2 + $0xd] sm:$0x1] %vm1406, %v1702
    %v1707 = vld [vmem:[%s659] sm:$0x3]
    %v1708 = vld [vmem:[%s16 + $0x1] sm:$0x1]
    %v1709 = vsel %vm59, %v1707, %v1667
    %v1710 = vld [vmem:[%s8] sm:$0xff]
    %v1711 = vld [vmem:[%s8 + $0x8] sm:$0xff]
    %v1712 = vld [vmem:[%s8 + $0x10] sm:$0xff]
    %v1713 = vld [vmem:[%s8 + $0x18] sm:$0xff]
    %v1714 = vld [vmem:[%s8 + $0x20] sm:$0xff]
    %v1715 = vld [vmem:[%s8 + $0x28] sm:$0xff]
    %v1716 = vlaneseq
    %v1717 = vshrl.u32 %v1716, 7
    %v1718 = vsub.s32 0, %v1717
    %v1719 = vrot.slane %v1708, %v1718
    %v1721 = vsel %vm71, %v1709, 0
    %1723 = vmatprep.subr.mxu0 0.0
    %1724 = vmatpush1.msra.mxu0 0.0
    %1725 = vmatprep.subr.mxu0 0.0
    %1726 = vmatpush1.msra.mxu0 0.0
    %1727 = vmatprep.subr.mxu0 0.0
    %1728 = vmatpush1.msra.mxu0 0.0
    %1729 = vmatprep.subr.mxu0 0.0
    %1730 = vmatpush1.msra.mxu0 0.0
    %1731 = vmatprep.subr.mxu0 0.0
    %1732 = vmatpush1.msra.mxu0 0.0
    %1733 = vmatprep.subr.mxu0 0.0
    %1734 = vmatpush1.msra.mxu0 0.0
    %1735 = vmatprep.subr.mxu0 0.0
    %1736 = vmatpush1.msra.mxu0 0.0
    %1737 = vmatprep.subr.mxu0 0.0
    %1738 = vmatpush1.msra.mxu0 0.0
    %1739 = vmatprep.subr.mxu0 0.0
    %1740 = vmatpush1.msra.mxu0 0.0
    %1741 = vmatprep.subr.mxu0 0.0
    %1742 = vmatpush1.msra.mxu0 0.0
    %1743 = vmatprep.subr.mxu0 0.0
    %1744 = vmatpush1.msra.mxu0 %v1715
    %1745 = vmatprep.subr.mxu0 0.0
    %1746 = vmatpush1.msra.mxu0 %v1714
    %1747 = vmatprep.subr.mxu0 0.0
    %1748 = vmatpush1.msra.mxu0 %v1713
    %1749 = vmatprep.subr.mxu0 0.0
    %1750 = vmatpush1.msra.mxu0 %v1712
    %1751 = vmatprep.subr.mxu0 0.0
    %1752 = vmatpush1.msra.mxu0 %v1711
    %1753 = vmatprep.subr.mxu0 0.0
    %1754 = vmatpush1.msra.mxu0 %v1710
    %1755 = vmatprep.subr.mxu0 0.0
    %1756 = vmatpush2.msra.mxu0 0.0
    %1757 = vmatprep.subr.mxu0 0.0
    %1758 = vmatpush2.msra.mxu0 0.0
    %1759 = vmatprep.subr.mxu0 0.0
    %1760 = vmatpush2.msra.mxu0 0.0
    %1761 = vmatprep.subr.mxu0 0.0
    %1762 = vmatpush2.msra.mxu0 0.0
    %1763 = vmatprep.subr.mxu0 0.0
    %1764 = vmatpush2.msra.mxu0 0.0
    %1765 = vmatprep.subr.mxu0 0.0
    %1766 = vmatpush2.msra.mxu0 0.0
    %1767 = vmatprep.subr.mxu0 0.0
    %1768 = vmatpush2.msra.mxu0 0.0
    %1769 = vmatprep.subr.mxu0 0.0
    %1770 = vmatpush2.msra.mxu0 0.0
    %1771 = vmatprep.subr.mxu0 0.0
    %1772 = vmatpush2.msra.mxu0 0.0
    %1773 = vmatprep.subr.mxu0 0.0
    %1774 = vmatpush2.msra.mxu0 0.0
    %1775 = vmatprep.subr.mxu0 0.0
    %1776 = vmatpush2.msra.mxu0 0.0
    %1777 = vmatprep.subr.mxu0 0.0
    %1778 = vmatpush2.msra.mxu0 0.0
    %1779 = vmatprep.subr.mxu0 0.0
    %1780 = vmatpush2.msra.mxu0 0.0
    %1781 = vmatprep.subr.mxu0 0.0
    %1782 = vmatpush2.msra.mxu0 0.0
    %1783 = vmatprep.subr.mxu0 0.0
    %1784 = vmatpush2.msra.mxu0 0.0
    %1785 = vmatprep.subr.mxu0 0.0
    %1786 = vmatpush2.msra.mxu0 0.0
    %1787 = vmatprep.mubr.f32.mxu0 0.0
    %1788 = vmatmul.mubr.f32.gmra.mxu0 %v1721
    %v1789 = vpop.f32.mrf.mxu0
    %v1790 = vadd.f32 %v1719, %v1789
    %v1791 = vpop.f32.mrf.mxu0
    %1792 = vdwg.mxu0
    %v1793 = vxor.u32 %v1790, 2147483648
    %v1794 = vmul.f32 %v1793, 1.442695
    %v1795 = vpow.pop %v1794
    %v1796 = vadd.f32 %v1795, 1.0
    %v1797 = vrcp.pop %v1796
    %v1798 = vmul.f32 1.0, %v1797
    %v1799 = vtanh.pop %v1790
    %v1800 = vmul.f32 %v1798, %v1661
    %1802 = vrot.lane.b32.xlu0 %v1799, 80
    %v1803 = vpop.permute.xlu0 %1802
    %v1805 = vmul.f32 %v1798, %v1803
    %1807 = vrot.lane.b32.xlu0 %v1805, 16
    %v1808 = vpop.permute.xlu0 %1807
    %v1810 = vadd.f32 %v1800, %v1808
    %v1811 = vtanh.pop %v1810
    %1813 = vrot.lane.b32.xlu0 %v1811, 16
    %v1814 = vpop.permute.xlu0 %1813
    %v1816 = vmul.f32 %v1798, %v1814
    %v1819 = vunpack.c.l.s4 1966171168
    %v1820 = vunpack.c.0.s8 %v1819
    %v1821 = vlaneseq
    %v1822 = vshrl.u32 %v1821, 7
    %v1823 = vsub.s32 %v1820, %v1822
    %v1824 = vrot.slane %v1816, %v1823
    %v1825 = vcombine.high %v1824, %v1824
    %v1827 = vunpack.c.l.s4 1966171168
    %v1828 = vunpack.c.0.s8 %v1827
    %v1829 = vlaneseq
    %v1830 = vshrl.u32 %v1829, 7
    %v1831 = vsub.s32 %v1828, %v1830
    %v1832 = vrot.slane %v1824, %v1831
    %v1834 = vunpack.c.l.s4 1966171168
    %v1835 = vunpack.c.0.s8 %v1834
    %v1836 = vlaneseq
    %v1837 = vshrl.u32 %v1836, 7
    %v1838 = vsub.s32 %v1835, %v1837
    %v1839 = vrot.slane %v1825, %v1838
    %v1840 = vlaneseq
    %v1841 = vshrl.u32 %v1840, 7
    %v1842 = vsub.s32 0, %v1841
    %v1843 = vrot.slane %v1832, %v1842
    %v1844 = vlaneseq
    %v1845 = vshrl.u32 %v1844, 7
    %v1846 = vsub.s32 0, %v1845
    %v1847 = vrot.slane %v1839, %v1846
    %1848 = vrot.lane.b32.xlu0 %v1843, 112
    %v1849 = vpop.permute.xlu0 %1848
    %1850 = vrot.lane.b32.xlu0 %v1847, 112
    %v1851 = vpop.permute.xlu0 %1850
    %1854 = vst.msk [vmem:[#allocation2 + $0x4] sm:$0x1] %vm1406, %v1849
    %1855 = vst.msk [vmem:[#allocation2 + $0xc] sm:$0x1] %vm1406, %v1851
    %v1856 = vld [vmem:[%s509] sm:$0x3]
    %v1857 = vld [vmem:[%s16 + $0x1] sm:$0x1]
    %v1858 = vsel %vm59, %v1856, %v1816
    %v1859 = vld [vmem:[%s8] sm:$0xff]
    %v1860 = vld [vmem:[%s8 + $0x8] sm:$0xff]
    %v1861 = vld [vmem:[%s8 + $0x10] sm:$0xff]
    %v1862 = vld [vmem:[%s8 + $0x18] sm:$0xff]
    %v1863 = vld [vmem:[%s8 + $0x20] sm:$0xff]
    %v1864 = vld [vmem:[%s8 + $0x28] sm:$0xff]
    %v1865 = vlaneseq
    %v1866 = vshrl.u32 %v1865, 7
    %v1867 = vsub.s32 0, %v1866
    %v1868 = vrot.slane %v1857, %v1867
    %v1870 = vsel %vm71, %v1858, 0
    %1872 = vmatprep.subr.mxu0 0.0
    %1873 = vmatpush1.msra.mxu0 0.0
    %1874 = vmatprep.subr.mxu0 0.0
    %1875 = vmatpush1.msra.mxu0 0.0
    %1876 = vmatprep.subr.mxu0 0.0
    %1877 = vmatpush1.msra.mxu0 0.0
    %1878 = vmatprep.subr.mxu0 0.0
    %1879 = vmatpush1.msra.mxu0 0.0
    %1880 = vmatprep.subr.mxu0 0.0
    %1881 = vmatpush1.msra.mxu0 0.0
    %1882 = vmatprep.subr.mxu0 0.0
    %1883 = vmatpush1.msra.mxu0 0.0
    %1884 = vmatprep.subr.mxu0 0.0
    %1885 = vmatpush1.msra.mxu0 0.0
    %1886 = vmatprep.subr.mxu0 0.0
    %1887 = vmatpush1.msra.mxu0 0.0
    %1888 = vmatprep.subr.mxu0 0.0
    %1889 = vmatpush1.msra.mxu0 0.0
    %1890 = vmatprep.subr.mxu0 0.0
    %1891 = vmatpush1.msra.mxu0 0.0
    %1892 = vmatprep.subr.mxu0 0.0
    %1893 = vmatpush1.msra.mxu0 %v1864
    %1894 = vmatprep.subr.mxu0 0.0
    %1895 = vmatpush1.msra.mxu0 %v1863
    %1896 = vmatprep.subr.mxu0 0.0
    %1897 = vmatpush1.msra.mxu0 %v1862
    %1898 = vmatprep.subr.mxu0 0.0
    %1899 = vmatpush1.msra.mxu0 %v1861
    %1900 = vmatprep.subr.mxu0 0.0
    %1901 = vmatpush1.msra.mxu0 %v1860
    %1902 = vmatprep.subr.mxu0 0.0
    %1903 = vmatpush1.msra.mxu0 %v1859
    %1904 = vmatprep.subr.mxu0 0.0
    %1905 = vmatpush2.msra.mxu0 0.0
    %1906 = vmatprep.subr.mxu0 0.0
    %1907 = vmatpush2.msra.mxu0 0.0
    %1908 = vmatprep.subr.mxu0 0.0
    %1909 = vmatpush2.msra.mxu0 0.0
    %1910 = vmatprep.subr.mxu0 0.0
    %1911 = vmatpush2.msra.mxu0 0.0
    %1912 = vmatprep.subr.mxu0 0.0
    %1913 = vmatpush2.msra.mxu0 0.0
    %1914 = vmatprep.subr.mxu0 0.0
    %1915 = vmatpush2.msra.mxu0 0.0
    %1916 = vmatprep.subr.mxu0 0.0
    %1917 = vmatpush2.msra.mxu0 0.0
    %1918 = vmatprep.subr.mxu0 0.0
    %1919 = vmatpush2.msra.mxu0 0.0
    %1920 = vmatprep.subr.mxu0 0.0
    %1921 = vmatpush2.msra.mxu0 0.0
    %1922 = vmatprep.subr.mxu0 0.0
    %1923 = vmatpush2.msra.mxu0 0.0
    %1924 = vmatprep.subr.mxu0 0.0
    %1925 = vmatpush2.msra.mxu0 0.0
    %1926 = vmatprep.subr.mxu0 0.0
    %1927 = vmatpush2.msra.mxu0 0.0
    %1928 = vmatprep.subr.mxu0 0.0
    %1929 = vmatpush2.msra.mxu0 0.0
    %1930 = vmatprep.subr.mxu0 0.0
    %1931 = vmatpush2.msra.mxu0 0.0
    %1932 = vmatprep.subr.mxu0 0.0
    %1933 = vmatpush2.msra.mxu0 0.0
    %1934 = vmatprep.subr.mxu0 0.0
    %1935 = vmatpush2.msra.mxu0 0.0
    %1936 = vmatprep.mubr.f32.mxu0 0.0
    %1937 = vmatmul.mubr.f32.gmra.mxu0 %v1870
    %v1938 = vpop.f32.mrf.mxu0
    %v1939 = vadd.f32 %v1868, %v1938
    %v1940 = vpop.f32.mrf.mxu0
    %1941 = vdwg.mxu0
    %v1942 = vxor.u32 %v1939, 2147483648
    %v1943 = vmul.f32 %v1942, 1.442695
    %v1944 = vpow.pop %v1943
    %v1945 = vadd.f32 %v1944, 1.0
    %v1946 = vrcp.pop %v1945
    %v1947 = vmul.f32 1.0, %v1946
    %v1948 = vtanh.pop %v1939
    %v1949 = vmul.f32 %v1947, %v1810
    %1951 = vrot.lane.b32.xlu0 %v1948, 80
    %v1952 = vpop.permute.xlu0 %1951
    %v1954 = vmul.f32 %v1947, %v1952
    %1956 = vrot.lane.b32.xlu0 %v1954, 16
    %v1957 = vpop.permute.xlu0 %1956
    %v1959 = vadd.f32 %v1949, %v1957
    %v1960 = vtanh.pop %v1959
    %1962 = vrot.lane.b32.xlu0 %v1960, 16
    %v1963 = vpop.permute.xlu0 %1962
    %v1965 = vmul.f32 %v1947, %v1963
    %v1968 = vunpack.c.l.s4 1966171168
    %v1969 = vunpack.c.0.s8 %v1968
    %v1970 = vlaneseq
    %v1971 = vshrl.u32 %v1970, 7
    %v1972 = vsub.s32 %v1969, %v1971
    %v1973 = vrot.slane %v1965, %v1972
    %v1974 = vcombine.high %v1973, %v1973
    %v1976 = vunpack.c.l.s4 1966171168
    %v1977 = vunpack.c.0.s8 %v1976
    %v1978 = vlaneseq
    %v1979 = vshrl.u32 %v1978, 7
    %v1980 = vsub.s32 %v1977, %v1979
    %v1981 = vrot.slane %v1973, %v1980
    %v1983 = vunpack.c.l.s4 1966171168
    %v1984 = vunpack.c.0.s8 %v1983
    %v1985 = vlaneseq
    %v1986 = vshrl.u32 %v1985, 7
    %v1987 = vsub.s32 %v1984, %v1986
    %v1988 = vrot.slane %v1974, %v1987
    %v1989 = vlaneseq
    %v1990 = vshrl.u32 %v1989, 7
    %v1991 = vsub.s32 0, %v1990
    %v1992 = vrot.slane %v1981, %v1991
    %v1993 = vlaneseq
    %v1994 = vshrl.u32 %v1993, 7
    %v1995 = vsub.s32 0, %v1994
    %v1996 = vrot.slane %v1988, %v1995
    %1997 = vrot.lane.b32.xlu0 %v1992, 112
    %v1998 = vpop.permute.xlu0 %1997
    %1999 = vrot.lane.b32.xlu0 %v1996, 112
    %v2000 = vpop.permute.xlu0 %1999
    %2003 = vst.msk [vmem:[#allocation2 + $0x3] sm:$0x1] %vm1406, %v1998
    %2004 = vst.msk [vmem:[#allocation2 + $0xb] sm:$0x1] %vm1406, %v2000
    %v2005 = vld [vmem:[%s359] sm:$0x3]
    %v2006 = vld [vmem:[%s16 + $0x1] sm:$0x1]
    %v2007 = vsel %vm59, %v2005, %v1965
    %v2008 = vld [vmem:[%s8] sm:$0xff]
    %v2009 = vld [vmem:[%s8 + $0x8] sm:$0xff]
    %v2010 = vld [vmem:[%s8 + $0x10] sm:$0xff]
    %v2011 = vld [vmem:[%s8 + $0x18] sm:$0xff]
    %v2012 = vld [vmem:[%s8 + $0x20] sm:$0xff]
    %v2013 = vld [vmem:[%s8 + $0x28] sm:$0xff]
    %v2014 = vlaneseq
    %v2015 = vshrl.u32 %v2014, 7
    %v2016 = vsub.s32 0, %v2015
    %v2017 = vrot.slane %v2006, %v2016
    %v2019 = vsel %vm71, %v2007, 0
    %2021 = vmatprep.subr.mxu0 0.0
    %2022 = vmatpush1.msra.mxu0 0.0
    %2023 = vmatprep.subr.mxu0 0.0
    %2024 = vmatpush1.msra.mxu0 0.0
    %2025 = vmatprep.subr.mxu0 0.0
    %2026 = vmatpush1.msra.mxu0 0.0
    %2027 = vmatprep.subr.mxu0 0.0
    %2028 = vmatpush1.msra.mxu0 0.0
    %2029 = vmatprep.subr.mxu0 0.0
    %2030 = vmatpush1.msra.mxu0 0.0
    %2031 = vmatprep.subr.mxu0 0.0
    %2032 = vmatpush1.msra.mxu0 0.0
    %2033 = vmatprep.subr.mxu0 0.0
    %2034 = vmatpush1.msra.mxu0 0.0
    %2035 = vmatprep.subr.mxu0 0.0
    %2036 = vmatpush1.msra.mxu0 0.0
    %2037 = vmatprep.subr.mxu0 0.0
    %2038 = vmatpush1.msra.mxu0 0.0
    %2039 = vmatprep.subr.mxu0 0.0
    %2040 = vmatpush1.msra.mxu0 0.0
    %2041 = vmatprep.subr.mxu0 0.0
    %2042 = vmatpush1.msra.mxu0 %v2013
    %2043 = vmatprep.subr.mxu0 0.0
    %2044 = vmatpush1.msra.mxu0 %v2012
    %2045 = vmatprep.subr.mxu0 0.0
    %2046 = vmatpush1.msra.mxu0 %v2011
    %2047 = vmatprep.subr.mxu0 0.0
    %2048 = vmatpush1.msra.mxu0 %v2010
    %2049 = vmatprep.subr.mxu0 0.0
    %2050 = vmatpush1.msra.mxu0 %v2009
    %2051 = vmatprep.subr.mxu0 0.0
    %2052 = vmatpush1.msra.mxu0 %v2008
    %2053 = vmatprep.subr.mxu0 0.0
    %2054 = vmatpush2.msra.mxu0 0.0
    %2055 = vmatprep.subr.mxu0 0.0
    %2056 = vmatpush2.msra.mxu0 0.0
    %2057 = vmatprep.subr.mxu0 0.0
    %2058 = vmatpush2.msra.mxu0 0.0
    %2059 = vmatprep.subr.mxu0 0.0
    %2060 = vmatpush2.msra.mxu0 0.0
    %2061 = vmatprep.subr.mxu0 0.0
    %2062 = vmatpush2.msra.mxu0 0.0
    %2063 = vmatprep.subr.mxu0 0.0
    %2064 = vmatpush2.msra.mxu0 0.0
    %2065 = vmatprep.subr.mxu0 0.0
    %2066 = vmatpush2.msra.mxu0 0.0
    %2067 = vmatprep.subr.mxu0 0.0
    %2068 = vmatpush2.msra.mxu0 0.0
    %2069 = vmatprep.subr.mxu0 0.0
    %2070 = vmatpush2.msra.mxu0 0.0
    %2071 = vmatprep.subr.mxu0 0.0
    %2072 = vmatpush2.msra.mxu0 0.0
    %2073 = vmatprep.subr.mxu0 0.0
    %2074 = vmatpush2.msra.mxu0 0.0
    %2075 = vmatprep.subr.mxu0 0.0
    %2076 = vmatpush2.msra.mxu0 0.0
    %2077 = vmatprep.subr.mxu0 0.0
    %2078 = vmatpush2.msra.mxu0 0.0
    %2079 = vmatprep.subr.mxu0 0.0
    %2080 = vmatpush2.msra.mxu0 0.0
    %2081 = vmatprep.subr.mxu0 0.0
    %2082 = vmatpush2.msra.mxu0 0.0
    %2083 = vmatprep.subr.mxu0 0.0
    %2084 = vmatpush2.msra.mxu0 0.0
    %2085 = vmatprep.mubr.f32.mxu0 0.0
    %2086 = vmatmul.mubr.f32.gmra.mxu0 %v2019
    %v2087 = vpop.f32.mrf.mxu0
    %v2088 = vadd.f32 %v2017, %v2087
    %v2089 = vpop.f32.mrf.mxu0
    %2090 = vdwg.mxu0
    %v2091 = vxor.u32 %v2088, 2147483648
    %v2092 = vmul.f32 %v2091, 1.442695
    %v2093 = vpow.pop %v2092
    %v2094 = vadd.f32 %v2093, 1.0
    %v2095 = vrcp.pop %v2094
    %v2096 = vmul.f32 1.0, %v2095
    %v2097 = vtanh.pop %v2088
    %v2098 = vmul.f32 %v2096, %v1959
    %2100 = vrot.lane.b32.xlu0 %v2097, 80
    %v2101 = vpop.permute.xlu0 %2100
    %v2103 = vmul.f32 %v2096, %v2101
    %2105 = vrot.lane.b32.xlu0 %v2103, 16
    %v2106 = vpop.permute.xlu0 %2105
    %v2108 = vadd.f32 %v2098, %v2106
    %v2109 = vtanh.pop %v2108
    %2111 = vrot.lane.b32.xlu0 %v2109, 16
    %v2112 = vpop.permute.xlu0 %2111
    %v2114 = vmul.f32 %v2096, %v2112
    %v2117 = vunpack.c.l.s4 1966171168
    %v2118 = vunpack.c.0.s8 %v2117
    %v2119 = vlaneseq
    %v2120 = vshrl.u32 %v2119, 7
    %v2121 = vsub.s32 %v2118, %v2120
    %v2122 = vrot.slane %v2114, %v2121
    %v2123 = vcombine.high %v2122, %v2122
    %v2125 = vunpack.c.l.s4 1966171168
    %v2126 = vunpack.c.0.s8 %v2125
    %v2127 = vlaneseq
    %v2128 = vshrl.u32 %v2127, 7
    %v2129 = vsub.s32 %v2126, %v2128
    %v2130 = vrot.slane %v2122, %v2129
    %v2132 = vunpack.c.l.s4 1966171168
    %v2133 = vunpack.c.0.s8 %v2132
    %v2134 = vlaneseq
    %v2135 = vshrl.u32 %v2134, 7
    %v2136 = vsub.s32 %v2133, %v2135
    %v2137 = vrot.slane %v2123, %v2136
    %v2138 = vlaneseq
    %v2139 = vshrl.u32 %v2138, 7
    %v2140 = vsub.s32 0, %v2139
    %v2141 = vrot.slane %v2130, %v2140
    %v2142 = vlaneseq
    %v2143 = vshrl.u32 %v2142, 7
    %v2144 = vsub.s32 0, %v2143
    %v2145 = vrot.slane %v2137, %v2144
    %2146 = vrot.lane.b32.xlu0 %v2141, 112
    %v2147 = vpop.permute.xlu0 %2146
    %2148 = vrot.lane.b32.xlu0 %v2145, 112
    %v2149 = vpop.permute.xlu0 %2148
    %2152 = vst.msk [vmem:[#allocation2 + $0x2] sm:$0x1] %vm1406, %v2147
    %2153 = vst.msk [vmem:[#allocation2 + $0xa] sm:$0x1] %vm1406, %v2149
    %v2154 = vld [vmem:[%s209] sm:$0x3]
    %v2155 = vld [vmem:[%s16 + $0x1] sm:$0x1]
    %v2156 = vsel %vm59, %v2154, %v2114
    %v2157 = vld [vmem:[%s8] sm:$0xff]
    %v2158 = vld [vmem:[%s8 + $0x8] sm:$0xff]
    %v2159 = vld [vmem:[%s8 + $0x10] sm:$0xff]
    %v2160 = vld [vmem:[%s8 + $0x18] sm:$0xff]
    %v2161 = vld [vmem:[%s8 + $0x20] sm:$0xff]
    %v2162 = vld [vmem:[%s8 + $0x28] sm:$0xff]
    %v2163 = vlaneseq
    %v2164 = vshrl.u32 %v2163, 7
    %v2165 = vsub.s32 0, %v2164
    %v2166 = vrot.slane %v2155, %v2165
    %v2168 = vsel %vm71, %v2156, 0
    %2170 = vmatprep.subr.mxu0 0.0
    %2171 = vmatpush1.msra.mxu0 0.0
    %2172 = vmatprep.subr.mxu0 0.0
    %2173 = vmatpush1.msra.mxu0 0.0
    %2174 = vmatprep.subr.mxu0 0.0
    %2175 = vmatpush1.msra.mxu0 0.0
    %2176 = vmatprep.subr.mxu0 0.0
    %2177 = vmatpush1.msra.mxu0 0.0
    %2178 = vmatprep.subr.mxu0 0.0
    %2179 = vmatpush1.msra.mxu0 0.0
    %2180 = vmatprep.subr.mxu0 0.0
    %2181 = vmatpush1.msra.mxu0 0.0
    %2182 = vmatprep.subr.mxu0 0.0
    %2183 = vmatpush1.msra.mxu0 0.0
    %2184 = vmatprep.subr.mxu0 0.0
    %2185 = vmatpush1.msra.mxu0 0.0
    %2186 = vmatprep.subr.mxu0 0.0
    %2187 = vmatpush1.msra.mxu0 0.0
    %2188 = vmatprep.subr.mxu0 0.0
    %2189 = vmatpush1.msra.mxu0 0.0
    %2190 = vmatprep.subr.mxu0 0.0
    %2191 = vmatpush1.msra.mxu0 %v2162
    %2192 = vmatprep.subr.mxu0 0.0
    %2193 = vmatpush1.msra.mxu0 %v2161
    %2194 = vmatprep.subr.mxu0 0.0
    %2195 = vmatpush1.msra.mxu0 %v2160
    %2196 = vmatprep.subr.mxu0 0.0
    %2197 = vmatpush1.msra.mxu0 %v2159
    %2198 = vmatprep.subr.mxu0 0.0
    %2199 = vmatpush1.msra.mxu0 %v2158
    %2200 = vmatprep.subr.mxu0 0.0
    %2201 = vmatpush1.msra.mxu0 %v2157
    %2202 = vmatprep.subr.mxu0 0.0
    %2203 = vmatpush2.msra.mxu0 0.0
    %2204 = vmatprep.subr.mxu0 0.0
    %2205 = vmatpush2.msra.mxu0 0.0
    %2206 = vmatprep.subr.mxu0 0.0
    %2207 = vmatpush2.msra.mxu0 0.0
    %2208 = vmatprep.subr.mxu0 0.0
    %2209 = vmatpush2.msra.mxu0 0.0
    %2210 = vmatprep.subr.mxu0 0.0
    %2211 = vmatpush2.msra.mxu0 0.0
    %2212 = vmatprep.subr.mxu0 0.0
    %2213 = vmatpush2.msra.mxu0 0.0
    %2214 = vmatprep.subr.mxu0 0.0
    %2215 = vmatpush2.msra.mxu0 0.0
    %2216 = vmatprep.subr.mxu0 0.0
    %2217 = vmatpush2.msra.mxu0 0.0
    %2218 = vmatprep.subr.mxu0 0.0
    %2219 = vmatpush2.msra.mxu0 0.0
    %2220 = vmatprep.subr.mxu0 0.0
    %2221 = vmatpush2.msra.mxu0 0.0
    %2222 = vmatprep.subr.mxu0 0.0
    %2223 = vmatpush2.msra.mxu0 0.0
    %2224 = vmatprep.subr.mxu0 0.0
    %2225 = vmatpush2.msra.mxu0 0.0
    %2226 = vmatprep.subr.mxu0 0.0
    %2227 = vmatpush2.msra.mxu0 0.0
    %2228 = vmatprep.subr.mxu0 0.0
    %2229 = vmatpush2.msra.mxu0 0.0
    %2230 = vmatprep.subr.mxu0 0.0
    %2231 = vmatpush2.msra.mxu0 0.0
    %2232 = vmatprep.subr.mxu0 0.0
    %2233 = vmatpush2.msra.mxu0 0.0
    %2234 = vmatprep.mubr.f32.mxu0 0.0
    %2235 = vmatmul.mubr.f32.gmra.mxu0 %v2168
    %v2236 = vpop.f32.mrf.mxu0
    %v2237 = vadd.f32 %v2166, %v2236
    %v2238 = vpop.f32.mrf.mxu0
    %2239 = vdwg.mxu0
    %v2240 = vxor.u32 %v2237, 2147483648
    %v2241 = vmul.f32 %v2240, 1.442695
    %v2242 = vpow.pop %v2241
    %v2243 = vadd.f32 %v2242, 1.0
    %v2244 = vrcp.pop %v2243
    %v2245 = vmul.f32 1.0, %v2244
    %v2246 = vtanh.pop %v2237
    %v2247 = vmul.f32 %v2245, %v2108
    %2249 = vrot.lane.b32.xlu0 %v2246, 80
    %v2250 = vpop.permute.xlu0 %2249
    %v2252 = vmul.f32 %v2245, %v2250
    %2254 = vrot.lane.b32.xlu0 %v2252, 16
    %v2255 = vpop.permute.xlu0 %2254
    %v2257 = vadd.f32 %v2247, %v2255
    %v2258 = vtanh.pop %v2257
    %2260 = vrot.lane.b32.xlu0 %v2258, 16
    %v2261 = vpop.permute.xlu0 %2260
    %v2263 = vmul.f32 %v2245, %v2261
    %v2266 = vunpack.c.l.s4 1966171168
    %v2267 = vunpack.c.0.s8 %v2266
    %v2268 = vlaneseq
    %v2269 = vshrl.u32 %v2268, 7
    %v2270 = vsub.s32 %v2267, %v2269
    %v2271 = vrot.slane %v2263, %v2270
    %v2272 = vcombine.high %v2271, %v2271
    %v2274 = vunpack.c.l.s4 1966171168
    %v2275 = vunpack.c.0.s8 %v2274
    %v2276 = vlaneseq
    %v2277 = vshrl.u32 %v2276, 7
    %v2278 = vsub.s32 %v2275, %v2277
    %v2279 = vrot.slane %v2271, %v2278
    %v2281 = vunpack.c.l.s4 1966171168
    %v2282 = vunpack.c.0.s8 %v2281
    %v2283 = vlaneseq
    %v2284 = vshrl.u32 %v2283, 7
    %v2285 = vsub.s32 %v2282, %v2284
    %v2286 = vrot.slane %v2272, %v2285
    %v2287 = vlaneseq
    %v2288 = vshrl.u32 %v2287, 7
    %v2289 = vsub.s32 0, %v2288
    %v2290 = vrot.slane %v2279, %v2289
    %v2291 = vlaneseq
    %v2292 = vshrl.u32 %v2291, 7
    %v2293 = vsub.s32 0, %v2292
    %v2294 = vrot.slane %v2286, %v2293
    %2295 = vrot.lane.b32.xlu0 %v2290, 112
    %v2296 = vpop.permute.xlu0 %2295
    %2297 = vrot.lane.b32.xlu0 %v2294, 112
    %v2298 = vpop.permute.xlu0 %2297
    %2301 = vst.msk [vmem:[#allocation2 + $0x1] sm:$0x1] %vm1406, %v2296
    %2302 = vst.msk [vmem:[#allocation2 + $0x9] sm:$0x1] %vm1406, %v2298
    %v2303 = vld [vmem:[%s0] sm:$0x3]
    %v2304 = vld [vmem:[%s16 + $0x1] sm:$0x1]
    %v2305 = vsel %vm59, %v2303, %v2263
    %v2306 = vld [vmem:[%s8] sm:$0xff]
    %v2307 = vld [vmem:[%s8 + $0x8] sm:$0xff]
    %v2308 = vld [vmem:[%s8 + $0x10] sm:$0xff]
    %v2309 = vld [vmem:[%s8 + $0x18] sm:$0xff]
    %v2310 = vld [vmem:[%s8 + $0x20] sm:$0xff]
    %v2311 = vld [vmem:[%s8 + $0x28] sm:$0xff]
    %v2312 = vlaneseq
    %v2313 = vshrl.u32 %v2312, 7
    %v2314 = vsub.s32 0, %v2313
    %v2315 = vrot.slane %v2304, %v2314
    %v2317 = vsel %vm71, %v2305, 0
    %2319 = vmatprep.subr.mxu0 0.0
    %2320 = vmatpush1.msra.mxu0 0.0
    %2321 = vmatprep.subr.mxu0 0.0
    %2322 = vmatpush1.msra.mxu0 0.0
    %2323 = vmatprep.subr.mxu0 0.0
    %2324 = vmatpush1.msra.mxu0 0.0
    %2325 = vmatprep.subr.mxu0 0.0
    %2326 = vmatpush1.msra.mxu0 0.0
    %2327 = vmatprep.subr.mxu0 0.0
    %2328 = vmatpush1.msra.mxu0 0.0
    %2329 = vmatprep.subr.mxu0 0.0
    %2330 = vmatpush1.msra.mxu0 0.0
    %2331 = vmatprep.subr.mxu0 0.0
    %2332 = vmatpush1.msra.mxu0 0.0
    %2333 = vmatprep.subr.mxu0 0.0
    %2334 = vmatpush1.msra.mxu0 0.0
    %2335 = vmatprep.subr.mxu0 0.0
    %2336 = vmatpush1.msra.mxu0 0.0
    %2337 = vmatprep.subr.mxu0 0.0
    %2338 = vmatpush1.msra.mxu0 0.0
    %2339 = vmatprep.subr.mxu0 0.0
    %2340 = vmatpush1.msra.mxu0 %v2311
    %2341 = vmatprep.subr.mxu0 0.0
    %2342 = vmatpush1.msra.mxu0 %v2310
    %2343 = vmatprep.subr.mxu0 0.0
    %2344 = vmatpush1.msra.mxu0 %v2309
    %2345 = vmatprep.subr.mxu0 0.0
    %2346 = vmatpush1.msra.mxu0 %v2308
    %2347 = vmatprep.subr.mxu0 0.0
    %2348 = vmatpush1.msra.mxu0 %v2307
    %2349 = vmatprep.subr.mxu0 0.0
    %2350 = vmatpush1.msra.mxu0 %v2306
    %2351 = vmatprep.subr.mxu0 0.0
    %2352 = vmatpush2.msra.mxu0 0.0
    %2353 = vmatprep.subr.mxu0 0.0
    %2354 = vmatpush2.msra.mxu0 0.0
    %2355 = vmatprep.subr.mxu0 0.0
    %2356 = vmatpush2.msra.mxu0 0.0
    %2357 = vmatprep.subr.mxu0 0.0
    %2358 = vmatpush2.msra.mxu0 0.0
    %2359 = vmatprep.subr.mxu0 0.0
    %2360 = vmatpush2.msra.mxu0 0.0
    %2361 = vmatprep.subr.mxu0 0.0
    %2362 = vmatpush2.msra.mxu0 0.0
    %2363 = vmatprep.subr.mxu0 0.0
    %2364 = vmatpush2.msra.mxu0 0.0
    %2365 = vmatprep.subr.mxu0 0.0
    %2366 = vmatpush2.msra.mxu0 0.0
    %2367 = vmatprep.subr.mxu0 0.0
    %2368 = vmatpush2.msra.mxu0 0.0
    %2369 = vmatprep.subr.mxu0 0.0
    %2370 = vmatpush2.msra.mxu0 0.0
    %2371 = vmatprep.subr.mxu0 0.0
    %2372 = vmatpush2.msra.mxu0 0.0
    %2373 = vmatprep.subr.mxu0 0.0
    %2374 = vmatpush2.msra.mxu0 0.0
    %2375 = vmatprep.subr.mxu0 0.0
    %2376 = vmatpush2.msra.mxu0 0.0
    %2377 = vmatprep.subr.mxu0 0.0
    %2378 = vmatpush2.msra.mxu0 0.0
    %2379 = vmatprep.subr.mxu0 0.0
    %2380 = vmatpush2.msra.mxu0 0.0
    %2381 = vmatprep.subr.mxu0 0.0
    %2382 = vmatpush2.msra.mxu0 0.0
    %2383 = vmatprep.mubr.f32.mxu0 0.0
    %2384 = vmatmul.mubr.f32.gmra.mxu0 %v2317
    %v2385 = vpop.f32.mrf.mxu0
    %v2386 = vadd.f32 %v2315, %v2385
    %v2387 = vpop.f32.mrf.mxu0
    %2388 = vdwg.mxu0
    %v2389 = vxor.u32 %v2386, 2147483648
    %v2390 = vmul.f32 %v2389, 1.442695
    %v2391 = vpow.pop %v2390
    %v2392 = vadd.f32 %v2391, 1.0
    %v2393 = vrcp.pop %v2392
    %v2394 = vmul.f32 1.0, %v2393
    %v2395 = vtanh.pop %v2386
    %v2396 = vmul.f32 %v2394, %v2257
    %2398 = vrot.lane.b32.xlu0 %v2395, 80
    %v2399 = vpop.permute.xlu0 %2398
    %v2401 = vmul.f32 %v2394, %v2399
    %2403 = vrot.lane.b32.xlu0 %v2401, 16
    %v2404 = vpop.permute.xlu0 %2403
    %v2406 = vadd.f32 %v2396, %v2404
    %v2407 = vtanh.pop %v2406
    %2409 = vrot.lane.b32.xlu0 %v2407, 16
    %v2410 = vpop.permute.xlu0 %2409
    %v2412 = vmul.f32 %v2394, %v2410
    %v2415 = vunpack.c.l.s4 1966171168
    %v2416 = vunpack.c.0.s8 %v2415
    %v2417 = vlaneseq
    %v2418 = vshrl.u32 %v2417, 7
    %v2419 = vsub.s32 %v2416, %v2418
    %v2420 = vrot.slane %v2412, %v2419
    %v2421 = vcombine.high %v2420, %v2420
    %v2423 = vunpack.c.l.s4 1966171168
    %v2424 = vunpack.c.0.s8 %v2423
    %v2425 = vlaneseq
    %v2426 = vshrl.u32 %v2425, 7
    %v2427 = vsub.s32 %v2424, %v2426
    %v2428 = vrot.slane %v2420, %v2427
    %v2430 = vunpack.c.l.s4 1966171168
    %v2431 = vunpack.c.0.s8 %v2430
    %v2432 = vlaneseq
    %v2433 = vshrl.u32 %v2432, 7
    %v2434 = vsub.s32 %v2431, %v2433
    %v2435 = vrot.slane %v2421, %v2434
    %v2436 = vlaneseq
    %v2437 = vshrl.u32 %v2436, 7
    %v2438 = vsub.s32 0, %v2437
    %v2439 = vrot.slane %v2428, %v2438
    %v2440 = vlaneseq
    %v2441 = vshrl.u32 %v2440, 7
    %v2442 = vsub.s32 0, %v2441
    %v2443 = vrot.slane %v2435, %v2442
    %2444 = vrot.lane.b32.xlu0 %v2439, 112
    %v2445 = vpop.permute.xlu0 %2444
    %2446 = vrot.lane.b32.xlu0 %v2443, 112
    %v2447 = vpop.permute.xlu0 %2446
    %2450 = vst.msk [vmem:[#allocation2] sm:$0x1] %vm1406, %v2445
    %2451 = vst.msk [vmem:[#allocation2 + $0x8] sm:$0x1] %vm1406, %v2447
    %v2452 = vld [vmem:[#allocation2] sm:$0xff]
    %v2453 = vld [vmem:[#allocation2 + $0x8] sm:$0xff]
    %v2454 = vld [vmem:[%s9] sm:$0xff]
    %v2455 = vld [vmem:[%s9 + $0x8] sm:$0xff]
    %v2456 = vld [vmem:[%s9 + $0x10] sm:$0xff]
    %v2457 = vld [vmem:[%s9 + $0x18] sm:$0xff]
    %v2458 = vld [vmem:[%s16 + $0x2] sm:$0x1]
    %v2459 = vlaneseq
    %v2460 = vshrl.u32 %v2459, 7
    %v2461 = vsub.s32 0, %v2460
    %v2462 = vrot.slane %v2458, %v2461
    %v2464 = vsel %vm59, %v2452, 0
    %v2467 = vsel %vm59, %v2453, 0
    %2469 = vmatprep.subr.mxu0 0.0
    %2470 = vmatpush1.msra.mxu0 0.0
    %2471 = vmatprep.subr.mxu0 0.0
    %2472 = vmatpush1.msra.mxu0 0.0
    %2473 = vmatprep.subr.mxu0 0.0
    %2474 = vmatpush1.msra.mxu0 0.0
    %2475 = vmatprep.subr.mxu0 0.0
    %2476 = vmatpush1.msra.mxu0 0.0
    %2477 = vmatprep.subr.mxu0 0.0
    %2478 = vmatpush1.msra.mxu0 0.0
    %2479 = vmatprep.subr.mxu0 0.0
    %2480 = vmatpush1.msra.mxu0 0.0
    %2481 = vmatprep.subr.mxu0 0.0
    %2482 = vmatpush1.msra.mxu0 0.0
    %2483 = vmatprep.subr.mxu0 0.0
    %2484 = vmatpush1.msra.mxu0 0.0
    %2485 = vmatprep.subr.mxu0 0.0
    %2486 = vmatpush1.msra.mxu0 0.0
    %2487 = vmatprep.subr.mxu0 0.0
    %2488 = vmatpush1.msra.mxu0 0.0
    %2489 = vmatprep.subr.mxu0 0.0
    %2490 = vmatpush1.msra.mxu0 0.0
    %2491 = vmatprep.subr.mxu0 0.0
    %2492 = vmatpush1.msra.mxu0 0.0
    %2493 = vmatprep.subr.mxu0 0.0
    %2494 = vmatpush1.msra.mxu0 %v2457
    %2495 = vmatprep.subr.mxu0 0.0
    %2496 = vmatpush1.msra.mxu0 %v2456
    %2497 = vmatprep.subr.mxu0 0.0
    %2498 = vmatpush1.msra.mxu0 %v2455
    %2499 = vmatprep.subr.mxu0 0.0
    %2500 = vmatpush1.msra.mxu0 %v2454
    %2501 = vmatprep.subr.mxu0 0.0
    %2502 = vmatpush2.msra.mxu0 0.0
    %2503 = vmatprep.subr.mxu0 0.0
    %2504 = vmatpush2.msra.mxu0 0.0
    %2505 = vmatprep.subr.mxu0 0.0
    %2506 = vmatpush2.msra.mxu0 0.0
    %2507 = vmatprep.subr.mxu0 0.0
    %2508 = vmatpush2.msra.mxu0 0.0
    %2509 = vmatprep.subr.mxu0 0.0
    %2510 = vmatpush2.msra.mxu0 0.0
    %2511 = vmatprep.subr.mxu0 0.0
    %2512 = vmatpush2.msra.mxu0 0.0
    %2513 = vmatprep.subr.mxu0 0.0
    %2514 = vmatpush2.msra.mxu0 0.0
    %2515 = vmatprep.subr.mxu0 0.0
    %2516 = vmatpush2.msra.mxu0 0.0
    %2517 = vmatprep.subr.mxu0 0.0
    %2518 = vmatpush2.msra.mxu0 0.0
    %2519 = vmatprep.subr.mxu0 0.0
    %2520 = vmatpush2.msra.mxu0 0.0
    %2521 = vmatprep.subr.mxu0 0.0
    %2522 = vmatpush2.msra.mxu0 0.0
    %2523 = vmatprep.subr.mxu0 0.0
    %2524 = vmatpush2.msra.mxu0 0.0
    %2525 = vmatprep.subr.mxu0 0.0
    %2526 = vmatpush2.msra.mxu0 0.0
    %2527 = vmatprep.subr.mxu0 0.0
    %2528 = vmatpush2.msra.mxu0 0.0
    %2529 = vmatprep.subr.mxu0 0.0
    %2530 = vmatpush2.msra.mxu0 0.0
    %2531 = vmatprep.subr.mxu0 0.0
    %2532 = vmatpush2.msra.mxu0 0.0
    %2533 = vmatprep.mubr.f32.mxu0 0.0
    %2534 = vmatmul.mubr.f32.gmra.mxu0 %v2464
    %v2535 = vpop.f32.mrf.mxu0
    %v2536 = vadd.f32 %v2462, %v2535
    %v2537 = vpop.f32.mrf.mxu0
    %2538 = vmatprep.mubr.f32.mxu0 0.0
    %2539 = vmatmul.mubr.f32.gmra.mxu0 %v2467
    %v2540 = vpop.f32.mrf.mxu0
    %v2541 = vadd.f32 %v2462, %v2540
    %v2542 = vpop.f32.mrf.mxu0
    %2543 = vdwg.mxu0
    %v2544 = vsel %vm59, %v2536, 0.0
    %2545 = vadd.xlane.f32.xlu0 %v2544
    %v2546 = vpop.xlane.xlu0 %2545
    %v2547 = vsel %vm59, %v2541, 0.0
    %2548 = vadd.xlane.f32.xlu0 %v2547
    %v2549 = vpop.xlane.xlu0 %2548
    %v2550 = vrcp.pop 32.0
    %v2551 = vmul.f32 %v2546, %v2550
    %v2552 = vmul.f32 %v2549, %v2550
    %v2553 = vsub.f32 %v2536, %v2551
    %v2554 = vsub.f32 %v2541, %v2552
    %v2555 = vmul.f32 %v2553, %v2553
    %v2556 = vmul.f32 %v2554, %v2554
    %v2557 = vsel %vm59, %v2555, 0.0
    %2558 = vadd.xlane.f32.xlu0 %v2557
    %v2559 = vpop.xlane.xlu0 %2558
    %v2560 = vsel %vm59, %v2556, 0.0
    %2561 = vadd.xlane.f32.xlu0 %v2560
    %v2562 = vpop.xlane.xlu0 %2561
    %v2563 = vmul.f32 %v2559, %v2550
    %v2564 = vmul.f32 %v2562, %v2550
    %v2565 = vadd.f32 %v2563, 1e-05
    %v2566 = vadd.f32 %v2564, 1e-05
    %v2567 = vrsqrt.pop %v2565
    %v2568 = vrsqrt.pop %v2566
    %v2569 = vmul.f32 %v2553, %v2567
    %v2570 = vmul.f32 %v2554, %v2568
    %v2571 = vld [vmem:[%s16 + $0x3] sm:$0x1]
    %v2572 = vlaneseq
    %v2573 = vshrl.u32 %v2572, 7
    %v2574 = vsub.s32 0, %v2573
    %v2575 = vrot.slane %v2571, %v2574
    %v2576 = vmul.f32 %v2569, %v2575
    %v2577 = vmul.f32 %v2570, %v2575
    %v2578 = vld [vmem:[%s16 + $0x4] sm:$0x1]
    %v2579 = vlaneseq
    %v2580 = vshrl.u32 %v2579, 7
    %v2581 = vsub.s32 0, %v2580
    %v2582 = vrot.slane %v2578, %v2581
    %v2583 = vadd.f32 %v2576, %v2582
    %v2584 = vadd.f32 %v2577, %v2582
    %v2585 = vld [vmem:[%s1] sm:$0x3]
    %2587 = vrot.lane.b32.xlu0 %v2585, 32
    %v2588 = vpop.permute.xlu0 %2587
    %v2590 = vsel %vm59, 0.0, %v2588
    %v2591 = vld [vmem:[%s10] sm:$0xff]
    %v2592 = vld [vmem:[%s10 + $0x8] sm:$0xff]
    %v2593 = vld [vmem:[%s10 + $0x10] sm:$0xff]
    %v2594 = vld [vmem:[%s10 + $0x18] sm:$0xff]
    %v2595 = vld [vmem:[%s10 + $0x20] sm:$0xff]
    %v2596 = vld [vmem:[%s10 + $0x28] sm:$0xff]
    %v2597 = vld [vmem:[%s10 + $0x30] sm:$0xff]
    %v2598 = vld [vmem:[%s10 + $0x38] sm:$0xff]
    %v2599 = vld [vmem:[%s16 + $0x5] sm:$0x1]
    %v2600 = vlaneseq
    %v2601 = vshrl.u32 %v2600, 7
    %v2602 = vsub.s32 0, %v2601
    %v2603 = vrot.slane %v2599, %v2602
    %vm2604 = vcmask 523264
    %v2606 = vsel %vm2604, %v2590, 0
    %2608 = vmatprep.subr.mxu0 0.0
    %2609 = vmatpush1.msra.mxu0 0.0
    %2610 = vmatprep.subr.mxu0 0.0
    %2611 = vmatpush1.msra.mxu0 0.0
    %2612 = vmatprep.subr.mxu0 0.0
    %2613 = vmatpush1.msra.mxu0 0.0
    %2614 = vmatprep.subr.mxu0 0.0
    %2615 = vmatpush1.msra.mxu0 0.0
    %2616 = vmatprep.subr.mxu0 0.0
    %2617 = vmatpush1.msra.mxu0 0.0
    %2618 = vmatprep.subr.mxu0 0.0
    %2619 = vmatpush1.msra.mxu0 0.0
    %2620 = vmatprep.subr.mxu0 0.0
    %2621 = vmatpush1.msra.mxu0 0.0
    %2622 = vmatprep.subr.mxu0 0.0
    %2623 = vmatpush1.msra.mxu0 0.0
    %2624 = vmatprep.subr.mxu0 0.0
    %2625 = vmatpush1.msra.mxu0 %v2598
    %2626 = vmatprep.subr.mxu0 0.0
    %2627 = vmatpush1.msra.mxu0 %v2597
    %2628 = vmatprep.subr.mxu0 0.0
    %2629 = vmatpush1.msra.mxu0 %v2596
    %2630 = vmatprep.subr.mxu0 0.0
    %2631 = vmatpush1.msra.mxu0 %v2595
    %2632 = vmatprep.subr.mxu0 0.0
    %2633 = vmatpush1.msra.mxu0 %v2594
    %2634 = vmatprep.subr.mxu0 0.0
    %2635 = vmatpush1.msra.mxu0 %v2593
    %2636 = vmatprep.subr.mxu0 0.0
    %2637 = vmatpush1.msra.mxu0 %v2592
    %2638 = vmatprep.subr.mxu0 0.0
    %2639 = vmatpush1.msra.mxu0 %v2591
    %2640 = vmatprep.subr.mxu0 0.0
    %2641 = vmatpush2.msra.mxu0 0.0
    %2642 = vmatprep.subr.mxu0 0.0
    %2643 = vmatpush2.msra.mxu0 0.0
    %2644 = vmatprep.subr.mxu0 0.0
    %2645 = vmatpush2.msra.mxu0 0.0
    %2646 = vmatprep.subr.mxu0 0.0
    %2647 = vmatpush2.msra.mxu0 0.0
    %2648 = vmatprep.subr.mxu0 0.0
    %2649 = vmatpush2.msra.mxu0 0.0
    %2650 = vmatprep.subr.mxu0 0.0
    %2651 = vmatpush2.msra.mxu0 0.0
    %2652 = vmatprep.subr.mxu0 0.0
    %2653 = vmatpush2.msra.mxu0 0.0
    %2654 = vmatprep.subr.mxu0 0.0
    %2655 = vmatpush2.msra.mxu0 0.0
    %2656 = vmatprep.subr.mxu0 0.0
    %2657 = vmatpush2.msra.mxu0 0.0
    %2658 = vmatprep.subr.mxu0 0.0
    %2659 = vmatpush2.msra.mxu0 0.0
    %2660 = vmatprep.subr.mxu0 0.0
    %2661 = vmatpush2.msra.mxu0 0.0
    %2662 = vmatprep.subr.mxu0 0.0
    %2663 = vmatpush2.msra.mxu0 0.0
    %2664 = vmatprep.subr.mxu0 0.0
    %2665 = vmatpush2.msra.mxu0 0.0
    %2666 = vmatprep.subr.mxu0 0.0
    %2667 = vmatpush2.msra.mxu0 0.0
    %2668 = vmatprep.subr.mxu0 0.0
    %2669 = vmatpush2.msra.mxu0 0.0
    %2670 = vmatprep.subr.mxu0 0.0
    %2671 = vmatpush2.msra.mxu0 0.0
    %2672 = vmatprep.mubr.f32.mxu0 0.0
    %2673 = vmatmul.mubr.f32.gmra.mxu0 %v2606
    %v2674 = vpop.f32.mrf.mxu0
    %v2675 = vadd.f32 %v2603, %v2674
    %v2676 = vpop.f32.mrf.mxu0
    %2677 = vdwg.mxu0
    %v2678 = vmax.f32 %v2675, 0.0
    %v2679 = vld [vmem:[%s16 + $0x6] sm:$0x1]
    %v2680 = vsel %vm59, %v2678, %v1219
    %v2681 = vld [vmem:[%s11] sm:$0xff]
    %v2682 = vld [vmem:[%s11 + $0x8] sm:$0xff]
    %v2683 = vld [vmem:[%s11 + $0x10] sm:$0xff]
    %v2684 = vld [vmem:[%s11 + $0x18] sm:$0xff]
    %v2685 = vld [vmem:[%s11 + $0x20] sm:$0xff]
    %v2686 = vld [vmem:[%s11 + $0x28] sm:$0xff]
    %v2687 = vlaneseq
    %v2688 = vshrl.u32 %v2687, 7
    %v2689 = vsub.s32 0, %v2688
    %v2690 = vrot.slane %v2679, %v2689
    %v2692 = vsel %vm71, %v2680, 0
    %2694 = vmatprep.subr.mxu0 0.0
    %2695 = vmatpush1.msra.mxu0 0.0
    %2696 = vmatprep.subr.mxu0 0.0
    %2697 = vmatpush1.msra.mxu0 0.0
    %2698 = vmatprep.subr.mxu0 0.0
    %2699 = vmatpush1.msra.mxu0 0.0
    %2700 = vmatprep.subr.mxu0 0.0
    %2701 = vmatpush1.msra.mxu0 0.0
    %2702 = vmatprep.subr.mxu0 0.0
    %2703 = vmatpush1.msra.mxu0 0.0
    %2704 = vmatprep.subr.mxu0 0.0
    %2705 = vmatpush1.msra.mxu0 0.0
    %2706 = vmatprep.subr.mxu0 0.0
    %2707 = vmatpush1.msra.mxu0 0.0
    %2708 = vmatprep.subr.mxu0 0.0
    %2709 = vmatpush1.msra.mxu0 0.0
    %2710 = vmatprep.subr.mxu0 0.0
    %2711 = vmatpush1.msra.mxu0 0.0
    %2712 = vmatprep.subr.mxu0 0.0
    %2713 = vmatpush1.msra.mxu0 0.0
    %2714 = vmatprep.subr.mxu0 0.0
    %2715 = vmatpush1.msra.mxu0 %v2686
    %2716 = vmatprep.subr.mxu0 0.0
    %2717 = vmatpush1.msra.mxu0 %v2685
    %2718 = vmatprep.subr.mxu0 0.0
    %2719 = vmatpush1.msra.mxu0 %v2684
    %2720 = vmatprep.subr.mxu0 0.0
    %2721 = vmatpush1.msra.mxu0 %v2683
    %2722 = vmatprep.subr.mxu0 0.0
    %2723 = vmatpush1.msra.mxu0 %v2682
    %2724 = vmatprep.subr.mxu0 0.0
    %2725 = vmatpush1.msra.mxu0 %v2681
    %2726 = vmatprep.subr.mxu0 0.0
    %2727 = vmatpush2.msra.mxu0 0.0
    %2728 = vmatprep.subr.mxu0 0.0
    %2729 = vmatpush2.msra.mxu0 0.0
    %2730 = vmatprep.subr.mxu0 0.0
    %2731 = vmatpush2.msra.mxu0 0.0
    %2732 = vmatprep.subr.mxu0 0.0
    %2733 = vmatpush2.msra.mxu0 0.0
    %2734 = vmatprep.subr.mxu0 0.0
    %2735 = vmatpush2.msra.mxu0 0.0
    %2736 = vmatprep.subr.mxu0 0.0
    %2737 = vmatpush2.msra.mxu0 0.0
    %2738 = vmatprep.subr.mxu0 0.0
    %2739 = vmatpush2.msra.mxu0 0.0
    %2740 = vmatprep.subr.mxu0 0.0
    %2741 = vmatpush2.msra.mxu0 0.0
    %2742 = vmatprep.subr.mxu0 0.0
    %2743 = vmatpush2.msra.mxu0 0.0
    %2744 = vmatprep.subr.mxu0 0.0
    %2745 = vmatpush2.msra.mxu0 0.0
    %2746 = vmatprep.subr.mxu0 0.0
    %2747 = vmatpush2.msra.mxu0 0.0
    %2748 = vmatprep.subr.mxu0 0.0
    %2749 = vmatpush2.msra.mxu0 0.0
    %2750 = vmatprep.subr.mxu0 0.0
    %2751 = vmatpush2.msra.mxu0 0.0
    %2752 = vmatprep.subr.mxu0 0.0
    %2753 = vmatpush2.msra.mxu0 0.0
    %2754 = vmatprep.subr.mxu0 0.0
    %2755 = vmatpush2.msra.mxu0 0.0
    %2756 = vmatprep.subr.mxu0 0.0
    %2757 = vmatpush2.msra.mxu0 0.0
    %2758 = vmatprep.mubr.f32.mxu0 0.0
    %2759 = vmatmul.mubr.f32.gmra.mxu0 %v2692
    %v2760 = vpop.f32.mrf.mxu0
    %v2761 = vadd.f32 %v2690, %v2760
    %v2762 = vpop.f32.mrf.mxu0
    %2763 = vdwg.mxu0
    %v2764 = vxor.u32 %v2761, 2147483648
    %v2765 = vmul.f32 %v2764, 1.442695
    %v2766 = vpow.pop %v2765
    %v2767 = vadd.f32 %v2766, 1.0
    %v2768 = vrcp.pop %v2767
    %v2769 = vmul.f32 1.0, %v2768
    %v2770 = vtanh.pop %v2761
    %v2771 = vmul.f32 %v2769, %v1213
    %2773 = vrot.lane.b32.xlu0 %v2770, 80
    %v2774 = vpop.permute.xlu0 %2773
    %v2776 = vmul.f32 %v2769, %v2774
    %2778 = vrot.lane.b32.xlu0 %v2776, 16
    %v2779 = vpop.permute.xlu0 %2778
    %v2781 = vadd.f32 %v2771, %v2779
    %v2782 = vtanh.pop %v2781
    %2784 = vrot.lane.b32.xlu0 %v2782, 16
    %v2785 = vpop.permute.xlu0 %2784
    %v2787 = vmul.f32 %v2769, %v2785
    %2789 = vrot.lane.b32.xlu0 %v2787, 96
    %v2790 = vpop.permute.xlu0 %2789
    %vm2792 = vcmask 130048
    %v2793 = vsel %vm2792, %v2790, %v2781
    %v2794 = vld [vmem:[%s12] sm:$0xff]
    %v2795 = vld [vmem:[%s12 + $0x8] sm:$0xff]
    %v2796 = vld [vmem:[%s12 + $0x10] sm:$0xff]
    %v2797 = vld [vmem:[%s12 + $0x18] sm:$0xff]
    %v2798 = vld [vmem:[%s16 + $0x7] sm:$0x1]
    %v2799 = vlaneseq
    %v2800 = vshrl.u32 %v2799, 7
    %v2801 = vsub.s32 0, %v2800
    %v2802 = vrot.slane %v2798, %v2801
    %v2804 = vsel %vm59, %v2793, 0
    %2806 = vmatprep.subr.mxu0 0.0
    %2807 = vmatpush1.msra.mxu0 0.0
    %2808 = vmatprep.subr.mxu0 0.0
    %2809 = vmatpush1.msra.mxu0 0.0
    %2810 = vmatprep.subr.mxu0 0.0
    %2811 = vmatpush1.msra.mxu0 0.0
    %2812 = vmatprep.subr.mxu0 0.0
    %2813 = vmatpush1.msra.mxu0 0.0
    %2814 = vmatprep.subr.mxu0 0.0
    %2815 = vmatpush1.msra.mxu0 0.0
    %2816 = vmatprep.subr.mxu0 0.0
    %2817 = vmatpush1.msra.mxu0 0.0
    %2818 = vmatprep.subr.mxu0 0.0
    %2819 = vmatpush1.msra.mxu0 0.0
    %2820 = vmatprep.subr.mxu0 0.0
    %2821 = vmatpush1.msra.mxu0 0.0
    %2822 = vmatprep.subr.mxu0 0.0
    %2823 = vmatpush1.msra.mxu0 0.0
    %2824 = vmatprep.subr.mxu0 0.0
    %2825 = vmatpush1.msra.mxu0 0.0
    %2826 = vmatprep.subr.mxu0 0.0
    %2827 = vmatpush1.msra.mxu0 0.0
    %2828 = vmatprep.subr.mxu0 0.0
    %2829 = vmatpush1.msra.mxu0 0.0
    %2830 = vmatprep.subr.mxu0 0.0
    %2831 = vmatpush1.msra.mxu0 %v2797
    %2832 = vmatprep.subr.mxu0 0.0
    %2833 = vmatpush1.msra.mxu0 %v2796
    %2834 = vmatprep.subr.mxu0 0.0
    %2835 = vmatpush1.msra.mxu0 %v2795
    %2836 = vmatprep.subr.mxu0 0.0
    %2837 = vmatpush1.msra.mxu0 %v2794
    %2838 = vmatprep.subr.mxu0 0.0
    %2839 = vmatpush2.msra.mxu0 0.0
    %2840 = vmatprep.subr.mxu0 0.0
    %2841 = vmatpush2.msra.mxu0 0.0
    %2842 = vmatprep.subr.mxu0 0.0
    %2843 = vmatpush2.msra.mxu0 0.0
    %2844 = vmatprep.subr.mxu0 0.0
    %2845 = vmatpush2.msra.mxu0 0.0
    %2846 = vmatprep.subr.mxu0 0.0
    %2847 = vmatpush2.msra.mxu0 0.0
    %2848 = vmatprep.subr.mxu0 0.0
    %2849 = vmatpush2.msra.mxu0 0.0
    %2850 = vmatprep.subr.mxu0 0.0
    %2851 = vmatpush2.msra.mxu0 0.0
    %2852 = vmatprep.subr.mxu0 0.0
    %2853 = vmatpush2.msra.mxu0 0.0
    %2854 = vmatprep.subr.mxu0 0.0
    %2855 = vmatpush2.msra.mxu0 0.0
    %2856 = vmatprep.subr.mxu0 0.0
    %2857 = vmatpush2.msra.mxu0 0.0
    %2858 = vmatprep.subr.mxu0 0.0
    %2859 = vmatpush2.msra.mxu0 0.0
    %2860 = vmatprep.subr.mxu0 0.0
    %2861 = vmatpush2.msra.mxu0 0.0
    %2862 = vmatprep.subr.mxu0 0.0
    %2863 = vmatpush2.msra.mxu0 0.0
    %2864 = vmatprep.subr.mxu0 0.0
    %2865 = vmatpush2.msra.mxu0 0.0
    %2866 = vmatprep.subr.mxu0 0.0
    %2867 = vmatpush2.msra.mxu0 0.0
    %2868 = vmatprep.subr.mxu0 0.0
    %2869 = vmatpush2.msra.mxu0 0.0
    %2870 = vmatprep.mubr.f32.mxu0 0.0
    %2871 = vmatmul.mubr.f32.gmra.mxu0 %v2804
    %v2872 = vpop.f32.mrf.mxu0
    %v2873 = vadd.f32 %v2802, %v2872
    %v2874 = vpop.f32.mrf.mxu0
    %2875 = vdwg.mxu0
    %v2876 = vld [vmem:[%s16 + $0x8] sm:$0x1]
    %v2877 = vlaneseq
    %v2878 = vshrl.u32 %v2877, 7
    %v2879 = vsub.s32 0, %v2878
    %v2880 = vrot.slane %v2876, %v2879
    %v2881 = vmul.f32 %v2873, %v2880
    %vm2882 = vcmask 254976
    %v2883 = vsel %vm2882, %v2881, 0.0
    %2884 = vadd.xlane.f32.xlu0 %v2883
    %v2885 = vpop.xlane.xlu0 %2884
    %v2888 = vunpack.c.l.s4 1966171168
    %v2889 = vunpack.c.0.s8 %v2888
    %v2890 = vlaneseq
    %v2891 = vshrl.u32 %v2890, 7
    %v2892 = vsub.s32 %v2889, %v2891
    %v2893 = vrot.slane %v2873, %v2892
    %v2894 = vcombine.high %v2893, %v2893
    %v2896 = vunpack.c.l.s4 1966171168
    %v2897 = vunpack.c.0.s8 %v2896
    %v2898 = vlaneseq
    %v2899 = vshrl.u32 %v2898, 7
    %v2900 = vsub.s32 %v2897, %v2899
    %v2901 = vrot.slane %v2893, %v2900
    %v2903 = vunpack.c.l.s4 1966171168
    %v2904 = vunpack.c.0.s8 %v2903
    %v2905 = vlaneseq
    %v2906 = vshrl.u32 %v2905, 7
    %v2907 = vsub.s32 %v2904, %v2906
    %v2908 = vrot.slane %v2894, %v2907
    %v2909 = vsel %vm59, %v2901, 0
    %v2912 = vsel %vm59, %v2583, 0
    %2914 = vmatprep.subr.mxu0 0.0
    %2915 = vmatpush1.xpose.msra.mxu0 0.0
    %2916 = vmatprep.subr.mxu0 0.0
    %2917 = vmatpush1.xpose.msra.mxu0 0.0
    %2918 = vmatprep.subr.mxu0 0.0
    %2919 = vmatpush1.xpose.msra.mxu0 0.0
    %2920 = vmatprep.subr.mxu0 0.0
    %2921 = vmatpush1.xpose.msra.mxu0 0.0
    %2922 = vmatprep.subr.mxu0 0.0
    %2923 = vmatpush1.xpose.msra.mxu0 0.0
    %2924 = vmatprep.subr.mxu0 0.0
    %2925 = vmatpush1.xpose.msra.mxu0 0.0
    %2926 = vmatprep.subr.mxu0 0.0
    %2927 = vmatpush1.xpose.msra.mxu0 0.0
    %2928 = vmatprep.subr.mxu0 0.0
    %2929 = vmatpush1.xpose.msra.mxu0 0.0
    %2930 = vmatprep.subr.mxu0 0.0
    %2931 = vmatpush1.xpose.msra.mxu0 0.0
    %2932 = vmatprep.subr.mxu0 0.0
    %2933 = vmatpush1.xpose.msra.mxu0 0.0
    %2934 = vmatprep.subr.mxu0 0.0
    %2935 = vmatpush1.xpose.msra.mxu0 0.0
    %2936 = vmatprep.subr.mxu0 0.0
    %2937 = vmatpush1.xpose.msra.mxu0 0.0
    %2938 = vmatprep.subr.mxu0 0.0
    %2939 = vmatpush1.xpose.msra.mxu0 0.0
    %2940 = vmatprep.subr.mxu0 0.0
    %2941 = vmatpush1.xpose.msra.mxu0 0.0
    %2942 = vmatprep.subr.mxu0 0.0
    %2943 = vmatpush1.xpose.msra.mxu0 0.0
    %2944 = vmatprep.subr.mxu0 0.0
    %2945 = vmatpush1.xpose.msra.mxu0 %v2912
    %2946 = vmatprep.subr.mxu0 0.0
    %2947 = vmatpush2.xpose.msra.mxu0 0.0
    %2948 = vmatprep.subr.mxu0 0.0
    %2949 = vmatpush2.xpose.msra.mxu0 0.0
    %2950 = vmatprep.subr.mxu0 0.0
    %2951 = vmatpush2.xpose.msra.mxu0 0.0
    %2952 = vmatprep.subr.mxu0 0.0
    %2953 = vmatpush2.xpose.msra.mxu0 0.0
    %2954 = vmatprep.subr.mxu0 0.0
    %2955 = vmatpush2.xpose.msra.mxu0 0.0
    %2956 = vmatprep.subr.mxu0 0.0
    %2957 = vmatpush2.xpose.msra.mxu0 0.0
    %2958 = vmatprep.subr.mxu0 0.0
    %2959 = vmatpush2.xpose.msra.mxu0 0.0
    %2960 = vmatprep.subr.mxu0 0.0
    %2961 = vmatpush2.xpose.msra.mxu0 0.0
    %2962 = vmatprep.subr.mxu0 0.0
    %2963 = vmatpush2.xpose.msra.mxu0 0.0
    %2964 = vmatprep.subr.mxu0 0.0
    %2965 = vmatpush2.xpose.msra.mxu0 0.0
    %2966 = vmatprep.subr.mxu0 0.0
    %2967 = vmatpush2.xpose.msra.mxu0 0.0
    %2968 = vmatprep.subr.mxu0 0.0
    %2969 = vmatpush2.xpose.msra.mxu0 0.0
    %2970 = vmatprep.subr.mxu0 0.0
    %2971 = vmatpush2.xpose.msra.mxu0 0.0
    %2972 = vmatprep.subr.mxu0 0.0
    %2973 = vmatpush2.xpose.msra.mxu0 0.0
    %2974 = vmatprep.subr.mxu0 0.0
    %2975 = vmatpush2.xpose.msra.mxu0 0.0
    %2976 = vmatprep.subr.mxu0 0.0
    %2977 = vmatpush2.xpose.msra.mxu0 0.0
    %2978 = vmatprep.mubr.f32.mxu0 0.0
    %2979 = vmatmul.mubr.f32.gmra.mxu0 %v2909
    %v2980 = vpop.f32.mrf.mxu0
    %v2981 = vadd.f32 0.0, %v2980
    %v2982 = vpop.f32.mrf.mxu0
    %2983 = vdwg.mxu0
    %v2984 = vsel %vm59, %v2908, 0
    %v2987 = vsel %vm59, %v2584, 0
    %2989 = vmatprep.subr.mxu0 0.0
    %2990 = vmatpush1.xpose.msra.mxu0 0.0
    %2991 = vmatprep.subr.mxu0 0.0
    %2992 = vmatpush1.xpose.msra.mxu0 0.0
    %2993 = vmatprep.subr.mxu0 0.0
    %2994 = vmatpush1.xpose.msra.mxu0 0.0
    %2995 = vmatprep.subr.mxu0 0.0
    %2996 = vmatpush1.xpose.msra.mxu0 0.0
    %2997 = vmatprep.subr.mxu0 0.0
    %2998 = vmatpush1.xpose.msra.mxu0 0.0
    %2999 = vmatprep.subr.mxu0 0.0
    %3000 = vmatpush1.xpose.msra.mxu0 0.0
    %3001 = vmatprep.subr.mxu0 0.0
    %3002 = vmatpush1.xpose.msra.mxu0 0.0
    %3003 = vmatprep.subr.mxu0 0.0
    %3004 = vmatpush1.xpose.msra.mxu0 0.0
    %3005 = vmatprep.subr.mxu0 0.0
    %3006 = vmatpush1.xpose.msra.mxu0 0.0
    %3007 = vmatprep.subr.mxu0 0.0
    %3008 = vmatpush1.xpose.msra.mxu0 0.0
    %3009 = vmatprep.subr.mxu0 0.0
    %3010 = vmatpush1.xpose.msra.mxu0 0.0
    %3011 = vmatprep.subr.mxu0 0.0
    %3012 = vmatpush1.xpose.msra.mxu0 0.0
    %3013 = vmatprep.subr.mxu0 0.0
    %3014 = vmatpush1.xpose.msra.mxu0 0.0
    %3015 = vmatprep.subr.mxu0 0.0
    %3016 = vmatpush1.xpose.msra.mxu0 0.0
    %3017 = vmatprep.subr.mxu0 0.0
    %3018 = vmatpush1.xpose.msra.mxu0 0.0
    %3019 = vmatprep.subr.mxu0 0.0
    %3020 = vmatpush1.xpose.msra.mxu0 %v2987
    %3021 = vmatprep.subr.mxu0 0.0
    %3022 = vmatpush2.xpose.msra.mxu0 0.0
    %3023 = vmatprep.subr.mxu0 0.0
    %3024 = vmatpush2.xpose.msra.mxu0 0.0
    %3025 = vmatprep.subr.mxu0 0.0
    %3026 = vmatpush2.xpose.msra.mxu0 0.0
    %3027 = vmatprep.subr.mxu0 0.0
    %3028 = vmatpush2.xpose.msra.mxu0 0.0
    %3029 = vmatprep.subr.mxu0 0.0
    %3030 = vmatpush2.xpose.msra.mxu0 0.0
    %3031 = vmatprep.subr.mxu0 0.0
    %3032 = vmatpush2.xpose.msra.mxu0 0.0
    %3033 = vmatprep.subr.mxu0 0.0
    %3034 = vmatpush2.xpose.msra.mxu0 0.0
    %3035 = vmatprep.subr.mxu0 0.0
    %3036 = vmatpush2.xpose.msra.mxu0 0.0
    %3037 = vmatprep.subr.mxu0 0.0
    %3038 = vmatpush2.xpose.msra.mxu0 0.0
    %3039 = vmatprep.subr.mxu0 0.0
    %3040 = vmatpush2.xpose.msra.mxu0 0.0
    %3041 = vmatprep.subr.mxu0 0.0
    %3042 = vmatpush2.xpose.msra.mxu0 0.0
    %3043 = vmatprep.subr.mxu0 0.0
    %3044 = vmatpush2.xpose.msra.mxu0 0.0
    %3045 = vmatprep.subr.mxu0 0.0
    %3046 = vmatpush2.xpose.msra.mxu0 0.0
    %3047 = vmatprep.subr.mxu0 0.0
    %3048 = vmatpush2.xpose.msra.mxu0 0.0
    %3049 = vmatprep.subr.mxu0 0.0
    %3050 = vmatpush2.xpose.msra.mxu0 0.0
    %3051 = vmatprep.subr.mxu0 0.0
    %3052 = vmatpush2.xpose.msra.mxu0 0.0
    %3053 = vmatprep.mubr.f32.mxu0 0.0
    %3054 = vmatmul.mubr.f32.gmra.mxu0 %v2984
    %v3055 = vpop.f32.mrf.mxu0
    %v3056 = vadd.f32 0.0, %v3055
    %v3057 = vpop.f32.mrf.mxu0
    %3058 = vdwg.mxu0
    %v3059 = vmul.f32 %v2885, 0.0
    %v3061 = vrot.slane %v3059, 1
    %v3064 = vadd.f32 %v2981, %v3059
    %v3065 = vadd.f32 %v3056, %v3061
    %v3066 = vld [vmem:[%s2] sm:$0x3]
    %v3068 = vrot.slane %v3066, 1
    %v3071 = vadd.f32 %v3064, %v3066
    %v3072 = vadd.f32 %v3065, %v3068
    %v3075 = vrot.slane %v3072, 7
    %vm3076 = vcmask 1041409
    %v3077 = vsel %vm3076, %v3075, %v3071
    %vm3079 = vcmask 58368
    %v3080 = vsel %vm3079, %v3077, -inf
    %3081 = vmax.xlane.f32.xlu0 %v3080
    %v3082 = vpop.xlane.xlu0 %3081
    %v3084 = vrot.slane %v3082, 1
    %v3087 = vsub.f32 %v3071, %v3082
    %v3088 = vsub.f32 %v3072, %v3084
    %v3089 = vmul.f32 %v3087, 1.442695
    %v3090 = vpow.pop %v3089
    %v3091 = vmul.f32 %v3088, 1.442695
    %v3092 = vpow.pop %v3091
    %v3095 = vrot.slane %v3092, 7
    %v3096 = vsel %vm3076, %v3095, %v3090
    %v3098 = vsel %vm3079, %v3096, 0.0
    %3099 = vadd.xlane.f32.xlu0 %v3098
    %v3100 = vpop.xlane.xlu0 %3099
    %v3102 = vrot.slane %v3100, 1
    %v3105 = vrcp.pop %v3100
    %v3106 = vmul.f32 %v3090, %v3105
    %v3107 = vrcp.pop %v3102
    %v3108 = vmul.f32 %v3092, %v3107
    %vm3109 = vcmask 64512
    %v3111 = vsel %vm3109, %v3106, 0
    %3113 = vmatprep.subr.mxu0 0.0
    %3114 = vmatpush1.msra.mxu0 0.0
    %3115 = vmatprep.subr.mxu0 0.0
    %3116 = vmatpush1.msra.mxu0 0.0
    %3117 = vmatprep.subr.mxu0 0.0
    %3118 = vmatpush1.msra.mxu0 0.0
    %3119 = vmatprep.subr.mxu0 0.0
    %3120 = vmatpush1.msra.mxu0 0.0
    %3121 = vmatprep.subr.mxu0 0.0
    %3122 = vmatpush1.msra.mxu0 0.0
    %3123 = vmatprep.subr.mxu0 0.0
    %3124 = vmatpush1.msra.mxu0 0.0
    %3125 = vmatprep.subr.mxu0 0.0
    %3126 = vmatpush1.msra.mxu0 0.0
    %3127 = vmatprep.subr.mxu0 0.0
    %3128 = vmatpush1.msra.mxu0 0.0
    %3129 = vmatprep.subr.mxu0 0.0
    %3130 = vmatpush1.msra.mxu0 0.0
    %3131 = vmatprep.subr.mxu0 0.0
    %3132 = vmatpush1.msra.mxu0 0.0
    %3133 = vmatprep.subr.mxu0 0.0
    %3134 = vmatpush1.msra.mxu0 0.0
    %3135 = vmatprep.subr.mxu0 0.0
    %3136 = vmatpush1.msra.mxu0 0.0
    %3137 = vmatprep.subr.mxu0 0.0
    %3138 = vmatpush1.msra.mxu0 0.0
    %3139 = vmatprep.subr.mxu0 0.0
    %3140 = vmatpush1.msra.mxu0 0.0
    %3141 = vmatprep.subr.mxu0 0.0
    %3142 = vmatpush1.msra.mxu0 0.0
    %3143 = vmatprep.subr.mxu0 0.0
    %3144 = vmatpush1.msra.mxu0 %v2452
    %3145 = vmatprep.subr.mxu0 0.0
    %3146 = vmatpush2.msra.mxu0 0.0
    %3147 = vmatprep.subr.mxu0 0.0
    %3148 = vmatpush2.msra.mxu0 0.0
    %3149 = vmatprep.subr.mxu0 0.0
    %3150 = vmatpush2.msra.mxu0 0.0
    %3151 = vmatprep.subr.mxu0 0.0
    %3152 = vmatpush2.msra.mxu0 0.0
    %3153 = vmatprep.subr.mxu0 0.0
    %3154 = vmatpush2.msra.mxu0 0.0
    %3155 = vmatprep.subr.mxu0 0.0
    %3156 = vmatpush2.msra.mxu0 0.0
    %3157 = vmatprep.subr.mxu0 0.0
    %3158 = vmatpush2.msra.mxu0 0.0
    %3159 = vmatprep.subr.mxu0 0.0
    %3160 = vmatpush2.msra.mxu0 0.0
    %3161 = vmatprep.subr.mxu0 0.0
    %3162 = vmatpush2.msra.mxu0 0.0
    %3163 = vmatprep.subr.mxu0 0.0
    %3164 = vmatpush2.msra.mxu0 0.0
    %3165 = vmatprep.subr.mxu0 0.0
    %3166 = vmatpush2.msra.mxu0 0.0
    %3167 = vmatprep.subr.mxu0 0.0
    %3168 = vmatpush2.msra.mxu0 0.0
    %3169 = vmatprep.subr.mxu0 0.0
    %3170 = vmatpush2.msra.mxu0 0.0
    %3171 = vmatprep.subr.mxu0 0.0
    %3172 = vmatpush2.msra.mxu0 0.0
    %3173 = vmatprep.subr.mxu0 0.0
    %3174 = vmatpush2.msra.mxu0 0.0
    %3175 = vmatprep.subr.mxu0 0.0
    %3176 = vmatpush2.msra.mxu0 0.0
    %3177 = vmatprep.mubr.f32.mxu0 0.0
    %3178 = vmatmul.mubr.f32.gmra.mxu0 %v3111
    %v3179 = vpop.f32.mrf.mxu0
    %v3180 = vadd.f32 0.0, %v3179
    %v3181 = vpop.f32.mrf.mxu0
    %3182 = vdwg.mxu0
    %v3184 = vsel %vm3109, %v3108, 0
    %3186 = vmatprep.subr.mxu0 0.0
    %3187 = vmatpush1.msra.mxu0 0.0
    %3188 = vmatprep.subr.mxu0 0.0
    %3189 = vmatpush1.msra.mxu0 0.0
    %3190 = vmatprep.subr.mxu0 0.0
    %3191 = vmatpush1.msra.mxu0 0.0
    %3192 = vmatprep.subr.mxu0 0.0
    %3193 = vmatpush1.msra.mxu0 0.0
    %3194 = vmatprep.subr.mxu0 0.0
    %3195 = vmatpush1.msra.mxu0 0.0
    %3196 = vmatprep.subr.mxu0 0.0
    %3197 = vmatpush1.msra.mxu0 0.0
    %3198 = vmatprep.subr.mxu0 0.0
    %3199 = vmatpush1.msra.mxu0 0.0
    %3200 = vmatprep.subr.mxu0 0.0
    %3201 = vmatpush1.msra.mxu0 0.0
    %3202 = vmatprep.subr.mxu0 0.0
    %3203 = vmatpush1.msra.mxu0 0.0
    %3204 = vmatprep.subr.mxu0 0.0
    %3205 = vmatpush1.msra.mxu0 0.0
    %3206 = vmatprep.subr.mxu0 0.0
    %3207 = vmatpush1.msra.mxu0 0.0
    %3208 = vmatprep.subr.mxu0 0.0
    %3209 = vmatpush1.msra.mxu0 0.0
    %3210 = vmatprep.subr.mxu0 0.0
    %3211 = vmatpush1.msra.mxu0 0.0
    %3212 = vmatprep.subr.mxu0 0.0
    %3213 = vmatpush1.msra.mxu0 0.0
    %3214 = vmatprep.subr.mxu0 0.0
    %3215 = vmatpush1.msra.mxu0 0.0
    %3216 = vmatprep.subr.mxu0 0.0
    %3217 = vmatpush1.msra.mxu0 %v2453
    %3218 = vmatprep.subr.mxu0 0.0
    %3219 = vmatpush2.msra.mxu0 0.0
    %3220 = vmatprep.subr.mxu0 0.0
    %3221 = vmatpush2.msra.mxu0 0.0
    %3222 = vmatprep.subr.mxu0 0.0
    %3223 = vmatpush2.msra.mxu0 0.0
    %3224 = vmatprep.subr.mxu0 0.0
    %3225 = vmatpush2.msra.mxu0 0.0
    %3226 = vmatprep.subr.mxu0 0.0
    %3227 = vmatpush2.msra.mxu0 0.0
    %3228 = vmatprep.subr.mxu0 0.0
    %3229 = vmatpush2.msra.mxu0 0.0
    %3230 = vmatprep.subr.mxu0 0.0
    %3231 = vmatpush2.msra.mxu0 0.0
    %3232 = vmatprep.subr.mxu0 0.0
    %3233 = vmatpush2.msra.mxu0 0.0
    %3234 = vmatprep.subr.mxu0 0.0
    %3235 = vmatpush2.msra.mxu0 0.0
    %3236 = vmatprep.subr.mxu0 0.0
    %3237 = vmatpush2.msra.mxu0 0.0
    %3238 = vmatprep.subr.mxu0 0.0
    %3239 = vmatpush2.msra.mxu0 0.0
    %3240 = vmatprep.subr.mxu0 0.0
    %3241 = vmatpush2.msra.mxu0 0.0
    %3242 = vmatprep.subr.mxu0 0.0
    %3243 = vmatpush2.msra.mxu0 0.0
    %3244 = vmatprep.subr.mxu0 0.0
    %3245 = vmatpush2.msra.mxu0 0.0
    %3246 = vmatprep.subr.mxu0 0.0
    %3247 = vmatpush2.msra.mxu0 0.0
    %3248 = vmatprep.subr.mxu0 0.0
    %3249 = vmatpush2.msra.mxu0 0.0
    %3250 = vmatprep.mubr.f32.mxu0 0.0
    %3251 = vmatmul.mubr.f32.gmra.mxu0 %v3184
    %v3252 = vpop.f32.mrf.mxu0
    %v3253 = vadd.f32 0.0, %v3252
    %v3254 = vpop.f32.mrf.mxu0
    %3255 = vdwg.mxu0
    %v3256 = vmin.f32 %v3106, 0.0
    %v3257 = vmin.f32 %v3108, 0.0
    %v3260 = vrot.slane %v3257, 7
    %v3261 = vsel %vm3076, %v3260, %v3256
    %v3263 = vsel %vm3079, %v3261, 0.0
    %3264 = vadd.xlane.f32.xlu0 %v3263
    %v3265 = vpop.xlane.xlu0 %3264
    %v3266 = vadd.f32 %v3106, 0.0
    %v3267 = vadd.f32 %v3108, 0.0
    %v3270 = vrot.slane %v3253, 7
    %v3271 = vsel %vm3076, %v3270, %v3180
    %3273 = vrot.lane.b32.xlu0 %v2793, 32
    %v3274 = vpop.permute.xlu0 %3273
    %3277 = vrot.lane.b32.xlu0 %v2678, 64
    %v3278 = vpop.permute.xlu0 %3277
    %v3280 = vsel %vm59, %v3271, %v3274
    %v3281 = vsel %vm2604, %v3280, %v3278
    %v3282 = vld [vmem:[%s16 + $0x9] sm:$0x1]
    %v3283 = vlaneseq
    %v3284 = vshrl.u32 %v3283, 7
    %v3285 = vsub.s32 0, %v3284
    %v3286 = vrot.slane %v3282, %v3285
    %v3287 = vmul.f32 %v3281, %v3286
    %vm3288 = vcmask 779264
    %v3289 = vsel %vm3288, %v3287, 0.0
    %3290 = vadd.xlane.f32.xlu0 %v3289
    %v3291 = vpop.xlane.xlu0 %3290
    %v3292 = vld [vmem:[%s16 + $0xa] sm:$0x1]
    %v3293 = vlaneseq
    %v3294 = vshrl.u32 %v3293, 7
    %v3295 = vsub.s32 0, %v3294
    %v3296 = vrot.slane %v3292, %v3295
    %v3297 = vadd.f32 %v3291, %v3296
    %v3298 = vxor.u32 %v3297, 2147483648
    %v3299 = vmul.f32 %v3298, 1.442695
    %v3300 = vpow.pop %v3299
    %v3301 = vadd.f32 %v3300, 1.0
    %v3302 = vrcp.pop %v3301
    %v3303 = vmul.f32 1.0, %v3302
    %3304 = vrot.lane.b32.xlu0 %v3271, 16
    %v3305 = vpop.permute.xlu0 %3304
    %v3307 = vsel %vm2792, %v2790, %v3305
    %v3308 = vld [vmem:[%s13] sm:$0xff]
    %v3309 = vld [vmem:[%s13 + $0x8] sm:$0xff]
    %v3310 = vld [vmem:[%s13 + $0x10] sm:$0xff]
    %v3311 = vld [vmem:[%s13 + $0x18] sm:$0xff]
    %v3312 = vld [vmem:[%s13 + $0x20] sm:$0xff]
    %v3313 = vld [vmem:[%s13 + $0x28] sm:$0xff]
    %v3314 = vld [vmem:[%s16 + $0xb] sm:$0x1]
    %v3315 = vlaneseq
    %v3316 = vshrl.u32 %v3315, 7
    %v3317 = vsub.s32 0, %v3316
    %v3318 = vrot.slane %v3314, %v3317
    %v3320 = vsel %vm71, %v3307, 0
    %3322 = vmatprep.subr.mxu0 0.0
    %3323 = vmatpush1.msra.mxu0 0.0
    %3324 = vmatprep.subr.mxu0 0.0
    %3325 = vmatpush1.msra.mxu0 0.0
    %3326 = vmatprep.subr.mxu0 0.0
    %3327 = vmatpush1.msra.mxu0 0.0
    %3328 = vmatprep.subr.mxu0 0.0
    %3329 = vmatpush1.msra.mxu0 0.0
    %3330 = vmatprep.subr.mxu0 0.0
    %3331 = vmatpush1.msra.mxu0 0.0
    %3332 = vmatprep.subr.mxu0 0.0
    %3333 = vmatpush1.msra.mxu0 0.0
    %3334 = vmatprep.subr.mxu0 0.0
    %3335 = vmatpush1.msra.mxu0 0.0
    %3336 = vmatprep.subr.mxu0 0.0
    %3337 = vmatpush1.msra.mxu0 0.0
    %3338 = vmatprep.subr.mxu0 0.0
    %3339 = vmatpush1.msra.mxu0 0.0
    %3340 = vmatprep.subr.mxu0 0.0
    %3341 = vmatpush1.msra.mxu0 0.0
    %3342 = vmatprep.subr.mxu0 0.0
    %3343 = vmatpush1.msra.mxu0 %v3313
    %3344 = vmatprep.subr.mxu0 0.0
    %3345 = vmatpush1.msra.mxu0 %v3312
    %3346 = vmatprep.subr.mxu0 0.0
    %3347 = vmatpush1.msra.mxu0 %v3311
    %3348 = vmatprep.subr.mxu0 0.0
    %3349 = vmatpush1.msra.mxu0 %v3310
    %3350 = vmatprep.subr.mxu0 0.0
    %3351 = vmatpush1.msra.mxu0 %v3309
    %3352 = vmatprep.subr.mxu0 0.0
    %3353 = vmatpush1.msra.mxu0 %v3308
    %3354 = vmatprep.subr.mxu0 0.0
    %3355 = vmatpush2.msra.mxu0 0.0
    %3356 = vmatprep.subr.mxu0 0.0
    %3357 = vmatpush2.msra.mxu0 0.0
    %3358 = vmatprep.subr.mxu0 0.0
    %3359 = vmatpush2.msra.mxu0 0.0
    %3360 = vmatprep.subr.mxu0 0.0
    %3361 = vmatpush2.msra.mxu0 0.0
    %3362 = vmatprep.subr.mxu0 0.0
    %3363 = vmatpush2.msra.mxu0 0.0
    %3364 = vmatprep.subr.mxu0 0.0
    %3365 = vmatpush2.msra.mxu0 0.0
    %3366 = vmatprep.subr.mxu0 0.0
    %3367 = vmatpush2.msra.mxu0 0.0
    %3368 = vmatprep.subr.mxu0 0.0
    %3369 = vmatpush2.msra.mxu0 0.0
    %3370 = vmatprep.subr.mxu0 0.0
    %3371 = vmatpush2.msra.mxu0 0.0
    %3372 = vmatprep.subr.mxu0 0.0
    %3373 = vmatpush2.msra.mxu0 0.0
    %3374 = vmatprep.subr.mxu0 0.0
    %3375 = vmatpush2.msra.mxu0 0.0
    %3376 = vmatprep.subr.mxu0 0.0
    %3377 = vmatpush2.msra.mxu0 0.0
    %3378 = vmatprep.subr.mxu0 0.0
    %3379 = vmatpush2.msra.mxu0 0.0
    %3380 = vmatprep.subr.mxu0 0.0
    %3381 = vmatpush2.msra.mxu0 0.0
    %3382 = vmatprep.subr.mxu0 0.0
    %3383 = vmatpush2.msra.mxu0 0.0
    %3384 = vmatprep.subr.mxu0 0.0
    %3385 = vmatpush2.msra.mxu0 0.0
    %3386 = vmatprep.mubr.f32.mxu0 0.0
    %3387 = vmatmul.mubr.f32.gmra.mxu0 %v3320
    %v3388 = vpop.f32.mrf.mxu0
    %v3389 = vadd.f32 %v3318, %v3388
    %v3390 = vpop.f32.mrf.mxu0
    %3391 = vdwg.mxu0
    %v3392 = vmax.f32 %v3389, 0.0
    %v3393 = vld [vmem:[%s14] sm:$0xff]
    %v3394 = vld [vmem:[%s14 + $0x8] sm:$0xff]
    %v3395 = vld [vmem:[%s15] sm:$0x1]
    %v3397 = vlaneseq
    %v3398 = vshrl.u32 %v3397, 7
    %v3399 = vsub.s32 0, %v3398
    %v3400 = vrot.slane %v3395, %v3399
    %v3403 = vsel %vm2792, %v3392, 0
    %3405 = vmatprep.subr.mxu0 0.0
    %3406 = vmatpush1.msra.mxu0 0.0
    %3407 = vmatprep.subr.mxu0 0.0
    %3408 = vmatpush1.msra.mxu0 0.0
    %3409 = vmatprep.subr.mxu0 0.0
    %3410 = vmatpush1.msra.mxu0 0.0
    %3411 = vmatprep.subr.mxu0 0.0
    %3412 = vmatpush1.msra.mxu0 0.0
    %3413 = vmatprep.subr.mxu0 0.0
    %3414 = vmatpush1.msra.mxu0 0.0
    %3415 = vmatprep.subr.mxu0 0.0
    %3416 = vmatpush1.msra.mxu0 0.0
    %3417 = vmatprep.subr.mxu0 0.0
    %3418 = vmatpush1.msra.mxu0 0.0
    %3419 = vmatprep.subr.mxu0 0.0
    %3420 = vmatpush1.msra.mxu0 0.0
    %3421 = vmatprep.subr.mxu0 0.0
    %3422 = vmatpush1.msra.mxu0 0.0
    %3423 = vmatprep.subr.mxu0 0.0
    %3424 = vmatpush1.msra.mxu0 0.0
    %3425 = vmatprep.subr.mxu0 0.0
    %3426 = vmatpush1.msra.mxu0 0.0
    %3427 = vmatprep.subr.mxu0 0.0
    %3428 = vmatpush1.msra.mxu0 0.0
    %3429 = vmatprep.subr.mxu0 0.0
    %3430 = vmatpush1.msra.mxu0 0.0
    %3431 = vmatprep.subr.mxu0 0.0
    %3432 = vmatpush1.msra.mxu0 0.0
    %3433 = vmatprep.subr.mxu0 0.0
    %3434 = vmatpush1.msra.mxu0 %v3394
    %3435 = vmatprep.subr.mxu0 0.0
    %3436 = vmatpush1.msra.mxu0 %v3393
    %3437 = vmatprep.subr.mxu0 0.0
    %3438 = vmatpush2.msra.mxu0 0.0
    %3439 = vmatprep.subr.mxu0 0.0
    %3440 = vmatpush2.msra.mxu0 0.0
    %3441 = vmatprep.subr.mxu0 0.0
    %3442 = vmatpush2.msra.mxu0 0.0
    %3443 = vmatprep.subr.mxu0 0.0
    %3444 = vmatpush2.msra.mxu0 0.0
    %3445 = vmatprep.subr.mxu0 0.0
    %3446 = vmatpush2.msra.mxu0 0.0
    %3447 = vmatprep.subr.mxu0 0.0
    %3448 = vmatpush2.msra.mxu0 0.0
    %3449 = vmatprep.subr.mxu0 0.0
    %3450 = vmatpush2.msra.mxu0 0.0
    %3451 = vmatprep.subr.mxu0 0.0
    %3452 = vmatpush2.msra.mxu0 0.0
    %3453 = vmatprep.subr.mxu0 0.0
    %3454 = vmatpush2.msra.mxu0 0.0
    %3455 = vmatprep.subr.mxu0 0.0
    %3456 = vmatpush2.msra.mxu0 0.0
    %3457 = vmatprep.subr.mxu0 0.0
    %3458 = vmatpush2.msra.mxu0 0.0
    %3459 = vmatprep.subr.mxu0 0.0
    %3460 = vmatpush2.msra.mxu0 0.0
    %3461 = vmatprep.subr.mxu0 0.0
    %3462 = vmatpush2.msra.mxu0 0.0
    %3463 = vmatprep.subr.mxu0 0.0
    %3464 = vmatpush2.msra.mxu0 0.0
    %3465 = vmatprep.subr.mxu0 0.0
    %3466 = vmatpush2.msra.mxu0 0.0
    %3467 = vmatprep.subr.mxu0 0.0
    %3468 = vmatpush2.msra.mxu0 0.0
    %3469 = vmatprep.mubr.f32.mxu0 0.0
    %3470 = vmatmul.mubr.f32.gmra.mxu0 %v3403
    %v3471 = vpop.f32.mrf.mxu0
    %v3472 = vadd.f32 %v3400, %v3471
    %v3473 = vpop.f32.mrf.mxu0
    %3474 = vdwg.mxu0
    %vm3475 = vcmask 1041408
    %v3476 = vsel %vm3475, %v3472, -inf
    %3477 = vmax.xlane.f32.xlu0 %v3476
    %v3478 = vpop.xlane.xlu0 %3477
    %v3479 = vsub.f32 %v3472, %v3478
    %v3480 = vmul.f32 %v3479, 1.442695
    %v3481 = vpow.pop %v3480
    %v3482 = vsel %vm3475, %v3481, 0.0
    %3483 = vadd.xlane.f32.xlu0 %v3482
    %v3484 = vpop.xlane.xlu0 %3483
    %v3485 = vrcp.pop %v3484
    %v3486 = vmul.f32 %v3481, %v3485
    %v3487 = vsub.f32 1.0, %v3303
    %3489 = vset.pattern.permute.xlu0 0
    %3490 = vperm.xlu0 %3489, %v3487
    %v3491 = vpop.permute.xlu0 %3490
    %v3493 = vrot.slane %v3108, 7
    %v3494 = vsel %vm3076, %v3493, %v3106
    %v3496 = vmul.f32 %v3491, %v3494
    %3498 = vset.pattern.permute.xlu0 0
    %3499 = vperm.xlu0 %3498, %v3303
    %v3500 = vpop.permute.xlu0 %3499
    %v3502 = vmul.f32 %v3500, %v3486
    %v3503 = vld [vmem:[%s3] sm:$0xff]
    %v3504 = vld [vmem:[%s3 + $0x8] sm:$0xff]
    %v3507 = vunpack.c.l.s4 1966171168
    %v3508 = vunpack.c.0.s8 %v3507
    %v3509 = vlaneseq
    %v3510 = vshrl.u32 %v3509, 7
    %v3511 = vsub.s32 %v3508, %v3510
    %v3512 = vrot.slane %v3496, %v3511
    %v3513 = vcombine.high %v3512, %v3512
    %v3515 = vunpack.c.l.s4 1966171168
    %v3516 = vunpack.c.0.s8 %v3515
    %v3517 = vlaneseq
    %v3518 = vshrl.u32 %v3517, 7
    %v3519 = vsub.s32 %v3516, %v3518
    %v3520 = vrot.slane %v3512, %v3519
    %v3522 = vunpack.c.l.s4 1966171168
    %v3523 = vunpack.c.0.s8 %v3522
    %v3524 = vlaneseq
    %v3525 = vshrl.u32 %v3524, 7
    %v3526 = vsub.s32 %v3523, %v3525
    %v3527 = vrot.slane %v3513, %v3526
    %v3528 = vsel %vm3109, %v3520, 0
    %3530 = vmatprep.subr.mxu0 0.0
    %3531 = vmatpush1.msra.mxu0 0.0
    %3532 = vmatprep.subr.mxu0 0.0
    %3533 = vmatpush1.msra.mxu0 0.0
    %3534 = vmatprep.subr.mxu0 0.0
    %3535 = vmatpush1.msra.mxu0 0.0
    %3536 = vmatprep.subr.mxu0 0.0
    %3537 = vmatpush1.msra.mxu0 0.0
    %3538 = vmatprep.subr.mxu0 0.0
    %3539 = vmatpush1.msra.mxu0 0.0
    %3540 = vmatprep.subr.mxu0 0.0
    %3541 = vmatpush1.msra.mxu0 0.0
    %3542 = vmatprep.subr.mxu0 0.0
    %3543 = vmatpush1.msra.mxu0 0.0
    %3544 = vmatprep.subr.mxu0 0.0
    %3545 = vmatpush1.msra.mxu0 0.0
    %3546 = vmatprep.subr.mxu0 0.0
    %3547 = vmatpush1.msra.mxu0 0.0
    %3548 = vmatprep.subr.mxu0 0.0
    %3549 = vmatpush1.msra.mxu0 0.0
    %3550 = vmatprep.subr.mxu0 0.0
    %3551 = vmatpush1.msra.mxu0 0.0
    %3552 = vmatprep.subr.mxu0 0.0
    %3553 = vmatpush1.msra.mxu0 0.0
    %3554 = vmatprep.subr.mxu0 0.0
    %3555 = vmatpush1.msra.mxu0 0.0
    %3556 = vmatprep.subr.mxu0 0.0
    %3557 = vmatpush1.msra.mxu0 0.0
    %3558 = vmatprep.subr.mxu0 0.0
    %3559 = vmatpush1.msra.mxu0 0.0
    %3560 = vmatprep.subr.mxu0 0.0
    %3561 = vmatpush1.msra.mxu0 %v3503
    %3562 = vmatprep.subr.mxu0 0.0
    %3563 = vmatpush2.msra.mxu0 0.0
    %3564 = vmatprep.subr.mxu0 0.0
    %3565 = vmatpush2.msra.mxu0 0.0
    %3566 = vmatprep.subr.mxu0 0.0
    %3567 = vmatpush2.msra.mxu0 0.0
    %3568 = vmatprep.subr.mxu0 0.0
    %3569 = vmatpush2.msra.mxu0 0.0
    %3570 = vmatprep.subr.mxu0 0.0
    %3571 = vmatpush2.msra.mxu0 0.0
    %3572 = vmatprep.subr.mxu0 0.0
    %3573 = vmatpush2.msra.mxu0 0.0
    %3574 = vmatprep.subr.mxu0 0.0
    %3575 = vmatpush2.msra.mxu0 0.0
    %3576 = vmatprep.subr.mxu0 0.0
    %3577 = vmatpush2.msra.mxu0 0.0
    %3578 = vmatprep.subr.mxu0 0.0
    %3579 = vmatpush2.msra.mxu0 0.0
    %3580 = vmatprep.subr.mxu0 0.0
    %3581 = vmatpush2.msra.mxu0 0.0
    %3582 = vmatprep.subr.mxu0 0.0
    %3583 = vmatpush2.msra.mxu0 0.0
    %3584 = vmatprep.subr.mxu0 0.0
    %3585 = vmatpush2.msra.mxu0 0.0
    %3586 = vmatprep.subr.mxu0 0.0
    %3587 = vmatpush2.msra.mxu0 0.0
    %3588 = vmatprep.subr.mxu0 0.0
    %3589 = vmatpush2.msra.mxu0 0.0
    %3590 = vmatprep.subr.mxu0 0.0
    %3591 = vmatpush2.msra.mxu0 0.0
    %3592 = vmatprep.subr.mxu0 0.0
    %3593 = vmatpush2.msra.mxu0 0.0
    %3594 = vmatprep.mubr.f32.mxu0 0.0
    %3595 = vmatmul.mubr.f32.gmra.mxu0 %v3528
    %v3596 = vpop.f32.mrf.mxu0
    %v3597 = vadd.f32 0.0, %v3596
    %v3598 = vpop.f32.mrf.mxu0
    %3599 = vdwg.mxu0
    %v3600 = vsel %vm3109, %v3527, 0
    %3602 = vmatprep.subr.mxu0 0.0
    %3603 = vmatpush1.msra.mxu0 0.0
    %3604 = vmatprep.subr.mxu0 0.0
    %3605 = vmatpush1.msra.mxu0 0.0
    %3606 = vmatprep.subr.mxu0 0.0
    %3607 = vmatpush1.msra.mxu0 0.0
    %3608 = vmatprep.subr.mxu0 0.0
    %3609 = vmatpush1.msra.mxu0 0.0
    %3610 = vmatprep.subr.mxu0 0.0
    %3611 = vmatpush1.msra.mxu0 0.0
    %3612 = vmatprep.subr.mxu0 0.0
    %3613 = vmatpush1.msra.mxu0 0.0
    %3614 = vmatprep.subr.mxu0 0.0
    %3615 = vmatpush1.msra.mxu0 0.0
    %3616 = vmatprep.subr.mxu0 0.0
    %3617 = vmatpush1.msra.mxu0 0.0
    %3618 = vmatprep.subr.mxu0 0.0
    %3619 = vmatpush1.msra.mxu0 0.0
    %3620 = vmatprep.subr.mxu0 0.0
    %3621 = vmatpush1.msra.mxu0 0.0
    %3622 = vmatprep.subr.mxu0 0.0
    %3623 = vmatpush1.msra.mxu0 0.0
    %3624 = vmatprep.subr.mxu0 0.0
    %3625 = vmatpush1.msra.mxu0 0.0
    %3626 = vmatprep.subr.mxu0 0.0
    %3627 = vmatpush1.msra.mxu0 0.0
    %3628 = vmatprep.subr.mxu0 0.0
    %3629 = vmatpush1.msra.mxu0 0.0
    %3630 = vmatprep.subr.mxu0 0.0
    %3631 = vmatpush1.msra.mxu0 0.0
    %3632 = vmatprep.subr.mxu0 0.0
    %3633 = vmatpush1.msra.mxu0 %v3504
    %3634 = vmatprep.subr.mxu0 0.0
    %3635 = vmatpush2.msra.mxu0 0.0
    %3636 = vmatprep.subr.mxu0 0.0
    %3637 = vmatpush2.msra.mxu0 0.0
    %3638 = vmatprep.subr.mxu0 0.0
    %3639 = vmatpush2.msra.mxu0 0.0
    %3640 = vmatprep.subr.mxu0 0.0
    %3641 = vmatpush2.msra.mxu0 0.0
    %3642 = vmatprep.subr.mxu0 0.0
    %3643 = vmatpush2.msra.mxu0 0.0
    %3644 = vmatprep.subr.mxu0 0.0
    %3645 = vmatpush2.msra.mxu0 0.0
    %3646 = vmatprep.subr.mxu0 0.0
    %3647 = vmatpush2.msra.mxu0 0.0
    %3648 = vmatprep.subr.mxu0 0.0
    %3649 = vmatpush2.msra.mxu0 0.0
    %3650 = vmatprep.subr.mxu0 0.0
    %3651 = vmatpush2.msra.mxu0 0.0
    %3652 = vmatprep.subr.mxu0 0.0
    %3653 = vmatpush2.msra.mxu0 0.0
    %3654 = vmatprep.subr.mxu0 0.0
    %3655 = vmatpush2.msra.mxu0 0.0
    %3656 = vmatprep.subr.mxu0 0.0
    %3657 = vmatpush2.msra.mxu0 0.0
    %3658 = vmatprep.subr.mxu0 0.0
    %3659 = vmatpush2.msra.mxu0 0.0
    %3660 = vmatprep.subr.mxu0 0.0
    %3661 = vmatpush2.msra.mxu0 0.0
    %3662 = vmatprep.subr.mxu0 0.0
    %3663 = vmatpush2.msra.mxu0 0.0
    %3664 = vmatprep.subr.mxu0 0.0
    %3665 = vmatpush2.msra.mxu0 0.0
    %3666 = vmatprep.mubr.f32.mxu0 0.0
    %3667 = vmatmul.mubr.f32.gmra.mxu0 %v3600
    %v3668 = vpop.f32.mrf.mxu0
    %v3669 = vadd.f32 0.0, %v3668
    %v3670 = vpop.f32.mrf.mxu0
    %3671 = vdwg.mxu0
    %v3674 = vrot.slane %v3669, 7
    %v3675 = vsel %vm3076, %v3674, %v3597
    %v3677 = vadd.f32 %v3502, %v3675
    %v3678 = vld [vmem:[%s4] sm:$0x3]
    %v3679 = vmul.f32 %v3677, %v3678
    %v3680 = vsel %vm3475, %v3679, 0.0
    %3681 = vadd.xlane.f32.xlu0 %v3680
    %v3682 = vpop.xlane.xlu0 %3681
    %v3683 = vadd.f32 %v3682, 1e-12
    %v3684 = vlog2.pop %v3683
    %v3685 = vmul.f32 %v3684, 0.6931472
    %v3686 = vsub.f32 0.0, %v3685
    %v3687 = vadd.f32 %v3686, %v3265
    %v3688 = vld [vmem:[%s5] sm:$0x3]
    %v3689 = vmul.f32 %v3687, %v3688
    %v3690 = vadd.f32 %v3689, 0.0
    %s3691 = scalar_lea.vmem %s1, 2
    %v3692 = vld [vmem:[%s3691] sm:$0x3]
    %3694 = vrot.lane.b32.xlu0 %v3692, 32
    %v3695 = vpop.permute.xlu0 %3694
    %v3697 = vsel %vm59, %v3271, %v3695
    %v3698 = vld [vmem:[%s10] sm:$0xff]
    %v3699 = vld [vmem:[%s10 + $0x8] sm:$0xff]
    %v3700 = vld [vmem:[%s10 + $0x10] sm:$0xff]
    %v3701 = vld [vmem:[%s10 + $0x18] sm:$0xff]
    %v3702 = vld [vmem:[%s10 + $0x20] sm:$0xff]
    %v3703 = vld [vmem:[%s10 + $0x28] sm:$0xff]
    %v3704 = vld [vmem:[%s10 + $0x30] sm:$0xff]
    %v3705 = vld [vmem:[%s10 + $0x38] sm:$0xff]
    %v3706 = vld [vmem:[%s16 + $0x5] sm:$0x1]
    %v3707 = vlaneseq
    %v3708 = vshrl.u32 %v3707, 7
    %v3709 = vsub.s32 0, %v3708
    %v3710 = vrot.slane %v3706, %v3709
    %v3712 = vsel %vm2604, %v3697, 0
    %3714 = vmatprep.subr.mxu0 0.0
    %3715 = vmatpush1.msra.mxu0 0.0
    %3716 = vmatprep.subr.mxu0 0.0
    %3717 = vmatpush1.msra.mxu0 0.0
    %3718 = vmatprep.subr.mxu0 0.0
    %3719 = vmatpush1.msra.mxu0 0.0
    %3720 = vmatprep.subr.mxu0 0.0
    %3721 = vmatpush1.msra.mxu0 0.0
    %3722 = vmatprep.subr.mxu0 0.0
    %3723 = vmatpush1.msra.mxu0 0.0
    %3724 = vmatprep.subr.mxu0 0.0
    %3725 = vmatpush1.msra.mxu0 0.0
    %3726 = vmatprep.subr.mxu0 0.0
    %3727 = vmatpush1.msra.mxu0 0.0
    %3728 = vmatprep.subr.mxu0 0.0
    %3729 = vmatpush1.msra.mxu0 0.0
    %3730 = vmatprep.subr.mxu0 0.0
    %3731 = vmatpush1.msra.mxu0 %v3705
    %3732 = vmatprep.subr.mxu0 0.0
    %3733 = vmatpush1.msra.mxu0 %v3704
    %3734 = vmatprep.subr.mxu0 0.0
    %3735 = vmatpush1.msra.mxu0 %v3703
    %3736 = vmatprep.subr.mxu0 0.0
    %3737 = vmatpush1.msra.mxu0 %v3702
    %3738 = vmatprep.subr.mxu0 0.0
    %3739 = vmatpush1.msra.mxu0 %v3701
    %3740 = vmatprep.subr.mxu0 0.0
    %3741 = vmatpush1.msra.mxu0 %v3700
    %3742 = vmatprep.subr.mxu0 0.0
    %3743 = vmatpush1.msra.mxu0 %v3699
    %3744 = vmatprep.subr.mxu0 0.0
    %3745 = vmatpush1.msra.mxu0 %v3698
    %3746 = vmatprep.subr.mxu0 0.0
    %3747 = vmatpush2.msra.mxu0 0.0
    %3748 = vmatprep.subr.mxu0 0.0
    %3749 = vmatpush2.msra.mxu0 0.0
    %3750 = vmatprep.subr.mxu0 0.0
    %3751 = vmatpush2.msra.mxu0 0.0
    %3752 = vmatprep.subr.mxu0 0.0
    %3753 = vmatpush2.msra.mxu0 0.0
    %3754 = vmatprep.subr.mxu0 0.0
    %3755 = vmatpush2.msra.mxu0 0.0
    %3756 = vmatprep.subr.mxu0 0.0
    %3757 = vmatpush2.msra.mxu0 0.0
    %3758 = vmatprep.subr.mxu0 0.0
    %3759 = vmatpush2.msra.mxu0 0.0
    %3760 = vmatprep.subr.mxu0 0.0
    %3761 = vmatpush2.msra.mxu0 0.0
    %3762 = vmatprep.subr.mxu0 0.0
    %3763 = vmatpush2.msra.mxu0 0.0
    %3764 = vmatprep.subr.mxu0 0.0
    %3765 = vmatpush2.msra.mxu0 0.0
    %3766 = vmatprep.subr.mxu0 0.0
    %3767 = vmatpush2.msra.mxu0 0.0
    %3768 = vmatprep.subr.mxu0 0.0
    %3769 = vmatpush2.msra.mxu0 0.0
    %3770 = vmatprep.subr.mxu0 0.0
    %3771 = vmatpush2.msra.mxu0 0.0
    %3772 = vmatprep.subr.mxu0 0.0
    %3773 = vmatpush2.msra.mxu0 0.0
    %3774 = vmatprep.subr.mxu0 0.0
    %3775 = vmatpush2.msra.mxu0 0.0
    %3776 = vmatprep.subr.mxu0 0.0
    %3777 = vmatpush2.msra.mxu0 0.0
    %3778 = vmatprep.mubr.f32.mxu0 0.0
    %3779 = vmatmul.mubr.f32.gmra.mxu0 %v3712
    %v3780 = vpop.f32.mrf.mxu0
    %v3781 = vadd.f32 %v3710, %v3780
    %v3782 = vpop.f32.mrf.mxu0
    %3783 = vdwg.mxu0
    %v3784 = vmax.f32 %v3781, 0.0
    %v3785 = vld [vmem:[%s16 + $0x6] sm:$0x1]
    %v3786 = vsel %vm59, %v3784, %v2787
    %v3787 = vld [vmem:[%s11] sm:$0xff]
    %v3788 = vld [vmem:[%s11 + $0x8] sm:$0xff]
    %v3789 = vld [vmem:[%s11 + $0x10] sm:$0xff]
    %v3790 = vld [vmem:[%s11 + $0x18] sm:$0xff]
    %v3791 = vld [vmem:[%s11 + $0x20] sm:$0xff]
    %v3792 = vld [vmem:[%s11 + $0x28] sm:$0xff]
    %v3793 = vlaneseq
    %v3794 = vshrl.u32 %v3793, 7
    %v3795 = vsub.s32 0, %v3794
    %v3796 = vrot.slane %v3785, %v3795
    %v3798 = vsel %vm71, %v3786, 0
    %3800 = vmatprep.subr.mxu0 0.0
    %3801 = vmatpush1.msra.mxu0 0.0
    %3802 = vmatprep.subr.mxu0 0.0
    %3803 = vmatpush1.msra.mxu0 0.0
    %3804 = vmatprep.subr.mxu0 0.0
    %3805 = vmatpush1.msra.mxu0 0.0
    %3806 = vmatprep.subr.mxu0 0.0
    %3807 = vmatpush1.msra.mxu0 0.0
    %3808 = vmatprep.subr.mxu0 0.0
    %3809 = vmatpush1.msra.mxu0 0.0
    %3810 = vmatprep.subr.mxu0 0.0
    %3811 = vmatpush1.msra.mxu0 0.0
    %3812 = vmatprep.subr.mxu0 0.0
    %3813 = vmatpush1.msra.mxu0 0.0
    %3814 = vmatprep.subr.mxu0 0.0
    %3815 = vmatpush1.msra.mxu0 0.0
    %3816 = vmatprep.subr.mxu0 0.0
    %3817 = vmatpush1.msra.mxu0 0.0
    %3818 = vmatprep.subr.mxu0 0.0
    %3819 = vmatpush1.msra.mxu0 0.0
    %3820 = vmatprep.subr.mxu0 0.0
    %3821 = vmatpush1.msra.mxu0 %v3792
    %3822 = vmatprep.subr.mxu0 0.0
    %3823 = vmatpush1.msra.mxu0 %v3791
    %3824 = vmatprep.subr.mxu0 0.0
    %3825 = vmatpush1.msra.mxu0 %v3790
    %3826 = vmatprep.subr.mxu0 0.0
    %3827 = vmatpush1.msra.mxu0 %v3789
    %3828 = vmatprep.subr.mxu0 0.0
    %3829 = vmatpush1.msra.mxu0 %v3788
    %3830 = vmatprep.subr.mxu0 0.0
    %3831 = vmatpush1.msra.mxu0 %v3787
    %3832 = vmatprep.subr.mxu0 0.0
    %3833 = vmatpush2.msra.mxu0 0.0
    %3834 = vmatprep.subr.mxu0 0.0
    %3835 = vmatpush2.msra.mxu0 0.0
    %3836 = vmatprep.subr.mxu0 0.0
    %3837 = vmatpush2.msra.mxu0 0.0
    %3838 = vmatprep.subr.mxu0 0.0
    %3839 = vmatpush2.msra.mxu0 0.0
    %3840 = vmatprep.subr.mxu0 0.0
    %3841 = vmatpush2.msra.mxu0 0.0
    %3842 = vmatprep.subr.mxu0 0.0
    %3843 = vmatpush2.msra.mxu0 0.0
    %3844 = vmatprep.subr.mxu0 0.0
    %3845 = vmatpush2.msra.mxu0 0.0
    %3846 = vmatprep.subr.mxu0 0.0
    %3847 = vmatpush2.msra.mxu0 0.0
    %3848 = vmatprep.subr.mxu0 0.0
    %3849 = vmatpush2.msra.mxu0 0.0
    %3850 = vmatprep.subr.mxu0 0.0
    %3851 = vmatpush2.msra.mxu0 0.0
    %3852 = vmatprep.subr.mxu0 0.0
    %3853 = vmatpush2.msra.mxu0 0.0
    %3854 = vmatprep.subr.mxu0 0.0
    %3855 = vmatpush2.msra.mxu0 0.0
    %3856 = vmatprep.subr.mxu0 0.0
    %3857 = vmatpush2.msra.mxu0 0.0
    %3858 = vmatprep.subr.mxu0 0.0
    %3859 = vmatpush2.msra.mxu0 0.0
    %3860 = vmatprep.subr.mxu0 0.0
    %3861 = vmatpush2.msra.mxu0 0.0
    %3862 = vmatprep.subr.mxu0 0.0
    %3863 = vmatpush2.msra.mxu0 0.0
    %3864 = vmatprep.mubr.f32.mxu0 0.0
    %3865 = vmatmul.mubr.f32.gmra.mxu0 %v3798
    %v3866 = vpop.f32.mrf.mxu0
    %v3867 = vadd.f32 %v3796, %v3866
    %v3868 = vpop.f32.mrf.mxu0
    %3869 = vdwg.mxu0
    %v3870 = vxor.u32 %v3867, 2147483648
    %v3871 = vmul.f32 %v3870, 1.442695
    %v3872 = vpow.pop %v3871
    %v3873 = vadd.f32 %v3872, 1.0
    %v3874 = vrcp.pop %v3873
    %v3875 = vmul.f32 1.0, %v3874
    %v3876 = vtanh.pop %v3867
    %v3877 = vmul.f32 %v3875, %v2781
    %3879 = vrot.lane.b32.xlu0 %v3876, 80
    %v3880 = vpop.permute.xlu0 %3879
    %v3882 = vmul.f32 %v3875, %v3880
    %3884 = vrot.lane.b32.xlu0 %v3882, 16
    %v3885 = vpop.permute.xlu0 %3884
    %v3887 = vadd.f32 %v3877, %v3885
    %v3888 = vtanh.pop %v3887
    %3890 = vrot.lane.b32.xlu0 %v3888, 16
    %v3891 = vpop.permute.xlu0 %3890
    %v3893 = vmul.f32 %v3875, %v3891
    %3895 = vrot.lane.b32.xlu0 %v3893, 96
    %v3896 = vpop.permute.xlu0 %3895
    %v3898 = vsel %vm2792, %v3896, %v3887
    %v3899 = vld [vmem:[%s12] sm:$0xff]
    %v3900 = vld [vmem:[%s12 + $0x8] sm:$0xff]
    %v3901 = vld [vmem:[%s12 + $0x10] sm:$0xff]
    %v3902 = vld [vmem:[%s12 + $0x18] sm:$0xff]
    %v3903 = vld [vmem:[%s16 + $0x7] sm:$0x1]
    %v3904 = vlaneseq
    %v3905 = vshrl.u32 %v3904, 7
    %v3906 = vsub.s32 0, %v3905
    %v3907 = vrot.slane %v3903, %v3906
    %v3909 = vsel %vm59, %v3898, 0
    %3911 = vmatprep.subr.mxu0 0.0
    %3912 = vmatpush1.msra.mxu0 0.0
    %3913 = vmatprep.subr.mxu0 0.0
    %3914 = vmatpush1.msra.mxu0 0.0
    %3915 = vmatprep.subr.mxu0 0.0
    %3916 = vmatpush1.msra.mxu0 0.0
    %3917 = vmatprep.subr.mxu0 0.0
    %3918 = vmatpush1.msra.mxu0 0.0
    %3919 = vmatprep.subr.mxu0 0.0
    %3920 = vmatpush1.msra.mxu0 0.0
    %3921 = vmatprep.subr.mxu0 0.0
    %3922 = vmatpush1.msra.mxu0 0.0
    %3923 = vmatprep.subr.mxu0 0.0
    %3924 = vmatpush1.msra.mxu0 0.0
    %3925 = vmatprep.subr.mxu0 0.0
    %3926 = vmatpush1.msra.mxu0 0.0
    %3927 = vmatprep.subr.mxu0 0.0
    %3928 = vmatpush1.msra.mxu0 0.0
    %3929 = vmatprep.subr.mxu0 0.0
    %3930 = vmatpush1.msra.mxu0 0.0
    %3931 = vmatprep.subr.mxu0 0.0
    %3932 = vmatpush1.msra.mxu0 0.0
    %3933 = vmatprep.subr.mxu0 0.0
    %3934 = vmatpush1.msra.mxu0 0.0
    %3935 = vmatprep.subr.mxu0 0.0
    %3936 = vmatpush1.msra.mxu0 %v3902
    %3937 = vmatprep.subr.mxu0 0.0
    %3938 = vmatpush1.msra.mxu0 %v3901
    %3939 = vmatprep.subr.mxu0 0.0
    %3940 = vmatpush1.msra.mxu0 %v3900
    %3941 = vmatprep.subr.mxu0 0.0
    %3942 = vmatpush1.msra.mxu0 %v3899
    %3943 = vmatprep.subr.mxu0 0.0
    %3944 = vmatpush2.msra.mxu0 0.0
    %3945 = vmatprep.subr.mxu0 0.0
    %3946 = vmatpush2.msra.mxu0 0.0
    %3947 = vmatprep.subr.mxu0 0.0
    %3948 = vmatpush2.msra.mxu0 0.0
    %3949 = vmatprep.subr.mxu0 0.0
    %3950 = vmatpush2.msra.mxu0 0.0
    %3951 = vmatprep.subr.mxu0 0.0
    %3952 = vmatpush2.msra.mxu0 0.0
    %3953 = vmatprep.subr.mxu0 0.0
    %3954 = vmatpush2.msra.mxu0 0.0
    %3955 = vmatprep.subr.mxu0 0.0
    %3956 = vmatpush2.msra.mxu0 0.0
    %3957 = vmatprep.subr.mxu0 0.0
    %3958 = vmatpush2.msra.mxu0 0.0
    %3959 = vmatprep.subr.mxu0 0.0
    %3960 = vmatpush2.msra.mxu0 0.0
    %3961 = vmatprep.subr.mxu0 0.0
    %3962 = vmatpush2.msra.mxu0 0.0
    %3963 = vmatprep.subr.mxu0 0.0
    %3964 = vmatpush2.msra.mxu0 0.0
    %3965 = vmatprep.subr.mxu0 0.0
    %3966 = vmatpush2.msra.mxu0 0.0
    %3967 = vmatprep.subr.mxu0 0.0
    %3968 = vmatpush2.msra.mxu0 0.0
    %3969 = vmatprep.subr.mxu0 0.0
    %3970 = vmatpush2.msra.mxu0 0.0
    %3971 = vmatprep.subr.mxu0 0.0
    %3972 = vmatpush2.msra.mxu0 0.0
    %3973 = vmatprep.subr.mxu0 0.0
    %3974 = vmatpush2.msra.mxu0 0.0
    %3975 = vmatprep.mubr.f32.mxu0 0.0
    %3976 = vmatmul.mubr.f32.gmra.mxu0 %v3909
    %v3977 = vpop.f32.mrf.mxu0
    %v3978 = vadd.f32 %v3907, %v3977
    %v3979 = vpop.f32.mrf.mxu0
    %3980 = vdwg.mxu0
    %v3981 = vld [vmem:[%s16 + $0x8] sm:$0x1]
    %v3982 = vlaneseq
    %v3983 = vshrl.u32 %v3982, 7
    %v3984 = vsub.s32 0, %v3983
    %v3985 = vrot.slane %v3981, %v3984
    %v3986 = vmul.f32 %v3978, %v3985
    %v3987 = vsel %vm2882, %v3986, 0.0
    %3988 = vadd.xlane.f32.xlu0 %v3987
    %v3989 = vpop.xlane.xlu0 %3988
    %v3992 = vunpack.c.l.s4 1966171168
    %v3993 = vunpack.c.0.s8 %v3992
    %v3994 = vlaneseq
    %v3995 = vshrl.u32 %v3994, 7
    %v3996 = vsub.s32 %v3993, %v3995
    %v3997 = vrot.slane %v3978, %v3996
    %v3998 = vcombine.high %v3997, %v3997
    %v4000 = vunpack.c.l.s4 1966171168
    %v4001 = vunpack.c.0.s8 %v4000
    %v4002 = vlaneseq
    %v4003 = vshrl.u32 %v4002, 7
    %v4004 = vsub.s32 %v4001, %v4003
    %v4005 = vrot.slane %v3997, %v4004
    %v4007 = vunpack.c.l.s4 1966171168
    %v4008 = vunpack.c.0.s8 %v4007
    %v4009 = vlaneseq
    %v4010 = vshrl.u32 %v4009, 7
    %v4011 = vsub.s32 %v4008, %v4010
    %v4012 = vrot.slane %v3998, %v4011
    %v4013 = vsel %vm59, %v4005, 0
    %4015 = vmatprep.subr.mxu0 0.0
    %4016 = vmatpush1.xpose.msra.mxu0 0.0
    %4017 = vmatprep.subr.mxu0 0.0
    %4018 = vmatpush1.xpose.msra.mxu0 0.0
    %4019 = vmatprep.subr.mxu0 0.0
    %4020 = vmatpush1.xpose.msra.mxu0 0.0
    %4021 = vmatprep.subr.mxu0 0.0
    %4022 = vmatpush1.xpose.msra.mxu0 0.0
    %4023 = vmatprep.subr.mxu0 0.0
    %4024 = vmatpush1.xpose.msra.mxu0 0.0
    %4025 = vmatprep.subr.mxu0 0.0
    %4026 = vmatpush1.xpose.msra.mxu0 0.0
    %4027 = vmatprep.subr.mxu0 0.0
    %4028 = vmatpush1.xpose.msra.mxu0 0.0
    %4029 = vmatprep.subr.mxu0 0.0
    %4030 = vmatpush1.xpose.msra.mxu0 0.0
    %4031 = vmatprep.subr.mxu0 0.0
    %4032 = vmatpush1.xpose.msra.mxu0 0.0
    %4033 = vmatprep.subr.mxu0 0.0
    %4034 = vmatpush1.xpose.msra.mxu0 0.0
    %4035 = vmatprep.subr.mxu0 0.0
    %4036 = vmatpush1.xpose.msra.mxu0 0.0
    %4037 = vmatprep.subr.mxu0 0.0
    %4038 = vmatpush1.xpose.msra.mxu0 0.0
    %4039 = vmatprep.subr.mxu0 0.0
    %4040 = vmatpush1.xpose.msra.mxu0 0.0
    %4041 = vmatprep.subr.mxu0 0.0
    %4042 = vmatpush1.xpose.msra.mxu0 0.0
    %4043 = vmatprep.subr.mxu0 0.0
    %4044 = vmatpush1.xpose.msra.mxu0 0.0
    %4045 = vmatprep.subr.mxu0 0.0
    %4046 = vmatpush1.xpose.msra.mxu0 %v2912
    %4047 = vmatprep.subr.mxu0 0.0
    %4048 = vmatpush2.xpose.msra.mxu0 0.0
    %4049 = vmatprep.subr.mxu0 0.0
    %4050 = vmatpush2.xpose.msra.mxu0 0.0
    %4051 = vmatprep.subr.mxu0 0.0
    %4052 = vmatpush2.xpose.msra.mxu0 0.0
    %4053 = vmatprep.subr.mxu0 0.0
    %4054 = vmatpush2.xpose.msra.mxu0 0.0
    %4055 = vmatprep.subr.mxu0 0.0
    %4056 = vmatpush2.xpose.msra.mxu0 0.0
    %4057 = vmatprep.subr.mxu0 0.0
    %4058 = vmatpush2.xpose.msra.mxu0 0.0
    %4059 = vmatprep.subr.mxu0 0.0
    %4060 = vmatpush2.xpose.msra.mxu0 0.0
    %4061 = vmatprep.subr.mxu0 0.0
    %4062 = vmatpush2.xpose.msra.mxu0 0.0
    %4063 = vmatprep.subr.mxu0 0.0
    %4064 = vmatpush2.xpose.msra.mxu0 0.0
    %4065 = vmatprep.subr.mxu0 0.0
    %4066 = vmatpush2.xpose.msra.mxu0 0.0
    %4067 = vmatprep.subr.mxu0 0.0
    %4068 = vmatpush2.xpose.msra.mxu0 0.0
    %4069 = vmatprep.subr.mxu0 0.0
    %4070 = vmatpush2.xpose.msra.mxu0 0.0
    %4071 = vmatprep.subr.mxu0 0.0
    %4072 = vmatpush2.xpose.msra.mxu0 0.0
    %4073 = vmatprep.subr.mxu0 0.0
    %4074 = vmatpush2.xpose.msra.mxu0 0.0
    %4075 = vmatprep.subr.mxu0 0.0
    %4076 = vmatpush2.xpose.msra.mxu0 0.0
    %4077 = vmatprep.subr.mxu0 0.0
    %4078 = vmatpush2.xpose.msra.mxu0 0.0
    %4079 = vmatprep.mubr.f32.mxu0 0.0
    %4080 = vmatmul.mubr.f32.gmra.mxu0 %v4013
    %v4081 = vpop.f32.mrf.mxu0
    %v4082 = vadd.f32 0.0, %v4081
    %v4083 = vpop.f32.mrf.mxu0
    %4084 = vdwg.mxu0
    %v4085 = vsel %vm59, %v4012, 0
    %4087 = vmatprep.subr.mxu0 0.0
    %4088 = vmatpush1.xpose.msra.mxu0 0.0
    %4089 = vmatprep.subr.mxu0 0.0
    %4090 = vmatpush1.xpose.msra.mxu0 0.0
    %4091 = vmatprep.subr.mxu0 0.0
    %4092 = vmatpush1.xpose.msra.mxu0 0.0
    %4093 = vmatprep.subr.mxu0 0.0
    %4094 = vmatpush1.xpose.msra.mxu0 0.0
    %4095 = vmatprep.subr.mxu0 0.0
    %4096 = vmatpush1.xpose.msra.mxu0 0.0
    %4097 = vmatprep.subr.mxu0 0.0
    %4098 = vmatpush1.xpose.msra.mxu0 0.0
    %4099 = vmatprep.subr.mxu0 0.0
    %4100 = vmatpush1.xpose.msra.mxu0 0.0
    %4101 = vmatprep.subr.mxu0 0.0
    %4102 = vmatpush1.xpose.msra.mxu0 0.0
    %4103 = vmatprep.subr.mxu0 0.0
    %4104 = vmatpush1.xpose.msra.mxu0 0.0
    %4105 = vmatprep.subr.mxu0 0.0
    %4106 = vmatpush1.xpose.msra.mxu0 0.0
    %4107 = vmatprep.subr.mxu0 0.0
    %4108 = vmatpush1.xpose.msra.mxu0 0.0
    %4109 = vmatprep.subr.mxu0 0.0
    %4110 = vmatpush1.xpose.msra.mxu0 0.0
    %4111 = vmatprep.subr.mxu0 0.0
    %4112 = vmatpush1.xpose.msra.mxu0 0.0
    %4113 = vmatprep.subr.mxu0 0.0
    %4114 = vmatpush1.xpose.msra.mxu0 0.0
    %4115 = vmatprep.subr.mxu0 0.0
    %4116 = vmatpush1.xpose.msra.mxu0 0.0
    %4117 = vmatprep.subr.mxu0 0.0
    %4118 = vmatpush1.xpose.msra.mxu0 %v2987
    %4119 = vmatprep.subr.mxu0 0.0
    %4120 = vmatpush2.xpose.msra.mxu0 0.0
    %4121 = vmatprep.subr.mxu0 0.0
    %4122 = vmatpush2.xpose.msra.mxu0 0.0
    %4123 = vmatprep.subr.mxu0 0.0
    %4124 = vmatpush2.xpose.msra.mxu0 0.0
    %4125 = vmatprep.subr.mxu0 0.0
    %4126 = vmatpush2.xpose.msra.mxu0 0.0
    %4127 = vmatprep.subr.mxu0 0.0
    %4128 = vmatpush2.xpose.msra.mxu0 0.0
    %4129 = vmatprep.subr.mxu0 0.0
    %4130 = vmatpush2.xpose.msra.mxu0 0.0
    %4131 = vmatprep.subr.mxu0 0.0
    %4132 = vmatpush2.xpose.msra.mxu0 0.0
    %4133 = vmatprep.subr.mxu0 0.0
    %4134 = vmatpush2.xpose.msra.mxu0 0.0
    %4135 = vmatprep.subr.mxu0 0.0
    %4136 = vmatpush2.xpose.msra.mxu0 0.0
    %4137 = vmatprep.subr.mxu0 0.0
    %4138 = vmatpush2.xpose.msra.mxu0 0.0
    %4139 = vmatprep.subr.mxu0 0.0
    %4140 = vmatpush2.xpose.msra.mxu0 0.0
    %4141 = vmatprep.subr.mxu0 0.0
    %4142 = vmatpush2.xpose.msra.mxu0 0.0
    %4143 = vmatprep.subr.mxu0 0.0
    %4144 = vmatpush2.xpose.msra.mxu0 0.0
    %4145 = vmatprep.subr.mxu0 0.0
    %4146 = vmatpush2.xpose.msra.mxu0 0.0
    %4147 = vmatprep.subr.mxu0 0.0
    %4148 = vmatpush2.xpose.msra.mxu0 0.0
    %4149 = vmatprep.subr.mxu0 0.0
    %4150 = vmatpush2.xpose.msra.mxu0 0.0
    %4151 = vmatprep.mubr.f32.mxu0 0.0
    %4152 = vmatmul.mubr.f32.gmra.mxu0 %v4085
    %v4153 = vpop.f32.mrf.mxu0
    %v4154 = vadd.f32 0.0, %v4153
    %v4155 = vpop.f32.mrf.mxu0
    %4156 = vdwg.mxu0
    %v4158 = vrot.slane %v3989, 1
    %v4161 = vmul.f32 %v3266, %v3989
    %v4162 = vmul.f32 %v3267, %v4158
    %v4163 = vadd.f32 %v4082, %v4161
    %v4164 = vadd.f32 %v4154, %v4162
    %v4165 = vld [vmem:[%s2] sm:$0x3]
    %v4167 = vrot.slane %v4165, 1
    %v4170 = vadd.f32 %v4163, %v4165
    %v4171 = vadd.f32 %v4164, %v4167
    %v4174 = vrot.slane %v4171, 7
    %v4175 = vsel %vm3076, %v4174, %v4170
    %v4177 = vsel %vm3079, %v4175, -inf
    %4178 = vmax.xlane.f32.xlu0 %v4177
    %v4179 = vpop.xlane.xlu0 %4178
    %v4181 = vrot.slane %v4179, 1
    %v4184 = vsub.f32 %v4170, %v4179
    %v4185 = vsub.f32 %v4171, %v4181
    %v4186 = vmul.f32 %v4184, 1.442695
    %v4187 = vpow.pop %v4186
    %v4188 = vmul.f32 %v4185, 1.442695
    %v4189 = vpow.pop %v4188
    %v4192 = vrot.slane %v4189, 7
    %v4193 = vsel %vm3076, %v4192, %v4187
    %v4195 = vsel %vm3079, %v4193, 0.0
    %4196 = vadd.xlane.f32.xlu0 %v4195
    %v4197 = vpop.xlane.xlu0 %4196
    %v4199 = vrot.slane %v4197, 1
    %v4202 = vrcp.pop %v4197
    %v4203 = vmul.f32 %v4187, %v4202
    %v4204 = vrcp.pop %v4199
    %v4205 = vmul.f32 %v4189, %v4204
    %v4207 = vsel %vm3109, %v4203, 0
    %4209 = vmatprep.subr.mxu0 0.0
    %4210 = vmatpush1.msra.mxu0 0.0
    %4211 = vmatprep.subr.mxu0 0.0
    %4212 = vmatpush1.msra.mxu0 0.0
    %4213 = vmatprep.subr.mxu0 0.0
    %4214 = vmatpush1.msra.mxu0 0.0
    %4215 = vmatprep.subr.mxu0 0.0
    %4216 = vmatpush1.msra.mxu0 0.0
    %4217 = vmatprep.subr.mxu0 0.0
    %4218 = vmatpush1.msra.mxu0 0.0
    %4219 = vmatprep.subr.mxu0 0.0
    %4220 = vmatpush1.msra.mxu0 0.0
    %4221 = vmatprep.subr.mxu0 0.0
    %4222 = vmatpush1.msra.mxu0 0.0
    %4223 = vmatprep.subr.mxu0 0.0
    %4224 = vmatpush1.msra.mxu0 0.0
    %4225 = vmatprep.subr.mxu0 0.0
    %4226 = vmatpush1.msra.mxu0 0.0
    %4227 = vmatprep.subr.mxu0 0.0
    %4228 = vmatpush1.msra.mxu0 0.0
    %4229 = vmatprep.subr.mxu0 0.0
    %4230 = vmatpush1.msra.mxu0 0.0
    %4231 = vmatprep.subr.mxu0 0.0
    %4232 = vmatpush1.msra.mxu0 0.0
    %4233 = vmatprep.subr.mxu0 0.0
    %4234 = vmatpush1.msra.mxu0 0.0
    %4235 = vmatprep.subr.mxu0 0.0
    %4236 = vmatpush1.msra.mxu0 0.0
    %4237 = vmatprep.subr.mxu0 0.0
    %4238 = vmatpush1.msra.mxu0 0.0
    %4239 = vmatprep.subr.mxu0 0.0
    %4240 = vmatpush1.msra.mxu0 %v2452
    %4241 = vmatprep.subr.mxu0 0.0
    %4242 = vmatpush2.msra.mxu0 0.0
    %4243 = vmatprep.subr.mxu0 0.0
    %4244 = vmatpush2.msra.mxu0 0.0
    %4245 = vmatprep.subr.mxu0 0.0
    %4246 = vmatpush2.msra.mxu0 0.0
    %4247 = vmatprep.subr.mxu0 0.0
    %4248 = vmatpush2.msra.mxu0 0.0
    %4249 = vmatprep.subr.mxu0 0.0
    %4250 = vmatpush2.msra.mxu0 0.0
    %4251 = vmatprep.subr.mxu0 0.0
    %4252 = vmatpush2.msra.mxu0 0.0
    %4253 = vmatprep.subr.mxu0 0.0
    %4254 = vmatpush2.msra.mxu0 0.0
    %4255 = vmatprep.subr.mxu0 0.0
    %4256 = vmatpush2.msra.mxu0 0.0
    %4257 = vmatprep.subr.mxu0 0.0
    %4258 = vmatpush2.msra.mxu0 0.0
    %4259 = vmatprep.subr.mxu0 0.0
    %4260 = vmatpush2.msra.mxu0 0.0
    %4261 = vmatprep.subr.mxu0 0.0
    %4262 = vmatpush2.msra.mxu0 0.0
    %4263 = vmatprep.subr.mxu0 0.0
    %4264 = vmatpush2.msra.mxu0 0.0
    %4265 = vmatprep.subr.mxu0 0.0
    %4266 = vmatpush2.msra.mxu0 0.0
    %4267 = vmatprep.subr.mxu0 0.0
    %4268 = vmatpush2.msra.mxu0 0.0
    %4269 = vmatprep.subr.mxu0 0.0
    %4270 = vmatpush2.msra.mxu0 0.0
    %4271 = vmatprep.subr.mxu0 0.0
    %4272 = vmatpush2.msra.mxu0 0.0
    %4273 = vmatprep.mubr.f32.mxu0 0.0
    %4274 = vmatmul.mubr.f32.gmra.mxu0 %v4207
    %v4275 = vpop.f32.mrf.mxu0
    %v4276 = vadd.f32 0.0, %v4275
    %v4277 = vpop.f32.mrf.mxu0
    %4278 = vdwg.mxu0
    %v4280 = vsel %vm3109, %v4205, 0
    %4282 = vmatprep.subr.mxu0 0.0
    %4283 = vmatpush1.msra.mxu0 0.0
    %4284 = vmatprep.subr.mxu0 0.0
    %4285 = vmatpush1.msra.mxu0 0.0
    %4286 = vmatprep.subr.mxu0 0.0
    %4287 = vmatpush1.msra.mxu0 0.0
    %4288 = vmatprep.subr.mxu0 0.0
    %4289 = vmatpush1.msra.mxu0 0.0
    %4290 = vmatprep.subr.mxu0 0.0
    %4291 = vmatpush1.msra.mxu0 0.0
    %4292 = vmatprep.subr.mxu0 0.0
    %4293 = vmatpush1.msra.mxu0 0.0
    %4294 = vmatprep.subr.mxu0 0.0
    %4295 = vmatpush1.msra.mxu0 0.0
    %4296 = vmatprep.subr.mxu0 0.0
    %4297 = vmatpush1.msra.mxu0 0.0
    %4298 = vmatprep.subr.mxu0 0.0
    %4299 = vmatpush1.msra.mxu0 0.0
    %4300 = vmatprep.subr.mxu0 0.0
    %4301 = vmatpush1.msra.mxu0 0.0
    %4302 = vmatprep.subr.mxu0 0.0
    %4303 = vmatpush1.msra.mxu0 0.0
    %4304 = vmatprep.subr.mxu0 0.0
    %4305 = vmatpush1.msra.mxu0 0.0
    %4306 = vmatprep.subr.mxu0 0.0
    %4307 = vmatpush1.msra.mxu0 0.0
    %4308 = vmatprep.subr.mxu0 0.0
    %4309 = vmatpush1.msra.mxu0 0.0
    %4310 = vmatprep.subr.mxu0 0.0
    %4311 = vmatpush1.msra.mxu0 0.0
    %4312 = vmatprep.subr.mxu0 0.0
    %4313 = vmatpush1.msra.mxu0 %v2453
    %4314 = vmatprep.subr.mxu0 0.0
    %4315 = vmatpush2.msra.mxu0 0.0
    %4316 = vmatprep.subr.mxu0 0.0
    %4317 = vmatpush2.msra.mxu0 0.0
    %4318 = vmatprep.subr.mxu0 0.0
    %4319 = vmatpush2.msra.mxu0 0.0
    %4320 = vmatprep.subr.mxu0 0.0
    %4321 = vmatpush2.msra.mxu0 0.0
    %4322 = vmatprep.subr.mxu0 0.0
    %4323 = vmatpush2.msra.mxu0 0.0
    %4324 = vmatprep.subr.mxu0 0.0
    %4325 = vmatpush2.msra.mxu0 0.0
    %4326 = vmatprep.subr.mxu0 0.0
    %4327 = vmatpush2.msra.mxu0 0.0
    %4328 = vmatprep.subr.mxu0 0.0
    %4329 = vmatpush2.msra.mxu0 0.0
    %4330 = vmatprep.subr.mxu0 0.0
    %4331 = vmatpush2.msra.mxu0 0.0
    %4332 = vmatprep.subr.mxu0 0.0
    %4333 = vmatpush2.msra.mxu0 0.0
    %4334 = vmatprep.subr.mxu0 0.0
    %4335 = vmatpush2.msra.mxu0 0.0
    %4336 = vmatprep.subr.mxu0 0.0
    %4337 = vmatpush2.msra.mxu0 0.0
    %4338 = vmatprep.subr.mxu0 0.0
    %4339 = vmatpush2.msra.mxu0 0.0
    %4340 = vmatprep.subr.mxu0 0.0
    %4341 = vmatpush2.msra.mxu0 0.0
    %4342 = vmatprep.subr.mxu0 0.0
    %4343 = vmatpush2.msra.mxu0 0.0
    %4344 = vmatprep.subr.mxu0 0.0
    %4345 = vmatpush2.msra.mxu0 0.0
    %4346 = vmatprep.mubr.f32.mxu0 0.0
    %4347 = vmatmul.mubr.f32.gmra.mxu0 %v4280
    %v4348 = vpop.f32.mrf.mxu0
    %v4349 = vadd.f32 0.0, %v4348
    %v4350 = vpop.f32.mrf.mxu0
    %4351 = vdwg.mxu0
    %v4352 = vmin.f32 %v4203, %v3266
    %v4353 = vmin.f32 %v4205, %v3267
    %v4356 = vrot.slane %v4353, 7
    %v4357 = vsel %vm3076, %v4356, %v4352
    %v4359 = vsel %vm3079, %v4357, 0.0
    %4360 = vadd.xlane.f32.xlu0 %v4359
    %v4361 = vpop.xlane.xlu0 %4360
    %v4362 = vadd.f32 %v3266, %v4203
    %v4363 = vadd.f32 %v3267, %v4205
    %v4366 = vrot.slane %v4349, 7
    %v4367 = vsel %vm3076, %v4366, %v4276
    %4369 = vrot.lane.b32.xlu0 %v3898, 32
    %v4370 = vpop.permute.xlu0 %4369
    %4373 = vrot.lane.b32.xlu0 %v3784, 64
    %v4374 = vpop.permute.xlu0 %4373
    %v4376 = vsel %vm59, %v4367, %v4370
    %v4377 = vsel %vm2604, %v4376, %v4374
    %v4378 = vld [vmem:[%s16 + $0x9] sm:$0x1]
    %v4379 = vlaneseq
    %v4380 = vshrl.u32 %v4379, 7
    %v4381 = vsub.s32 0, %v4380
    %v4382 = vrot.slane %v4378, %v4381
    %v4383 = vmul.f32 %v4377, %v4382
    %v4384 = vsel %vm3288, %v4383, 0.0
    %4385 = vadd.xlane.f32.xlu0 %v4384
    %v4386 = vpop.xlane.xlu0 %4385
    %v4387 = vld [vmem:[%s16 + $0xa] sm:$0x1]
    %v4388 = vlaneseq
    %v4389 = vshrl.u32 %v4388, 7
    %v4390 = vsub.s32 0, %v4389
    %v4391 = vrot.slane %v4387, %v4390
    %v4392 = vadd.f32 %v4386, %v4391
    %v4393 = vxor.u32 %v4392, 2147483648
    %v4394 = vmul.f32 %v4393, 1.442695
    %v4395 = vpow.pop %v4394
    %v4396 = vadd.f32 %v4395, 1.0
    %v4397 = vrcp.pop %v4396
    %v4398 = vmul.f32 1.0, %v4397
    %4399 = vrot.lane.b32.xlu0 %v4367, 16
    %v4400 = vpop.permute.xlu0 %4399
    %v4402 = vsel %vm2792, %v3896, %v4400
    %v4403 = vld [vmem:[%s13] sm:$0xff]
    %v4404 = vld [vmem:[%s13 + $0x8] sm:$0xff]
    %v4405 = vld [vmem:[%s13 + $0x10] sm:$0xff]
    %v4406 = vld [vmem:[%s13 + $0x18] sm:$0xff]
    %v4407 = vld [vmem:[%s13 + $0x20] sm:$0xff]
    %v4408 = vld [vmem:[%s13 + $0x28] sm:$0xff]
    %v4409 = vld [vmem:[%s16 + $0xb] sm:$0x1]
    %v4410 = vlaneseq
    %v4411 = vshrl.u32 %v4410, 7
    %v4412 = vsub.s32 0, %v4411
    %v4413 = vrot.slane %v4409, %v4412
    %v4415 = vsel %vm71, %v4402, 0
    %4417 = vmatprep.subr.mxu0 0.0
    %4418 = vmatpush1.msra.mxu0 0.0
    %4419 = vmatprep.subr.mxu0 0.0
    %4420 = vmatpush1.msra.mxu0 0.0
    %4421 = vmatprep.subr.mxu0 0.0
    %4422 = vmatpush1.msra.mxu0 0.0
    %4423 = vmatprep.subr.mxu0 0.0
    %4424 = vmatpush1.msra.mxu0 0.0
    %4425 = vmatprep.subr.mxu0 0.0
    %4426 = vmatpush1.msra.mxu0 0.0
    %4427 = vmatprep.subr.mxu0 0.0
    %4428 = vmatpush1.msra.mxu0 0.0
    %4429 = vmatprep.subr.mxu0 0.0
    %4430 = vmatpush1.msra.mxu0 0.0
    %4431 = vmatprep.subr.mxu0 0.0
    %4432 = vmatpush1.msra.mxu0 0.0
    %4433 = vmatprep.subr.mxu0 0.0
    %4434 = vmatpush1.msra.mxu0 0.0
    %4435 = vmatprep.subr.mxu0 0.0
    %4436 = vmatpush1.msra.mxu0 0.0
    %4437 = vmatprep.subr.mxu0 0.0
    %4438 = vmatpush1.msra.mxu0 %v4408
    %4439 = vmatprep.subr.mxu0 0.0
    %4440 = vmatpush1.msra.mxu0 %v4407
    %4441 = vmatprep.subr.mxu0 0.0
    %4442 = vmatpush1.msra.mxu0 %v4406
    %4443 = vmatprep.subr.mxu0 0.0
    %4444 = vmatpush1.msra.mxu0 %v4405
    %4445 = vmatprep.subr.mxu0 0.0
    %4446 = vmatpush1.msra.mxu0 %v4404
    %4447 = vmatprep.subr.mxu0 0.0
    %4448 = vmatpush1.msra.mxu0 %v4403
    %4449 = vmatprep.subr.mxu0 0.0
    %4450 = vmatpush2.msra.mxu0 0.0
    %4451 = vmatprep.subr.mxu0 0.0
    %4452 = vmatpush2.msra.mxu0 0.0
    %4453 = vmatprep.subr.mxu0 0.0
    %4454 = vmatpush2.msra.mxu0 0.0
    %4455 = vmatprep.subr.mxu0 0.0
    %4456 = vmatpush2.msra.mxu0 0.0
    %4457 = vmatprep.subr.mxu0 0.0
    %4458 = vmatpush2.msra.mxu0 0.0
    %4459 = vmatprep.subr.mxu0 0.0
    %4460 = vmatpush2.msra.mxu0 0.0
    %4461 = vmatprep.subr.mxu0 0.0
    %4462 = vmatpush2.msra.mxu0 0.0
    %4463 = vmatprep.subr.mxu0 0.0
    %4464 = vmatpush2.msra.mxu0 0.0
    %4465 = vmatprep.subr.mxu0 0.0
    %4466 = vmatpush2.msra.mxu0 0.0
    %4467 = vmatprep.subr.mxu0 0.0
    %4468 = vmatpush2.msra.mxu0 0.0
    %4469 = vmatprep.subr.mxu0 0.0
    %4470 = vmatpush2.msra.mxu0 0.0
    %4471 = vmatprep.subr.mxu0 0.0
    %4472 = vmatpush2.msra.mxu0 0.0
    %4473 = vmatprep.subr.mxu0 0.0
    %4474 = vmatpush2.msra.mxu0 0.0
    %4475 = vmatprep.subr.mxu0 0.0
    %4476 = vmatpush2.msra.mxu0 0.0
    %4477 = vmatprep.subr.mxu0 0.0
    %4478 = vmatpush2.msra.mxu0 0.0
    %4479 = vmatprep.subr.mxu0 0.0
    %4480 = vmatpush2.msra.mxu0 0.0
    %4481 = vmatprep.mubr.f32.mxu0 0.0
    %4482 = vmatmul.mubr.f32.gmra.mxu0 %v4415
    %v4483 = vpop.f32.mrf.mxu0
    %v4484 = vadd.f32 %v4413, %v4483
    %v4485 = vpop.f32.mrf.mxu0
    %4486 = vdwg.mxu0
    %v4487 = vmax.f32 %v4484, 0.0
    %v4488 = vld [vmem:[%s14] sm:$0xff]
    %v4489 = vld [vmem:[%s14 + $0x8] sm:$0xff]
    %v4490 = vld [vmem:[%s15] sm:$0x1]
    %v4492 = vlaneseq
    %v4493 = vshrl.u32 %v4492, 7
    %v4494 = vsub.s32 0, %v4493
    %v4495 = vrot.slane %v4490, %v4494
    %v4498 = vsel %vm2792, %v4487, 0
    %4500 = vmatprep.subr.mxu0 0.0
    %4501 = vmatpush1.msra.mxu0 0.0
    %4502 = vmatprep.subr.mxu0 0.0
    %4503 = vmatpush1.msra.mxu0 0.0
    %4504 = vmatprep.subr.mxu0 0.0
    %4505 = vmatpush1.msra.mxu0 0.0
    %4506 = vmatprep.subr.mxu0 0.0
    %4507 = vmatpush1.msra.mxu0 0.0
    %4508 = vmatprep.subr.mxu0 0.0
    %4509 = vmatpush1.msra.mxu0 0.0
    %4510 = vmatprep.subr.mxu0 0.0
    %4511 = vmatpush1.msra.mxu0 0.0
    %4512 = vmatprep.subr.mxu0 0.0
    %4513 = vmatpush1.msra.mxu0 0.0
    %4514 = vmatprep.subr.mxu0 0.0
    %4515 = vmatpush1.msra.mxu0 0.0
    %4516 = vmatprep.subr.mxu0 0.0
    %4517 = vmatpush1.msra.mxu0 0.0
    %4518 = vmatprep.subr.mxu0 0.0
    %4519 = vmatpush1.msra.mxu0 0.0
    %4520 = vmatprep.subr.mxu0 0.0
    %4521 = vmatpush1.msra.mxu0 0.0
    %4522 = vmatprep.subr.mxu0 0.0
    %4523 = vmatpush1.msra.mxu0 0.0
    %4524 = vmatprep.subr.mxu0 0.0
    %4525 = vmatpush1.msra.mxu0 0.0
    %4526 = vmatprep.subr.mxu0 0.0
    %4527 = vmatpush1.msra.mxu0 0.0
    %4528 = vmatprep.subr.mxu0 0.0
    %4529 = vmatpush1.msra.mxu0 %v4489
    %4530 = vmatprep.subr.mxu0 0.0
    %4531 = vmatpush1.msra.mxu0 %v4488
    %4532 = vmatprep.subr.mxu0 0.0
    %4533 = vmatpush2.msra.mxu0 0.0
    %4534 = vmatprep.subr.mxu0 0.0
    %4535 = vmatpush2.msra.mxu0 0.0
    %4536 = vmatprep.subr.mxu0 0.0
    %4537 = vmatpush2.msra.mxu0 0.0
    %4538 = vmatprep.subr.mxu0 0.0
    %4539 = vmatpush2.msra.mxu0 0.0
    %4540 = vmatprep.subr.mxu0 0.0
    %4541 = vmatpush2.msra.mxu0 0.0
    %4542 = vmatprep.subr.mxu0 0.0
    %4543 = vmatpush2.msra.mxu0 0.0
    %4544 = vmatprep.subr.mxu0 0.0
    %4545 = vmatpush2.msra.mxu0 0.0
    %4546 = vmatprep.subr.mxu0 0.0
    %4547 = vmatpush2.msra.mxu0 0.0
    %4548 = vmatprep.subr.mxu0 0.0
    %4549 = vmatpush2.msra.mxu0 0.0
    %4550 = vmatprep.subr.mxu0 0.0
    %4551 = vmatpush2.msra.mxu0 0.0
    %4552 = vmatprep.subr.mxu0 0.0
    %4553 = vmatpush2.msra.mxu0 0.0
    %4554 = vmatprep.subr.mxu0 0.0
    %4555 = vmatpush2.msra.mxu0 0.0
    %4556 = vmatprep.subr.mxu0 0.0
    %4557 = vmatpush2.msra.mxu0 0.0
    %4558 = vmatprep.subr.mxu0 0.0
    %4559 = vmatpush2.msra.mxu0 0.0
    %4560 = vmatprep.subr.mxu0 0.0
    %4561 = vmatpush2.msra.mxu0 0.0
    %4562 = vmatprep.subr.mxu0 0.0
    %4563 = vmatpush2.msra.mxu0 0.0
    %4564 = vmatprep.mubr.f32.mxu0 0.0
    %4565 = vmatmul.mubr.f32.gmra.mxu0 %v4498
    %v4566 = vpop.f32.mrf.mxu0
    %v4567 = vadd.f32 %v4495, %v4566
    %v4568 = vpop.f32.mrf.mxu0
    %4569 = vdwg.mxu0
    %v4570 = vsel %vm3475, %v4567, -inf
    %4571 = vmax.xlane.f32.xlu0 %v4570
    %v4572 = vpop.xlane.xlu0 %4571
    %v4573 = vsub.f32 %v4567, %v4572
    %v4574 = vmul.f32 %v4573, 1.442695
    %v4575 = vpow.pop %v4574
    %v4576 = vsel %vm3475, %v4575, 0.0
    %4577 = vadd.xlane.f32.xlu0 %v4576
    %v4578 = vpop.xlane.xlu0 %4577
    %v4579 = vrcp.pop %v4578
    %v4580 = vmul.f32 %v4575, %v4579
    %v4581 = vsub.f32 1.0, %v4398
    %4583 = vset.pattern.permute.xlu0 0
    %4584 = vperm.xlu0 %4583, %v4581
    %v4585 = vpop.permute.xlu0 %4584
    %v4587 = vrot.slane %v4205, 7
    %v4588 = vsel %vm3076, %v4587, %v4203
    %v4590 = vmul.f32 %v4585, %v4588
    %4592 = vset.pattern.permute.xlu0 0
    %4593 = vperm.xlu0 %4592, %v4398
    %v4594 = vpop.permute.xlu0 %4593
    %v4596 = vmul.f32 %v4594, %v4580
    %v4597 = vld [vmem:[%s3] sm:$0xff]
    %v4598 = vld [vmem:[%s3 + $0x8] sm:$0xff]
    %v4601 = vunpack.c.l.s4 1966171168
    %v4602 = vunpack.c.0.s8 %v4601
    %v4603 = vlaneseq
    %v4604 = vshrl.u32 %v4603, 7
    %v4605 = vsub.s32 %v4602, %v4604
    %v4606 = vrot.slane %v4590, %v4605
    %v4607 = vcombine.high %v4606, %v4606
    %v4609 = vunpack.c.l.s4 1966171168
    %v4610 = vunpack.c.0.s8 %v4609
    %v4611 = vlaneseq
    %v4612 = vshrl.u32 %v4611, 7
    %v4613 = vsub.s32 %v4610, %v4612
    %v4614 = vrot.slane %v4606, %v4613
    %v4616 = vunpack.c.l.s4 1966171168
    %v4617 = vunpack.c.0.s8 %v4616
    %v4618 = vlaneseq
    %v4619 = vshrl.u32 %v4618, 7
    %v4620 = vsub.s32 %v4617, %v4619
    %v4621 = vrot.slane %v4607, %v4620
    %v4622 = vsel %vm3109, %v4614, 0
    %4624 = vmatprep.subr.mxu0 0.0
    %4625 = vmatpush1.msra.mxu0 0.0
    %4626 = vmatprep.subr.mxu0 0.0
    %4627 = vmatpush1.msra.mxu0 0.0
    %4628 = vmatprep.subr.mxu0 0.0
    %4629 = vmatpush1.msra.mxu0 0.0
    %4630 = vmatprep.subr.mxu0 0.0
    %4631 = vmatpush1.msra.mxu0 0.0
    %4632 = vmatprep.subr.mxu0 0.0
    %4633 = vmatpush1.msra.mxu0 0.0
    %4634 = vmatprep.subr.mxu0 0.0
    %4635 = vmatpush1.msra.mxu0 0.0
    %4636 = vmatprep.subr.mxu0 0.0
    %4637 = vmatpush1.msra.mxu0 0.0
    %4638 = vmatprep.subr.mxu0 0.0
    %4639 = vmatpush1.msra.mxu0 0.0
    %4640 = vmatprep.subr.mxu0 0.0
    %4641 = vmatpush1.msra.mxu0 0.0
    %4642 = vmatprep.subr.mxu0 0.0
    %4643 = vmatpush1.msra.mxu0 0.0
    %4644 = vmatprep.subr.mxu0 0.0
    %4645 = vmatpush1.msra.mxu0 0.0
    %4646 = vmatprep.subr.mxu0 0.0
    %4647 = vmatpush1.msra.mxu0 0.0
    %4648 = vmatprep.subr.mxu0 0.0
    %4649 = vmatpush1.msra.mxu0 0.0
    %4650 = vmatprep.subr.mxu0 0.0
    %4651 = vmatpush1.msra.mxu0 0.0
    %4652 = vmatprep.subr.mxu0 0.0
    %4653 = vmatpush1.msra.mxu0 0.0
    %4654 = vmatprep.subr.mxu0 0.0
    %4655 = vmatpush1.msra.mxu0 %v4597
    %4656 = vmatprep.subr.mxu0 0.0
    %4657 = vmatpush2.msra.mxu0 0.0
    %4658 = vmatprep.subr.mxu0 0.0
    %4659 = vmatpush2.msra.mxu0 0.0
    %4660 = vmatprep.subr.mxu0 0.0
    %4661 = vmatpush2.msra.mxu0 0.0
    %4662 = vmatprep.subr.mxu0 0.0
    %4663 = vmatpush2.msra.mxu0 0.0
    %4664 = vmatprep.subr.mxu0 0.0
    %4665 = vmatpush2.msra.mxu0 0.0
    %4666 = vmatprep.subr.mxu0 0.0
    %4667 = vmatpush2.msra.mxu0 0.0
    %4668 = vmatprep.subr.mxu0 0.0
    %4669 = vmatpush2.msra.mxu0 0.0
    %4670 = vmatprep.subr.mxu0 0.0
    %4671 = vmatpush2.msra.mxu0 0.0
    %4672 = vmatprep.subr.mxu0 0.0
    %4673 = vmatpush2.msra.mxu0 0.0
    %4674 = vmatprep.subr.mxu0 0.0
    %4675 = vmatpush2.msra.mxu0 0.0
    %4676 = vmatprep.subr.mxu0 0.0
    %4677 = vmatpush2.msra.mxu0 0.0
    %4678 = vmatprep.subr.mxu0 0.0
    %4679 = vmatpush2.msra.mxu0 0.0
    %4680 = vmatprep.subr.mxu0 0.0
    %4681 = vmatpush2.msra.mxu0 0.0
    %4682 = vmatprep.subr.mxu0 0.0
    %4683 = vmatpush2.msra.mxu0 0.0
    %4684 = vmatprep.subr.mxu0 0.0
    %4685 = vmatpush2.msra.mxu0 0.0
    %4686 = vmatprep.subr.mxu0 0.0
    %4687 = vmatpush2.msra.mxu0 0.0
    %4688 = vmatprep.mubr.f32.mxu0 0.0
    %4689 = vmatmul.mubr.f32.gmra.mxu0 %v4622
    %v4690 = vpop.f32.mrf.mxu0
    %v4691 = vadd.f32 0.0, %v4690
    %v4692 = vpop.f32.mrf.mxu0
    %4693 = vdwg.mxu0
    %v4694 = vsel %vm3109, %v4621, 0
    %4696 = vmatprep.subr.mxu0 0.0
    %4697 = vmatpush1.msra.mxu0 0.0
    %4698 = vmatprep.subr.mxu0 0.0
    %4699 = vmatpush1.msra.mxu0 0.0
    %4700 = vmatprep.subr.mxu0 0.0
    %4701 = vmatpush1.msra.mxu0 0.0
    %4702 = vmatprep.subr.mxu0 0.0
    %4703 = vmatpush1.msra.mxu0 0.0
    %4704 = vmatprep.subr.mxu0 0.0
    %4705 = vmatpush1.msra.mxu0 0.0
    %4706 = vmatprep.subr.mxu0 0.0
    %4707 = vmatpush1.msra.mxu0 0.0
    %4708 = vmatprep.subr.mxu0 0.0
    %4709 = vmatpush1.msra.mxu0 0.0
    %4710 = vmatprep.subr.mxu0 0.0
    %4711 = vmatpush1.msra.mxu0 0.0
    %4712 = vmatprep.subr.mxu0 0.0
    %4713 = vmatpush1.msra.mxu0 0.0
    %4714 = vmatprep.subr.mxu0 0.0
    %4715 = vmatpush1.msra.mxu0 0.0
    %4716 = vmatprep.subr.mxu0 0.0
    %4717 = vmatpush1.msra.mxu0 0.0
    %4718 = vmatprep.subr.mxu0 0.0
    %4719 = vmatpush1.msra.mxu0 0.0
    %4720 = vmatprep.subr.mxu0 0.0
    %4721 = vmatpush1.msra.mxu0 0.0
    %4722 = vmatprep.subr.mxu0 0.0
    %4723 = vmatpush1.msra.mxu0 0.0
    %4724 = vmatprep.subr.mxu0 0.0
    %4725 = vmatpush1.msra.mxu0 0.0
    %4726 = vmatprep.subr.mxu0 0.0
    %4727 = vmatpush1.msra.mxu0 %v4598
    %4728 = vmatprep.subr.mxu0 0.0
    %4729 = vmatpush2.msra.mxu0 0.0
    %4730 = vmatprep.subr.mxu0 0.0
    %4731 = vmatpush2.msra.mxu0 0.0
    %4732 = vmatprep.subr.mxu0 0.0
    %4733 = vmatpush2.msra.mxu0 0.0
    %4734 = vmatprep.subr.mxu0 0.0
    %4735 = vmatpush2.msra.mxu0 0.0
    %4736 = vmatprep.subr.mxu0 0.0
    %4737 = vmatpush2.msra.mxu0 0.0
    %4738 = vmatprep.subr.mxu0 0.0
    %4739 = vmatpush2.msra.mxu0 0.0
    %4740 = vmatprep.subr.mxu0 0.0
    %4741 = vmatpush2.msra.mxu0 0.0
    %4742 = vmatprep.subr.mxu0 0.0
    %4743 = vmatpush2.msra.mxu0 0.0
    %4744 = vmatprep.subr.mxu0 0.0
    %4745 = vmatpush2.msra.mxu0 0.0
    %4746 = vmatprep.subr.mxu0 0.0
    %4747 = vmatpush2.msra.mxu0 0.0
    %4748 = vmatprep.subr.mxu0 0.0
    %4749 = vmatpush2.msra.mxu0 0.0
    %4750 = vmatprep.subr.mxu0 0.0
    %4751 = vmatpush2.msra.mxu0 0.0
    %4752 = vmatprep.subr.mxu0 0.0
    %4753 = vmatpush2.msra.mxu0 0.0
    %4754 = vmatprep.subr.mxu0 0.0
    %4755 = vmatpush2.msra.mxu0 0.0
    %4756 = vmatprep.subr.mxu0 0.0
    %4757 = vmatpush2.msra.mxu0 0.0
    %4758 = vmatprep.subr.mxu0 0.0
    %4759 = vmatpush2.msra.mxu0 0.0
    %4760 = vmatprep.mubr.f32.mxu0 0.0
    %4761 = vmatmul.mubr.f32.gmra.mxu0 %v4694
    %v4762 = vpop.f32.mrf.mxu0
    %v4763 = vadd.f32 0.0, %v4762
    %v4764 = vpop.f32.mrf.mxu0
    %4765 = vdwg.mxu0
    %v4768 = vrot.slane %v4763, 7
    %v4769 = vsel %vm3076, %v4768, %v4691
    %v4771 = vadd.f32 %v4596, %v4769
    %s4772 = scalar_lea.vmem %s4, 2
    %v4773 = vld [vmem:[%s4772] sm:$0x3]
    %v4774 = vmul.f32 %v4771, %v4773
    %v4775 = vsel %vm3475, %v4774, 0.0
    %4776 = vadd.xlane.f32.xlu0 %v4775
    %v4777 = vpop.xlane.xlu0 %4776
    %v4778 = vadd.f32 %v4777, 1e-12
    %v4779 = vlog2.pop %v4778
    %v4780 = vmul.f32 %v4779, 0.6931472
    %v4781 = vsub.f32 0.0, %v4780
    %v4782 = vadd.f32 %v4781, %v4361
    %s4783 = scalar_lea.vmem %s5, 2
    %v4784 = vld [vmem:[%s4783] sm:$0x3]
    %v4785 = vmul.f32 %v4782, %v4784
    %v4786 = vadd.f32 %v3690, %v4785
    %s4787 = scalar_lea.vmem %s1, 4
    %v4788 = vld [vmem:[%s4787] sm:$0x3]
    %4790 = vrot.lane.b32.xlu0 %v4788, 32
    %v4791 = vpop.permute.xlu0 %4790
    %v4793 = vsel %vm59, %v4367, %v4791
    %v4794 = vld [vmem:[%s10] sm:$0xff]
    %v4795 = vld [vmem:[%s10 + $0x8] sm:$0xff]
    %v4796 = vld [vmem:[%s10 + $0x10] sm:$0xff]
    %v4797 = vld [vmem:[%s10 + $0x18] sm:$0xff]
    %v4798 = vld [vmem:[%s10 + $0x20] sm:$0xff]
    %v4799 = vld [vmem:[%s10 + $0x28] sm:$0xff]
    %v4800 = vld [vmem:[%s10 + $0x30] sm:$0xff]
    %v4801 = vld [vmem:[%s10 + $0x38] sm:$0xff]
    %v4802 = vld [vmem:[%s16 + $0x5] sm:$0x1]
    %v4803 = vlaneseq
    %v4804 = vshrl.u32 %v4803, 7
    %v4805 = vsub.s32 0, %v4804
    %v4806 = vrot.slane %v4802, %v4805
    %v4808 = vsel %vm2604, %v4793, 0
    %4810 = vmatprep.subr.mxu0 0.0
    %4811 = vmatpush1.msra.mxu0 0.0
    %4812 = vmatprep.subr.mxu0 0.0
    %4813 = vmatpush1.msra.mxu0 0.0
    %4814 = vmatprep.subr.mxu0 0.0
    %4815 = vmatpush1.msra.mxu0 0.0
    %4816 = vmatprep.subr.mxu0 0.0
    %4817 = vmatpush1.msra.mxu0 0.0
    %4818 = vmatprep.subr.mxu0 0.0
    %4819 = vmatpush1.msra.mxu0 0.0
    %4820 = vmatprep.subr.mxu0 0.0
    %4821 = vmatpush1.msra.mxu0 0.0
    %4822 = vmatprep.subr.mxu0 0.0
    %4823 = vmatpush1.msra.mxu0 0.0
    %4824 = vmatprep.subr.mxu0 0.0
    %4825 = vmatpush1.msra.mxu0 0.0
    %4826 = vmatprep.subr.mxu0 0.0
    %4827 = vmatpush1.msra.mxu0 %v4801
    %4828 = vmatprep.subr.mxu0 0.0
    %4829 = vmatpush1.msra.mxu0 %v4800
    %4830 = vmatprep.subr.mxu0 0.0
    %4831 = vmatpush1.msra.mxu0 %v4799
    %4832 = vmatprep.subr.mxu0 0.0
    %4833 = vmatpush1.msra.mxu0 %v4798
    %4834 = vmatprep.subr.mxu0 0.0
    %4835 = vmatpush1.msra.mxu0 %v4797
    %4836 = vmatprep.subr.mxu0 0.0
    %4837 = vmatpush1.msra.mxu0 %v4796
    %4838 = vmatprep.subr.mxu0 0.0
    %4839 = vmatpush1.msra.mxu0 %v4795
    %4840 = vmatprep.subr.mxu0 0.0
    %4841 = vmatpush1.msra.mxu0 %v4794
    %4842 = vmatprep.subr.mxu0 0.0
    %4843 = vmatpush2.msra.mxu0 0.0
    %4844 = vmatprep.subr.mxu0 0.0
    %4845 = vmatpush2.msra.mxu0 0.0
    %4846 = vmatprep.subr.mxu0 0.0
    %4847 = vmatpush2.msra.mxu0 0.0
    %4848 = vmatprep.subr.mxu0 0.0
    %4849 = vmatpush2.msra.mxu0 0.0
    %4850 = vmatprep.subr.mxu0 0.0
    %4851 = vmatpush2.msra.mxu0 0.0
    %4852 = vmatprep.subr.mxu0 0.0
    %4853 = vmatpush2.msra.mxu0 0.0
    %4854 = vmatprep.subr.mxu0 0.0
    %4855 = vmatpush2.msra.mxu0 0.0
    %4856 = vmatprep.subr.mxu0 0.0
    %4857 = vmatpush2.msra.mxu0 0.0
    %4858 = vmatprep.subr.mxu0 0.0
    %4859 = vmatpush2.msra.mxu0 0.0
    %4860 = vmatprep.subr.mxu0 0.0
    %4861 = vmatpush2.msra.mxu0 0.0
    %4862 = vmatprep.subr.mxu0 0.0
    %4863 = vmatpush2.msra.mxu0 0.0
    %4864 = vmatprep.subr.mxu0 0.0
    %4865 = vmatpush2.msra.mxu0 0.0
    %4866 = vmatprep.subr.mxu0 0.0
    %4867 = vmatpush2.msra.mxu0 0.0
    %4868 = vmatprep.subr.mxu0 0.0
    %4869 = vmatpush2.msra.mxu0 0.0
    %4870 = vmatprep.subr.mxu0 0.0
    %4871 = vmatpush2.msra.mxu0 0.0
    %4872 = vmatprep.subr.mxu0 0.0
    %4873 = vmatpush2.msra.mxu0 0.0
    %4874 = vmatprep.mubr.f32.mxu0 0.0
    %4875 = vmatmul.mubr.f32.gmra.mxu0 %v4808
    %v4876 = vpop.f32.mrf.mxu0
    %v4877 = vadd.f32 %v4806, %v4876
    %v4878 = vpop.f32.mrf.mxu0
    %4879 = vdwg.mxu0
    %v4880 = vmax.f32 %v4877, 0.0
    %v4881 = vld [vmem:[%s16 + $0x6] sm:$0x1]
    %v4882 = vsel %vm59, %v4880, %v3893
    %v4883 = vld [vmem:[%s11] sm:$0xff]
    %v4884 = vld [vmem:[%s11 + $0x8] sm:$0xff]
    %v4885 = vld [vmem:[%s11 + $0x10] sm:$0xff]
    %v4886 = vld [vmem:[%s11 + $0x18] sm:$0xff]
    %v4887 = vld [vmem:[%s11 + $0x20] sm:$0xff]
    %v4888 = vld [vmem:[%s11 + $0x28] sm:$0xff]
    %v4889 = vlaneseq
    %v4890 = vshrl.u32 %v4889, 7
    %v4891 = vsub.s32 0, %v4890
    %v4892 = vrot.slane %v4881, %v4891
    %v4894 = vsel %vm71, %v4882, 0
    %4896 = vmatprep.subr.mxu0 0.0
    %4897 = vmatpush1.msra.mxu0 0.0
    %4898 = vmatprep.subr.mxu0 0.0
    %4899 = vmatpush1.msra.mxu0 0.0
    %4900 = vmatprep.subr.mxu0 0.0
    %4901 = vmatpush1.msra.mxu0 0.0
    %4902 = vmatprep.subr.mxu0 0.0
    %4903 = vmatpush1.msra.mxu0 0.0
    %4904 = vmatprep.subr.mxu0 0.0
    %4905 = vmatpush1.msra.mxu0 0.0
    %4906 = vmatprep.subr.mxu0 0.0
    %4907 = vmatpush1.msra.mxu0 0.0
    %4908 = vmatprep.subr.mxu0 0.0
    %4909 = vmatpush1.msra.mxu0 0.0
    %4910 = vmatprep.subr.mxu0 0.0
    %4911 = vmatpush1.msra.mxu0 0.0
    %4912 = vmatprep.subr.mxu0 0.0
    %4913 = vmatpush1.msra.mxu0 0.0
    %4914 = vmatprep.subr.mxu0 0.0
    %4915 = vmatpush1.msra.mxu0 0.0
    %4916 = vmatprep.subr.mxu0 0.0
    %4917 = vmatpush1.msra.mxu0 %v4888
    %4918 = vmatprep.subr.mxu0 0.0
    %4919 = vmatpush1.msra.mxu0 %v4887
    %4920 = vmatprep.subr.mxu0 0.0
    %4921 = vmatpush1.msra.mxu0 %v4886
    %4922 = vmatprep.subr.mxu0 0.0
    %4923 = vmatpush1.msra.mxu0 %v4885
    %4924 = vmatprep.subr.mxu0 0.0
    %4925 = vmatpush1.msra.mxu0 %v4884
    %4926 = vmatprep.subr.mxu0 0.0
    %4927 = vmatpush1.msra.mxu0 %v4883
    %4928 = vmatprep.subr.mxu0 0.0
    %4929 = vmatpush2.msra.mxu0 0.0
    %4930 = vmatprep.subr.mxu0 0.0
    %4931 = vmatpush2.msra.mxu0 0.0
    %4932 = vmatprep.subr.mxu0 0.0
    %4933 = vmatpush2.msra.mxu0 0.0
    %4934 = vmatprep.subr.mxu0 0.0
    %4935 = vmatpush2.msra.mxu0 0.0
    %4936 = vmatprep.subr.mxu0 0.0
    %4937 = vmatpush2.msra.mxu0 0.0
    %4938 = vmatprep.subr.mxu0 0.0
    %4939 = vmatpush2.msra.mxu0 0.0
    %4940 = vmatprep.subr.mxu0 0.0
    %4941 = vmatpush2.msra.mxu0 0.0
    %4942 = vmatprep.subr.mxu0 0.0
    %4943 = vmatpush2.msra.mxu0 0.0
    %4944 = vmatprep.subr.mxu0 0.0
    %4945 = vmatpush2.msra.mxu0 0.0
    %4946 = vmatprep.subr.mxu0 0.0
    %4947 = vmatpush2.msra.mxu0 0.0
    %4948 = vmatprep.subr.mxu0 0.0
    %4949 = vmatpush2.msra.mxu0 0.0
    %4950 = vmatprep.subr.mxu0 0.0
    %4951 = vmatpush2.msra.mxu0 0.0
    %4952 = vmatprep.subr.mxu0 0.0
    %4953 = vmatpush2.msra.mxu0 0.0
    %4954 = vmatprep.subr.mxu0 0.0
    %4955 = vmatpush2.msra.mxu0 0.0
    %4956 = vmatprep.subr.mxu0 0.0
    %4957 = vmatpush2.msra.mxu0 0.0
    %4958 = vmatprep.subr.mxu0 0.0
    %4959 = vmatpush2.msra.mxu0 0.0
    %4960 = vmatprep.mubr.f32.mxu0 0.0
    %4961 = vmatmul.mubr.f32.gmra.mxu0 %v4894
    %v4962 = vpop.f32.mrf.mxu0
    %v4963 = vadd.f32 %v4892, %v4962
    %v4964 = vpop.f32.mrf.mxu0
    %4965 = vdwg.mxu0
    %v4966 = vxor.u32 %v4963, 2147483648
    %v4967 = vmul.f32 %v4966, 1.442695
    %v4968 = vpow.pop %v4967
    %v4969 = vadd.f32 %v4968, 1.0
    %v4970 = vrcp.pop %v4969
    %v4971 = vmul.f32 1.0, %v4970
    %v4972 = vtanh.pop %v4963
    %v4973 = vmul.f32 %v4971, %v3887
    %4975 = vrot.lane.b32.xlu0 %v4972, 80
    %v4976 = vpop.permute.xlu0 %4975
    %v4978 = vmul.f32 %v4971, %v4976
    %4980 = vrot.lane.b32.xlu0 %v4978, 16
    %v4981 = vpop.permute.xlu0 %4980
    %v4983 = vadd.f32 %v4973, %v4981
    %v4984 = vtanh.pop %v4983
    %4986 = vrot.lane.b32.xlu0 %v4984, 16
    %v4987 = vpop.permute.xlu0 %4986
    %v4989 = vmul.f32 %v4971, %v4987
    %4991 = vrot.lane.b32.xlu0 %v4989, 96
    %v4992 = vpop.permute.xlu0 %4991
    %v4994 = vsel %vm2792, %v4992, %v4983
    %v4995 = vld [vmem:[%s12] sm:$0xff]
    %v4996 = vld [vmem:[%s12 + $0x8] sm:$0xff]
    %v4997 = vld [vmem:[%s12 + $0x10] sm:$0xff]
    %v4998 = vld [vmem:[%s12 + $0x18] sm:$0xff]
    %v4999 = vld [vmem:[%s16 + $0x7] sm:$0x1]
    %v5000 = vlaneseq
    %v5001 = vshrl.u32 %v5000, 7
    %v5002 = vsub.s32 0, %v5001
    %v5003 = vrot.slane %v4999, %v5002
    %v5005 = vsel %vm59, %v4994, 0
    %5007 = vmatprep.subr.mxu0 0.0
    %5008 = vmatpush1.msra.mxu0 0.0
    %5009 = vmatprep.subr.mxu0 0.0
    %5010 = vmatpush1.msra.mxu0 0.0
    %5011 = vmatprep.subr.mxu0 0.0
    %5012 = vmatpush1.msra.mxu0 0.0
    %5013 = vmatprep.subr.mxu0 0.0
    %5014 = vmatpush1.msra.mxu0 0.0
    %5015 = vmatprep.subr.mxu0 0.0
    %5016 = vmatpush1.msra.mxu0 0.0
    %5017 = vmatprep.subr.mxu0 0.0
    %5018 = vmatpush1.msra.mxu0 0.0
    %5019 = vmatprep.subr.mxu0 0.0
    %5020 = vmatpush1.msra.mxu0 0.0
    %5021 = vmatprep.subr.mxu0 0.0
    %5022 = vmatpush1.msra.mxu0 0.0
    %5023 = vmatprep.subr.mxu0 0.0
    %5024 = vmatpush1.msra.mxu0 0.0
    %5025 = vmatprep.subr.mxu0 0.0
    %5026 = vmatpush1.msra.mxu0 0.0
    %5027 = vmatprep.subr.mxu0 0.0
    %5028 = vmatpush1.msra.mxu0 0.0
    %5029 = vmatprep.subr.mxu0 0.0
    %5030 = vmatpush1.msra.mxu0 0.0
    %5031 = vmatprep.subr.mxu0 0.0
    %5032 = vmatpush1.msra.mxu0 %v4998
    %5033 = vmatprep.subr.mxu0 0.0
    %5034 = vmatpush1.msra.mxu0 %v4997
    %5035 = vmatprep.subr.mxu0 0.0
    %5036 = vmatpush1.msra.mxu0 %v4996
    %5037 = vmatprep.subr.mxu0 0.0
    %5038 = vmatpush1.msra.mxu0 %v4995
    %5039 = vmatprep.subr.mxu0 0.0
    %5040 = vmatpush2.msra.mxu0 0.0
    %5041 = vmatprep.subr.mxu0 0.0
    %5042 = vmatpush2.msra.mxu0 0.0
    %5043 = vmatprep.subr.mxu0 0.0
    %5044 = vmatpush2.msra.mxu0 0.0
    %5045 = vmatprep.subr.mxu0 0.0
    %5046 = vmatpush2.msra.mxu0 0.0
    %5047 = vmatprep.subr.mxu0 0.0
    %5048 = vmatpush2.msra.mxu0 0.0
    %5049 = vmatprep.subr.mxu0 0.0
    %5050 = vmatpush2.msra.mxu0 0.0
    %5051 = vmatprep.subr.mxu0 0.0
    %5052 = vmatpush2.msra.mxu0 0.0
    %5053 = vmatprep.subr.mxu0 0.0
    %5054 = vmatpush2.msra.mxu0 0.0
    %5055 = vmatprep.subr.mxu0 0.0
    %5056 = vmatpush2.msra.mxu0 0.0
    %5057 = vmatprep.subr.mxu0 0.0
    %5058 = vmatpush2.msra.mxu0 0.0
    %5059 = vmatprep.subr.mxu0 0.0
    %5060 = vmatpush2.msra.mxu0 0.0
    %5061 = vmatprep.subr.mxu0 0.0
    %5062 = vmatpush2.msra.mxu0 0.0
    %5063 = vmatprep.subr.mxu0 0.0
    %5064 = vmatpush2.msra.mxu0 0.0
    %5065 = vmatprep.subr.mxu0 0.0
    %5066 = vmatpush2.msra.mxu0 0.0
    %5067 = vmatprep.subr.mxu0 0.0
    %5068 = vmatpush2.msra.mxu0 0.0
    %5069 = vmatprep.subr.mxu0 0.0
    %5070 = vmatpush2.msra.mxu0 0.0
    %5071 = vmatprep.mubr.f32.mxu0 0.0
    %5072 = vmatmul.mubr.f32.gmra.mxu0 %v5005
    %v5073 = vpop.f32.mrf.mxu0
    %v5074 = vadd.f32 %v5003, %v5073
    %v5075 = vpop.f32.mrf.mxu0
    %5076 = vdwg.mxu0
    %v5077 = vld [vmem:[%s16 + $0x8] sm:$0x1]
    %v5078 = vlaneseq
    %v5079 = vshrl.u32 %v5078, 7
    %v5080 = vsub.s32 0, %v5079
    %v5081 = vrot.slane %v5077, %v5080
    %v5082 = vmul.f32 %v5074, %v5081
    %v5083 = vsel %vm2882, %v5082, 0.0
    %5084 = vadd.xlane.f32.xlu0 %v5083
    %v5085 = vpop.xlane.xlu0 %5084
    %v5088 = vunpack.c.l.s4 1966171168
    %v5089 = vunpack.c.0.s8 %v5088
    %v5090 = vlaneseq
    %v5091 = vshrl.u32 %v5090, 7
    %v5092 = vsub.s32 %v5089, %v5091
    %v5093 = vrot.slane %v5074, %v5092
    %v5094 = vcombine.high %v5093, %v5093
    %v5096 = vunpack.c.l.s4 1966171168
    %v5097 = vunpack.c.0.s8 %v5096
    %v5098 = vlaneseq
    %v5099 = vshrl.u32 %v5098, 7
    %v5100 = vsub.s32 %v5097, %v5099
    %v5101 = vrot.slane %v5093, %v5100
    %v5103 = vunpack.c.l.s4 1966171168
    %v5104 = vunpack.c.0.s8 %v5103
    %v5105 = vlaneseq
    %v5106 = vshrl.u32 %v5105, 7
    %v5107 = vsub.s32 %v5104, %v5106
    %v5108 = vrot.slane %v5094, %v5107
    %v5109 = vsel %vm59, %v5101, 0
    %5111 = vmatprep.subr.mxu0 0.0
    %5112 = vmatpush1.xpose.msra.mxu0 0.0
    %5113 = vmatprep.subr.mxu0 0.0
    %5114 = vmatpush1.xpose.msra.mxu0 0.0
    %5115 = vmatprep.subr.mxu0 0.0
    %5116 = vmatpush1.xpose.msra.mxu0 0.0
    %5117 = vmatprep.subr.mxu0 0.0
    %5118 = vmatpush1.xpose.msra.mxu0 0.0
    %5119 = vmatprep.subr.mxu0 0.0
    %5120 = vmatpush1.xpose.msra.mxu0 0.0
    %5121 = vmatprep.subr.mxu0 0.0
    %5122 = vmatpush1.xpose.msra.mxu0 0.0
    %5123 = vmatprep.subr.mxu0 0.0
    %5124 = vmatpush1.xpose.msra.mxu0 0.0
    %5125 = vmatprep.subr.mxu0 0.0
    %5126 = vmatpush1.xpose.msra.mxu0 0.0
    %5127 = vmatprep.subr.mxu0 0.0
    %5128 = vmatpush1.xpose.msra.mxu0 0.0
    %5129 = vmatprep.subr.mxu0 0.0
    %5130 = vmatpush1.xpose.msra.mxu0 0.0
    %5131 = vmatprep.subr.mxu0 0.0
    %5132 = vmatpush1.xpose.msra.mxu0 0.0
    %5133 = vmatprep.subr.mxu0 0.0
    %5134 = vmatpush1.xpose.msra.mxu0 0.0
    %5135 = vmatprep.subr.mxu0 0.0
    %5136 = vmatpush1.xpose.msra.mxu0 0.0
    %5137 = vmatprep.subr.mxu0 0.0
    %5138 = vmatpush1.xpose.msra.mxu0 0.0
    %5139 = vmatprep.subr.mxu0 0.0
    %5140 = vmatpush1.xpose.msra.mxu0 0.0
    %5141 = vmatprep.subr.mxu0 0.0
    %5142 = vmatpush1.xpose.msra.mxu0 %v2912
    %5143 = vmatprep.subr.mxu0 0.0
    %5144 = vmatpush2.xpose.msra.mxu0 0.0
    %5145 = vmatprep.subr.mxu0 0.0
    %5146 = vmatpush2.xpose.msra.mxu0 0.0
    %5147 = vmatprep.subr.mxu0 0.0
    %5148 = vmatpush2.xpose.msra.mxu0 0.0
    %5149 = vmatprep.subr.mxu0 0.0
    %5150 = vmatpush2.xpose.msra.mxu0 0.0
    %5151 = vmatprep.subr.mxu0 0.0
    %5152 = vmatpush2.xpose.msra.mxu0 0.0
    %5153 = vmatprep.subr.mxu0 0.0
    %5154 = vmatpush2.xpose.msra.mxu0 0.0
    %5155 = vmatprep.subr.mxu0 0.0
    %5156 = vmatpush2.xpose.msra.mxu0 0.0
    %5157 = vmatprep.subr.mxu0 0.0
    %5158 = vmatpush2.xpose.msra.mxu0 0.0
    %5159 = vmatprep.subr.mxu0 0.0
    %5160 = vmatpush2.xpose.msra.mxu0 0.0
    %5161 = vmatprep.subr.mxu0 0.0
    %5162 = vmatpush2.xpose.msra.mxu0 0.0
    %5163 = vmatprep.subr.mxu0 0.0
    %5164 = vmatpush2.xpose.msra.mxu0 0.0
    %5165 = vmatprep.subr.mxu0 0.0
    %5166 = vmatpush2.xpose.msra.mxu0 0.0
    %5167 = vmatprep.subr.mxu0 0.0
    %5168 = vmatpush2.xpose.msra.mxu0 0.0
    %5169 = vmatprep.subr.mxu0 0.0
    %5170 = vmatpush2.xpose.msra.mxu0 0.0
    %5171 = vmatprep.subr.mxu0 0.0
    %5172 = vmatpush2.xpose.msra.mxu0 0.0
    %5173 = vmatprep.subr.mxu0 0.0
    %5174 = vmatpush2.xpose.msra.mxu0 0.0
    %5175 = vmatprep.mubr.f32.mxu0 0.0
    %5176 = vmatmul.mubr.f32.gmra.mxu0 %v5109
    %v5177 = vpop.f32.mrf.mxu0
    %v5178 = vadd.f32 0.0, %v5177
    %v5179 = vpop.f32.mrf.mxu0
    %5180 = vdwg.mxu0
    %v5181 = vsel %vm59, %v5108, 0
    %5183 = vmatprep.subr.mxu0 0.0
    %5184 = vmatpush1.xpose.msra.mxu0 0.0
    %5185 = vmatprep.subr.mxu0 0.0
    %5186 = vmatpush1.xpose.msra.mxu0 0.0
    %5187 = vmatprep.subr.mxu0 0.0
    %5188 = vmatpush1.xpose.msra.mxu0 0.0
    %5189 = vmatprep.subr.mxu0 0.0
    %5190 = vmatpush1.xpose.msra.mxu0 0.0
    %5191 = vmatprep.subr.mxu0 0.0
    %5192 = vmatpush1.xpose.msra.mxu0 0.0
    %5193 = vmatprep.subr.mxu0 0.0
    %5194 = vmatpush1.xpose.msra.mxu0 0.0
    %5195 = vmatprep.subr.mxu0 0.0
    %5196 = vmatpush1.xpose.msra.mxu0 0.0
    %5197 = vmatprep.subr.mxu0 0.0
    %5198 = vmatpush1.xpose.msra.mxu0 0.0
    %5199 = vmatprep.subr.mxu0 0.0
    %5200 = vmatpush1.xpose.msra.mxu0 0.0
    %5201 = vmatprep.subr.mxu0 0.0
    %5202 = vmatpush1.xpose.msra.mxu0 0.0
    %5203 = vmatprep.subr.mxu0 0.0
    %5204 = vmatpush1.xpose.msra.mxu0 0.0
    %5205 = vmatprep.subr.mxu0 0.0
    %5206 = vmatpush1.xpose.msra.mxu0 0.0
    %5207 = vmatprep.subr.mxu0 0.0
    %5208 = vmatpush1.xpose.msra.mxu0 0.0
    %5209 = vmatprep.subr.mxu0 0.0
    %5210 = vmatpush1.xpose.msra.mxu0 0.0
    %5211 = vmatprep.subr.mxu0 0.0
    %5212 = vmatpush1.xpose.msra.mxu0 0.0
    %5213 = vmatprep.subr.mxu0 0.0
    %5214 = vmatpush1.xpose.msra.mxu0 %v2987
    %5215 = vmatprep.subr.mxu0 0.0
    %5216 = vmatpush2.xpose.msra.mxu0 0.0
    %5217 = vmatprep.subr.mxu0 0.0
    %5218 = vmatpush2.xpose.msra.mxu0 0.0
    %5219 = vmatprep.subr.mxu0 0.0
    %5220 = vmatpush2.xpose.msra.mxu0 0.0
    %5221 = vmatprep.subr.mxu0 0.0
    %5222 = vmatpush2.xpose.msra.mxu0 0.0
    %5223 = vmatprep.subr.mxu0 0.0
    %5224 = vmatpush2.xpose.msra.mxu0 0.0
    %5225 = vmatprep.subr.mxu0 0.0
    %5226 = vmatpush2.xpose.msra.mxu0 0.0
    %5227 = vmatprep.subr.mxu0 0.0
    %5228 = vmatpush2.xpose.msra.mxu0 0.0
    %5229 = vmatprep.subr.mxu0 0.0
    %5230 = vmatpush2.xpose.msra.mxu0 0.0
    %5231 = vmatprep.subr.mxu0 0.0
    %5232 = vmatpush2.xpose.msra.mxu0 0.0
    %5233 = vmatprep.subr.mxu0 0.0
    %5234 = vmatpush2.xpose.msra.mxu0 0.0
    %5235 = vmatprep.subr.mxu0 0.0
    %5236 = vmatpush2.xpose.msra.mxu0 0.0
    %5237 = vmatprep.subr.mxu0 0.0
    %5238 = vmatpush2.xpose.msra.mxu0 0.0
    %5239 = vmatprep.subr.mxu0 0.0
    %5240 = vmatpush2.xpose.msra.mxu0 0.0
    %5241 = vmatprep.subr.mxu0 0.0
    %5242 = vmatpush2.xpose.msra.mxu0 0.0
    %5243 = vmatprep.subr.mxu0 0.0
    %5244 = vmatpush2.xpose.msra.mxu0 0.0
    %5245 = vmatprep.subr.mxu0 0.0
    %5246 = vmatpush2.xpose.msra.mxu0 0.0
    %5247 = vmatprep.mubr.f32.mxu0 0.0
    %5248 = vmatmul.mubr.f32.gmra.mxu0 %v5181
    %v5249 = vpop.f32.mrf.mxu0
    %v5250 = vadd.f32 0.0, %v5249
    %v5251 = vpop.f32.mrf.mxu0
    %5252 = vdwg.mxu0
    %v5254 = vrot.slane %v5085, 1
    %v5257 = vmul.f32 %v4362, %v5085
    %v5258 = vmul.f32 %v4363, %v5254
    %v5259 = vadd.f32 %v5178, %v5257
    %v5260 = vadd.f32 %v5250, %v5258
    %v5261 = vld [vmem:[%s2] sm:$0x3]
    %v5263 = vrot.slane %v5261, 1
    %v5266 = vadd.f32 %v5259, %v5261
    %v5267 = vadd.f32 %v5260, %v5263
    %v5270 = vrot.slane %v5267, 7
    %v5271 = vsel %vm3076, %v5270, %v5266
    %v5273 = vsel %vm3079, %v5271, -inf
    %5274 = vmax.xlane.f32.xlu0 %v5273
    %v5275 = vpop.xlane.xlu0 %5274
    %v5277 = vrot.slane %v5275, 1
    %v5280 = vsub.f32 %v5266, %v5275
    %v5281 = vsub.f32 %v5267, %v5277
    %v5282 = vmul.f32 %v5280, 1.442695
    %v5283 = vpow.pop %v5282
    %v5284 = vmul.f32 %v5281, 1.442695
    %v5285 = vpow.pop %v5284
    %v5288 = vrot.slane %v5285, 7
    %v5289 = vsel %vm3076, %v5288, %v5283
    %v5291 = vsel %vm3079, %v5289, 0.0
    %5292 = vadd.xlane.f32.xlu0 %v5291
    %v5293 = vpop.xlane.xlu0 %5292
    %v5295 = vrot.slane %v5293, 1
    %v5298 = vrcp.pop %v5293
    %v5299 = vmul.f32 %v5283, %v5298
    %v5300 = vrcp.pop %v5295
    %v5301 = vmul.f32 %v5285, %v5300
    %v5303 = vsel %vm3109, %v5299, 0
    %5305 = vmatprep.subr.mxu0 0.0
    %5306 = vmatpush1.msra.mxu0 0.0
    %5307 = vmatprep.subr.mxu0 0.0
    %5308 = vmatpush1.msra.mxu0 0.0
    %5309 = vmatprep.subr.mxu0 0.0
    %5310 = vmatpush1.msra.mxu0 0.0
    %5311 = vmatprep.subr.mxu0 0.0
    %5312 = vmatpush1.msra.mxu0 0.0
    %5313 = vmatprep.subr.mxu0 0.0
    %5314 = vmatpush1.msra.mxu0 0.0
    %5315 = vmatprep.subr.mxu0 0.0
    %5316 = vmatpush1.msra.mxu0 0.0
    %5317 = vmatprep.subr.mxu0 0.0
    %5318 = vmatpush1.msra.mxu0 0.0
    %5319 = vmatprep.subr.mxu0 0.0
    %5320 = vmatpush1.msra.mxu0 0.0
    %5321 = vmatprep.subr.mxu0 0.0
    %5322 = vmatpush1.msra.mxu0 0.0
    %5323 = vmatprep.subr.mxu0 0.0
    %5324 = vmatpush1.msra.mxu0 0.0
    %5325 = vmatprep.subr.mxu0 0.0
    %5326 = vmatpush1.msra.mxu0 0.0
    %5327 = vmatprep.subr.mxu0 0.0
    %5328 = vmatpush1.msra.mxu0 0.0
    %5329 = vmatprep.subr.mxu0 0.0
    %5330 = vmatpush1.msra.mxu0 0.0
    %5331 = vmatprep.subr.mxu0 0.0
    %5332 = vmatpush1.msra.mxu0 0.0
    %5333 = vmatprep.subr.mxu0 0.0
    %5334 = vmatpush1.msra.mxu0 0.0
    %5335 = vmatprep.subr.mxu0 0.0
    %5336 = vmatpush1.msra.mxu0 %v2452
    %5337 = vmatprep.subr.mxu0 0.0
    %5338 = vmatpush2.msra.mxu0 0.0
    %5339 = vmatprep.subr.mxu0 0.0
    %5340 = vmatpush2.msra.mxu0 0.0
    %5341 = vmatprep.subr.mxu0 0.0
    %5342 = vmatpush2.msra.mxu0 0.0
    %5343 = vmatprep.subr.mxu0 0.0
    %5344 = vmatpush2.msra.mxu0 0.0
    %5345 = vmatprep.subr.mxu0 0.0
    %5346 = vmatpush2.msra.mxu0 0.0
    %5347 = vmatprep.subr.mxu0 0.0
    %5348 = vmatpush2.msra.mxu0 0.0
    %5349 = vmatprep.subr.mxu0 0.0
    %5350 = vmatpush2.msra.mxu0 0.0
    %5351 = vmatprep.subr.mxu0 0.0
    %5352 = vmatpush2.msra.mxu0 0.0
    %5353 = vmatprep.subr.mxu0 0.0
    %5354 = vmatpush2.msra.mxu0 0.0
    %5355 = vmatprep.subr.mxu0 0.0
    %5356 = vmatpush2.msra.mxu0 0.0
    %5357 = vmatprep.subr.mxu0 0.0
    %5358 = vmatpush2.msra.mxu0 0.0
    %5359 = vmatprep.subr.mxu0 0.0
    %5360 = vmatpush2.msra.mxu0 0.0
    %5361 = vmatprep.subr.mxu0 0.0
    %5362 = vmatpush2.msra.mxu0 0.0
    %5363 = vmatprep.subr.mxu0 0.0
    %5364 = vmatpush2.msra.mxu0 0.0
    %5365 = vmatprep.subr.mxu0 0.0
    %5366 = vmatpush2.msra.mxu0 0.0
    %5367 = vmatprep.subr.mxu0 0.0
    %5368 = vmatpush2.msra.mxu0 0.0
    %5369 = vmatprep.mubr.f32.mxu0 0.0
    %5370 = vmatmul.mubr.f32.gmra.mxu0 %v5303
    %v5371 = vpop.f32.mrf.mxu0
    %v5372 = vadd.f32 0.0, %v5371
    %v5373 = vpop.f32.mrf.mxu0
    %5374 = vdwg.mxu0
    %v5376 = vsel %vm3109, %v5301, 0
    %5378 = vmatprep.subr.mxu0 0.0
    %5379 = vmatpush1.msra.mxu0 0.0
    %5380 = vmatprep.subr.mxu0 0.0
    %5381 = vmatpush1.msra.mxu0 0.0
    %5382 = vmatprep.subr.mxu0 0.0
    %5383 = vmatpush1.msra.mxu0 0.0
    %5384 = vmatprep.subr.mxu0 0.0
    %5385 = vmatpush1.msra.mxu0 0.0
    %5386 = vmatprep.subr.mxu0 0.0
    %5387 = vmatpush1.msra.mxu0 0.0
    %5388 = vmatprep.subr.mxu0 0.0
    %5389 = vmatpush1.msra.mxu0 0.0
    %5390 = vmatprep.subr.mxu0 0.0
    %5391 = vmatpush1.msra.mxu0 0.0
    %5392 = vmatprep.subr.mxu0 0.0
    %5393 = vmatpush1.msra.mxu0 0.0
    %5394 = vmatprep.subr.mxu0 0.0
    %5395 = vmatpush1.msra.mxu0 0.0
    %5396 = vmatprep.subr.mxu0 0.0
    %5397 = vmatpush1.msra.mxu0 0.0
    %5398 = vmatprep.subr.mxu0 0.0
    %5399 = vmatpush1.msra.mxu0 0.0
    %5400 = vmatprep.subr.mxu0 0.0
    %5401 = vmatpush1.msra.mxu0 0.0
    %5402 = vmatprep.subr.mxu0 0.0
    %5403 = vmatpush1.msra.mxu0 0.0
    %5404 = vmatprep.subr.mxu0 0.0
    %5405 = vmatpush1.msra.mxu0 0.0
    %5406 = vmatprep.subr.mxu0 0.0
    %5407 = vmatpush1.msra.mxu0 0.0
    %5408 = vmatprep.subr.mxu0 0.0
    %5409 = vmatpush1.msra.mxu0 %v2453
    %5410 = vmatprep.subr.mxu0 0.0
    %5411 = vmatpush2.msra.mxu0 0.0
    %5412 = vmatprep.subr.mxu0 0.0
    %5413 = vmatpush2.msra.mxu0 0.0
    %5414 = vmatprep.subr.mxu0 0.0
    %5415 = vmatpush2.msra.mxu0 0.0
    %5416 = vmatprep.subr.mxu0 0.0
    %5417 = vmatpush2.msra.mxu0 0.0
    %5418 = vmatprep.subr.mxu0 0.0
    %5419 = vmatpush2.msra.mxu0 0.0
    %5420 = vmatprep.subr.mxu0 0.0
    %5421 = vmatpush2.msra.mxu0 0.0
    %5422 = vmatprep.subr.mxu0 0.0
    %5423 = vmatpush2.msra.mxu0 0.0
    %5424 = vmatprep.subr.mxu0 0.0
    %5425 = vmatpush2.msra.mxu0 0.0
    %5426 = vmatprep.subr.mxu0 0.0
    %5427 = vmatpush2.msra.mxu0 0.0
    %5428 = vmatprep.subr.mxu0 0.0
    %5429 = vmatpush2.msra.mxu0 0.0
    %5430 = vmatprep.subr.mxu0 0.0
    %5431 = vmatpush2.msra.mxu0 0.0
    %5432 = vmatprep.subr.mxu0 0.0
    %5433 = vmatpush2.msra.mxu0 0.0
    %5434 = vmatprep.subr.mxu0 0.0
    %5435 = vmatpush2.msra.mxu0 0.0
    %5436 = vmatprep.subr.mxu0 0.0
    %5437 = vmatpush2.msra.mxu0 0.0
    %5438 = vmatprep.subr.mxu0 0.0
    %5439 = vmatpush2.msra.mxu0 0.0
    %5440 = vmatprep.subr.mxu0 0.0
    %5441 = vmatpush2.msra.mxu0 0.0
    %5442 = vmatprep.mubr.f32.mxu0 0.0
    %5443 = vmatmul.mubr.f32.gmra.mxu0 %v5376
    %v5444 = vpop.f32.mrf.mxu0
    %v5445 = vadd.f32 0.0, %v5444
    %v5446 = vpop.f32.mrf.mxu0
    %5447 = vdwg.mxu0
    %v5448 = vmin.f32 %v5299, %v4362
    %v5449 = vmin.f32 %v5301, %v4363
    %v5452 = vrot.slane %v5449, 7
    %v5453 = vsel %vm3076, %v5452, %v5448
    %v5455 = vsel %vm3079, %v5453, 0.0
    %5456 = vadd.xlane.f32.xlu0 %v5455
    %v5457 = vpop.xlane.xlu0 %5456
    %v5458 = vadd.f32 %v4362, %v5299
    %v5459 = vadd.f32 %v4363, %v5301
    %v5462 = vrot.slane %v5445, 7
    %v5463 = vsel %vm3076, %v5462, %v5372
    %5465 = vrot.lane.b32.xlu0 %v4994, 32
    %v5466 = vpop.permute.xlu0 %5465
    %5469 = vrot.lane.b32.xlu0 %v4880, 64
    %v5470 = vpop.permute.xlu0 %5469
    %v5472 = vsel %vm59, %v5463, %v5466
    %v5473 = vsel %vm2604, %v5472, %v5470
    %v5474 = vld [vmem:[%s16 + $0x9] sm:$0x1]
    %v5475 = vlaneseq
    %v5476 = vshrl.u32 %v5475, 7
    %v5477 = vsub.s32 0, %v5476
    %v5478 = vrot.slane %v5474, %v5477
    %v5479 = vmul.f32 %v5473, %v5478
    %v5480 = vsel %vm3288, %v5479, 0.0
    %5481 = vadd.xlane.f32.xlu0 %v5480
    %v5482 = vpop.xlane.xlu0 %5481
    %v5483 = vld [vmem:[%s16 + $0xa] sm:$0x1]
    %v5484 = vlaneseq
    %v5485 = vshrl.u32 %v5484, 7
    %v5486 = vsub.s32 0, %v5485
    %v5487 = vrot.slane %v5483, %v5486
    %v5488 = vadd.f32 %v5482, %v5487
    %v5489 = vxor.u32 %v5488, 2147483648
    %v5490 = vmul.f32 %v5489, 1.442695
    %v5491 = vpow.pop %v5490
    %v5492 = vadd.f32 %v5491, 1.0
    %v5493 = vrcp.pop %v5492
    %v5494 = vmul.f32 1.0, %v5493
    %5495 = vrot.lane.b32.xlu0 %v5463, 16
    %v5496 = vpop.permute.xlu0 %5495
    %v5498 = vsel %vm2792, %v4992, %v5496
    %v5499 = vld [vmem:[%s13] sm:$0xff]
    %v5500 = vld [vmem:[%s13 + $0x8] sm:$0xff]
    %v5501 = vld [vmem:[%s13 + $0x10] sm:$0xff]
    %v5502 = vld [vmem:[%s13 + $0x18] sm:$0xff]
    %v5503 = vld [vmem:[%s13 + $0x20] sm:$0xff]
    %v5504 = vld [vmem:[%s13 + $0x28] sm:$0xff]
    %v5505 = vld [vmem:[%s16 + $0xb] sm:$0x1]
    %v5506 = vlaneseq
    %v5507 = vshrl.u32 %v5506, 7
    %v5508 = vsub.s32 0, %v5507
    %v5509 = vrot.slane %v5505, %v5508
    %v5511 = vsel %vm71, %v5498, 0
    %5513 = vmatprep.subr.mxu0 0.0
    %5514 = vmatpush1.msra.mxu0 0.0
    %5515 = vmatprep.subr.mxu0 0.0
    %5516 = vmatpush1.msra.mxu0 0.0
    %5517 = vmatprep.subr.mxu0 0.0
    %5518 = vmatpush1.msra.mxu0 0.0
    %5519 = vmatprep.subr.mxu0 0.0
    %5520 = vmatpush1.msra.mxu0 0.0
    %5521 = vmatprep.subr.mxu0 0.0
    %5522 = vmatpush1.msra.mxu0 0.0
    %5523 = vmatprep.subr.mxu0 0.0
    %5524 = vmatpush1.msra.mxu0 0.0
    %5525 = vmatprep.subr.mxu0 0.0
    %5526 = vmatpush1.msra.mxu0 0.0
    %5527 = vmatprep.subr.mxu0 0.0
    %5528 = vmatpush1.msra.mxu0 0.0
    %5529 = vmatprep.subr.mxu0 0.0
    %5530 = vmatpush1.msra.mxu0 0.0
    %5531 = vmatprep.subr.mxu0 0.0
    %5532 = vmatpush1.msra.mxu0 0.0
    %5533 = vmatprep.subr.mxu0 0.0
    %5534 = vmatpush1.msra.mxu0 %v5504
    %5535 = vmatprep.subr.mxu0 0.0
    %5536 = vmatpush1.msra.mxu0 %v5503
    %5537 = vmatprep.subr.mxu0 0.0
    %5538 = vmatpush1.msra.mxu0 %v5502
    %5539 = vmatprep.subr.mxu0 0.0
    %5540 = vmatpush1.msra.mxu0 %v5501
    %5541 = vmatprep.subr.mxu0 0.0
    %5542 = vmatpush1.msra.mxu0 %v5500
    %5543 = vmatprep.subr.mxu0 0.0
    %5544 = vmatpush1.msra.mxu0 %v5499
    %5545 = vmatprep.subr.mxu0 0.0
    %5546 = vmatpush2.msra.mxu0 0.0
    %5547 = vmatprep.subr.mxu0 0.0
    %5548 = vmatpush2.msra.mxu0 0.0
    %5549 = vmatprep.subr.mxu0 0.0
    %5550 = vmatpush2.msra.mxu0 0.0
    %5551 = vmatprep.subr.mxu0 0.0
    %5552 = vmatpush2.msra.mxu0 0.0
    %5553 = vmatprep.subr.mxu0 0.0
    %5554 = vmatpush2.msra.mxu0 0.0
    %5555 = vmatprep.subr.mxu0 0.0
    %5556 = vmatpush2.msra.mxu0 0.0
    %5557 = vmatprep.subr.mxu0 0.0
    %5558 = vmatpush2.msra.mxu0 0.0
    %5559 = vmatprep.subr.mxu0 0.0
    %5560 = vmatpush2.msra.mxu0 0.0
    %5561 = vmatprep.subr.mxu0 0.0
    %5562 = vmatpush2.msra.mxu0 0.0
    %5563 = vmatprep.subr.mxu0 0.0
    %5564 = vmatpush2.msra.mxu0 0.0
    %5565 = vmatprep.subr.mxu0 0.0
    %5566 = vmatpush2.msra.mxu0 0.0
    %5567 = vmatprep.subr.mxu0 0.0
    %5568 = vmatpush2.msra.mxu0 0.0
    %5569 = vmatprep.subr.mxu0 0.0
    %5570 = vmatpush2.msra.mxu0 0.0
    %5571 = vmatprep.subr.mxu0 0.0
    %5572 = vmatpush2.msra.mxu0 0.0
    %5573 = vmatprep.subr.mxu0 0.0
    %5574 = vmatpush2.msra.mxu0 0.0
    %5575 = vmatprep.subr.mxu0 0.0
    %5576 = vmatpush2.msra.mxu0 0.0
    %5577 = vmatprep.mubr.f32.mxu0 0.0
    %5578 = vmatmul.mubr.f32.gmra.mxu0 %v5511
    %v5579 = vpop.f32.mrf.mxu0
    %v5580 = vadd.f32 %v5509, %v5579
    %v5581 = vpop.f32.mrf.mxu0
    %5582 = vdwg.mxu0
    %v5583 = vmax.f32 %v5580, 0.0
    %v5584 = vld [vmem:[%s14] sm:$0xff]
    %v5585 = vld [vmem:[%s14 + $0x8] sm:$0xff]
    %v5586 = vld [vmem:[%s15] sm:$0x1]
    %v5588 = vlaneseq
    %v5589 = vshrl.u32 %v5588, 7
    %v5590 = vsub.s32 0, %v5589
    %v5591 = vrot.slane %v5586, %v5590
    %v5594 = vsel %vm2792, %v5583, 0
    %5596 = vmatprep.subr.mxu0 0.0
    %5597 = vmatpush1.msra.mxu0 0.0
    %5598 = vmatprep.subr.mxu0 0.0
    %5599 = vmatpush1.msra.mxu0 0.0
    %5600 = vmatprep.subr.mxu0 0.0
    %5601 = vmatpush1.msra.mxu0 0.0
    %5602 = vmatprep.subr.mxu0 0.0
    %5603 = vmatpush1.msra.mxu0 0.0
    %5604 = vmatprep.subr.mxu0 0.0
    %5605 = vmatpush1.msra.mxu0 0.0
    %5606 = vmatprep.subr.mxu0 0.0
    %5607 = vmatpush1.msra.mxu0 0.0
    %5608 = vmatprep.subr.mxu0 0.0
    %5609 = vmatpush1.msra.mxu0 0.0
    %5610 = vmatprep.subr.mxu0 0.0
    %5611 = vmatpush1.msra.mxu0 0.0
    %5612 = vmatprep.subr.mxu0 0.0
    %5613 = vmatpush1.msra.mxu0 0.0
    %5614 = vmatprep.subr.mxu0 0.0
    %5615 = vmatpush1.msra.mxu0 0.0
    %5616 = vmatprep.subr.mxu0 0.0
    %5617 = vmatpush1.msra.mxu0 0.0
    %5618 = vmatprep.subr.mxu0 0.0
    %5619 = vmatpush1.msra.mxu0 0.0
    %5620 = vmatprep.subr.mxu0 0.0
    %5621 = vmatpush1.msra.mxu0 0.0
    %5622 = vmatprep.subr.mxu0 0.0
    %5623 = vmatpush1.msra.mxu0 0.0
    %5624 = vmatprep.subr.mxu0 0.0
    %5625 = vmatpush1.msra.mxu0 %v5585
    %5626 = vmatprep.subr.mxu0 0.0
    %5627 = vmatpush1.msra.mxu0 %v5584
    %5628 = vmatprep.subr.mxu0 0.0
    %5629 = vmatpush2.msra.mxu0 0.0
    %5630 = vmatprep.subr.mxu0 0.0
    %5631 = vmatpush2.msra.mxu0 0.0
    %5632 = vmatprep.subr.mxu0 0.0
    %5633 = vmatpush2.msra.mxu0 0.0
    %5634 = vmatprep.subr.mxu0 0.0
    %5635 = vmatpush2.msra.mxu0 0.0
    %5636 = vmatprep.subr.mxu0 0.0
    %5637 = vmatpush2.msra.mxu0 0.0
    %5638 = vmatprep.subr.mxu0 0.0
    %5639 = vmatpush2.msra.mxu0 0.0
    %5640 = vmatprep.subr.mxu0 0.0
    %5641 = vmatpush2.msra.mxu0 0.0
    %5642 = vmatprep.subr.mxu0 0.0
    %5643 = vmatpush2.msra.mxu0 0.0
    %5644 = vmatprep.subr.mxu0 0.0
    %5645 = vmatpush2.msra.mxu0 0.0
    %5646 = vmatprep.subr.mxu0 0.0
    %5647 = vmatpush2.msra.mxu0 0.0
    %5648 = vmatprep.subr.mxu0 0.0
    %5649 = vmatpush2.msra.mxu0 0.0
    %5650 = vmatprep.subr.mxu0 0.0
    %5651 = vmatpush2.msra.mxu0 0.0
    %5652 = vmatprep.subr.mxu0 0.0
    %5653 = vmatpush2.msra.mxu0 0.0
    %5654 = vmatprep.subr.mxu0 0.0
    %5655 = vmatpush2.msra.mxu0 0.0
    %5656 = vmatprep.subr.mxu0 0.0
    %5657 = vmatpush2.msra.mxu0 0.0
    %5658 = vmatprep.subr.mxu0 0.0
    %5659 = vmatpush2.msra.mxu0 0.0
    %5660 = vmatprep.mubr.f32.mxu0 0.0
    %5661 = vmatmul.mubr.f32.gmra.mxu0 %v5594
    %v5662 = vpop.f32.mrf.mxu0
    %v5663 = vadd.f32 %v5591, %v5662
    %v5664 = vpop.f32.mrf.mxu0
    %5665 = vdwg.mxu0
    %v5666 = vsel %vm3475, %v5663, -inf
    %5667 = vmax.xlane.f32.xlu0 %v5666
    %v5668 = vpop.xlane.xlu0 %5667
    %v5669 = vsub.f32 %v5663, %v5668
    %v5670 = vmul.f32 %v5669, 1.442695
    %v5671 = vpow.pop %v5670
    %v5672 = vsel %vm3475, %v5671, 0.0
    %5673 = vadd.xlane.f32.xlu0 %v5672
    %v5674 = vpop.xlane.xlu0 %5673
    %v5675 = vrcp.pop %v5674
    %v5676 = vmul.f32 %v5671, %v5675
    %v5677 = vsub.f32 1.0, %v5494
    %5679 = vset.pattern.permute.xlu0 0
    %5680 = vperm.xlu0 %5679, %v5677
    %v5681 = vpop.permute.xlu0 %5680
    %v5683 = vrot.slane %v5301, 7
    %v5684 = vsel %vm3076, %v5683, %v5299
    %v5686 = vmul.f32 %v5681, %v5684
    %5688 = vset.pattern.permute.xlu0 0
    %5689 = vperm.xlu0 %5688, %v5494
    %v5690 = vpop.permute.xlu0 %5689
    %v5692 = vmul.f32 %v5690, %v5676
    %v5693 = vld [vmem:[%s3] sm:$0xff]
    %v5694 = vld [vmem:[%s3 + $0x8] sm:$0xff]
    %v5697 = vunpack.c.l.s4 1966171168
    %v5698 = vunpack.c.0.s8 %v5697
    %v5699 = vlaneseq
    %v5700 = vshrl.u32 %v5699, 7
    %v5701 = vsub.s32 %v5698, %v5700
    %v5702 = vrot.slane %v5686, %v5701
    %v5703 = vcombine.high %v5702, %v5702
    %v5705 = vunpack.c.l.s4 1966171168
    %v5706 = vunpack.c.0.s8 %v5705
    %v5707 = vlaneseq
    %v5708 = vshrl.u32 %v5707, 7
    %v5709 = vsub.s32 %v5706, %v5708
    %v5710 = vrot.slane %v5702, %v5709
    %v5712 = vunpack.c.l.s4 1966171168
    %v5713 = vunpack.c.0.s8 %v5712
    %v5714 = vlaneseq
    %v5715 = vshrl.u32 %v5714, 7
    %v5716 = vsub.s32 %v5713, %v5715
    %v5717 = vrot.slane %v5703, %v5716
    %v5718 = vsel %vm3109, %v5710, 0
    %5720 = vmatprep.subr.mxu0 0.0
    %5721 = vmatpush1.msra.mxu0 0.0
    %5722 = vmatprep.subr.mxu0 0.0
    %5723 = vmatpush1.msra.mxu0 0.0
    %5724 = vmatprep.subr.mxu0 0.0
    %5725 = vmatpush1.msra.mxu0 0.0
    %5726 = vmatprep.subr.mxu0 0.0
    %5727 = vmatpush1.msra.mxu0 0.0
    %5728 = vmatprep.subr.mxu0 0.0
    %5729 = vmatpush1.msra.mxu0 0.0
    %5730 = vmatprep.subr.mxu0 0.0
    %5731 = vmatpush1.msra.mxu0 0.0
    %5732 = vmatprep.subr.mxu0 0.0
    %5733 = vmatpush1.msra.mxu0 0.0
    %5734 = vmatprep.subr.mxu0 0.0
    %5735 = vmatpush1.msra.mxu0 0.0
    %5736 = vmatprep.subr.mxu0 0.0
    %5737 = vmatpush1.msra.mxu0 0.0
    %5738 = vmatprep.subr.mxu0 0.0
    %5739 = vmatpush1.msra.mxu0 0.0
    %5740 = vmatprep.subr.mxu0 0.0
    %5741 = vmatpush1.msra.mxu0 0.0
    %5742 = vmatprep.subr.mxu0 0.0
    %5743 = vmatpush1.msra.mxu0 0.0
    %5744 = vmatprep.subr.mxu0 0.0
    %5745 = vmatpush1.msra.mxu0 0.0
    %5746 = vmatprep.subr.mxu0 0.0
    %5747 = vmatpush1.msra.mxu0 0.0
    %5748 = vmatprep.subr.mxu0 0.0
    %5749 = vmatpush1.msra.mxu0 0.0
    %5750 = vmatprep.subr.mxu0 0.0
    %5751 = vmatpush1.msra.mxu0 %v5693
    %5752 = vmatprep.subr.mxu0 0.0
    %5753 = vmatpush2.msra.mxu0 0.0
    %5754 = vmatprep.subr.mxu0 0.0
    %5755 = vmatpush2.msra.mxu0 0.0
    %5756 = vmatprep.subr.mxu0 0.0
    %5757 = vmatpush2.msra.mxu0 0.0
    %5758 = vmatprep.subr.mxu0 0.0
    %5759 = vmatpush2.msra.mxu0 0.0
    %5760 = vmatprep.subr.mxu0 0.0
    %5761 = vmatpush2.msra.mxu0 0.0
    %5762 = vmatprep.subr.mxu0 0.0
    %5763 = vmatpush2.msra.mxu0 0.0
    %5764 = vmatprep.subr.mxu0 0.0
    %5765 = vmatpush2.msra.mxu0 0.0
    %5766 = vmatprep.subr.mxu0 0.0
    %5767 = vmatpush2.msra.mxu0 0.0
    %5768 = vmatprep.subr.mxu0 0.0
    %5769 = vmatpush2.msra.mxu0 0.0
    %5770 = vmatprep.subr.mxu0 0.0
    %5771 = vmatpush2.msra.mxu0 0.0
    %5772 = vmatprep.subr.mxu0 0.0
    %5773 = vmatpush2.msra.mxu0 0.0
    %5774 = vmatprep.subr.mxu0 0.0
    %5775 = vmatpush2.msra.mxu0 0.0
    %5776 = vmatprep.subr.mxu0 0.0
    %5777 = vmatpush2.msra.mxu0 0.0
    %5778 = vmatprep.subr.mxu0 0.0
    %5779 = vmatpush2.msra.mxu0 0.0
    %5780 = vmatprep.subr.mxu0 0.0
    %5781 = vmatpush2.msra.mxu0 0.0
    %5782 = vmatprep.subr.mxu0 0.0
    %5783 = vmatpush2.msra.mxu0 0.0
    %5784 = vmatprep.mubr.f32.mxu0 0.0
    %5785 = vmatmul.mubr.f32.gmra.mxu0 %v5718
    %v5786 = vpop.f32.mrf.mxu0
    %v5787 = vadd.f32 0.0, %v5786
    %v5788 = vpop.f32.mrf.mxu0
    %5789 = vdwg.mxu0
    %v5790 = vsel %vm3109, %v5717, 0
    %5792 = vmatprep.subr.mxu0 0.0
    %5793 = vmatpush1.msra.mxu0 0.0
    %5794 = vmatprep.subr.mxu0 0.0
    %5795 = vmatpush1.msra.mxu0 0.0
    %5796 = vmatprep.subr.mxu0 0.0
    %5797 = vmatpush1.msra.mxu0 0.0
    %5798 = vmatprep.subr.mxu0 0.0
    %5799 = vmatpush1.msra.mxu0 0.0
    %5800 = vmatprep.subr.mxu0 0.0
    %5801 = vmatpush1.msra.mxu0 0.0
    %5802 = vmatprep.subr.mxu0 0.0
    %5803 = vmatpush1.msra.mxu0 0.0
    %5804 = vmatprep.subr.mxu0 0.0
    %5805 = vmatpush1.msra.mxu0 0.0
    %5806 = vmatprep.subr.mxu0 0.0
    %5807 = vmatpush1.msra.mxu0 0.0
    %5808 = vmatprep.subr.mxu0 0.0
    %5809 = vmatpush1.msra.mxu0 0.0
    %5810 = vmatprep.subr.mxu0 0.0
    %5811 = vmatpush1.msra.mxu0 0.0
    %5812 = vmatprep.subr.mxu0 0.0
    %5813 = vmatpush1.msra.mxu0 0.0
    %5814 = vmatprep.subr.mxu0 0.0
    %5815 = vmatpush1.msra.mxu0 0.0
    %5816 = vmatprep.subr.mxu0 0.0
    %5817 = vmatpush1.msra.mxu0 0.0
    %5818 = vmatprep.subr.mxu0 0.0
    %5819 = vmatpush1.msra.mxu0 0.0
    %5820 = vmatprep.subr.mxu0 0.0
    %5821 = vmatpush1.msra.mxu0 0.0
    %5822 = vmatprep.subr.mxu0 0.0
    %5823 = vmatpush1.msra.mxu0 %v5694
    %5824 = vmatprep.subr.mxu0 0.0
    %5825 = vmatpush2.msra.mxu0 0.0
    %5826 = vmatprep.subr.mxu0 0.0
    %5827 = vmatpush2.msra.mxu0 0.0
    %5828 = vmatprep.subr.mxu0 0.0
    %5829 = vmatpush2.msra.mxu0 0.0
    %5830 = vmatprep.subr.mxu0 0.0
    %5831 = vmatpush2.msra.mxu0 0.0
    %5832 = vmatprep.subr.mxu0 0.0
    %5833 = vmatpush2.msra.mxu0 0.0
    %5834 = vmatprep.subr.mxu0 0.0
    %5835 = vmatpush2.msra.mxu0 0.0
    %5836 = vmatprep.subr.mxu0 0.0
    %5837 = vmatpush2.msra.mxu0 0.0
    %5838 = vmatprep.subr.mxu0 0.0
    %5839 = vmatpush2.msra.mxu0 0.0
    %5840 = vmatprep.subr.mxu0 0.0
    %5841 = vmatpush2.msra.mxu0 0.0
    %5842 = vmatprep.subr.mxu0 0.0
    %5843 = vmatpush2.msra.mxu0 0.0
    %5844 = vmatprep.subr.mxu0 0.0
    %5845 = vmatpush2.msra.mxu0 0.0
    %5846 = vmatprep.subr.mxu0 0.0
    %5847 = vmatpush2.msra.mxu0 0.0
    %5848 = vmatprep.subr.mxu0 0.0
    %5849 = vmatpush2.msra.mxu0 0.0
    %5850 = vmatprep.subr.mxu0 0.0
    %5851 = vmatpush2.msra.mxu0 0.0
    %5852 = vmatprep.subr.mxu0 0.0
    %5853 = vmatpush2.msra.mxu0 0.0
    %5854 = vmatprep.subr.mxu0 0.0
    %5855 = vmatpush2.msra.mxu0 0.0
    %5856 = vmatprep.mubr.f32.mxu0 0.0
    %5857 = vmatmul.mubr.f32.gmra.mxu0 %v5790
    %v5858 = vpop.f32.mrf.mxu0
    %v5859 = vadd.f32 0.0, %v5858
    %v5860 = vpop.f32.mrf.mxu0
    %5861 = vdwg.mxu0
    %v5864 = vrot.slane %v5859, 7
    %v5865 = vsel %vm3076, %v5864, %v5787
    %v5867 = vadd.f32 %v5692, %v5865
    %s5868 = scalar_lea.vmem %s4, 4
    %v5869 = vld [vmem:[%s5868] sm:$0x3]
    %v5870 = vmul.f32 %v5867, %v5869
    %v5871 = vsel %vm3475, %v5870, 0.0
    %5872 = vadd.xlane.f32.xlu0 %v5871
    %v5873 = vpop.xlane.xlu0 %5872
    %v5874 = vadd.f32 %v5873, 1e-12
    %v5875 = vlog2.pop %v5874
    %v5876 = vmul.f32 %v5875, 0.6931472
    %v5877 = vsub.f32 0.0, %v5876
    %v5878 = vadd.f32 %v5877, %v5457
    %s5879 = scalar_lea.vmem %s5, 4
    %v5880 = vld [vmem:[%s5879] sm:$0x3]
    %v5881 = vmul.f32 %v5878, %v5880
    %v5882 = vadd.f32 %v4786, %v5881
    %s5883 = scalar_lea.vmem %s1, 6
    %v5884 = vld [vmem:[%s5883] sm:$0x3]
    %5886 = vrot.lane.b32.xlu0 %v5884, 32
    %v5887 = vpop.permute.xlu0 %5886
    %v5889 = vsel %vm59, %v5463, %v5887
    %v5890 = vld [vmem:[%s10] sm:$0xff]
    %v5891 = vld [vmem:[%s10 + $0x8] sm:$0xff]
    %v5892 = vld [vmem:[%s10 + $0x10] sm:$0xff]
    %v5893 = vld [vmem:[%s10 + $0x18] sm:$0xff]
    %v5894 = vld [vmem:[%s10 + $0x20] sm:$0xff]
    %v5895 = vld [vmem:[%s10 + $0x28] sm:$0xff]
    %v5896 = vld [vmem:[%s10 + $0x30] sm:$0xff]
    %v5897 = vld [vmem:[%s10 + $0x38] sm:$0xff]
    %v5898 = vld [vmem:[%s16 + $0x5] sm:$0x1]
    %v5899 = vlaneseq
    %v5900 = vshrl.u32 %v5899, 7
    %v5901 = vsub.s32 0, %v5900
    %v5902 = vrot.slane %v5898, %v5901
    %v5904 = vsel %vm2604, %v5889, 0
    %5906 = vmatprep.subr.mxu0 0.0
    %5907 = vmatpush1.msra.mxu0 0.0
    %5908 = vmatprep.subr.mxu0 0.0
    %5909 = vmatpush1.msra.mxu0 0.0
    %5910 = vmatprep.subr.mxu0 0.0
    %5911 = vmatpush1.msra.mxu0 0.0
    %5912 = vmatprep.subr.mxu0 0.0
    %5913 = vmatpush1.msra.mxu0 0.0
    %5914 = vmatprep.subr.mxu0 0.0
    %5915 = vmatpush1.msra.mxu0 0.0
    %5916 = vmatprep.subr.mxu0 0.0
    %5917 = vmatpush1.msra.mxu0 0.0
    %5918 = vmatprep.subr.mxu0 0.0
    %5919 = vmatpush1.msra.mxu0 0.0
    %5920 = vmatprep.subr.mxu0 0.0
    %5921 = vmatpush1.msra.mxu0 0.0
    %5922 = vmatprep.subr.mxu0 0.0
    %5923 = vmatpush1.msra.mxu0 %v5897
    %5924 = vmatprep.subr.mxu0 0.0
    %5925 = vmatpush1.msra.mxu0 %v5896
    %5926 = vmatprep.subr.mxu0 0.0
    %5927 = vmatpush1.msra.mxu0 %v5895
    %5928 = vmatprep.subr.mxu0 0.0
    %5929 = vmatpush1.msra.mxu0 %v5894
    %5930 = vmatprep.subr.mxu0 0.0
    %5931 = vmatpush1.msra.mxu0 %v5893
    %5932 = vmatprep.subr.mxu0 0.0
    %5933 = vmatpush1.msra.mxu0 %v5892
    %5934 = vmatprep.subr.mxu0 0.0
    %5935 = vmatpush1.msra.mxu0 %v5891
    %5936 = vmatprep.subr.mxu0 0.0
    %5937 = vmatpush1.msra.mxu0 %v5890
    %5938 = vmatprep.subr.mxu0 0.0
    %5939 = vmatpush2.msra.mxu0 0.0
    %5940 = vmatprep.subr.mxu0 0.0
    %5941 = vmatpush2.msra.mxu0 0.0
    %5942 = vmatprep.subr.mxu0 0.0
    %5943 = vmatpush2.msra.mxu0 0.0
    %5944 = vmatprep.subr.mxu0 0.0
    %5945 = vmatpush2.msra.mxu0 0.0
    %5946 = vmatprep.subr.mxu0 0.0
    %5947 = vmatpush2.msra.mxu0 0.0
    %5948 = vmatprep.subr.mxu0 0.0
    %5949 = vmatpush2.msra.mxu0 0.0
    %5950 = vmatprep.subr.mxu0 0.0
    %5951 = vmatpush2.msra.mxu0 0.0
    %5952 = vmatprep.subr.mxu0 0.0
    %5953 = vmatpush2.msra.mxu0 0.0
    %5954 = vmatprep.subr.mxu0 0.0
    %5955 = vmatpush2.msra.mxu0 0.0
    %5956 = vmatprep.subr.mxu0 0.0
    %5957 = vmatpush2.msra.mxu0 0.0
    %5958 = vmatprep.subr.mxu0 0.0
    %5959 = vmatpush2.msra.mxu0 0.0
    %5960 = vmatprep.subr.mxu0 0.0
    %5961 = vmatpush2.msra.mxu0 0.0
    %5962 = vmatprep.subr.mxu0 0.0
    %5963 = vmatpush2.msra.mxu0 0.0
    %5964 = vmatprep.subr.mxu0 0.0
    %5965 = vmatpush2.msra.mxu0 0.0
    %5966 = vmatprep.subr.mxu0 0.0
    %5967 = vmatpush2.msra.mxu0 0.0
    %5968 = vmatprep.subr.mxu0 0.0
    %5969 = vmatpush2.msra.mxu0 0.0
    %5970 = vmatprep.mubr.f32.mxu0 0.0
    %5971 = vmatmul.mubr.f32.gmra.mxu0 %v5904
    %v5972 = vpop.f32.mrf.mxu0
    %v5973 = vadd.f32 %v5902, %v5972
    %v5974 = vpop.f32.mrf.mxu0
    %5975 = vdwg.mxu0
    %v5976 = vmax.f32 %v5973, 0.0
    %v5977 = vld [vmem:[%s16 + $0x6] sm:$0x1]
    %v5978 = vsel %vm59, %v5976, %v4989
    %v5979 = vld [vmem:[%s11] sm:$0xff]
    %v5980 = vld [vmem:[%s11 + $0x8] sm:$0xff]
    %v5981 = vld [vmem:[%s11 + $0x10] sm:$0xff]
    %v5982 = vld [vmem:[%s11 + $0x18] sm:$0xff]
    %v5983 = vld [vmem:[%s11 + $0x20] sm:$0xff]
    %v5984 = vld [vmem:[%s11 + $0x28] sm:$0xff]
    %v5985 = vlaneseq
    %v5986 = vshrl.u32 %v5985, 7
    %v5987 = vsub.s32 0, %v5986
    %v5988 = vrot.slane %v5977, %v5987
    %v5990 = vsel %vm71, %v5978, 0
    %5992 = vmatprep.subr.mxu0 0.0
    %5993 = vmatpush1.msra.mxu0 0.0
    %5994 = vmatprep.subr.mxu0 0.0
    %5995 = vmatpush1.msra.mxu0 0.0
    %5996 = vmatprep.subr.mxu0 0.0
    %5997 = vmatpush1.msra.mxu0 0.0
    %5998 = vmatprep.subr.mxu0 0.0
    %5999 = vmatpush1.msra.mxu0 0.0
    %6000 = vmatprep.subr.mxu0 0.0
    %6001 = vmatpush1.msra.mxu0 0.0
    %6002 = vmatprep.subr.mxu0 0.0
    %6003 = vmatpush1.msra.mxu0 0.0
    %6004 = vmatprep.subr.mxu0 0.0
    %6005 = vmatpush1.msra.mxu0 0.0
    %6006 = vmatprep.subr.mxu0 0.0
    %6007 = vmatpush1.msra.mxu0 0.0
    %6008 = vmatprep.subr.mxu0 0.0
    %6009 = vmatpush1.msra.mxu0 0.0
    %6010 = vmatprep.subr.mxu0 0.0
    %6011 = vmatpush1.msra.mxu0 0.0
    %6012 = vmatprep.subr.mxu0 0.0
    %6013 = vmatpush1.msra.mxu0 %v5984
    %6014 = vmatprep.subr.mxu0 0.0
    %6015 = vmatpush1.msra.mxu0 %v5983
    %6016 = vmatprep.subr.mxu0 0.0
    %6017 = vmatpush1.msra.mxu0 %v5982
    %6018 = vmatprep.subr.mxu0 0.0
    %6019 = vmatpush1.msra.mxu0 %v5981
    %6020 = vmatprep.subr.mxu0 0.0
    %6021 = vmatpush1.msra.mxu0 %v5980
    %6022 = vmatprep.subr.mxu0 0.0
    %6023 = vmatpush1.msra.mxu0 %v5979
    %6024 = vmatprep.subr.mxu0 0.0
    %6025 = vmatpush2.msra.mxu0 0.0
    %6026 = vmatprep.subr.mxu0 0.0
    %6027 = vmatpush2.msra.mxu0 0.0
    %6028 = vmatprep.subr.mxu0 0.0
    %6029 = vmatpush2.msra.mxu0 0.0
    %6030 = vmatprep.subr.mxu0 0.0
    %6031 = vmatpush2.msra.mxu0 0.0
    %6032 = vmatprep.subr.mxu0 0.0
    %6033 = vmatpush2.msra.mxu0 0.0
    %6034 = vmatprep.subr.mxu0 0.0
    %6035 = vmatpush2.msra.mxu0 0.0
    %6036 = vmatprep.subr.mxu0 0.0
    %6037 = vmatpush2.msra.mxu0 0.0
    %6038 = vmatprep.subr.mxu0 0.0
    %6039 = vmatpush2.msra.mxu0 0.0
    %6040 = vmatprep.subr.mxu0 0.0
    %6041 = vmatpush2.msra.mxu0 0.0
    %6042 = vmatprep.subr.mxu0 0.0
    %6043 = vmatpush2.msra.mxu0 0.0
    %6044 = vmatprep.subr.mxu0 0.0
    %6045 = vmatpush2.msra.mxu0 0.0
    %6046 = vmatprep.subr.mxu0 0.0
    %6047 = vmatpush2.msra.mxu0 0.0
    %6048 = vmatprep.subr.mxu0 0.0
    %6049 = vmatpush2.msra.mxu0 0.0
    %6050 = vmatprep.subr.mxu0 0.0
    %6051 = vmatpush2.msra.mxu0 0.0
    %6052 = vmatprep.subr.mxu0 0.0
    %6053 = vmatpush2.msra.mxu0 0.0
    %6054 = vmatprep.subr.mxu0 0.0
    %6055 = vmatpush2.msra.mxu0 0.0
    %6056 = vmatprep.mubr.f32.mxu0 0.0
    %6057 = vmatmul.mubr.f32.gmra.mxu0 %v5990
    %v6058 = vpop.f32.mrf.mxu0
    %v6059 = vadd.f32 %v5988, %v6058
    %v6060 = vpop.f32.mrf.mxu0
    %6061 = vdwg.mxu0
    %v6062 = vxor.u32 %v6059, 2147483648
    %v6063 = vmul.f32 %v6062, 1.442695
    %v6064 = vpow.pop %v6063
    %v6065 = vadd.f32 %v6064, 1.0
    %v6066 = vrcp.pop %v6065
    %v6067 = vmul.f32 1.0, %v6066
    %v6068 = vtanh.pop %v6059
    %v6069 = vmul.f32 %v6067, %v4983
    %6071 = vrot.lane.b32.xlu0 %v6068, 80
    %v6072 = vpop.permute.xlu0 %6071
    %v6074 = vmul.f32 %v6067, %v6072
    %6076 = vrot.lane.b32.xlu0 %v6074, 16
    %v6077 = vpop.permute.xlu0 %6076
    %v6079 = vadd.f32 %v6069, %v6077
    %v6080 = vtanh.pop %v6079
    %6082 = vrot.lane.b32.xlu0 %v6080, 16
    %v6083 = vpop.permute.xlu0 %6082
    %v6085 = vmul.f32 %v6067, %v6083
    %6087 = vrot.lane.b32.xlu0 %v6085, 96
    %v6088 = vpop.permute.xlu0 %6087
    %v6090 = vsel %vm2792, %v6088, %v6079
    %v6091 = vld [vmem:[%s12] sm:$0xff]
    %v6092 = vld [vmem:[%s12 + $0x8] sm:$0xff]
    %v6093 = vld [vmem:[%s12 + $0x10] sm:$0xff]
    %v6094 = vld [vmem:[%s12 + $0x18] sm:$0xff]
    %v6095 = vld [vmem:[%s16 + $0x7] sm:$0x1]
    %v6096 = vlaneseq
    %v6097 = vshrl.u32 %v6096, 7
    %v6098 = vsub.s32 0, %v6097
    %v6099 = vrot.slane %v6095, %v6098
    %v6101 = vsel %vm59, %v6090, 0
    %6103 = vmatprep.subr.mxu0 0.0
    %6104 = vmatpush1.msra.mxu0 0.0
    %6105 = vmatprep.subr.mxu0 0.0
    %6106 = vmatpush1.msra.mxu0 0.0
    %6107 = vmatprep.subr.mxu0 0.0
    %6108 = vmatpush1.msra.mxu0 0.0
    %6109 = vmatprep.subr.mxu0 0.0
    %6110 = vmatpush1.msra.mxu0 0.0
    %6111 = vmatprep.subr.mxu0 0.0
    %6112 = vmatpush1.msra.mxu0 0.0
    %6113 = vmatprep.subr.mxu0 0.0
    %6114 = vmatpush1.msra.mxu0 0.0
    %6115 = vmatprep.subr.mxu0 0.0
    %6116 = vmatpush1.msra.mxu0 0.0
    %6117 = vmatprep.subr.mxu0 0.0
    %6118 = vmatpush1.msra.mxu0 0.0
    %6119 = vmatprep.subr.mxu0 0.0
    %6120 = vmatpush1.msra.mxu0 0.0
    %6121 = vmatprep.subr.mxu0 0.0
    %6122 = vmatpush1.msra.mxu0 0.0
    %6123 = vmatprep.subr.mxu0 0.0
    %6124 = vmatpush1.msra.mxu0 0.0
    %6125 = vmatprep.subr.mxu0 0.0
    %6126 = vmatpush1.msra.mxu0 0.0
    %6127 = vmatprep.subr.mxu0 0.0
    %6128 = vmatpush1.msra.mxu0 %v6094
    %6129 = vmatprep.subr.mxu0 0.0
    %6130 = vmatpush1.msra.mxu0 %v6093
    %6131 = vmatprep.subr.mxu0 0.0
    %6132 = vmatpush1.msra.mxu0 %v6092
    %6133 = vmatprep.subr.mxu0 0.0
    %6134 = vmatpush1.msra.mxu0 %v6091
    %6135 = vmatprep.subr.mxu0 0.0
    %6136 = vmatpush2.msra.mxu0 0.0
    %6137 = vmatprep.subr.mxu0 0.0
    %6138 = vmatpush2.msra.mxu0 0.0
    %6139 = vmatprep.subr.mxu0 0.0
    %6140 = vmatpush2.msra.mxu0 0.0
    %6141 = vmatprep.subr.mxu0 0.0
    %6142 = vmatpush2.msra.mxu0 0.0
    %6143 = vmatprep.subr.mxu0 0.0
    %6144 = vmatpush2.msra.mxu0 0.0
    %6145 = vmatprep.subr.mxu0 0.0
    %6146 = vmatpush2.msra.mxu0 0.0
    %6147 = vmatprep.subr.mxu0 0.0
    %6148 = vmatpush2.msra.mxu0 0.0
    %6149 = vmatprep.subr.mxu0 0.0
    %6150 = vmatpush2.msra.mxu0 0.0
    %6151 = vmatprep.subr.mxu0 0.0
    %6152 = vmatpush2.msra.mxu0 0.0
    %6153 = vmatprep.subr.mxu0 0.0
    %6154 = vmatpush2.msra.mxu0 0.0
    %6155 = vmatprep.subr.mxu0 0.0
    %6156 = vmatpush2.msra.mxu0 0.0
    %6157 = vmatprep.subr.mxu0 0.0
    %6158 = vmatpush2.msra.mxu0 0.0
    %6159 = vmatprep.subr.mxu0 0.0
    %6160 = vmatpush2.msra.mxu0 0.0
    %6161 = vmatprep.subr.mxu0 0.0
    %6162 = vmatpush2.msra.mxu0 0.0
    %6163 = vmatprep.subr.mxu0 0.0
    %6164 = vmatpush2.msra.mxu0 0.0
    %6165 = vmatprep.subr.mxu0 0.0
    %6166 = vmatpush2.msra.mxu0 0.0
    %6167 = vmatprep.mubr.f32.mxu0 0.0
    %6168 = vmatmul.mubr.f32.gmra.mxu0 %v6101
    %v6169 = vpop.f32.mrf.mxu0
    %v6170 = vadd.f32 %v6099, %v6169
    %v6171 = vpop.f32.mrf.mxu0
    %6172 = vdwg.mxu0
    %v6173 = vld [vmem:[%s16 + $0x8] sm:$0x1]
    %v6174 = vlaneseq
    %v6175 = vshrl.u32 %v6174, 7
    %v6176 = vsub.s32 0, %v6175
    %v6177 = vrot.slane %v6173, %v6176
    %v6178 = vmul.f32 %v6170, %v6177
    %v6179 = vsel %vm2882, %v6178, 0.0
    %6180 = vadd.xlane.f32.xlu0 %v6179
    %v6181 = vpop.xlane.xlu0 %6180
    %v6184 = vunpack.c.l.s4 1966171168
    %v6185 = vunpack.c.0.s8 %v6184
    %v6186 = vlaneseq
    %v6187 = vshrl.u32 %v6186, 7
    %v6188 = vsub.s32 %v6185, %v6187
    %v6189 = vrot.slane %v6170, %v6188
    %v6190 = vcombine.high %v6189, %v6189
    %v6192 = vunpack.c.l.s4 1966171168
    %v6193 = vunpack.c.0.s8 %v6192
    %v6194 = vlaneseq
    %v6195 = vshrl.u32 %v6194, 7
    %v6196 = vsub.s32 %v6193, %v6195
    %v6197 = vrot.slane %v6189, %v6196
    %v6199 = vunpack.c.l.s4 1966171168
    %v6200 = vunpack.c.0.s8 %v6199
    %v6201 = vlaneseq
    %v6202 = vshrl.u32 %v6201, 7
    %v6203 = vsub.s32 %v6200, %v6202
    %v6204 = vrot.slane %v6190, %v6203
    %v6205 = vsel %vm59, %v6197, 0
    %6207 = vmatprep.subr.mxu0 0.0
    %6208 = vmatpush1.xpose.msra.mxu0 0.0
    %6209 = vmatprep.subr.mxu0 0.0
    %6210 = vmatpush1.xpose.msra.mxu0 0.0
    %6211 = vmatprep.subr.mxu0 0.0
    %6212 = vmatpush1.xpose.msra.mxu0 0.0
    %6213 = vmatprep.subr.mxu0 0.0
    %6214 = vmatpush1.xpose.msra.mxu0 0.0
    %6215 = vmatprep.subr.mxu0 0.0
    %6216 = vmatpush1.xpose.msra.mxu0 0.0
    %6217 = vmatprep.subr.mxu0 0.0
    %6218 = vmatpush1.xpose.msra.mxu0 0.0
    %6219 = vmatprep.subr.mxu0 0.0
    %6220 = vmatpush1.xpose.msra.mxu0 0.0
    %6221 = vmatprep.subr.mxu0 0.0
    %6222 = vmatpush1.xpose.msra.mxu0 0.0
    %6223 = vmatprep.subr.mxu0 0.0
    %6224 = vmatpush1.xpose.msra.mxu0 0.0
    %6225 = vmatprep.subr.mxu0 0.0
    %6226 = vmatpush1.xpose.msra.mxu0 0.0
    %6227 = vmatprep.subr.mxu0 0.0
    %6228 = vmatpush1.xpose.msra.mxu0 0.0
    %6229 = vmatprep.subr.mxu0 0.0
    %6230 = vmatpush1.xpose.msra.mxu0 0.0
    %6231 = vmatprep.subr.mxu0 0.0
    %6232 = vmatpush1.xpose.msra.mxu0 0.0
    %6233 = vmatprep.subr.mxu0 0.0
    %6234 = vmatpush1.xpose.msra.mxu0 0.0
    %6235 = vmatprep.subr.mxu0 0.0
    %6236 = vmatpush1.xpose.msra.mxu0 0.0
    %6237 = vmatprep.subr.mxu0 0.0
    %6238 = vmatpush1.xpose.msra.mxu0 %v2912
    %6239 = vmatprep.subr.mxu0 0.0
    %6240 = vmatpush2.xpose.msra.mxu0 0.0
    %6241 = vmatprep.subr.mxu0 0.0
    %6242 = vmatpush2.xpose.msra.mxu0 0.0
    %6243 = vmatprep.subr.mxu0 0.0
    %6244 = vmatpush2.xpose.msra.mxu0 0.0
    %6245 = vmatprep.subr.mxu0 0.0
    %6246 = vmatpush2.xpose.msra.mxu0 0.0
    %6247 = vmatprep.subr.mxu0 0.0
    %6248 = vmatpush2.xpose.msra.mxu0 0.0
    %6249 = vmatprep.subr.mxu0 0.0
    %6250 = vmatpush2.xpose.msra.mxu0 0.0
    %6251 = vmatprep.subr.mxu0 0.0
    %6252 = vmatpush2.xpose.msra.mxu0 0.0
    %6253 = vmatprep.subr.mxu0 0.0
    %6254 = vmatpush2.xpose.msra.mxu0 0.0
    %6255 = vmatprep.subr.mxu0 0.0
    %6256 = vmatpush2.xpose.msra.mxu0 0.0
    %6257 = vmatprep.subr.mxu0 0.0
    %6258 = vmatpush2.xpose.msra.mxu0 0.0
    %6259 = vmatprep.subr.mxu0 0.0
    %6260 = vmatpush2.xpose.msra.mxu0 0.0
    %6261 = vmatprep.subr.mxu0 0.0
    %6262 = vmatpush2.xpose.msra.mxu0 0.0
    %6263 = vmatprep.subr.mxu0 0.0
    %6264 = vmatpush2.xpose.msra.mxu0 0.0
    %6265 = vmatprep.subr.mxu0 0.0
    %6266 = vmatpush2.xpose.msra.mxu0 0.0
    %6267 = vmatprep.subr.mxu0 0.0
    %6268 = vmatpush2.xpose.msra.mxu0 0.0
    %6269 = vmatprep.subr.mxu0 0.0
    %6270 = vmatpush2.xpose.msra.mxu0 0.0
    %6271 = vmatprep.mubr.f32.mxu0 0.0
    %6272 = vmatmul.mubr.f32.gmra.mxu0 %v6205
    %v6273 = vpop.f32.mrf.mxu0
    %v6274 = vadd.f32 0.0, %v6273
    %v6275 = vpop.f32.mrf.mxu0
    %6276 = vdwg.mxu0
    %v6277 = vsel %vm59, %v6204, 0
    %6279 = vmatprep.subr.mxu0 0.0
    %6280 = vmatpush1.xpose.msra.mxu0 0.0
    %6281 = vmatprep.subr.mxu0 0.0
    %6282 = vmatpush1.xpose.msra.mxu0 0.0
    %6283 = vmatprep.subr.mxu0 0.0
    %6284 = vmatpush1.xpose.msra.mxu0 0.0
    %6285 = vmatprep.subr.mxu0 0.0
    %6286 = vmatpush1.xpose.msra.mxu0 0.0
    %6287 = vmatprep.subr.mxu0 0.0
    %6288 = vmatpush1.xpose.msra.mxu0 0.0
    %6289 = vmatprep.subr.mxu0 0.0
    %6290 = vmatpush1.xpose.msra.mxu0 0.0
    %6291 = vmatprep.subr.mxu0 0.0
    %6292 = vmatpush1.xpose.msra.mxu0 0.0
    %6293 = vmatprep.subr.mxu0 0.0
    %6294 = vmatpush1.xpose.msra.mxu0 0.0
    %6295 = vmatprep.subr.mxu0 0.0
    %6296 = vmatpush1.xpose.msra.mxu0 0.0
    %6297 = vmatprep.subr.mxu0 0.0
    %6298 = vmatpush1.xpose.msra.mxu0 0.0
    %6299 = vmatprep.subr.mxu0 0.0
    %6300 = vmatpush1.xpose.msra.mxu0 0.0
    %6301 = vmatprep.subr.mxu0 0.0
    %6302 = vmatpush1.xpose.msra.mxu0 0.0
    %6303 = vmatprep.subr.mxu0 0.0
    %6304 = vmatpush1.xpose.msra.mxu0 0.0
    %6305 = vmatprep.subr.mxu0 0.0
    %6306 = vmatpush1.xpose.msra.mxu0 0.0
    %6307 = vmatprep.subr.mxu0 0.0
    %6308 = vmatpush1.xpose.msra.mxu0 0.0
    %6309 = vmatprep.subr.mxu0 0.0
    %6310 = vmatpush1.xpose.msra.mxu0 %v2987
    %6311 = vmatprep.subr.mxu0 0.0
    %6312 = vmatpush2.xpose.msra.mxu0 0.0
    %6313 = vmatprep.subr.mxu0 0.0
    %6314 = vmatpush2.xpose.msra.mxu0 0.0
    %6315 = vmatprep.subr.mxu0 0.0
    %6316 = vmatpush2.xpose.msra.mxu0 0.0
    %6317 = vmatprep.subr.mxu0 0.0
    %6318 = vmatpush2.xpose.msra.mxu0 0.0
    %6319 = vmatprep.subr.mxu0 0.0
    %6320 = vmatpush2.xpose.msra.mxu0 0.0
    %6321 = vmatprep.subr.mxu0 0.0
    %6322 = vmatpush2.xpose.msra.mxu0 0.0
    %6323 = vmatprep.subr.mxu0 0.0
    %6324 = vmatpush2.xpose.msra.mxu0 0.0
    %6325 = vmatprep.subr.mxu0 0.0
    %6326 = vmatpush2.xpose.msra.mxu0 0.0
    %6327 = vmatprep.subr.mxu0 0.0
    %6328 = vmatpush2.xpose.msra.mxu0 0.0
    %6329 = vmatprep.subr.mxu0 0.0
    %6330 = vmatpush2.xpose.msra.mxu0 0.0
    %6331 = vmatprep.subr.mxu0 0.0
    %6332 = vmatpush2.xpose.msra.mxu0 0.0
    %6333 = vmatprep.subr.mxu0 0.0
    %6334 = vmatpush2.xpose.msra.mxu0 0.0
    %6335 = vmatprep.subr.mxu0 0.0
    %6336 = vmatpush2.xpose.msra.mxu0 0.0
    %6337 = vmatprep.subr.mxu0 0.0
    %6338 = vmatpush2.xpose.msra.mxu0 0.0
    %6339 = vmatprep.subr.mxu0 0.0
    %6340 = vmatpush2.xpose.msra.mxu0 0.0
    %6341 = vmatprep.subr.mxu0 0.0
    %6342 = vmatpush2.xpose.msra.mxu0 0.0
    %6343 = vmatprep.mubr.f32.mxu0 0.0
    %6344 = vmatmul.mubr.f32.gmra.mxu0 %v6277
    %v6345 = vpop.f32.mrf.mxu0
    %v6346 = vadd.f32 0.0, %v6345
    %v6347 = vpop.f32.mrf.mxu0
    %6348 = vdwg.mxu0
    %v6350 = vrot.slane %v6181, 1
    %v6353 = vmul.f32 %v5458, %v6181
    %v6354 = vmul.f32 %v5459, %v6350
    %v6355 = vadd.f32 %v6274, %v6353
    %v6356 = vadd.f32 %v6346, %v6354
    %v6357 = vld [vmem:[%s2] sm:$0x3]
    %v6359 = vrot.slane %v6357, 1
    %v6362 = vadd.f32 %v6355, %v6357
    %v6363 = vadd.f32 %v6356, %v6359
    %v6366 = vrot.slane %v6363, 7
    %v6367 = vsel %vm3076, %v6366, %v6362
    %v6369 = vsel %vm3079, %v6367, -inf
    %6370 = vmax.xlane.f32.xlu0 %v6369
    %v6371 = vpop.xlane.xlu0 %6370
    %v6373 = vrot.slane %v6371, 1
    %v6376 = vsub.f32 %v6362, %v6371
    %v6377 = vsub.f32 %v6363, %v6373
    %v6378 = vmul.f32 %v6376, 1.442695
    %v6379 = vpow.pop %v6378
    %v6380 = vmul.f32 %v6377, 1.442695
    %v6381 = vpow.pop %v6380
    %v6384 = vrot.slane %v6381, 7
    %v6385 = vsel %vm3076, %v6384, %v6379
    %v6387 = vsel %vm3079, %v6385, 0.0
    %6388 = vadd.xlane.f32.xlu0 %v6387
    %v6389 = vpop.xlane.xlu0 %6388
    %v6391 = vrot.slane %v6389, 1
    %v6394 = vrcp.pop %v6389
    %v6395 = vmul.f32 %v6379, %v6394
    %v6396 = vrcp.pop %v6391
    %v6397 = vmul.f32 %v6381, %v6396
    %v6399 = vsel %vm3109, %v6395, 0
    %6401 = vmatprep.subr.mxu0 0.0
    %6402 = vmatpush1.msra.mxu0 0.0
    %6403 = vmatprep.subr.mxu0 0.0
    %6404 = vmatpush1.msra.mxu0 0.0
    %6405 = vmatprep.subr.mxu0 0.0
    %6406 = vmatpush1.msra.mxu0 0.0
    %6407 = vmatprep.subr.mxu0 0.0
    %6408 = vmatpush1.msra.mxu0 0.0
    %6409 = vmatprep.subr.mxu0 0.0
    %6410 = vmatpush1.msra.mxu0 0.0
    %6411 = vmatprep.subr.mxu0 0.0
    %6412 = vmatpush1.msra.mxu0 0.0
    %6413 = vmatprep.subr.mxu0 0.0
    %6414 = vmatpush1.msra.mxu0 0.0
    %6415 = vmatprep.subr.mxu0 0.0
    %6416 = vmatpush1.msra.mxu0 0.0
    %6417 = vmatprep.subr.mxu0 0.0
    %6418 = vmatpush1.msra.mxu0 0.0
    %6419 = vmatprep.subr.mxu0 0.0
    %6420 = vmatpush1.msra.mxu0 0.0
    %6421 = vmatprep.subr.mxu0 0.0
    %6422 = vmatpush1.msra.mxu0 0.0
    %6423 = vmatprep.subr.mxu0 0.0
    %6424 = vmatpush1.msra.mxu0 0.0
    %6425 = vmatprep.subr.mxu0 0.0
    %6426 = vmatpush1.msra.mxu0 0.0
    %6427 = vmatprep.subr.mxu0 0.0
    %6428 = vmatpush1.msra.mxu0 0.0
    %6429 = vmatprep.subr.mxu0 0.0
    %6430 = vmatpush1.msra.mxu0 0.0
    %6431 = vmatprep.subr.mxu0 0.0
    %6432 = vmatpush1.msra.mxu0 %v2452
    %6433 = vmatprep.subr.mxu0 0.0
    %6434 = vmatpush2.msra.mxu0 0.0
    %6435 = vmatprep.subr.mxu0 0.0
    %6436 = vmatpush2.msra.mxu0 0.0
    %6437 = vmatprep.subr.mxu0 0.0
    %6438 = vmatpush2.msra.mxu0 0.0
    %6439 = vmatprep.subr.mxu0 0.0
    %6440 = vmatpush2.msra.mxu0 0.0
    %6441 = vmatprep.subr.mxu0 0.0
    %6442 = vmatpush2.msra.mxu0 0.0
    %6443 = vmatprep.subr.mxu0 0.0
    %6444 = vmatpush2.msra.mxu0 0.0
    %6445 = vmatprep.subr.mxu0 0.0
    %6446 = vmatpush2.msra.mxu0 0.0
    %6447 = vmatprep.subr.mxu0 0.0
    %6448 = vmatpush2.msra.mxu0 0.0
    %6449 = vmatprep.subr.mxu0 0.0
    %6450 = vmatpush2.msra.mxu0 0.0
    %6451 = vmatprep.subr.mxu0 0.0
    %6452 = vmatpush2.msra.mxu0 0.0
    %6453 = vmatprep.subr.mxu0 0.0
    %6454 = vmatpush2.msra.mxu0 0.0
    %6455 = vmatprep.subr.mxu0 0.0
    %6456 = vmatpush2.msra.mxu0 0.0
    %6457 = vmatprep.subr.mxu0 0.0
    %6458 = vmatpush2.msra.mxu0 0.0
    %6459 = vmatprep.subr.mxu0 0.0
    %6460 = vmatpush2.msra.mxu0 0.0
    %6461 = vmatprep.subr.mxu0 0.0
    %6462 = vmatpush2.msra.mxu0 0.0
    %6463 = vmatprep.subr.mxu0 0.0
    %6464 = vmatpush2.msra.mxu0 0.0
    %6465 = vmatprep.mubr.f32.mxu0 0.0
    %6466 = vmatmul.mubr.f32.gmra.mxu0 %v6399
    %v6467 = vpop.f32.mrf.mxu0
    %v6468 = vadd.f32 0.0, %v6467
    %v6469 = vpop.f32.mrf.mxu0
    %6470 = vdwg.mxu0
    %v6472 = vsel %vm3109, %v6397, 0
    %6474 = vmatprep.subr.mxu0 0.0
    %6475 = vmatpush1.msra.mxu0 0.0
    %6476 = vmatprep.subr.mxu0 0.0
    %6477 = vmatpush1.msra.mxu0 0.0
    %6478 = vmatprep.subr.mxu0 0.0
    %6479 = vmatpush1.msra.mxu0 0.0
    %6480 = vmatprep.subr.mxu0 0.0
    %6481 = vmatpush1.msra.mxu0 0.0
    %6482 = vmatprep.subr.mxu0 0.0
    %6483 = vmatpush1.msra.mxu0 0.0
    %6484 = vmatprep.subr.mxu0 0.0
    %6485 = vmatpush1.msra.mxu0 0.0
    %6486 = vmatprep.subr.mxu0 0.0
    %6487 = vmatpush1.msra.mxu0 0.0
    %6488 = vmatprep.subr.mxu0 0.0
    %6489 = vmatpush1.msra.mxu0 0.0
    %6490 = vmatprep.subr.mxu0 0.0
    %6491 = vmatpush1.msra.mxu0 0.0
    %6492 = vmatprep.subr.mxu0 0.0
    %6493 = vmatpush1.msra.mxu0 0.0
    %6494 = vmatprep.subr.mxu0 0.0
    %6495 = vmatpush1.msra.mxu0 0.0
    %6496 = vmatprep.subr.mxu0 0.0
    %6497 = vmatpush1.msra.mxu0 0.0
    %6498 = vmatprep.subr.mxu0 0.0
    %6499 = vmatpush1.msra.mxu0 0.0
    %6500 = vmatprep.subr.mxu0 0.0
    %6501 = vmatpush1.msra.mxu0 0.0
    %6502 = vmatprep.subr.mxu0 0.0
    %6503 = vmatpush1.msra.mxu0 0.0
    %6504 = vmatprep.subr.mxu0 0.0
    %6505 = vmatpush1.msra.mxu0 %v2453
    %6506 = vmatprep.subr.mxu0 0.0
    %6507 = vmatpush2.msra.mxu0 0.0
    %6508 = vmatprep.subr.mxu0 0.0
    %6509 = vmatpush2.msra.mxu0 0.0
    %6510 = vmatprep.subr.mxu0 0.0
    %6511 = vmatpush2.msra.mxu0 0.0
    %6512 = vmatprep.subr.mxu0 0.0
    %6513 = vmatpush2.msra.mxu0 0.0
    %6514 = vmatprep.subr.mxu0 0.0
    %6515 = vmatpush2.msra.mxu0 0.0
    %6516 = vmatprep.subr.mxu0 0.0
    %6517 = vmatpush2.msra.mxu0 0.0
    %6518 = vmatprep.subr.mxu0 0.0
    %6519 = vmatpush2.msra.mxu0 0.0
    %6520 = vmatprep.subr.mxu0 0.0
    %6521 = vmatpush2.msra.mxu0 0.0
    %6522 = vmatprep.subr.mxu0 0.0
    %6523 = vmatpush2.msra.mxu0 0.0
    %6524 = vmatprep.subr.mxu0 0.0
    %6525 = vmatpush2.msra.mxu0 0.0
    %6526 = vmatprep.subr.mxu0 0.0
    %6527 = vmatpush2.msra.mxu0 0.0
    %6528 = vmatprep.subr.mxu0 0.0
    %6529 = vmatpush2.msra.mxu0 0.0
    %6530 = vmatprep.subr.mxu0 0.0
    %6531 = vmatpush2.msra.mxu0 0.0
    %6532 = vmatprep.subr.mxu0 0.0
    %6533 = vmatpush2.msra.mxu0 0.0
    %6534 = vmatprep.subr.mxu0 0.0
    %6535 = vmatpush2.msra.mxu0 0.0
    %6536 = vmatprep.subr.mxu0 0.0
    %6537 = vmatpush2.msra.mxu0 0.0
    %6538 = vmatprep.mubr.f32.mxu0 0.0
    %6539 = vmatmul.mubr.f32.gmra.mxu0 %v6472
    %v6540 = vpop.f32.mrf.mxu0
    %v6541 = vadd.f32 0.0, %v6540
    %v6542 = vpop.f32.mrf.mxu0
    %6543 = vdwg.mxu0
    %v6544 = vmin.f32 %v6395, %v5458
    %v6545 = vmin.f32 %v6397, %v5459
    %v6548 = vrot.slane %v6545, 7
    %v6549 = vsel %vm3076, %v6548, %v6544
    %v6551 = vsel %vm3079, %v6549, 0.0
    %6552 = vadd.xlane.f32.xlu0 %v6551
    %v6553 = vpop.xlane.xlu0 %6552
    %v6556 = vrot.slane %v6541, 7
    %v6557 = vsel %vm3076, %v6556, %v6468
    %6559 = vrot.lane.b32.xlu0 %v6090, 32
    %v6560 = vpop.permute.xlu0 %6559
    %6563 = vrot.lane.b32.xlu0 %v5976, 64
    %v6564 = vpop.permute.xlu0 %6563
    %v6566 = vsel %vm59, %v6557, %v6560
    %v6567 = vsel %vm2604, %v6566, %v6564
    %v6568 = vld [vmem:[%s16 + $0x9] sm:$0x1]
    %v6569 = vlaneseq
    %v6570 = vshrl.u32 %v6569, 7
    %v6571 = vsub.s32 0, %v6570
    %v6572 = vrot.slane %v6568, %v6571
    %v6573 = vmul.f32 %v6567, %v6572
    %v6574 = vsel %vm3288, %v6573, 0.0
    %6575 = vadd.xlane.f32.xlu0 %v6574
    %v6576 = vpop.xlane.xlu0 %6575
    %v6577 = vld [vmem:[%s16 + $0xa] sm:$0x1]
    %v6578 = vlaneseq
    %v6579 = vshrl.u32 %v6578, 7
    %v6580 = vsub.s32 0, %v6579
    %v6581 = vrot.slane %v6577, %v6580
    %v6582 = vadd.f32 %v6576, %v6581
    %v6583 = vxor.u32 %v6582, 2147483648
    %v6584 = vmul.f32 %v6583, 1.442695
    %v6585 = vpow.pop %v6584
    %v6586 = vadd.f32 %v6585, 1.0
    %v6587 = vrcp.pop %v6586
    %v6588 = vmul.f32 1.0, %v6587
    %6589 = vrot.lane.b32.xlu0 %v6557, 16
    %v6590 = vpop.permute.xlu0 %6589
    %v6592 = vsel %vm2792, %v6088, %v6590
    %v6593 = vld [vmem:[%s13] sm:$0xff]
    %v6594 = vld [vmem:[%s13 + $0x8] sm:$0xff]
    %v6595 = vld [vmem:[%s13 + $0x10] sm:$0xff]
    %v6596 = vld [vmem:[%s13 + $0x18] sm:$0xff]
    %v6597 = vld [vmem:[%s13 + $0x20] sm:$0xff]
    %v6598 = vld [vmem:[%s13 + $0x28] sm:$0xff]
    %v6599 = vld [vmem:[%s16 + $0xb] sm:$0x1]
    %v6600 = vlaneseq
    %v6601 = vshrl.u32 %v6600, 7
    %v6602 = vsub.s32 0, %v6601
    %v6603 = vrot.slane %v6599, %v6602
    %v6605 = vsel %vm71, %v6592, 0
    %6607 = vmatprep.subr.mxu0 0.0
    %6608 = vmatpush1.msra.mxu0 0.0
    %6609 = vmatprep.subr.mxu0 0.0
    %6610 = vmatpush1.msra.mxu0 0.0
    %6611 = vmatprep.subr.mxu0 0.0
    %6612 = vmatpush1.msra.mxu0 0.0
    %6613 = vmatprep.subr.mxu0 0.0
    %6614 = vmatpush1.msra.mxu0 0.0
    %6615 = vmatprep.subr.mxu0 0.0
    %6616 = vmatpush1.msra.mxu0 0.0
    %6617 = vmatprep.subr.mxu0 0.0
    %6618 = vmatpush1.msra.mxu0 0.0
    %6619 = vmatprep.subr.mxu0 0.0
    %6620 = vmatpush1.msra.mxu0 0.0
    %6621 = vmatprep.subr.mxu0 0.0
    %6622 = vmatpush1.msra.mxu0 0.0
    %6623 = vmatprep.subr.mxu0 0.0
    %6624 = vmatpush1.msra.mxu0 0.0
    %6625 = vmatprep.subr.mxu0 0.0
    %6626 = vmatpush1.msra.mxu0 0.0
    %6627 = vmatprep.subr.mxu0 0.0
    %6628 = vmatpush1.msra.mxu0 %v6598
    %6629 = vmatprep.subr.mxu0 0.0
    %6630 = vmatpush1.msra.mxu0 %v6597
    %6631 = vmatprep.subr.mxu0 0.0
    %6632 = vmatpush1.msra.mxu0 %v6596
    %6633 = vmatprep.subr.mxu0 0.0
    %6634 = vmatpush1.msra.mxu0 %v6595
    %6635 = vmatprep.subr.mxu0 0.0
    %6636 = vmatpush1.msra.mxu0 %v6594
    %6637 = vmatprep.subr.mxu0 0.0
    %6638 = vmatpush1.msra.mxu0 %v6593
    %6639 = vmatprep.subr.mxu0 0.0
    %6640 = vmatpush2.msra.mxu0 0.0
    %6641 = vmatprep.subr.mxu0 0.0
    %6642 = vmatpush2.msra.mxu0 0.0
    %6643 = vmatprep.subr.mxu0 0.0
    %6644 = vmatpush2.msra.mxu0 0.0
    %6645 = vmatprep.subr.mxu0 0.0
    %6646 = vmatpush2.msra.mxu0 0.0
    %6647 = vmatprep.subr.mxu0 0.0
    %6648 = vmatpush2.msra.mxu0 0.0
    %6649 = vmatprep.subr.mxu0 0.0
    %6650 = vmatpush2.msra.mxu0 0.0
    %6651 = vmatprep.subr.mxu0 0.0
    %6652 = vmatpush2.msra.mxu0 0.0
    %6653 = vmatprep.subr.mxu0 0.0
    %6654 = vmatpush2.msra.mxu0 0.0
    %6655 = vmatprep.subr.mxu0 0.0
    %6656 = vmatpush2.msra.mxu0 0.0
    %6657 = vmatprep.subr.mxu0 0.0
    %6658 = vmatpush2.msra.mxu0 0.0
    %6659 = vmatprep.subr.mxu0 0.0
    %6660 = vmatpush2.msra.mxu0 0.0
    %6661 = vmatprep.subr.mxu0 0.0
    %6662 = vmatpush2.msra.mxu0 0.0
    %6663 = vmatprep.subr.mxu0 0.0
    %6664 = vmatpush2.msra.mxu0 0.0
    %6665 = vmatprep.subr.mxu0 0.0
    %6666 = vmatpush2.msra.mxu0 0.0
    %6667 = vmatprep.subr.mxu0 0.0
    %6668 = vmatpush2.msra.mxu0 0.0
    %6669 = vmatprep.subr.mxu0 0.0
    %6670 = vmatpush2.msra.mxu0 0.0
    %6671 = vmatprep.mubr.f32.mxu0 0.0
    %6672 = vmatmul.mubr.f32.gmra.mxu0 %v6605
    %v6673 = vpop.f32.mrf.mxu0
    %v6674 = vadd.f32 %v6603, %v6673
    %v6675 = vpop.f32.mrf.mxu0
    %6676 = vdwg.mxu0
    %v6677 = vmax.f32 %v6674, 0.0
    %v6678 = vld [vmem:[%s14] sm:$0xff]
    %v6679 = vld [vmem:[%s14 + $0x8] sm:$0xff]
    %v6680 = vld [vmem:[%s15] sm:$0x1]
    %v6682 = vlaneseq
    %v6683 = vshrl.u32 %v6682, 7
    %v6684 = vsub.s32 0, %v6683
    %v6685 = vrot.slane %v6680, %v6684
    %v6688 = vsel %vm2792, %v6677, 0
    %6690 = vmatprep.subr.mxu0 0.0
    %6691 = vmatpush1.msra.mxu0 0.0
    %6692 = vmatprep.subr.mxu0 0.0
    %6693 = vmatpush1.msra.mxu0 0.0
    %6694 = vmatprep.subr.mxu0 0.0
    %6695 = vmatpush1.msra.mxu0 0.0
    %6696 = vmatprep.subr.mxu0 0.0
    %6697 = vmatpush1.msra.mxu0 0.0
    %6698 = vmatprep.subr.mxu0 0.0
    %6699 = vmatpush1.msra.mxu0 0.0
    %6700 = vmatprep.subr.mxu0 0.0
    %6701 = vmatpush1.msra.mxu0 0.0
    %6702 = vmatprep.subr.mxu0 0.0
    %6703 = vmatpush1.msra.mxu0 0.0
    %6704 = vmatprep.subr.mxu0 0.0
    %6705 = vmatpush1.msra.mxu0 0.0
    %6706 = vmatprep.subr.mxu0 0.0
    %6707 = vmatpush1.msra.mxu0 0.0
    %6708 = vmatprep.subr.mxu0 0.0
    %6709 = vmatpush1.msra.mxu0 0.0
    %6710 = vmatprep.subr.mxu0 0.0
    %6711 = vmatpush1.msra.mxu0 0.0
    %6712 = vmatprep.subr.mxu0 0.0
    %6713 = vmatpush1.msra.mxu0 0.0
    %6714 = vmatprep.subr.mxu0 0.0
    %6715 = vmatpush1.msra.mxu0 0.0
    %6716 = vmatprep.subr.mxu0 0.0
    %6717 = vmatpush1.msra.mxu0 0.0
    %6718 = vmatprep.subr.mxu0 0.0
    %6719 = vmatpush1.msra.mxu0 %v6679
    %6720 = vmatprep.subr.mxu0 0.0
    %6721 = vmatpush1.msra.mxu0 %v6678
    %6722 = vmatprep.subr.mxu0 0.0
    %6723 = vmatpush2.msra.mxu0 0.0
    %6724 = vmatprep.subr.mxu0 0.0
    %6725 = vmatpush2.msra.mxu0 0.0
    %6726 = vmatprep.subr.mxu0 0.0
    %6727 = vmatpush2.msra.mxu0 0.0
    %6728 = vmatprep.subr.mxu0 0.0
    %6729 = vmatpush2.msra.mxu0 0.0
    %6730 = vmatprep.subr.mxu0 0.0
    %6731 = vmatpush2.msra.mxu0 0.0
    %6732 = vmatprep.subr.mxu0 0.0
    %6733 = vmatpush2.msra.mxu0 0.0
    %6734 = vmatprep.subr.mxu0 0.0
    %6735 = vmatpush2.msra.mxu0 0.0
    %6736 = vmatprep.subr.mxu0 0.0
    %6737 = vmatpush2.msra.mxu0 0.0
    %6738 = vmatprep.subr.mxu0 0.0
    %6739 = vmatpush2.msra.mxu0 0.0
    %6740 = vmatprep.subr.mxu0 0.0
    %6741 = vmatpush2.msra.mxu0 0.0
    %6742 = vmatprep.subr.mxu0 0.0
    %6743 = vmatpush2.msra.mxu0 0.0
    %6744 = vmatprep.subr.mxu0 0.0
    %6745 = vmatpush2.msra.mxu0 0.0
    %6746 = vmatprep.subr.mxu0 0.0
    %6747 = vmatpush2.msra.mxu0 0.0
    %6748 = vmatprep.subr.mxu0 0.0
    %6749 = vmatpush2.msra.mxu0 0.0
    %6750 = vmatprep.subr.mxu0 0.0
    %6751 = vmatpush2.msra.mxu0 0.0
    %6752 = vmatprep.subr.mxu0 0.0
    %6753 = vmatpush2.msra.mxu0 0.0
    %6754 = vmatprep.mubr.f32.mxu0 0.0
    %6755 = vmatmul.mubr.f32.gmra.mxu0 %v6688
    %v6756 = vpop.f32.mrf.mxu0
    %v6757 = vadd.f32 %v6685, %v6756
    %v6758 = vpop.f32.mrf.mxu0
    %6759 = vdwg.mxu0
    %v6760 = vsel %vm3475, %v6757, -inf
    %6761 = vmax.xlane.f32.xlu0 %v6760
    %v6762 = vpop.xlane.xlu0 %6761
    %v6763 = vsub.f32 %v6757, %v6762
    %v6764 = vmul.f32 %v6763, 1.442695
    %v6765 = vpow.pop %v6764
    %v6766 = vsel %vm3475, %v6765, 0.0
    %6767 = vadd.xlane.f32.xlu0 %v6766
    %v6768 = vpop.xlane.xlu0 %6767
    %v6769 = vrcp.pop %v6768
    %v6770 = vmul.f32 %v6765, %v6769
    %v6771 = vsub.f32 1.0, %v6588
    %6773 = vset.pattern.permute.xlu0 0
    %6774 = vperm.xlu0 %6773, %v6771
    %v6775 = vpop.permute.xlu0 %6774
    %v6777 = vrot.slane %v6397, 7
    %v6778 = vsel %vm3076, %v6777, %v6395
    %v6780 = vmul.f32 %v6775, %v6778
    %6782 = vset.pattern.permute.xlu0 0
    %6783 = vperm.xlu0 %6782, %v6588
    %v6784 = vpop.permute.xlu0 %6783
    %v6786 = vmul.f32 %v6784, %v6770
    %v6787 = vld [vmem:[%s3] sm:$0xff]
    %v6788 = vld [vmem:[%s3 + $0x8] sm:$0xff]
    %v6791 = vunpack.c.l.s4 1966171168
    %v6792 = vunpack.c.0.s8 %v6791
    %v6793 = vlaneseq
    %v6794 = vshrl.u32 %v6793, 7
    %v6795 = vsub.s32 %v6792, %v6794
    %v6796 = vrot.slane %v6780, %v6795
    %v6797 = vcombine.high %v6796, %v6796
    %v6799 = vunpack.c.l.s4 1966171168
    %v6800 = vunpack.c.0.s8 %v6799
    %v6801 = vlaneseq
    %v6802 = vshrl.u32 %v6801, 7
    %v6803 = vsub.s32 %v6800, %v6802
    %v6804 = vrot.slane %v6796, %v6803
    %v6806 = vunpack.c.l.s4 1966171168
    %v6807 = vunpack.c.0.s8 %v6806
    %v6808 = vlaneseq
    %v6809 = vshrl.u32 %v6808, 7
    %v6810 = vsub.s32 %v6807, %v6809
    %v6811 = vrot.slane %v6797, %v6810
    %v6812 = vsel %vm3109, %v6804, 0
    %6814 = vmatprep.subr.mxu0 0.0
    %6815 = vmatpush1.msra.mxu0 0.0
    %6816 = vmatprep.subr.mxu0 0.0
    %6817 = vmatpush1.msra.mxu0 0.0
    %6818 = vmatprep.subr.mxu0 0.0
    %6819 = vmatpush1.msra.mxu0 0.0
    %6820 = vmatprep.subr.mxu0 0.0
    %6821 = vmatpush1.msra.mxu0 0.0
    %6822 = vmatprep.subr.mxu0 0.0
    %6823 = vmatpush1.msra.mxu0 0.0
    %6824 = vmatprep.subr.mxu0 0.0
    %6825 = vmatpush1.msra.mxu0 0.0
    %6826 = vmatprep.subr.mxu0 0.0
    %6827 = vmatpush1.msra.mxu0 0.0
    %6828 = vmatprep.subr.mxu0 0.0
    %6829 = vmatpush1.msra.mxu0 0.0
    %6830 = vmatprep.subr.mxu0 0.0
    %6831 = vmatpush1.msra.mxu0 0.0
    %6832 = vmatprep.subr.mxu0 0.0
    %6833 = vmatpush1.msra.mxu0 0.0
    %6834 = vmatprep.subr.mxu0 0.0
    %6835 = vmatpush1.msra.mxu0 0.0
    %6836 = vmatprep.subr.mxu0 0.0
    %6837 = vmatpush1.msra.mxu0 0.0
    %6838 = vmatprep.subr.mxu0 0.0
    %6839 = vmatpush1.msra.mxu0 0.0
    %6840 = vmatprep.subr.mxu0 0.0
    %6841 = vmatpush1.msra.mxu0 0.0
    %6842 = vmatprep.subr.mxu0 0.0
    %6843 = vmatpush1.msra.mxu0 0.0
    %6844 = vmatprep.subr.mxu0 0.0
    %6845 = vmatpush1.msra.mxu0 %v6787
    %6846 = vmatprep.subr.mxu0 0.0
    %6847 = vmatpush2.msra.mxu0 0.0
    %6848 = vmatprep.subr.mxu0 0.0
    %6849 = vmatpush2.msra.mxu0 0.0
    %6850 = vmatprep.subr.mxu0 0.0
    %6851 = vmatpush2.msra.mxu0 0.0
    %6852 = vmatprep.subr.mxu0 0.0
    %6853 = vmatpush2.msra.mxu0 0.0
    %6854 = vmatprep.subr.mxu0 0.0
    %6855 = vmatpush2.msra.mxu0 0.0
    %6856 = vmatprep.subr.mxu0 0.0
    %6857 = vmatpush2.msra.mxu0 0.0
    %6858 = vmatprep.subr.mxu0 0.0
    %6859 = vmatpush2.msra.mxu0 0.0
    %6860 = vmatprep.subr.mxu0 0.0
    %6861 = vmatpush2.msra.mxu0 0.0
    %6862 = vmatprep.subr.mxu0 0.0
    %6863 = vmatpush2.msra.mxu0 0.0
    %6864 = vmatprep.subr.mxu0 0.0
    %6865 = vmatpush2.msra.mxu0 0.0
    %6866 = vmatprep.subr.mxu0 0.0
    %6867 = vmatpush2.msra.mxu0 0.0
    %6868 = vmatprep.subr.mxu0 0.0
    %6869 = vmatpush2.msra.mxu0 0.0
    %6870 = vmatprep.subr.mxu0 0.0
    %6871 = vmatpush2.msra.mxu0 0.0
    %6872 = vmatprep.subr.mxu0 0.0
    %6873 = vmatpush2.msra.mxu0 0.0
    %6874 = vmatprep.subr.mxu0 0.0
    %6875 = vmatpush2.msra.mxu0 0.0
    %6876 = vmatprep.subr.mxu0 0.0
    %6877 = vmatpush2.msra.mxu0 0.0
    %6878 = vmatprep.mubr.f32.mxu0 0.0
    %6879 = vmatmul.mubr.f32.gmra.mxu0 %v6812
    %v6880 = vpop.f32.mrf.mxu0
    %v6881 = vadd.f32 0.0, %v6880
    %v6882 = vpop.f32.mrf.mxu0
    %6883 = vdwg.mxu0
    %v6884 = vsel %vm3109, %v6811, 0
    %6886 = vmatprep.subr.mxu0 0.0
    %6887 = vmatpush1.msra.mxu0 0.0
    %6888 = vmatprep.subr.mxu0 0.0
    %6889 = vmatpush1.msra.mxu0 0.0
    %6890 = vmatprep.subr.mxu0 0.0
    %6891 = vmatpush1.msra.mxu0 0.0
    %6892 = vmatprep.subr.mxu0 0.0
    %6893 = vmatpush1.msra.mxu0 0.0
    %6894 = vmatprep.subr.mxu0 0.0
    %6895 = vmatpush1.msra.mxu0 0.0
    %6896 = vmatprep.subr.mxu0 0.0
    %6897 = vmatpush1.msra.mxu0 0.0
    %6898 = vmatprep.subr.mxu0 0.0
    %6899 = vmatpush1.msra.mxu0 0.0
    %6900 = vmatprep.subr.mxu0 0.0
    %6901 = vmatpush1.msra.mxu0 0.0
    %6902 = vmatprep.subr.mxu0 0.0
    %6903 = vmatpush1.msra.mxu0 0.0
    %6904 = vmatprep.subr.mxu0 0.0
    %6905 = vmatpush1.msra.mxu0 0.0
    %6906 = vmatprep.subr.mxu0 0.0
    %6907 = vmatpush1.msra.mxu0 0.0
    %6908 = vmatprep.subr.mxu0 0.0
    %6909 = vmatpush1.msra.mxu0 0.0
    %6910 = vmatprep.subr.mxu0 0.0
    %6911 = vmatpush1.msra.mxu0 0.0
    %6912 = vmatprep.subr.mxu0 0.0
    %6913 = vmatpush1.msra.mxu0 0.0
    %6914 = vmatprep.subr.mxu0 0.0
    %6915 = vmatpush1.msra.mxu0 0.0
    %6916 = vmatprep.subr.mxu0 0.0
    %6917 = vmatpush1.msra.mxu0 %v6788
    %6918 = vmatprep.subr.mxu0 0.0
    %6919 = vmatpush2.msra.mxu0 0.0
    %6920 = vmatprep.subr.mxu0 0.0
    %6921 = vmatpush2.msra.mxu0 0.0
    %6922 = vmatprep.subr.mxu0 0.0
    %6923 = vmatpush2.msra.mxu0 0.0
    %6924 = vmatprep.subr.mxu0 0.0
    %6925 = vmatpush2.msra.mxu0 0.0
    %6926 = vmatprep.subr.mxu0 0.0
    %6927 = vmatpush2.msra.mxu0 0.0
    %6928 = vmatprep.subr.mxu0 0.0
    %6929 = vmatpush2.msra.mxu0 0.0
    %6930 = vmatprep.subr.mxu0 0.0
    %6931 = vmatpush2.msra.mxu0 0.0
    %6932 = vmatprep.subr.mxu0 0.0
    %6933 = vmatpush2.msra.mxu0 0.0
    %6934 = vmatprep.subr.mxu0 0.0
    %6935 = vmatpush2.msra.mxu0 0.0
    %6936 = vmatprep.subr.mxu0 0.0
    %6937 = vmatpush2.msra.mxu0 0.0
    %6938 = vmatprep.subr.mxu0 0.0
    %6939 = vmatpush2.msra.mxu0 0.0
    %6940 = vmatprep.subr.mxu0 0.0
    %6941 = vmatpush2.msra.mxu0 0.0
    %6942 = vmatprep.subr.mxu0 0.0
    %6943 = vmatpush2.msra.mxu0 0.0
    %6944 = vmatprep.subr.mxu0 0.0
    %6945 = vmatpush2.msra.mxu0 0.0
    %6946 = vmatprep.subr.mxu0 0.0
    %6947 = vmatpush2.msra.mxu0 0.0
    %6948 = vmatprep.subr.mxu0 0.0
    %6949 = vmatpush2.msra.mxu0 0.0
    %6950 = vmatprep.mubr.f32.mxu0 0.0
    %6951 = vmatmul.mubr.f32.gmra.mxu0 %v6884
    %v6952 = vpop.f32.mrf.mxu0
    %v6953 = vadd.f32 0.0, %v6952
    %v6954 = vpop.f32.mrf.mxu0
    %6955 = vdwg.mxu0
    %v6958 = vrot.slane %v6953, 7
    %v6959 = vsel %vm3076, %v6958, %v6881
    %v6961 = vadd.f32 %v6786, %v6959
    %s6962 = scalar_lea.vmem %s4, 6
    %v6963 = vld [vmem:[%s6962] sm:$0x3]
    %v6964 = vmul.f32 %v6961, %v6963
    %v6965 = vsel %vm3475, %v6964, 0.0
    %6966 = vadd.xlane.f32.xlu0 %v6965
    %v6967 = vpop.xlane.xlu0 %6966
    %v6968 = vadd.f32 %v6967, 1e-12
    %v6969 = vlog2.pop %v6968
    %v6970 = vmul.f32 %v6969, 0.6931472
    %v6971 = vsub.f32 0.0, %v6970
    %v6972 = vadd.f32 %v6971, %v6553
    %s6973 = scalar_lea.vmem %s5, 6
    %v6974 = vld [vmem:[%s6973] sm:$0x3]
    %v6975 = vmul.f32 %v6972, %v6974
    %v6976 = vadd.f32 %v5882, %v6975
    %v6977 = vld [vmem:[%s6] sm:$0x3]
    %v6978 = vrcp.pop %v6977
    %v6979 = vmul.f32 %v6976, %v6978
    %vm6980 = vcmask 1024
    %v6981 = vsel %vm6980, %v6979, 0.0
    %v6982 = vrot.slane %v6981, 4
    %v6983 = vadd.f32 %v6981, %v6982
    %v6984 = vrot.slane %v6983, 2
    %v6985 = vadd.f32 %v6983, %v6984
    %v6986 = vrot.slane %v6985, 1
    %v6987 = vadd.f32 %v6985, %v6986
    %v6988 = vmul.f32 %v6987, 0.5
    %vm6989 = vcmask 0
    %6990 = vst.msk [vmem:[#allocation3] sm:$0x1] %vm6989, %v6988
    // Predicated region
    $region70: #{pointer_generator_forward.1} parent=1 // pred_check
      _
    $region71: #{pointer_generator_forward.1} parent=1 // pred_check_branch
      %6992 = sbr.rel (0) target = $region73
    $region72: #{pointer_generator_forward.1} parent=1 // pred_region
      %s6994 = ssub.s32 16, 16
      %6995 = vsyncadd [#allocation4], %s6994
      %s6997 = sshll.u32 [#allocation3], 4
      %s6998 = int_to_ptr.vmem [resolvable:$true] %s6997
      %7000 = dma.vmem_to_hbm [thread:$0]  %s6998, 16, %s17, [#allocation4]
    $region73: #{pointer_generator_forward.1} parent=1 // pred_fallthru
      _
    // Predicated region
    $region74: #{pointer_generator_forward.1} parent=1 // pred_check
      _
    $region75: #{pointer_generator_forward.1} parent=1 // pred_check_branch
      %7002 = sbr.rel (0) target = $region77
    $region76: #{pointer_generator_forward.1} parent=1 // pred_region
      %7003 = dma.done [#allocation4], 16
    $region77: #{pointer_generator_forward.1} parent=1 // pred_fallthru
      _
    %7004 = vsyncpa [#allocation4], 1

</llo_original>
